<compile_context>
chip_gen: v7x
topology: tpu7x:2x2x1
jax: 0.10.0
libtpu: 0.0.40
codegen_flags: <defaults>
</compile_context>

<pallas_src>
import functools

import jax
import jax.numpy as jnp
from jax.experimental import pallas as pl
from jax.experimental.pallas import tpu as pltpu

EPS = 1e-5
CP = 16      # all conv channel dims zero-padded to 16 (real: 2 in for block1, 16 else)
PAD = 7      # per-sample halo baked into the lane layout (= conv1 'same' pad, the max)
GUARD = 8    # scratch guard columns on each side (>= PAD), keeps tap slices in bounds


# --------------------------------- fused kernel ----------------------------------- #

def _resnet_fwd_kernel(*refs, n, l, lanes, taps, cp, guard):
    """Entire ResNet forward in one kernel invocation.

    refs = [x0, mask, pgap,
            (w1, g1, b1, ws, gs, bs, w2, g2, b2, w3, g3, b3) * 3,
            fc_w, fc_b, out, act]
      x0   : (cp, lanes) bf16   input, lane-major with per-sample halos, channel-padded
      mask : (1, lanes)  f32    1.0 on valid lanes, 0.0 on halo / tail-pad lanes
      pgap : (lanes, n)  f32    per-sample averaging matrix (GAP as a matmul)
      w*   : (K, cp, cp) bf16   per-tap conv weight matrices; ws: (cp, cp) bf16
      g*/b*: (cp, 1)     f32    BN affine params
      fc_w : (OUT, cp) f32, fc_b : (OUT, 1) f32
      out  : (OUT, n) f32
      act  : VMEM scratch (cp, guard + lanes + guard) bf16, canonical activation storage
    """
    *ins, out_ref, act = refs
    it = iter(ins)
    x_ref, mask_ref, pgap_ref = next(it), next(it), next(it)

    inv_nl = 1.0 / (n * l)
    mask = jnp.broadcast_to(mask_ref[...], (cp, lanes))   # hoisted broadcast (0/1, f32)

    # Zero the scratch once (guard columns + halos); interiors are fully overwritten.
    act[...] = jnp.zeros(act.shape, act.dtype)
    act[:, guard:guard + lanes] = x_ref[...]

    def conv(w_ref, k):
        # 'same' 1-D conv = k accumulated MXU matmuls on lane-shifted views (bf16 -> f32).
        p = (k - 1) // 2
        acc = None
        for t in range(k):
            off = guard + t - p
            rhs = act[:, off:off + lanes]                               # (cp, lanes) bf16
            y = jnp.dot(w_ref[t], rhs, preferred_element_type=jnp.float32)
            acc = y if acc is None else acc + y
        return acc                                                      # (cp, lanes) f32

    def bn(y, g_ref, b_ref):
        # Train-mode BatchNorm1d: batch stats over valid lanes only (divide by true N*L),
        # biased variance (centered two-pass), applied as one y*scale + shift pass.
        mean = jnp.sum(y * mask, axis=1, keepdims=True) * inv_nl        # (cp, 1)
        d = (y - mean) * mask
        var = jnp.sum(d * d, axis=1, keepdims=True) * inv_nl
        scale = g_ref[...] * jax.lax.rsqrt(var + EPS)                   # rsqrt on the EUP
        shift = b_ref[...] - mean * scale
        return y * scale + shift

    def store(h):
        act[:, guard:guard + lanes] = h.astype(act.dtype)

    a = None
    for k1, k2, k3 in taps:
        w1, g1, b1 = next(it), next(it), next(it)
        ws, gs, bs = next(it), next(it), next(it)
        w2, g2, b2 = next(it), next(it), next(it)
        w3, g3, b3 = next(it), next(it), next(it)

        # 1x1 shortcut conv + BN on the (unshifted) block input.
        # TODO(synk): the shortcut conv bias is exactly cancelled by the train-mode BN
        #             mean subtraction and is therefore not applied (no numerical change).
        sc = bn(jnp.dot(ws[...], act[:, guard:guard + lanes],
                        preferred_element_type=jnp.float32), gs, bs)

        h = jnp.maximum(bn(conv(w1, k1), g1, b1), 0.0) * mask           # relu + zero halos
        store(h)
        h = jnp.maximum(bn(conv(w2, k2), g2, b2), 0.0) * mask
        store(h)
        a = jnp.maximum(bn(conv(w3, k3), g3, b3) + sc, 0.0) * mask
        store(a)

    fcw, fcb = next(it), next(it)
    # AdaptiveAvgPool1d(1) + Flatten + Linear as two tiny matmuls (no relayout / XLU reduce).
    gap = jnp.dot(a, pgap_ref[...], preferred_element_type=jnp.float32)            # (cp, n)
    logits = jnp.dot(fcw[...], gap, preferred_element_type=jnp.float32) + fcb[...]  # (OUT, n)
    out_ref[...] = logits.astype(out_ref.dtype)


# ------------------------------ wrapper / weight packing --------------------------- #

def _round_up(v, m):
    return -(-v // m) * m


def _pack_conv(w, cp):
    """PyTorch (Cout, Cin, K) -> per-tap (K, cp, cp) bf16, channels zero-padded."""
    cout, cin, k = w.shape
    wt = jnp.transpose(w, (2, 0, 1))                                    # (K, Cout, Cin)
    wt = jnp.pad(wt, ((0, 0), (0, cp - cout), (0, cp - cin)))
    return wt.astype(jnp.bfloat16)


def _pack_block(p, cp):
    col = lambda v: v.reshape(-1, 1).astype(jnp.float32)
    cout, cin = p["ws"].shape[0], p["ws"].shape[1]
    ws = jnp.pad(p["ws"][:, :, 0], ((0, cp - cout), (0, cp - cin))).astype(jnp.bfloat16)
    args = [_pack_conv(p["w1"], cp), col(p["g1"]), col(p["b1"]),
            ws, col(p["gs"]), col(p["bs"]),
            _pack_conv(p["w2"], cp), col(p["g2"]), col(p["b2"]),
            _pack_conv(p["w3"], cp), col(p["g3"]), col(p["b3"])]
    taps = (p["w1"].shape[2], p["w2"].shape[2], p["w3"].shape[2])
    return args, taps


def resnet_forward(x_ncl, params):
    N, CIN, L = x_ncl.shape
    Lp = L + 2 * PAD
    LANES = _round_up(N * Lp, 128)

    # Wrapper-side layout plumbing (free): (N, Cin, L) -> lane-major (CP, LANES) bf16 with
    # per-sample halos and channel zero-padding baked in.
    xt = jnp.transpose(x_ncl.astype(jnp.float32), (1, 0, 2))            # (CIN, N, L)
    xt = jnp.pad(xt, ((0, CP - CIN), (0, 0), (PAD, PAD)))               # (CP, N, Lp)
    x0 = jnp.pad(xt.reshape(CP, N * Lp), ((0, 0), (0, LANES - N * Lp))).astype(jnp.bfloat16)

    # Valid-lane mask (1, LANES) and the GAP averaging matrix (LANES, N).
    mrow = jnp.pad(jnp.ones((L,), jnp.float32), (PAD, PAD))             # (Lp,)
    mask = jnp.pad(jnp.tile(mrow, N), (0, LANES - N * Lp)).reshape(1, LANES)
    prow = mrow / jnp.float32(L)
    pgap = jnp.repeat(jnp.eye(N, dtype=jnp.float32), Lp, axis=0) * jnp.tile(prow, N)[:, None]
    pgap = jnp.pad(pgap, ((0, LANES - N * Lp), (0, 0)))                 # (LANES, N)

    args = [x0, mask, pgap]
    taps = []
    for name in ("block1", "block2", "block3"):
        b_args, t = _pack_block(params[name], CP)
        args += b_args
        taps.append(t)

    n_out = params["fc_w"].shape[0]
    args += [params["fc_w"].astype(jnp.float32),
             params["fc_b"].reshape(n_out, 1).astype(jnp.float32)]

    kern = functools.partial(_resnet_fwd_kernel, n=N, l=L, lanes=LANES,
                             taps=tuple(taps), cp=CP, guard=GUARD)
    out = pl.pallas_call(
        kern,
        out_shape=jax.ShapeDtypeStruct((n_out, N), jnp.float32),
        in_specs=[pl.BlockSpec(memory_space=pltpu.MemorySpace.VMEM)] * len(args),
        out_specs=pl.BlockSpec(memory_space=pltpu.MemorySpace.VMEM),
        scratch_shapes=[
            pltpu.VMEM((CP, GUARD + LANES + GUARD), jnp.bfloat16),      # padded activation
        ],
    )(*args)
    return out.T                                                         # (N, n_out)


# --------------------------------- parameters -------------------------------------- #

def init_block_params(key, cin, cout):
    ks = jax.random.split(key, 5)

    def wscale(fan_in):
        return 1.0 / jnp.sqrt(jnp.float32(fan_in))

    return {
        "w1": jax.random.normal(ks[0], (cout, cin, 15), jnp.float32) * wscale(cin * 15),
        "g1": jnp.ones((cout,), jnp.float32), "b1": jnp.zeros((cout,), jnp.float32),
        "w2": jax.random.normal(ks[1], (cout, cout, 9), jnp.float32) * wscale(cout * 9),
        "g2": jnp.ones((cout,), jnp.float32), "b2": jnp.zeros((cout,), jnp.float32),
        "w3": jax.random.normal(ks[2], (cout, cout, 3), jnp.float32) * wscale(cout * 3),
        "g3": jnp.ones((cout,), jnp.float32), "b3": jnp.zeros((cout,), jnp.float32),
        "ws": jax.random.normal(ks[3], (cout, cin, 1), jnp.float32) * wscale(cin),
        # Shortcut conv bias exists in the module but is cancelled by train-mode BN;
        # kept here only for parameter-shape fidelity (unused in the kernel).
        "bias_s": jax.random.normal(ks[4], (cout,), jnp.float32) * wscale(cin),
        "gs": jnp.ones((cout,), jnp.float32), "bs": jnp.zeros((cout,), jnp.float32),
    }


def init_params(key):
    k1, k2, k3, k4, k5 = jax.random.split(key, 5)
    return {
        "block1": init_block_params(k1, 2, 16),
        "block2": init_block_params(k2, 16, 16),
        "block3": init_block_params(k3, 16, 16),
        "fc_w": jax.random.normal(k4, (2, 16), jnp.float32) / jnp.sqrt(16.0),
        "fc_b": jax.random.normal(k5, (2,), jnp.float32) / jnp.sqrt(16.0),
    }


# ------------------------------------- main ----------------------------------------- #

if __name__ == "__main__":
    key = jax.random.PRNGKey(0)
    kx, kp = jax.random.split(key)

    N, CIN, L = 2, 2, 16
    x = jax.random.normal(kx, (N, CIN, L), jnp.float32)    # PyTorch NCL input
    params = init_params(kp)

    fwd = jax.jit(lambda xin: resnet_forward(xin, params))
    out = fwd(x)
    jax.block_until_ready(out)

    assert out.shape == (N, 2), out.shape
    assert bool(jnp.all(jnp.isfinite(out)))
    print("KERNEL_OK")
</pallas_src>

<mosaic_0001>
module attributes {stable_mosaic.version = 11 : i64} {
  func.func @_resnet_fwd_kernel(%arg0: memref<16x128xbf16, #tpu.memory_space<vmem>>, %arg1: memref<1x128xf32, #tpu.memory_space<vmem>>, %arg2: memref<128x2xf32, #tpu.memory_space<vmem>>, %arg3: memref<15x16x16xbf16, #tpu.memory_space<vmem>>, %arg4: memref<16x1xf32, #tpu.memory_space<vmem>>, %arg5: memref<16x1xf32, #tpu.memory_space<vmem>>, %arg6: memref<16x16xbf16, #tpu.memory_space<vmem>>, %arg7: memref<16x1xf32, #tpu.memory_space<vmem>>, %arg8: memref<16x1xf32, #tpu.memory_space<vmem>>, %arg9: memref<9x16x16xbf16, #tpu.memory_space<vmem>>, %arg10: memref<16x1xf32, #tpu.memory_space<vmem>>, %arg11: memref<16x1xf32, #tpu.memory_space<vmem>>, %arg12: memref<3x16x16xbf16, #tpu.memory_space<vmem>>, %arg13: memref<16x1xf32, #tpu.memory_space<vmem>>, %arg14: memref<16x1xf32, #tpu.memory_space<vmem>>, %arg15: memref<15x16x16xbf16, #tpu.memory_space<vmem>>, %arg16: memref<16x1xf32, #tpu.memory_space<vmem>>, %arg17: memref<16x1xf32, #tpu.memory_space<vmem>>, %arg18: memref<16x16xbf16, #tpu.memory_space<vmem>>, %arg19: memref<16x1xf32, #tpu.memory_space<vmem>>, %arg20: memref<16x1xf32, #tpu.memory_space<vmem>>, %arg21: memref<9x16x16xbf16, #tpu.memory_space<vmem>>, %arg22: memref<16x1xf32, #tpu.memory_space<vmem>>, %arg23: memref<16x1xf32, #tpu.memory_space<vmem>>, %arg24: memref<3x16x16xbf16, #tpu.memory_space<vmem>>, %arg25: memref<16x1xf32, #tpu.memory_space<vmem>>, %arg26: memref<16x1xf32, #tpu.memory_space<vmem>>, %arg27: memref<15x16x16xbf16, #tpu.memory_space<vmem>>, %arg28: memref<16x1xf32, #tpu.memory_space<vmem>>, %arg29: memref<16x1xf32, #tpu.memory_space<vmem>>, %arg30: memref<16x16xbf16, #tpu.memory_space<vmem>>, %arg31: memref<16x1xf32, #tpu.memory_space<vmem>>, %arg32: memref<16x1xf32, #tpu.memory_space<vmem>>, %arg33: memref<9x16x16xbf16, #tpu.memory_space<vmem>>, %arg34: memref<16x1xf32, #tpu.memory_space<vmem>>, %arg35: memref<16x1xf32, #tpu.memory_space<vmem>>, %arg36: memref<3x16x16xbf16, #tpu.memory_space<vmem>>, %arg37: memref<16x1xf32, #tpu.memory_space<vmem>>, %arg38: memref<16x1xf32, #tpu.memory_space<vmem>>, %arg39: memref<2x16xf32, #tpu.memory_space<vmem>>, %arg40: memref<2x1xf32, #tpu.memory_space<vmem>>, %arg41: memref<2x2xf32, #tpu.memory_space<vmem>>, %arg42: memref<16x144xbf16, #tpu.memory_space<vmem>>) attributes {dimension_semantics = [], scalar_prefetch = 0 : i64, scratch_operands = 1 : i64, tpu.core_type = #tpu.core_type<tc>} {
    %c0 = arith.constant 0 : index
    %c0_0 = arith.constant 0 : index
    %0 = vector.load %arg1[%c0, %c0_0] : memref<1x128xf32, #tpu.memory_space<vmem>>, vector<1x128xf32>
    %1 = vector.shape_cast %0 : vector<1x128xf32> to vector<1x128xf32>
    %2 = vector.broadcast %1 : vector<1x128xf32> to vector<16x128xf32>
    %cst = arith.constant 0.000000e+00 : bf16
    %3 = vector.broadcast %cst : bf16 to vector<16x144xbf16>
    %c0_1 = arith.constant 0 : index
    %c0_2 = arith.constant 0 : index
    %4 = vector.load %arg42[%c0_1, %c0_2] : memref<16x144xbf16, #tpu.memory_space<vmem>>, vector<16x144xbf16>
    tpu.vector_store %arg42[%c0_1, %c0_2], %3 {strides = array<i32>} : memref<16x144xbf16, #tpu.memory_space<vmem>>, vector<16x144xbf16>,
    %c0_3 = arith.constant 0 : index
    %c0_4 = arith.constant 0 : index
    %5 = vector.load %arg0[%c0_3, %c0_4] : memref<16x128xbf16, #tpu.memory_space<vmem>>, vector<16x128xbf16>
    %c0_5 = arith.constant 0 : index
    %c8 = arith.constant 8 : index
    %6 = vector.load %arg42[%c0_5, %c8] : memref<16x144xbf16, #tpu.memory_space<vmem>>, vector<16x128xbf16>
    tpu.vector_store %arg42[%c0_5, %c8], %5 {strides = array<i32>} : memref<16x144xbf16, #tpu.memory_space<vmem>>, vector<16x128xbf16>,
    %c0_6 = arith.constant 0 : index
    %c0_7 = arith.constant 0 : index
    %7 = vector.load %arg6[%c0_6, %c0_7] : memref<16x16xbf16, #tpu.memory_space<vmem>>, vector<16x16xbf16>
    %c0_8 = arith.constant 0 : index
    %c8_9 = arith.constant 8 : index
    %8 = vector.load %arg42[%c0_8, %c8_9] : memref<16x144xbf16, #tpu.memory_space<vmem>>, vector<16x128xbf16>
    %cst_10 = arith.constant dense<0.000000e+00> : vector<16x128xf32>
    %9 = tpu.matmul %7, %8, %cst_10 {dimension_numbers = #tpu.dot_dimension_numbers<[1], [0], [0], [1], [0, 0, 1, 1], [], []>} : vector<16x16xbf16>, vector<16x128xbf16>, vector<16x128xf32> -> vector<16x128xf32>
    %10 = arith.mulf %9, %2 : vector<16x128xf32>
    %cst_11 = arith.constant dense<0.000000e+00> : vector<16xf32>
    %11 = vector.multi_reduction <add>, %10, %cst_11 [1] : vector<16x128xf32> to vector<16xf32>
    %12 = vector.shape_cast %11 : vector<16xf32> to vector<16x1xf32>
    %cst_12 = arith.constant 3.125000e-02 : f32
    %13 = vector.broadcast %cst_12 : f32 to vector<16x1xf32>
    %14 = arith.mulf %12, %13 : vector<16x1xf32>
    %15 = vector.broadcast %14 : vector<16x1xf32> to vector<16x128xf32>
    %16 = arith.subf %9, %15 : vector<16x128xf32>
    %17 = arith.mulf %16, %2 : vector<16x128xf32>
    %18 = arith.mulf %17, %17 : vector<16x128xf32>
    %cst_13 = arith.constant dense<0.000000e+00> : vector<16xf32>
    %19 = vector.multi_reduction <add>, %18, %cst_13 [1] : vector<16x128xf32> to vector<16xf32>
    %20 = vector.shape_cast %19 : vector<16xf32> to vector<16x1xf32>
    %cst_14 = arith.constant 3.125000e-02 : f32
    %21 = vector.broadcast %cst_14 : f32 to vector<16x1xf32>
    %22 = arith.mulf %20, %21 : vector<16x1xf32>
    %c0_15 = arith.constant 0 : index
    %c0_16 = arith.constant 0 : index
    %23 = vector.load %arg7[%c0_15, %c0_16] : memref<16x1xf32, #tpu.memory_space<vmem>>, vector<16x1xf32>
    %cst_17 = arith.constant 9.99999974E-6 : f32
    %24 = vector.broadcast %cst_17 : f32 to vector<16x1xf32>
    %25 = arith.addf %22, %24 : vector<16x1xf32>
    %26 = math.rsqrt %25 : vector<16x1xf32>
    %27 = arith.mulf %23, %26 : vector<16x1xf32>
    %c0_18 = arith.constant 0 : index
    %c0_19 = arith.constant 0 : index
    %28 = vector.load %arg8[%c0_18, %c0_19] : memref<16x1xf32, #tpu.memory_space<vmem>>, vector<16x1xf32>
    %29 = arith.mulf %14, %27 : vector<16x1xf32>
    %30 = arith.subf %28, %29 : vector<16x1xf32>
    %31 = vector.broadcast %27 : vector<16x1xf32> to vector<16x128xf32>
    %32 = arith.mulf %9, %31 : vector<16x128xf32>
    %33 = vector.broadcast %30 : vector<16x1xf32> to vector<16x128xf32>
    %34 = arith.addf %32, %33 : vector<16x128xf32>
    %c0_20 = arith.constant 0 : index
    %c1 = arith.constant 1 : index
    %35 = vector.load %arg42[%c0_20, %c1] : memref<16x144xbf16, #tpu.memory_space<vmem>>, vector<16x128xbf16>
    %c0_21 = arith.constant 0 : index
    %c0_22 = arith.constant 0 : index
    %c0_23 = arith.constant 0 : index
    %36 = vector.load %arg3[%c0_21, %c0_22, %c0_23] : memref<15x16x16xbf16, #tpu.memory_space<vmem>>, vector<1x16x16xbf16>
    %37 = vector.shape_cast %36 : vector<1x16x16xbf16> to vector<16x16xbf16>
    %cst_24 = arith.constant dense<0.000000e+00> : vector<16x128xf32>
    %38 = tpu.matmul %37, %35, %cst_24 {dimension_numbers = #tpu.dot_dimension_numbers<[1], [0], [0], [1], [0, 0, 1, 1], [], []>} : vector<16x16xbf16>, vector<16x128xbf16>, vector<16x128xf32> -> vector<16x128xf32>
    %c0_25 = arith.constant 0 : index
    %c2 = arith.constant 2 : index
    %39 = vector.load %arg42[%c0_25, %c2] : memref<16x144xbf16, #tpu.memory_space<vmem>>, vector<16x128xbf16>
    %c1_26 = arith.constant 1 : index
    %c0_27 = arith.constant 0 : index
    %c0_28 = arith.constant 0 : index
    %40 = vector.load %arg3[%c1_26, %c0_27, %c0_28] : memref<15x16x16xbf16, #tpu.memory_space<vmem>>, vector<1x16x16xbf16>
    %41 = vector.shape_cast %40 : vector<1x16x16xbf16> to vector<16x16xbf16>
    %cst_29 = arith.constant dense<0.000000e+00> : vector<16x128xf32>
    %42 = tpu.matmul %41, %39, %cst_29 {dimension_numbers = #tpu.dot_dimension_numbers<[1], [0], [0], [1], [0, 0, 1, 1], [], []>} : vector<16x16xbf16>, vector<16x128xbf16>, vector<16x128xf32> -> vector<16x128xf32>
    %43 = arith.addf %38, %42 : vector<16x128xf32>
    %c0_30 = arith.constant 0 : index
    %c3 = arith.constant 3 : index
    %44 = vector.load %arg42[%c0_30, %c3] : memref<16x144xbf16, #tpu.memory_space<vmem>>, vector<16x128xbf16>
    %c2_31 = arith.constant 2 : index
    %c0_32 = arith.constant 0 : index
    %c0_33 = arith.constant 0 : index
    %45 = vector.load %arg3[%c2_31, %c0_32, %c0_33] : memref<15x16x16xbf16, #tpu.memory_space<vmem>>, vector<1x16x16xbf16>
    %46 = vector.shape_cast %45 : vector<1x16x16xbf16> to vector<16x16xbf16>
    %cst_34 = arith.constant dense<0.000000e+00> : vector<16x128xf32>
    %47 = tpu.matmul %46, %44, %cst_34 {dimension_numbers = #tpu.dot_dimension_numbers<[1], [0], [0], [1], [0, 0, 1, 1], [], []>} : vector<16x16xbf16>, vector<16x128xbf16>, vector<16x128xf32> -> vector<16x128xf32>
    %48 = arith.addf %43, %47 : vector<16x128xf32>
    %c0_35 = arith.constant 0 : index
    %c4 = arith.constant 4 : index
    %49 = vector.load %arg42[%c0_35, %c4] : memref<16x144xbf16, #tpu.memory_space<vmem>>, vector<16x128xbf16>
    %c3_36 = arith.constant 3 : index
    %c0_37 = arith.constant 0 : index
    %c0_38 = arith.constant 0 : index
    %50 = vector.load %arg3[%c3_36, %c0_37, %c0_38] : memref<15x16x16xbf16, #tpu.memory_space<vmem>>, vector<1x16x16xbf16>
    %51 = vector.shape_cast %50 : vector<1x16x16xbf16> to vector<16x16xbf16>
    %cst_39 = arith.constant dense<0.000000e+00> : vector<16x128xf32>
    %52 = tpu.matmul %51, %49, %cst_39 {dimension_numbers = #tpu.dot_dimension_numbers<[1], [0], [0], [1], [0, 0, 1, 1], [], []>} : vector<16x16xbf16>, vector<16x128xbf16>, vector<16x128xf32> -> vector<16x128xf32>
    %53 = arith.addf %48, %52 : vector<16x128xf32>
    %c0_40 = arith.constant 0 : index
    %c5 = arith.constant 5 : index
    %54 = vector.load %arg42[%c0_40, %c5] : memref<16x144xbf16, #tpu.memory_space<vmem>>, vector<16x128xbf16>
    %c4_41 = arith.constant 4 : index
    %c0_42 = arith.constant 0 : index
    %c0_43 = arith.constant 0 : index
    %55 = vector.load %arg3[%c4_41, %c0_42, %c0_43] : memref<15x16x16xbf16, #tpu.memory_space<vmem>>, vector<1x16x16xbf16>
    %56 = vector.shape_cast %55 : vector<1x16x16xbf16> to vector<16x16xbf16>
    %cst_44 = arith.constant dense<0.000000e+00> : vector<16x128xf32>
    %57 = tpu.matmul %56, %54, %cst_44 {dimension_numbers = #tpu.dot_dimension_numbers<[1], [0], [0], [1], [0, 0, 1, 1], [], []>} : vector<16x16xbf16>, vector<16x128xbf16>, vector<16x128xf32> -> vector<16x128xf32>
    %58 = arith.addf %53, %57 : vector<16x128xf32>
    %c0_45 = arith.constant 0 : index
    %c6 = arith.constant 6 : index
    %59 = vector.load %arg42[%c0_45, %c6] : memref<16x144xbf16, #tpu.memory_space<vmem>>, vector<16x128xbf16>
    %c5_46 = arith.constant 5 : index
    %c0_47 = arith.constant 0 : index
    %c0_48 = arith.constant 0 : index
    %60 = vector.load %arg3[%c5_46, %c0_47, %c0_48] : memref<15x16x16xbf16, #tpu.memory_space<vmem>>, vector<1x16x16xbf16>
    %61 = vector.shape_cast %60 : vector<1x16x16xbf16> to vector<16x16xbf16>
    %cst_49 = arith.constant dense<0.000000e+00> : vector<16x128xf32>
    %62 = tpu.matmul %61, %59, %cst_49 {dimension_numbers = #tpu.dot_dimension_numbers<[1], [0], [0], [1], [0, 0, 1, 1], [], []>} : vector<16x16xbf16>, vector<16x128xbf16>, vector<16x128xf32> -> vector<16x128xf32>
    %63 = arith.addf %58, %62 : vector<16x128xf32>
    %c0_50 = arith.constant 0 : index
    %c7 = arith.constant 7 : index
    %64 = vector.load %arg42[%c0_50, %c7] : memref<16x144xbf16, #tpu.memory_space<vmem>>, vector<16x128xbf16>
    %c6_51 = arith.constant 6 : index
    %c0_52 = arith.constant 0 : index
    %c0_53 = arith.constant 0 : index
    %65 = vector.load %arg3[%c6_51, %c0_52, %c0_53] : memref<15x16x16xbf16, #tpu.memory_space<vmem>>, vector<1x16x16xbf16>
    %66 = vector.shape_cast %65 : vector<1x16x16xbf16> to vector<16x16xbf16>
    %cst_54 = arith.constant dense<0.000000e+00> : vector<16x128xf32>
    %67 = tpu.matmul %66, %64, %cst_54 {dimension_numbers = #tpu.dot_dimension_numbers<[1], [0], [0], [1], [0, 0, 1, 1], [], []>} : vector<16x16xbf16>, vector<16x128xbf16>, vector<16x128xf32> -> vector<16x128xf32>
    %68 = arith.addf %63, %67 : vector<16x128xf32>
    %c0_55 = arith.constant 0 : index
    %c8_56 = arith.constant 8 : index
    %69 = vector.load %arg42[%c0_55, %c8_56] : memref<16x144xbf16, #tpu.memory_space<vmem>>, vector<16x128xbf16>
    %c7_57 = arith.constant 7 : index
    %c0_58 = arith.constant 0 : index
    %c0_59 = arith.constant 0 : index
    %70 = vector.load %arg3[%c7_57, %c0_58, %c0_59] : memref<15x16x16xbf16, #tpu.memory_space<vmem>>, vector<1x16x16xbf16>
    %71 = vector.shape_cast %70 : vector<1x16x16xbf16> to vector<16x16xbf16>
    %cst_60 = arith.constant dense<0.000000e+00> : vector<16x128xf32>
    %72 = tpu.matmul %71, %69, %cst_60 {dimension_numbers = #tpu.dot_dimension_numbers<[1], [0], [0], [1], [0, 0, 1, 1], [], []>} : vector<16x16xbf16>, vector<16x128xbf16>, vector<16x128xf32> -> vector<16x128xf32>
    %73 = arith.addf %68, %72 : vector<16x128xf32>
    %c0_61 = arith.constant 0 : index
    %c9 = arith.constant 9 : index
    %74 = vector.load %arg42[%c0_61, %c9] : memref<16x144xbf16, #tpu.memory_space<vmem>>, vector<16x128xbf16>
    %c8_62 = arith.constant 8 : index
    %c0_63 = arith.constant 0 : index
    %c0_64 = arith.constant 0 : index
    %75 = vector.load %arg3[%c8_62, %c0_63, %c0_64] : memref<15x16x16xbf16, #tpu.memory_space<vmem>>, vector<1x16x16xbf16>
    %76 = vector.shape_cast %75 : vector<1x16x16xbf16> to vector<16x16xbf16>
    %cst_65 = arith.constant dense<0.000000e+00> : vector<16x128xf32>
    %77 = tpu.matmul %76, %74, %cst_65 {dimension_numbers = #tpu.dot_dimension_numbers<[1], [0], [0], [1], [0, 0, 1, 1], [], []>} : vector<16x16xbf16>, vector<16x128xbf16>, vector<16x128xf32> -> vector<16x128xf32>
    %78 = arith.addf %73, %77 : vector<16x128xf32>
    %c0_66 = arith.constant 0 : index
    %c10 = arith.constant 10 : index
    %79 = vector.load %arg42[%c0_66, %c10] : memref<16x144xbf16, #tpu.memory_space<vmem>>, vector<16x128xbf16>
    %c9_67 = arith.constant 9 : index
    %c0_68 = arith.constant 0 : index
    %c0_69 = arith.constant 0 : index
    %80 = vector.load %arg3[%c9_67, %c0_68, %c0_69] : memref<15x16x16xbf16, #tpu.memory_space<vmem>>, vector<1x16x16xbf16>
    %81 = vector.shape_cast %80 : vector<1x16x16xbf16> to vector<16x16xbf16>
    %cst_70 = arith.constant dense<0.000000e+00> : vector<16x128xf32>
    %82 = tpu.matmul %81, %79, %cst_70 {dimension_numbers = #tpu.dot_dimension_numbers<[1], [0], [0], [1], [0, 0, 1, 1], [], []>} : vector<16x16xbf16>, vector<16x128xbf16>, vector<16x128xf32> -> vector<16x128xf32>
    %83 = arith.addf %78, %82 : vector<16x128xf32>
    %c0_71 = arith.constant 0 : index
    %c11 = arith.constant 11 : index
    %84 = vector.load %arg42[%c0_71, %c11] : memref<16x144xbf16, #tpu.memory_space<vmem>>, vector<16x128xbf16>
    %c10_72 = arith.constant 10 : index
    %c0_73 = arith.constant 0 : index
    %c0_74 = arith.constant 0 : index
    %85 = vector.load %arg3[%c10_72, %c0_73, %c0_74] : memref<15x16x16xbf16, #tpu.memory_space<vmem>>, vector<1x16x16xbf16>
    %86 = vector.shape_cast %85 : vector<1x16x16xbf16> to vector<16x16xbf16>
    %cst_75 = arith.constant dense<0.000000e+00> : vector<16x128xf32>
    %87 = tpu.matmul %86, %84, %cst_75 {dimension_numbers = #tpu.dot_dimension_numbers<[1], [0], [0], [1], [0, 0, 1, 1], [], []>} : vector<16x16xbf16>, vector<16x128xbf16>, vector<16x128xf32> -> vector<16x128xf32>
    %88 = arith.addf %83, %87 : vector<16x128xf32>
    %c0_76 = arith.constant 0 : index
    %c12 = arith.constant 12 : index
    %89 = vector.load %arg42[%c0_76, %c12] : memref<16x144xbf16, #tpu.memory_space<vmem>>, vector<16x128xbf16>
    %c11_77 = arith.constant 11 : index
    %c0_78 = arith.constant 0 : index
    %c0_79 = arith.constant 0 : index
    %90 = vector.load %arg3[%c11_77, %c0_78, %c0_79] : memref<15x16x16xbf16, #tpu.memory_space<vmem>>, vector<1x16x16xbf16>
    %91 = vector.shape_cast %90 : vector<1x16x16xbf16> to vector<16x16xbf16>
    %cst_80 = arith.constant dense<0.000000e+00> : vector<16x128xf32>
    %92 = tpu.matmul %91, %89, %cst_80 {dimension_numbers = #tpu.dot_dimension_numbers<[1], [0], [0], [1], [0, 0, 1, 1], [], []>} : vector<16x16xbf16>, vector<16x128xbf16>, vector<16x128xf32> -> vector<16x128xf32>
    %93 = arith.addf %88, %92 : vector<16x128xf32>
    %c0_81 = arith.constant 0 : index
    %c13 = arith.constant 13 : index
    %94 = vector.load %arg42[%c0_81, %c13] : memref<16x144xbf16, #tpu.memory_space<vmem>>, vector<16x128xbf16>
    %c12_82 = arith.constant 12 : index
    %c0_83 = arith.constant 0 : index
    %c0_84 = arith.constant 0 : index
    %95 = vector.load %arg3[%c12_82, %c0_83, %c0_84] : memref<15x16x16xbf16, #tpu.memory_space<vmem>>, vector<1x16x16xbf16>
    %96 = vector.shape_cast %95 : vector<1x16x16xbf16> to vector<16x16xbf16>
    %cst_85 = arith.constant dense<0.000000e+00> : vector<16x128xf32>
    %97 = tpu.matmul %96, %94, %cst_85 {dimension_numbers = #tpu.dot_dimension_numbers<[1], [0], [0], [1], [0, 0, 1, 1], [], []>} : vector<16x16xbf16>, vector<16x128xbf16>, vector<16x128xf32> -> vector<16x128xf32>
    %98 = arith.addf %93, %97 : vector<16x128xf32>
    %c0_86 = arith.constant 0 : index
    %c14 = arith.constant 14 : index
    %99 = vector.load %arg42[%c0_86, %c14] : memref<16x144xbf16, #tpu.memory_space<vmem>>, vector<16x128xbf16>
    %c13_87 = arith.constant 13 : index
    %c0_88 = arith.constant 0 : index
    %c0_89 = arith.constant 0 : index
    %100 = vector.load %arg3[%c13_87, %c0_88, %c0_89] : memref<15x16x16xbf16, #tpu.memory_space<vmem>>, vector<1x16x16xbf16>
    %101 = vector.shape_cast %100 : vector<1x16x16xbf16> to vector<16x16xbf16>
    %cst_90 = arith.constant dense<0.000000e+00> : vector<16x128xf32>
    %102 = tpu.matmul %101, %99, %cst_90 {dimension_numbers = #tpu.dot_dimension_numbers<[1], [0], [0], [1], [0, 0, 1, 1], [], []>} : vector<16x16xbf16>, vector<16x128xbf16>, vector<16x128xf32> -> vector<16x128xf32>
    %103 = arith.addf %98, %102 : vector<16x128xf32>
    %c0_91 = arith.constant 0 : index
    %c15 = arith.constant 15 : index
    %104 = vector.load %arg42[%c0_91, %c15] : memref<16x144xbf16, #tpu.memory_space<vmem>>, vector<16x128xbf16>
    %c14_92 = arith.constant 14 : index
    %c0_93 = arith.constant 0 : index
    %c0_94 = arith.constant 0 : index
    %105 = vector.load %arg3[%c14_92, %c0_93, %c0_94] : memref<15x16x16xbf16, #tpu.memory_space<vmem>>, vector<1x16x16xbf16>
    %106 = vector.shape_cast %105 : vector<1x16x16xbf16> to vector<16x16xbf16>
    %cst_95 = arith.constant dense<0.000000e+00> : vector<16x128xf32>
    %107 = tpu.matmul %106, %104, %cst_95 {dimension_numbers = #tpu.dot_dimension_numbers<[1], [0], [0], [1], [0, 0, 1, 1], [], []>} : vector<16x16xbf16>, vector<16x128xbf16>, vector<16x128xf32> -> vector<16x128xf32>
    %108 = arith.addf %103, %107 : vector<16x128xf32>
    %109 = arith.mulf %108, %2 : vector<16x128xf32>
    %cst_96 = arith.constant dense<0.000000e+00> : vector<16xf32>
    %110 = vector.multi_reduction <add>, %109, %cst_96 [1] : vector<16x128xf32> to vector<16xf32>
    %111 = vector.shape_cast %110 : vector<16xf32> to vector<16x1xf32>
    %cst_97 = arith.constant 3.125000e-02 : f32
    %112 = vector.broadcast %cst_97 : f32 to vector<16x1xf32>
    %113 = arith.mulf %111, %112 : vector<16x1xf32>
    %114 = vector.broadcast %113 : vector<16x1xf32> to vector<16x128xf32>
    %115 = arith.subf %108, %114 : vector<16x128xf32>
    %116 = arith.mulf %115, %2 : vector<16x128xf32>
    %117 = arith.mulf %116, %116 : vector<16x128xf32>
    %cst_98 = arith.constant dense<0.000000e+00> : vector<16xf32>
    %118 = vector.multi_reduction <add>, %117, %cst_98 [1] : vector<16x128xf32> to vector<16xf32>
    %119 = vector.shape_cast %118 : vector<16xf32> to vector<16x1xf32>
    %cst_99 = arith.constant 3.125000e-02 : f32
    %120 = vector.broadcast %cst_99 : f32 to vector<16x1xf32>
    %121 = arith.mulf %119, %120 : vector<16x1xf32>
    %c0_100 = arith.constant 0 : index
    %c0_101 = arith.constant 0 : index
    %122 = vector.load %arg4[%c0_100, %c0_101] : memref<16x1xf32, #tpu.memory_space<vmem>>, vector<16x1xf32>
    %cst_102 = arith.constant 9.99999974E-6 : f32
    %123 = vector.broadcast %cst_102 : f32 to vector<16x1xf32>
    %124 = arith.addf %121, %123 : vector<16x1xf32>
    %125 = math.rsqrt %124 : vector<16x1xf32>
    %126 = arith.mulf %122, %125 : vector<16x1xf32>
    %c0_103 = arith.constant 0 : index
    %c0_104 = arith.constant 0 : index
    %127 = vector.load %arg5[%c0_103, %c0_104] : memref<16x1xf32, #tpu.memory_space<vmem>>, vector<16x1xf32>
    %128 = arith.mulf %113, %126 : vector<16x1xf32>
    %129 = arith.subf %127, %128 : vector<16x1xf32>
    %130 = vector.broadcast %126 : vector<16x1xf32> to vector<16x128xf32>
    %131 = arith.mulf %108, %130 : vector<16x128xf32>
    %132 = vector.broadcast %129 : vector<16x1xf32> to vector<16x128xf32>
    %133 = arith.addf %131, %132 : vector<16x128xf32>
    %cst_105 = arith.constant 0.000000e+00 : f32
    %134 = vector.broadcast %cst_105 : f32 to vector<16x128xf32>
    %135 = arith.maximumf %133, %134 : vector<16x128xf32>
    %136 = arith.mulf %135, %2 : vector<16x128xf32>
    %137 = arith.truncf %136 : vector<16x128xf32> to vector<16x128xbf16>
    %c0_106 = arith.constant 0 : index
    %c8_107 = arith.constant 8 : index
    %138 = vector.load %arg42[%c0_106, %c8_107] : memref<16x144xbf16, #tpu.memory_space<vmem>>, vector<16x128xbf16>
    tpu.vector_store %arg42[%c0_106, %c8_107], %137 {strides = array<i32>} : memref<16x144xbf16, #tpu.memory_space<vmem>>, vector<16x128xbf16>,
    %c0_108 = arith.constant 0 : index
    %c4_109 = arith.constant 4 : index
    %139 = vector.load %arg42[%c0_108, %c4_109] : memref<16x144xbf16, #tpu.memory_space<vmem>>, vector<16x128xbf16>
    %c0_110 = arith.constant 0 : index
    %c0_111 = arith.constant 0 : index
    %c0_112 = arith.constant 0 : index
    %140 = vector.load %arg9[%c0_110, %c0_111, %c0_112] : memref<9x16x16xbf16, #tpu.memory_space<vmem>>, vector<1x16x16xbf16>
    %141 = vector.shape_cast %140 : vector<1x16x16xbf16> to vector<16x16xbf16>
    %cst_113 = arith.constant dense<0.000000e+00> : vector<16x128xf32>
    %142 = tpu.matmul %141, %139, %cst_113 {dimension_numbers = #tpu.dot_dimension_numbers<[1], [0], [0], [1], [0, 0, 1, 1], [], []>} : vector<16x16xbf16>, vector<16x128xbf16>, vector<16x128xf32> -> vector<16x128xf32>
    %c0_114 = arith.constant 0 : index
    %c5_115 = arith.constant 5 : index
    %143 = vector.load %arg42[%c0_114, %c5_115] : memref<16x144xbf16, #tpu.memory_space<vmem>>, vector<16x128xbf16>
    %c1_116 = arith.constant 1 : index
    %c0_117 = arith.constant 0 : index
    %c0_118 = arith.constant 0 : index
    %144 = vector.load %arg9[%c1_116, %c0_117, %c0_118] : memref<9x16x16xbf16, #tpu.memory_space<vmem>>, vector<1x16x16xbf16>
    %145 = vector.shape_cast %144 : vector<1x16x16xbf16> to vector<16x16xbf16>
    %cst_119 = arith.constant dense<0.000000e+00> : vector<16x128xf32>
    %146 = tpu.matmul %145, %143, %cst_119 {dimension_numbers = #tpu.dot_dimension_numbers<[1], [0], [0], [1], [0, 0, 1, 1], [], []>} : vector<16x16xbf16>, vector<16x128xbf16>, vector<16x128xf32> -> vector<16x128xf32>
    %147 = arith.addf %142, %146 : vector<16x128xf32>
    %c0_120 = arith.constant 0 : index
    %c6_121 = arith.constant 6 : index
    %148 = vector.load %arg42[%c0_120, %c6_121] : memref<16x144xbf16, #tpu.memory_space<vmem>>, vector<16x128xbf16>
    %c2_122 = arith.constant 2 : index
    %c0_123 = arith.constant 0 : index
    %c0_124 = arith.constant 0 : index
    %149 = vector.load %arg9[%c2_122, %c0_123, %c0_124] : memref<9x16x16xbf16, #tpu.memory_space<vmem>>, vector<1x16x16xbf16>
    %150 = vector.shape_cast %149 : vector<1x16x16xbf16> to vector<16x16xbf16>
    %cst_125 = arith.constant dense<0.000000e+00> : vector<16x128xf32>
    %151 = tpu.matmul %150, %148, %cst_125 {dimension_numbers = #tpu.dot_dimension_numbers<[1], [0], [0], [1], [0, 0, 1, 1], [], []>} : vector<16x16xbf16>, vector<16x128xbf16>, vector<16x128xf32> -> vector<16x128xf32>
    %152 = arith.addf %147, %151 : vector<16x128xf32>
    %c0_126 = arith.constant 0 : index
    %c7_127 = arith.constant 7 : index
    %153 = vector.load %arg42[%c0_126, %c7_127] : memref<16x144xbf16, #tpu.memory_space<vmem>>, vector<16x128xbf16>
    %c3_128 = arith.constant 3 : index
    %c0_129 = arith.constant 0 : index
    %c0_130 = arith.constant 0 : index
    %154 = vector.load %arg9[%c3_128, %c0_129, %c0_130] : memref<9x16x16xbf16, #tpu.memory_space<vmem>>, vector<1x16x16xbf16>
    %155 = vector.shape_cast %154 : vector<1x16x16xbf16> to vector<16x16xbf16>
    %cst_131 = arith.constant dense<0.000000e+00> : vector<16x128xf32>
    %156 = tpu.matmul %155, %153, %cst_131 {dimension_numbers = #tpu.dot_dimension_numbers<[1], [0], [0], [1], [0, 0, 1, 1], [], []>} : vector<16x16xbf16>, vector<16x128xbf16>, vector<16x128xf32> -> vector<16x128xf32>
    %157 = arith.addf %152, %156 : vector<16x128xf32>
    %c0_132 = arith.constant 0 : index
    %c8_133 = arith.constant 8 : index
    %158 = vector.load %arg42[%c0_132, %c8_133] : memref<16x144xbf16, #tpu.memory_space<vmem>>, vector<16x128xbf16>
    %c4_134 = arith.constant 4 : index
    %c0_135 = arith.constant 0 : index
    %c0_136 = arith.constant 0 : index
    %159 = vector.load %arg9[%c4_134, %c0_135, %c0_136] : memref<9x16x16xbf16, #tpu.memory_space<vmem>>, vector<1x16x16xbf16>
    %160 = vector.shape_cast %159 : vector<1x16x16xbf16> to vector<16x16xbf16>
    %cst_137 = arith.constant dense<0.000000e+00> : vector<16x128xf32>
    %161 = tpu.matmul %160, %158, %cst_137 {dimension_numbers = #tpu.dot_dimension_numbers<[1], [0], [0], [1], [0, 0, 1, 1], [], []>} : vector<16x16xbf16>, vector<16x128xbf16>, vector<16x128xf32> -> vector<16x128xf32>
    %162 = arith.addf %157, %161 : vector<16x128xf32>
    %c0_138 = arith.constant 0 : index
    %c9_139 = arith.constant 9 : index
    %163 = vector.load %arg42[%c0_138, %c9_139] : memref<16x144xbf16, #tpu.memory_space<vmem>>, vector<16x128xbf16>
    %c5_140 = arith.constant 5 : index
    %c0_141 = arith.constant 0 : index
    %c0_142 = arith.constant 0 : index
    %164 = vector.load %arg9[%c5_140, %c0_141, %c0_142] : memref<9x16x16xbf16, #tpu.memory_space<vmem>>, vector<1x16x16xbf16>
    %165 = vector.shape_cast %164 : vector<1x16x16xbf16> to vector<16x16xbf16>
    %cst_143 = arith.constant dense<0.000000e+00> : vector<16x128xf32>
    %166 = tpu.matmul %165, %163, %cst_143 {dimension_numbers = #tpu.dot_dimension_numbers<[1], [0], [0], [1], [0, 0, 1, 1], [], []>} : vector<16x16xbf16>, vector<16x128xbf16>, vector<16x128xf32> -> vector<16x128xf32>
    %167 = arith.addf %162, %166 : vector<16x128xf32>
    %c0_144 = arith.constant 0 : index
    %c10_145 = arith.constant 10 : index
    %168 = vector.load %arg42[%c0_144, %c10_145] : memref<16x144xbf16, #tpu.memory_space<vmem>>, vector<16x128xbf16>
    %c6_146 = arith.constant 6 : index
    %c0_147 = arith.constant 0 : index
    %c0_148 = arith.constant 0 : index
    %169 = vector.load %arg9[%c6_146, %c0_147, %c0_148] : memref<9x16x16xbf16, #tpu.memory_space<vmem>>, vector<1x16x16xbf16>
    %170 = vector.shape_cast %169 : vector<1x16x16xbf16> to vector<16x16xbf16>
    %cst_149 = arith.constant dense<0.000000e+00> : vector<16x128xf32>
    %171 = tpu.matmul %170, %168, %cst_149 {dimension_numbers = #tpu.dot_dimension_numbers<[1], [0], [0], [1], [0, 0, 1, 1], [], []>} : vector<16x16xbf16>, vector<16x128xbf16>, vector<16x128xf32> -> vector<16x128xf32>
    %172 = arith.addf %167, %171 : vector<16x128xf32>
    %c0_150 = arith.constant 0 : index
    %c11_151 = arith.constant 11 : index
    %173 = vector.load %arg42[%c0_150, %c11_151] : memref<16x144xbf16, #tpu.memory_space<vmem>>, vector<16x128xbf16>
    %c7_152 = arith.constant 7 : index
    %c0_153 = arith.constant 0 : index
    %c0_154 = arith.constant 0 : index
    %174 = vector.load %arg9[%c7_152, %c0_153, %c0_154] : memref<9x16x16xbf16, #tpu.memory_space<vmem>>, vector<1x16x16xbf16>
    %175 = vector.shape_cast %174 : vector<1x16x16xbf16> to vector<16x16xbf16>
    %cst_155 = arith.constant dense<0.000000e+00> : vector<16x128xf32>
    %176 = tpu.matmul %175, %173, %cst_155 {dimension_numbers = #tpu.dot_dimension_numbers<[1], [0], [0], [1], [0, 0, 1, 1], [], []>} : vector<16x16xbf16>, vector<16x128xbf16>, vector<16x128xf32> -> vector<16x128xf32>
    %177 = arith.addf %172, %176 : vector<16x128xf32>
    %c0_156 = arith.constant 0 : index
    %c12_157 = arith.constant 12 : index
    %178 = vector.load %arg42[%c0_156, %c12_157] : memref<16x144xbf16, #tpu.memory_space<vmem>>, vector<16x128xbf16>
    %c8_158 = arith.constant 8 : index
    %c0_159 = arith.constant 0 : index
    %c0_160 = arith.constant 0 : index
    %179 = vector.load %arg9[%c8_158, %c0_159, %c0_160] : memref<9x16x16xbf16, #tpu.memory_space<vmem>>, vector<1x16x16xbf16>
    %180 = vector.shape_cast %179 : vector<1x16x16xbf16> to vector<16x16xbf16>
    %cst_161 = arith.constant dense<0.000000e+00> : vector<16x128xf32>
    %181 = tpu.matmul %180, %178, %cst_161 {dimension_numbers = #tpu.dot_dimension_numbers<[1], [0], [0], [1], [0, 0, 1, 1], [], []>} : vector<16x16xbf16>, vector<16x128xbf16>, vector<16x128xf32> -> vector<16x128xf32>
    %182 = arith.addf %177, %181 : vector<16x128xf32>
    %183 = arith.mulf %182, %2 : vector<16x128xf32>
    %cst_162 = arith.constant dense<0.000000e+00> : vector<16xf32>
    %184 = vector.multi_reduction <add>, %183, %cst_162 [1] : vector<16x128xf32> to vector<16xf32>
    %185 = vector.shape_cast %184 : vector<16xf32> to vector<16x1xf32>
    %cst_163 = arith.constant 3.125000e-02 : f32
    %186 = vector.broadcast %cst_163 : f32 to vector<16x1xf32>
    %187 = arith.mulf %185, %186 : vector<16x1xf32>
    %188 = vector.broadcast %187 : vector<16x1xf32> to vector<16x128xf32>
    %189 = arith.subf %182, %188 : vector<16x128xf32>
    %190 = arith.mulf %189, %2 : vector<16x128xf32>
    %191 = arith.mulf %190, %190 : vector<16x128xf32>
    %cst_164 = arith.constant dense<0.000000e+00> : vector<16xf32>
    %192 = vector.multi_reduction <add>, %191, %cst_164 [1] : vector<16x128xf32> to vector<16xf32>
    %193 = vector.shape_cast %192 : vector<16xf32> to vector<16x1xf32>
    %cst_165 = arith.constant 3.125000e-02 : f32
    %194 = vector.broadcast %cst_165 : f32 to vector<16x1xf32>
    %195 = arith.mulf %193, %194 : vector<16x1xf32>
    %c0_166 = arith.constant 0 : index
    %c0_167 = arith.constant 0 : index
    %196 = vector.load %arg10[%c0_166, %c0_167] : memref<16x1xf32, #tpu.memory_space<vmem>>, vector<16x1xf32>
    %cst_168 = arith.constant 9.99999974E-6 : f32
    %197 = vector.broadcast %cst_168 : f32 to vector<16x1xf32>
    %198 = arith.addf %195, %197 : vector<16x1xf32>
    %199 = math.rsqrt %198 : vector<16x1xf32>
    %200 = arith.mulf %196, %199 : vector<16x1xf32>
    %c0_169 = arith.constant 0 : index
    %c0_170 = arith.constant 0 : index
    %201 = vector.load %arg11[%c0_169, %c0_170] : memref<16x1xf32, #tpu.memory_space<vmem>>, vector<16x1xf32>
    %202 = arith.mulf %187, %200 : vector<16x1xf32>
    %203 = arith.subf %201, %202 : vector<16x1xf32>
    %204 = vector.broadcast %200 : vector<16x1xf32> to vector<16x128xf32>
    %205 = arith.mulf %182, %204 : vector<16x128xf32>
    %206 = vector.broadcast %203 : vector<16x1xf32> to vector<16x128xf32>
    %207 = arith.addf %205, %206 : vector<16x128xf32>
    %cst_171 = arith.constant 0.000000e+00 : f32
    %208 = vector.broadcast %cst_171 : f32 to vector<16x128xf32>
    %209 = arith.maximumf %207, %208 : vector<16x128xf32>
    %210 = arith.mulf %209, %2 : vector<16x128xf32>
    %211 = arith.truncf %210 : vector<16x128xf32> to vector<16x128xbf16>
    %c0_172 = arith.constant 0 : index
    %c8_173 = arith.constant 8 : index
    %212 = vector.load %arg42[%c0_172, %c8_173] : memref<16x144xbf16, #tpu.memory_space<vmem>>, vector<16x128xbf16>
    tpu.vector_store %arg42[%c0_172, %c8_173], %211 {strides = array<i32>} : memref<16x144xbf16, #tpu.memory_space<vmem>>, vector<16x128xbf16>,
    %c0_174 = arith.constant 0 : index
    %c7_175 = arith.constant 7 : index
    %213 = vector.load %arg42[%c0_174, %c7_175] : memref<16x144xbf16, #tpu.memory_space<vmem>>, vector<16x128xbf16>
    %c0_176 = arith.constant 0 : index
    %c0_177 = arith.constant 0 : index
    %c0_178 = arith.constant 0 : index
    %214 = vector.load %arg12[%c0_176, %c0_177, %c0_178] : memref<3x16x16xbf16, #tpu.memory_space<vmem>>, vector<1x16x16xbf16>
    %215 = vector.shape_cast %214 : vector<1x16x16xbf16> to vector<16x16xbf16>
    %cst_179 = arith.constant dense<0.000000e+00> : vector<16x128xf32>
    %216 = tpu.matmul %215, %213, %cst_179 {dimension_numbers = #tpu.dot_dimension_numbers<[1], [0], [0], [1], [0, 0, 1, 1], [], []>} : vector<16x16xbf16>, vector<16x128xbf16>, vector<16x128xf32> -> vector<16x128xf32>
    %c0_180 = arith.constant 0 : index
    %c8_181 = arith.constant 8 : index
    %217 = vector.load %arg42[%c0_180, %c8_181] : memref<16x144xbf16, #tpu.memory_space<vmem>>, vector<16x128xbf16>
    %c1_182 = arith.constant 1 : index
    %c0_183 = arith.constant 0 : index
    %c0_184 = arith.constant 0 : index
    %218 = vector.load %arg12[%c1_182, %c0_183, %c0_184] : memref<3x16x16xbf16, #tpu.memory_space<vmem>>, vector<1x16x16xbf16>
    %219 = vector.shape_cast %218 : vector<1x16x16xbf16> to vector<16x16xbf16>
    %cst_185 = arith.constant dense<0.000000e+00> : vector<16x128xf32>
    %220 = tpu.matmul %219, %217, %cst_185 {dimension_numbers = #tpu.dot_dimension_numbers<[1], [0], [0], [1], [0, 0, 1, 1], [], []>} : vector<16x16xbf16>, vector<16x128xbf16>, vector<16x128xf32> -> vector<16x128xf32>
    %221 = arith.addf %216, %220 : vector<16x128xf32>
    %c0_186 = arith.constant 0 : index
    %c9_187 = arith.constant 9 : index
    %222 = vector.load %arg42[%c0_186, %c9_187] : memref<16x144xbf16, #tpu.memory_space<vmem>>, vector<16x128xbf16>
    %c2_188 = arith.constant 2 : index
    %c0_189 = arith.constant 0 : index
    %c0_190 = arith.constant 0 : index
    %223 = vector.load %arg12[%c2_188, %c0_189, %c0_190] : memref<3x16x16xbf16, #tpu.memory_space<vmem>>, vector<1x16x16xbf16>
    %224 = vector.shape_cast %223 : vector<1x16x16xbf16> to vector<16x16xbf16>
    %cst_191 = arith.constant dense<0.000000e+00> : vector<16x128xf32>
    %225 = tpu.matmul %224, %222, %cst_191 {dimension_numbers = #tpu.dot_dimension_numbers<[1], [0], [0], [1], [0, 0, 1, 1], [], []>} : vector<16x16xbf16>, vector<16x128xbf16>, vector<16x128xf32> -> vector<16x128xf32>
    %226 = arith.addf %221, %225 : vector<16x128xf32>
    %227 = arith.mulf %226, %2 : vector<16x128xf32>
    %cst_192 = arith.constant dense<0.000000e+00> : vector<16xf32>
    %228 = vector.multi_reduction <add>, %227, %cst_192 [1] : vector<16x128xf32> to vector<16xf32>
    %229 = vector.shape_cast %228 : vector<16xf32> to vector<16x1xf32>
    %cst_193 = arith.constant 3.125000e-02 : f32
    %230 = vector.broadcast %cst_193 : f32 to vector<16x1xf32>
    %231 = arith.mulf %229, %230 : vector<16x1xf32>
    %232 = vector.broadcast %231 : vector<16x1xf32> to vector<16x128xf32>
    %233 = arith.subf %226, %232 : vector<16x128xf32>
    %234 = arith.mulf %233, %2 : vector<16x128xf32>
    %235 = arith.mulf %234, %234 : vector<16x128xf32>
    %cst_194 = arith.constant dense<0.000000e+00> : vector<16xf32>
    %236 = vector.multi_reduction <add>, %235, %cst_194 [1] : vector<16x128xf32> to vector<16xf32>
    %237 = vector.shape_cast %236 : vector<16xf32> to vector<16x1xf32>
    %cst_195 = arith.constant 3.125000e-02 : f32
    %238 = vector.broadcast %cst_195 : f32 to vector<16x1xf32>
    %239 = arith.mulf %237, %238 : vector<16x1xf32>
    %c0_196 = arith.constant 0 : index
    %c0_197 = arith.constant 0 : index
    %240 = vector.load %arg13[%c0_196, %c0_197] : memref<16x1xf32, #tpu.memory_space<vmem>>, vector<16x1xf32>
    %cst_198 = arith.constant 9.99999974E-6 : f32
    %241 = vector.broadcast %cst_198 : f32 to vector<16x1xf32>
    %242 = arith.addf %239, %241 : vector<16x1xf32>
    %243 = math.rsqrt %242 : vector<16x1xf32>
    %244 = arith.mulf %240, %243 : vector<16x1xf32>
    %c0_199 = arith.constant 0 : index
    %c0_200 = arith.constant 0 : index
    %245 = vector.load %arg14[%c0_199, %c0_200] : memref<16x1xf32, #tpu.memory_space<vmem>>, vector<16x1xf32>
    %246 = arith.mulf %231, %244 : vector<16x1xf32>
    %247 = arith.subf %245, %246 : vector<16x1xf32>
    %248 = vector.broadcast %244 : vector<16x1xf32> to vector<16x128xf32>
    %249 = arith.mulf %226, %248 : vector<16x128xf32>
    %250 = vector.broadcast %247 : vector<16x1xf32> to vector<16x128xf32>
    %251 = arith.addf %249, %250 : vector<16x128xf32>
    %252 = arith.addf %251, %34 : vector<16x128xf32>
    %cst_201 = arith.constant 0.000000e+00 : f32
    %253 = vector.broadcast %cst_201 : f32 to vector<16x128xf32>
    %254 = arith.maximumf %252, %253 : vector<16x128xf32>
    %255 = arith.mulf %254, %2 : vector<16x128xf32>
    %256 = arith.truncf %255 : vector<16x128xf32> to vector<16x128xbf16>
    %c0_202 = arith.constant 0 : index
    %c8_203 = arith.constant 8 : index
    %257 = vector.load %arg42[%c0_202, %c8_203] : memref<16x144xbf16, #tpu.memory_space<vmem>>, vector<16x128xbf16>
    tpu.vector_store %arg42[%c0_202, %c8_203], %256 {strides = array<i32>} : memref<16x144xbf16, #tpu.memory_space<vmem>>, vector<16x128xbf16>,
    %c0_204 = arith.constant 0 : index
    %c0_205 = arith.constant 0 : index
    %258 = vector.load %arg18[%c0_204, %c0_205] : memref<16x16xbf16, #tpu.memory_space<vmem>>, vector<16x16xbf16>
    %c0_206 = arith.constant 0 : index
    %c8_207 = arith.constant 8 : index
    %259 = vector.load %arg42[%c0_206, %c8_207] : memref<16x144xbf16, #tpu.memory_space<vmem>>, vector<16x128xbf16>
    %cst_208 = arith.constant dense<0.000000e+00> : vector<16x128xf32>
    %260 = tpu.matmul %258, %259, %cst_208 {dimension_numbers = #tpu.dot_dimension_numbers<[1], [0], [0], [1], [0, 0, 1, 1], [], []>} : vector<16x16xbf16>, vector<16x128xbf16>, vector<16x128xf32> -> vector<16x128xf32>
    %261 = arith.mulf %260, %2 : vector<16x128xf32>
    %cst_209 = arith.constant dense<0.000000e+00> : vector<16xf32>
    %262 = vector.multi_reduction <add>, %261, %cst_209 [1] : vector<16x128xf32> to vector<16xf32>
    %263 = vector.shape_cast %262 : vector<16xf32> to vector<16x1xf32>
    %cst_210 = arith.constant 3.125000e-02 : f32
    %264 = vector.broadcast %cst_210 : f32 to vector<16x1xf32>
    %265 = arith.mulf %263, %264 : vector<16x1xf32>
    %266 = vector.broadcast %265 : vector<16x1xf32> to vector<16x128xf32>
    %267 = arith.subf %260, %266 : vector<16x128xf32>
    %268 = arith.mulf %267, %2 : vector<16x128xf32>
    %269 = arith.mulf %268, %268 : vector<16x128xf32>
    %cst_211 = arith.constant dense<0.000000e+00> : vector<16xf32>
    %270 = vector.multi_reduction <add>, %269, %cst_211 [1] : vector<16x128xf32> to vector<16xf32>
    %271 = vector.shape_cast %270 : vector<16xf32> to vector<16x1xf32>
    %cst_212 = arith.constant 3.125000e-02 : f32
    %272 = vector.broadcast %cst_212 : f32 to vector<16x1xf32>
    %273 = arith.mulf %271, %272 : vector<16x1xf32>
    %c0_213 = arith.constant 0 : index
    %c0_214 = arith.constant 0 : index
    %274 = vector.load %arg19[%c0_213, %c0_214] : memref<16x1xf32, #tpu.memory_space<vmem>>, vector<16x1xf32>
    %cst_215 = arith.constant 9.99999974E-6 : f32
    %275 = vector.broadcast %cst_215 : f32 to vector<16x1xf32>
    %276 = arith.addf %273, %275 : vector<16x1xf32>
    %277 = math.rsqrt %276 : vector<16x1xf32>
    %278 = arith.mulf %274, %277 : vector<16x1xf32>
    %c0_216 = arith.constant 0 : index
    %c0_217 = arith.constant 0 : index
    %279 = vector.load %arg20[%c0_216, %c0_217] : memref<16x1xf32, #tpu.memory_space<vmem>>, vector<16x1xf32>
    %280 = arith.mulf %265, %278 : vector<16x1xf32>
    %281 = arith.subf %279, %280 : vector<16x1xf32>
    %282 = vector.broadcast %278 : vector<16x1xf32> to vector<16x128xf32>
    %283 = arith.mulf %260, %282 : vector<16x128xf32>
    %284 = vector.broadcast %281 : vector<16x1xf32> to vector<16x128xf32>
    %285 = arith.addf %283, %284 : vector<16x128xf32>
    %c0_218 = arith.constant 0 : index
    %c1_219 = arith.constant 1 : index
    %286 = vector.load %arg42[%c0_218, %c1_219] : memref<16x144xbf16, #tpu.memory_space<vmem>>, vector<16x128xbf16>
    %c0_220 = arith.constant 0 : index
    %c0_221 = arith.constant 0 : index
    %c0_222 = arith.constant 0 : index
    %287 = vector.load %arg15[%c0_220, %c0_221, %c0_222] : memref<15x16x16xbf16, #tpu.memory_space<vmem>>, vector<1x16x16xbf16>
    %288 = vector.shape_cast %287 : vector<1x16x16xbf16> to vector<16x16xbf16>
    %cst_223 = arith.constant dense<0.000000e+00> : vector<16x128xf32>
    %289 = tpu.matmul %288, %286, %cst_223 {dimension_numbers = #tpu.dot_dimension_numbers<[1], [0], [0], [1], [0, 0, 1, 1], [], []>} : vector<16x16xbf16>, vector<16x128xbf16>, vector<16x128xf32> -> vector<16x128xf32>
    %c0_224 = arith.constant 0 : index
    %c2_225 = arith.constant 2 : index
    %290 = vector.load %arg42[%c0_224, %c2_225] : memref<16x144xbf16, #tpu.memory_space<vmem>>, vector<16x128xbf16>
    %c1_226 = arith.constant 1 : index
    %c0_227 = arith.constant 0 : index
    %c0_228 = arith.constant 0 : index
    %291 = vector.load %arg15[%c1_226, %c0_227, %c0_228] : memref<15x16x16xbf16, #tpu.memory_space<vmem>>, vector<1x16x16xbf16>
    %292 = vector.shape_cast %291 : vector<1x16x16xbf16> to vector<16x16xbf16>
    %cst_229 = arith.constant dense<0.000000e+00> : vector<16x128xf32>
    %293 = tpu.matmul %292, %290, %cst_229 {dimension_numbers = #tpu.dot_dimension_numbers<[1], [0], [0], [1], [0, 0, 1, 1], [], []>} : vector<16x16xbf16>, vector<16x128xbf16>, vector<16x128xf32> -> vector<16x128xf32>
    %294 = arith.addf %289, %293 : vector<16x128xf32>
    %c0_230 = arith.constant 0 : index
    %c3_231 = arith.constant 3 : index
    %295 = vector.load %arg42[%c0_230, %c3_231] : memref<16x144xbf16, #tpu.memory_space<vmem>>, vector<16x128xbf16>
    %c2_232 = arith.constant 2 : index
    %c0_233 = arith.constant 0 : index
    %c0_234 = arith.constant 0 : index
    %296 = vector.load %arg15[%c2_232, %c0_233, %c0_234] : memref<15x16x16xbf16, #tpu.memory_space<vmem>>, vector<1x16x16xbf16>
    %297 = vector.shape_cast %296 : vector<1x16x16xbf16> to vector<16x16xbf16>
    %cst_235 = arith.constant dense<0.000000e+00> : vector<16x128xf32>
    %298 = tpu.matmul %297, %295, %cst_235 {dimension_numbers = #tpu.dot_dimension_numbers<[1], [0], [0], [1], [0, 0, 1, 1], [], []>} : vector<16x16xbf16>, vector<16x128xbf16>, vector<16x128xf32> -> vector<16x128xf32>
    %299 = arith.addf %294, %298 : vector<16x128xf32>
    %c0_236 = arith.constant 0 : index
    %c4_237 = arith.constant 4 : index
    %300 = vector.load %arg42[%c0_236, %c4_237] : memref<16x144xbf16, #tpu.memory_space<vmem>>, vector<16x128xbf16>
    %c3_238 = arith.constant 3 : index
    %c0_239 = arith.constant 0 : index
    %c0_240 = arith.constant 0 : index
    %301 = vector.load %arg15[%c3_238, %c0_239, %c0_240] : memref<15x16x16xbf16, #tpu.memory_space<vmem>>, vector<1x16x16xbf16>
    %302 = vector.shape_cast %301 : vector<1x16x16xbf16> to vector<16x16xbf16>
    %cst_241 = arith.constant dense<0.000000e+00> : vector<16x128xf32>
    %303 = tpu.matmul %302, %300, %cst_241 {dimension_numbers = #tpu.dot_dimension_numbers<[1], [0], [0], [1], [0, 0, 1, 1], [], []>} : vector<16x16xbf16>, vector<16x128xbf16>, vector<16x128xf32> -> vector<16x128xf32>
    %304 = arith.addf %299, %303 : vector<16x128xf32>
    %c0_242 = arith.constant 0 : index
    %c5_243 = arith.constant 5 : index
    %305 = vector.load %arg42[%c0_242, %c5_243] : memref<16x144xbf16, #tpu.memory_space<vmem>>, vector<16x128xbf16>
    %c4_244 = arith.constant 4 : index
    %c0_245 = arith.constant 0 : index
    %c0_246 = arith.constant 0 : index
    %306 = vector.load %arg15[%c4_244, %c0_245, %c0_246] : memref<15x16x16xbf16, #tpu.memory_space<vmem>>, vector<1x16x16xbf16>
    %307 = vector.shape_cast %306 : vector<1x16x16xbf16> to vector<16x16xbf16>
    %cst_247 = arith.constant dense<0.000000e+00> : vector<16x128xf32>
    %308 = tpu.matmul %307, %305, %cst_247 {dimension_numbers = #tpu.dot_dimension_numbers<[1], [0], [0], [1], [0, 0, 1, 1], [], []>} : vector<16x16xbf16>, vector<16x128xbf16>, vector<16x128xf32> -> vector<16x128xf32>
    %309 = arith.addf %304, %308 : vector<16x128xf32>
    %c0_248 = arith.constant 0 : index
    %c6_249 = arith.constant 6 : index
    %310 = vector.load %arg42[%c0_248, %c6_249] : memref<16x144xbf16, #tpu.memory_space<vmem>>, vector<16x128xbf16>
    %c5_250 = arith.constant 5 : index
    %c0_251 = arith.constant 0 : index
    %c0_252 = arith.constant 0 : index
    %311 = vector.load %arg15[%c5_250, %c0_251, %c0_252] : memref<15x16x16xbf16, #tpu.memory_space<vmem>>, vector<1x16x16xbf16>
    %312 = vector.shape_cast %311 : vector<1x16x16xbf16> to vector<16x16xbf16>
    %cst_253 = arith.constant dense<0.000000e+00> : vector<16x128xf32>
    %313 = tpu.matmul %312, %310, %cst_253 {dimension_numbers = #tpu.dot_dimension_numbers<[1], [0], [0], [1], [0, 0, 1, 1], [], []>} : vector<16x16xbf16>, vector<16x128xbf16>, vector<16x128xf32> -> vector<16x128xf32>
    %314 = arith.addf %309, %313 : vector<16x128xf32>
    %c0_254 = arith.constant 0 : index
    %c7_255 = arith.constant 7 : index
    %315 = vector.load %arg42[%c0_254, %c7_255] : memref<16x144xbf16, #tpu.memory_space<vmem>>, vector<16x128xbf16>
    %c6_256 = arith.constant 6 : index
    %c0_257 = arith.constant 0 : index
    %c0_258 = arith.constant 0 : index
    %316 = vector.load %arg15[%c6_256, %c0_257, %c0_258] : memref<15x16x16xbf16, #tpu.memory_space<vmem>>, vector<1x16x16xbf16>
    %317 = vector.shape_cast %316 : vector<1x16x16xbf16> to vector<16x16xbf16>
    %cst_259 = arith.constant dense<0.000000e+00> : vector<16x128xf32>
    %318 = tpu.matmul %317, %315, %cst_259 {dimension_numbers = #tpu.dot_dimension_numbers<[1], [0], [0], [1], [0, 0, 1, 1], [], []>} : vector<16x16xbf16>, vector<16x128xbf16>, vector<16x128xf32> -> vector<16x128xf32>
    %319 = arith.addf %314, %318 : vector<16x128xf32>
    %c0_260 = arith.constant 0 : index
    %c8_261 = arith.constant 8 : index
    %320 = vector.load %arg42[%c0_260, %c8_261] : memref<16x144xbf16, #tpu.memory_space<vmem>>, vector<16x128xbf16>
    %c7_262 = arith.constant 7 : index
    %c0_263 = arith.constant 0 : index
    %c0_264 = arith.constant 0 : index
    %321 = vector.load %arg15[%c7_262, %c0_263, %c0_264] : memref<15x16x16xbf16, #tpu.memory_space<vmem>>, vector<1x16x16xbf16>
    %322 = vector.shape_cast %321 : vector<1x16x16xbf16> to vector<16x16xbf16>
    %cst_265 = arith.constant dense<0.000000e+00> : vector<16x128xf32>
    %323 = tpu.matmul %322, %320, %cst_265 {dimension_numbers = #tpu.dot_dimension_numbers<[1], [0], [0], [1], [0, 0, 1, 1], [], []>} : vector<16x16xbf16>, vector<16x128xbf16>, vector<16x128xf32> -> vector<16x128xf32>
    %324 = arith.addf %319, %323 : vector<16x128xf32>
    %c0_266 = arith.constant 0 : index
    %c9_267 = arith.constant 9 : index
    %325 = vector.load %arg42[%c0_266, %c9_267] : memref<16x144xbf16, #tpu.memory_space<vmem>>, vector<16x128xbf16>
    %c8_268 = arith.constant 8 : index
    %c0_269 = arith.constant 0 : index
    %c0_270 = arith.constant 0 : index
    %326 = vector.load %arg15[%c8_268, %c0_269, %c0_270] : memref<15x16x16xbf16, #tpu.memory_space<vmem>>, vector<1x16x16xbf16>
    %327 = vector.shape_cast %326 : vector<1x16x16xbf16> to vector<16x16xbf16>
    %cst_271 = arith.constant dense<0.000000e+00> : vector<16x128xf32>
    %328 = tpu.matmul %327, %325, %cst_271 {dimension_numbers = #tpu.dot_dimension_numbers<[1], [0], [0], [1], [0, 0, 1, 1], [], []>} : vector<16x16xbf16>, vector<16x128xbf16>, vector<16x128xf32> -> vector<16x128xf32>
    %329 = arith.addf %324, %328 : vector<16x128xf32>
    %c0_272 = arith.constant 0 : index
    %c10_273 = arith.constant 10 : index
    %330 = vector.load %arg42[%c0_272, %c10_273] : memref<16x144xbf16, #tpu.memory_space<vmem>>, vector<16x128xbf16>
    %c9_274 = arith.constant 9 : index
    %c0_275 = arith.constant 0 : index
    %c0_276 = arith.constant 0 : index
    %331 = vector.load %arg15[%c9_274, %c0_275, %c0_276] : memref<15x16x16xbf16, #tpu.memory_space<vmem>>, vector<1x16x16xbf16>
    %332 = vector.shape_cast %331 : vector<1x16x16xbf16> to vector<16x16xbf16>
    %cst_277 = arith.constant dense<0.000000e+00> : vector<16x128xf32>
    %333 = tpu.matmul %332, %330, %cst_277 {dimension_numbers = #tpu.dot_dimension_numbers<[1], [0], [0], [1], [0, 0, 1, 1], [], []>} : vector<16x16xbf16>, vector<16x128xbf16>, vector<16x128xf32> -> vector<16x128xf32>
    %334 = arith.addf %329, %333 : vector<16x128xf32>
    %c0_278 = arith.constant 0 : index
    %c11_279 = arith.constant 11 : index
    %335 = vector.load %arg42[%c0_278, %c11_279] : memref<16x144xbf16, #tpu.memory_space<vmem>>, vector<16x128xbf16>
    %c10_280 = arith.constant 10 : index
    %c0_281 = arith.constant 0 : index
    %c0_282 = arith.constant 0 : index
    %336 = vector.load %arg15[%c10_280, %c0_281, %c0_282] : memref<15x16x16xbf16, #tpu.memory_space<vmem>>, vector<1x16x16xbf16>
    %337 = vector.shape_cast %336 : vector<1x16x16xbf16> to vector<16x16xbf16>
    %cst_283 = arith.constant dense<0.000000e+00> : vector<16x128xf32>
    %338 = tpu.matmul %337, %335, %cst_283 {dimension_numbers = #tpu.dot_dimension_numbers<[1], [0], [0], [1], [0, 0, 1, 1], [], []>} : vector<16x16xbf16>, vector<16x128xbf16>, vector<16x128xf32> -> vector<16x128xf32>
    %339 = arith.addf %334, %338 : vector<16x128xf32>
    %c0_284 = arith.constant 0 : index
    %c12_285 = arith.constant 12 : index
    %340 = vector.load %arg42[%c0_284, %c12_285] : memref<16x144xbf16, #tpu.memory_space<vmem>>, vector<16x128xbf16>
    %c11_286 = arith.constant 11 : index
    %c0_287 = arith.constant 0 : index
    %c0_288 = arith.constant 0 : index
    %341 = vector.load %arg15[%c11_286, %c0_287, %c0_288] : memref<15x16x16xbf16, #tpu.memory_space<vmem>>, vector<1x16x16xbf16>
    %342 = vector.shape_cast %341 : vector<1x16x16xbf16> to vector<16x16xbf16>
    %cst_289 = arith.constant dense<0.000000e+00> : vector<16x128xf32>
    %343 = tpu.matmul %342, %340, %cst_289 {dimension_numbers = #tpu.dot_dimension_numbers<[1], [0], [0], [1], [0, 0, 1, 1], [], []>} : vector<16x16xbf16>, vector<16x128xbf16>, vector<16x128xf32> -> vector<16x128xf32>
    %344 = arith.addf %339, %343 : vector<16x128xf32>
    %c0_290 = arith.constant 0 : index
    %c13_291 = arith.constant 13 : index
    %345 = vector.load %arg42[%c0_290, %c13_291] : memref<16x144xbf16, #tpu.memory_space<vmem>>, vector<16x128xbf16>
    %c12_292 = arith.constant 12 : index
    %c0_293 = arith.constant 0 : index
    %c0_294 = arith.constant 0 : index
    %346 = vector.load %arg15[%c12_292, %c0_293, %c0_294] : memref<15x16x16xbf16, #tpu.memory_space<vmem>>, vector<1x16x16xbf16>
    %347 = vector.shape_cast %346 : vector<1x16x16xbf16> to vector<16x16xbf16>
    %cst_295 = arith.constant dense<0.000000e+00> : vector<16x128xf32>
    %348 = tpu.matmul %347, %345, %cst_295 {dimension_numbers = #tpu.dot_dimension_numbers<[1], [0], [0], [1], [0, 0, 1, 1], [], []>} : vector<16x16xbf16>, vector<16x128xbf16>, vector<16x128xf32> -> vector<16x128xf32>
    %349 = arith.addf %344, %348 : vector<16x128xf32>
    %c0_296 = arith.constant 0 : index
    %c14_297 = arith.constant 14 : index
    %350 = vector.load %arg42[%c0_296, %c14_297] : memref<16x144xbf16, #tpu.memory_space<vmem>>, vector<16x128xbf16>
    %c13_298 = arith.constant 13 : index
    %c0_299 = arith.constant 0 : index
    %c0_300 = arith.constant 0 : index
    %351 = vector.load %arg15[%c13_298, %c0_299, %c0_300] : memref<15x16x16xbf16, #tpu.memory_space<vmem>>, vector<1x16x16xbf16>
    %352 = vector.shape_cast %351 : vector<1x16x16xbf16> to vector<16x16xbf16>
    %cst_301 = arith.constant dense<0.000000e+00> : vector<16x128xf32>
    %353 = tpu.matmul %352, %350, %cst_301 {dimension_numbers = #tpu.dot_dimension_numbers<[1], [0], [0], [1], [0, 0, 1, 1], [], []>} : vector<16x16xbf16>, vector<16x128xbf16>, vector<16x128xf32> -> vector<16x128xf32>
    %354 = arith.addf %349, %353 : vector<16x128xf32>
    %c0_302 = arith.constant 0 : index
    %c15_303 = arith.constant 15 : index
    %355 = vector.load %arg42[%c0_302, %c15_303] : memref<16x144xbf16, #tpu.memory_space<vmem>>, vector<16x128xbf16>
    %c14_304 = arith.constant 14 : index
    %c0_305 = arith.constant 0 : index
    %c0_306 = arith.constant 0 : index
    %356 = vector.load %arg15[%c14_304, %c0_305, %c0_306] : memref<15x16x16xbf16, #tpu.memory_space<vmem>>, vector<1x16x16xbf16>
    %357 = vector.shape_cast %356 : vector<1x16x16xbf16> to vector<16x16xbf16>
    %cst_307 = arith.constant dense<0.000000e+00> : vector<16x128xf32>
    %358 = tpu.matmul %357, %355, %cst_307 {dimension_numbers = #tpu.dot_dimension_numbers<[1], [0], [0], [1], [0, 0, 1, 1], [], []>} : vector<16x16xbf16>, vector<16x128xbf16>, vector<16x128xf32> -> vector<16x128xf32>
    %359 = arith.addf %354, %358 : vector<16x128xf32>
    %360 = arith.mulf %359, %2 : vector<16x128xf32>
    %cst_308 = arith.constant dense<0.000000e+00> : vector<16xf32>
    %361 = vector.multi_reduction <add>, %360, %cst_308 [1] : vector<16x128xf32> to vector<16xf32>
    %362 = vector.shape_cast %361 : vector<16xf32> to vector<16x1xf32>
    %cst_309 = arith.constant 3.125000e-02 : f32
    %363 = vector.broadcast %cst_309 : f32 to vector<16x1xf32>
    %364 = arith.mulf %362, %363 : vector<16x1xf32>
    %365 = vector.broadcast %364 : vector<16x1xf32> to vector<16x128xf32>
    %366 = arith.subf %359, %365 : vector<16x128xf32>
    %367 = arith.mulf %366, %2 : vector<16x128xf32>
    %368 = arith.mulf %367, %367 : vector<16x128xf32>
    %cst_310 = arith.constant dense<0.000000e+00> : vector<16xf32>
    %369 = vector.multi_reduction <add>, %368, %cst_310 [1] : vector<16x128xf32> to vector<16xf32>
    %370 = vector.shape_cast %369 : vector<16xf32> to vector<16x1xf32>
    %cst_311 = arith.constant 3.125000e-02 : f32
    %371 = vector.broadcast %cst_311 : f32 to vector<16x1xf32>
    %372 = arith.mulf %370, %371 : vector<16x1xf32>
    %c0_312 = arith.constant 0 : index
    %c0_313 = arith.constant 0 : index
    %373 = vector.load %arg16[%c0_312, %c0_313] : memref<16x1xf32, #tpu.memory_space<vmem>>, vector<16x1xf32>
    %cst_314 = arith.constant 9.99999974E-6 : f32
    %374 = vector.broadcast %cst_314 : f32 to vector<16x1xf32>
    %375 = arith.addf %372, %374 : vector<16x1xf32>
    %376 = math.rsqrt %375 : vector<16x1xf32>
    %377 = arith.mulf %373, %376 : vector<16x1xf32>
    %c0_315 = arith.constant 0 : index
    %c0_316 = arith.constant 0 : index
    %378 = vector.load %arg17[%c0_315, %c0_316] : memref<16x1xf32, #tpu.memory_space<vmem>>, vector<16x1xf32>
    %379 = arith.mulf %364, %377 : vector<16x1xf32>
    %380 = arith.subf %378, %379 : vector<16x1xf32>
    %381 = vector.broadcast %377 : vector<16x1xf32> to vector<16x128xf32>
    %382 = arith.mulf %359, %381 : vector<16x128xf32>
    %383 = vector.broadcast %380 : vector<16x1xf32> to vector<16x128xf32>
    %384 = arith.addf %382, %383 : vector<16x128xf32>
    %cst_317 = arith.constant 0.000000e+00 : f32
    %385 = vector.broadcast %cst_317 : f32 to vector<16x128xf32>
    %386 = arith.maximumf %384, %385 : vector<16x128xf32>
    %387 = arith.mulf %386, %2 : vector<16x128xf32>
    %388 = arith.truncf %387 : vector<16x128xf32> to vector<16x128xbf16>
    %c0_318 = arith.constant 0 : index
    %c8_319 = arith.constant 8 : index
    %389 = vector.load %arg42[%c0_318, %c8_319] : memref<16x144xbf16, #tpu.memory_space<vmem>>, vector<16x128xbf16>
    tpu.vector_store %arg42[%c0_318, %c8_319], %388 {strides = array<i32>} : memref<16x144xbf16, #tpu.memory_space<vmem>>, vector<16x128xbf16>,
    %c0_320 = arith.constant 0 : index
    %c4_321 = arith.constant 4 : index
    %390 = vector.load %arg42[%c0_320, %c4_321] : memref<16x144xbf16, #tpu.memory_space<vmem>>, vector<16x128xbf16>
    %c0_322 = arith.constant 0 : index
    %c0_323 = arith.constant 0 : index
    %c0_324 = arith.constant 0 : index
    %391 = vector.load %arg21[%c0_322, %c0_323, %c0_324] : memref<9x16x16xbf16, #tpu.memory_space<vmem>>, vector<1x16x16xbf16>
    %392 = vector.shape_cast %391 : vector<1x16x16xbf16> to vector<16x16xbf16>
    %cst_325 = arith.constant dense<0.000000e+00> : vector<16x128xf32>
    %393 = tpu.matmul %392, %390, %cst_325 {dimension_numbers = #tpu.dot_dimension_numbers<[1], [0], [0], [1], [0, 0, 1, 1], [], []>} : vector<16x16xbf16>, vector<16x128xbf16>, vector<16x128xf32> -> vector<16x128xf32>
    %c0_326 = arith.constant 0 : index
    %c5_327 = arith.constant 5 : index
    %394 = vector.load %arg42[%c0_326, %c5_327] : memref<16x144xbf16, #tpu.memory_space<vmem>>, vector<16x128xbf16>
    %c1_328 = arith.constant 1 : index
    %c0_329 = arith.constant 0 : index
    %c0_330 = arith.constant 0 : index
    %395 = vector.load %arg21[%c1_328, %c0_329, %c0_330] : memref<9x16x16xbf16, #tpu.memory_space<vmem>>, vector<1x16x16xbf16>
    %396 = vector.shape_cast %395 : vector<1x16x16xbf16> to vector<16x16xbf16>
    %cst_331 = arith.constant dense<0.000000e+00> : vector<16x128xf32>
    %397 = tpu.matmul %396, %394, %cst_331 {dimension_numbers = #tpu.dot_dimension_numbers<[1], [0], [0], [1], [0, 0, 1, 1], [], []>} : vector<16x16xbf16>, vector<16x128xbf16>, vector<16x128xf32> -> vector<16x128xf32>
    %398 = arith.addf %393, %397 : vector<16x128xf32>
    %c0_332 = arith.constant 0 : index
    %c6_333 = arith.constant 6 : index
    %399 = vector.load %arg42[%c0_332, %c6_333] : memref<16x144xbf16, #tpu.memory_space<vmem>>, vector<16x128xbf16>
    %c2_334 = arith.constant 2 : index
    %c0_335 = arith.constant 0 : index
    %c0_336 = arith.constant 0 : index
    %400 = vector.load %arg21[%c2_334, %c0_335, %c0_336] : memref<9x16x16xbf16, #tpu.memory_space<vmem>>, vector<1x16x16xbf16>
    %401 = vector.shape_cast %400 : vector<1x16x16xbf16> to vector<16x16xbf16>
    %cst_337 = arith.constant dense<0.000000e+00> : vector<16x128xf32>
    %402 = tpu.matmul %401, %399, %cst_337 {dimension_numbers = #tpu.dot_dimension_numbers<[1], [0], [0], [1], [0, 0, 1, 1], [], []>} : vector<16x16xbf16>, vector<16x128xbf16>, vector<16x128xf32> -> vector<16x128xf32>
    %403 = arith.addf %398, %402 : vector<16x128xf32>
    %c0_338 = arith.constant 0 : index
    %c7_339 = arith.constant 7 : index
    %404 = vector.load %arg42[%c0_338, %c7_339] : memref<16x144xbf16, #tpu.memory_space<vmem>>, vector<16x128xbf16>
    %c3_340 = arith.constant 3 : index
    %c0_341 = arith.constant 0 : index
    %c0_342 = arith.constant 0 : index
    %405 = vector.load %arg21[%c3_340, %c0_341, %c0_342] : memref<9x16x16xbf16, #tpu.memory_space<vmem>>, vector<1x16x16xbf16>
    %406 = vector.shape_cast %405 : vector<1x16x16xbf16> to vector<16x16xbf16>
    %cst_343 = arith.constant dense<0.000000e+00> : vector<16x128xf32>
    %407 = tpu.matmul %406, %404, %cst_343 {dimension_numbers = #tpu.dot_dimension_numbers<[1], [0], [0], [1], [0, 0, 1, 1], [], []>} : vector<16x16xbf16>, vector<16x128xbf16>, vector<16x128xf32> -> vector<16x128xf32>
    %408 = arith.addf %403, %407 : vector<16x128xf32>
    %c0_344 = arith.constant 0 : index
    %c8_345 = arith.constant 8 : index
    %409 = vector.load %arg42[%c0_344, %c8_345] : memref<16x144xbf16, #tpu.memory_space<vmem>>, vector<16x128xbf16>
    %c4_346 = arith.constant 4 : index
    %c0_347 = arith.constant 0 : index
    %c0_348 = arith.constant 0 : index
    %410 = vector.load %arg21[%c4_346, %c0_347, %c0_348] : memref<9x16x16xbf16, #tpu.memory_space<vmem>>, vector<1x16x16xbf16>
    %411 = vector.shape_cast %410 : vector<1x16x16xbf16> to vector<16x16xbf16>
    %cst_349 = arith.constant dense<0.000000e+00> : vector<16x128xf32>
    %412 = tpu.matmul %411, %409, %cst_349 {dimension_numbers = #tpu.dot_dimension_numbers<[1], [0], [0], [1], [0, 0, 1, 1], [], []>} : vector<16x16xbf16>, vector<16x128xbf16>, vector<16x128xf32> -> vector<16x128xf32>
    %413 = arith.addf %408, %412 : vector<16x128xf32>
    %c0_350 = arith.constant 0 : index
    %c9_351 = arith.constant 9 : index
    %414 = vector.load %arg42[%c0_350, %c9_351] : memref<16x144xbf16, #tpu.memory_space<vmem>>, vector<16x128xbf16>
    %c5_352 = arith.constant 5 : index
    %c0_353 = arith.constant 0 : index
    %c0_354 = arith.constant 0 : index
    %415 = vector.load %arg21[%c5_352, %c0_353, %c0_354] : memref<9x16x16xbf16, #tpu.memory_space<vmem>>, vector<1x16x16xbf16>
    %416 = vector.shape_cast %415 : vector<1x16x16xbf16> to vector<16x16xbf16>
    %cst_355 = arith.constant dense<0.000000e+00> : vector<16x128xf32>
    %417 = tpu.matmul %416, %414, %cst_355 {dimension_numbers = #tpu.dot_dimension_numbers<[1], [0], [0], [1], [0, 0, 1, 1], [], []>} : vector<16x16xbf16>, vector<16x128xbf16>, vector<16x128xf32> -> vector<16x128xf32>
    %418 = arith.addf %413, %417 : vector<16x128xf32>
    %c0_356 = arith.constant 0 : index
    %c10_357 = arith.constant 10 : index
    %419 = vector.load %arg42[%c0_356, %c10_357] : memref<16x144xbf16, #tpu.memory_space<vmem>>, vector<16x128xbf16>
    %c6_358 = arith.constant 6 : index
    %c0_359 = arith.constant 0 : index
    %c0_360 = arith.constant 0 : index
    %420 = vector.load %arg21[%c6_358, %c0_359, %c0_360] : memref<9x16x16xbf16, #tpu.memory_space<vmem>>, vector<1x16x16xbf16>
    %421 = vector.shape_cast %420 : vector<1x16x16xbf16> to vector<16x16xbf16>
    %cst_361 = arith.constant dense<0.000000e+00> : vector<16x128xf32>
    %422 = tpu.matmul %421, %419, %cst_361 {dimension_numbers = #tpu.dot_dimension_numbers<[1], [0], [0], [1], [0, 0, 1, 1], [], []>} : vector<16x16xbf16>, vector<16x128xbf16>, vector<16x128xf32> -> vector<16x128xf32>
    %423 = arith.addf %418, %422 : vector<16x128xf32>
    %c0_362 = arith.constant 0 : index
    %c11_363 = arith.constant 11 : index
    %424 = vector.load %arg42[%c0_362, %c11_363] : memref<16x144xbf16, #tpu.memory_space<vmem>>, vector<16x128xbf16>
    %c7_364 = arith.constant 7 : index
    %c0_365 = arith.constant 0 : index
    %c0_366 = arith.constant 0 : index
    %425 = vector.load %arg21[%c7_364, %c0_365, %c0_366] : memref<9x16x16xbf16, #tpu.memory_space<vmem>>, vector<1x16x16xbf16>
    %426 = vector.shape_cast %425 : vector<1x16x16xbf16> to vector<16x16xbf16>
    %cst_367 = arith.constant dense<0.000000e+00> : vector<16x128xf32>
    %427 = tpu.matmul %426, %424, %cst_367 {dimension_numbers = #tpu.dot_dimension_numbers<[1], [0], [0], [1], [0, 0, 1, 1], [], []>} : vector<16x16xbf16>, vector<16x128xbf16>, vector<16x128xf32> -> vector<16x128xf32>
    %428 = arith.addf %423, %427 : vector<16x128xf32>
    %c0_368 = arith.constant 0 : index
    %c12_369 = arith.constant 12 : index
    %429 = vector.load %arg42[%c0_368, %c12_369] : memref<16x144xbf16, #tpu.memory_space<vmem>>, vector<16x128xbf16>
    %c8_370 = arith.constant 8 : index
    %c0_371 = arith.constant 0 : index
    %c0_372 = arith.constant 0 : index
    %430 = vector.load %arg21[%c8_370, %c0_371, %c0_372] : memref<9x16x16xbf16, #tpu.memory_space<vmem>>, vector<1x16x16xbf16>
    %431 = vector.shape_cast %430 : vector<1x16x16xbf16> to vector<16x16xbf16>
    %cst_373 = arith.constant dense<0.000000e+00> : vector<16x128xf32>
    %432 = tpu.matmul %431, %429, %cst_373 {dimension_numbers = #tpu.dot_dimension_numbers<[1], [0], [0], [1], [0, 0, 1, 1], [], []>} : vector<16x16xbf16>, vector<16x128xbf16>, vector<16x128xf32> -> vector<16x128xf32>
    %433 = arith.addf %428, %432 : vector<16x128xf32>
    %434 = arith.mulf %433, %2 : vector<16x128xf32>
    %cst_374 = arith.constant dense<0.000000e+00> : vector<16xf32>
    %435 = vector.multi_reduction <add>, %434, %cst_374 [1] : vector<16x128xf32> to vector<16xf32>
    %436 = vector.shape_cast %435 : vector<16xf32> to vector<16x1xf32>
    %cst_375 = arith.constant 3.125000e-02 : f32
    %437 = vector.broadcast %cst_375 : f32 to vector<16x1xf32>
    %438 = arith.mulf %436, %437 : vector<16x1xf32>
    %439 = vector.broadcast %438 : vector<16x1xf32> to vector<16x128xf32>
    %440 = arith.subf %433, %439 : vector<16x128xf32>
    %441 = arith.mulf %440, %2 : vector<16x128xf32>
    %442 = arith.mulf %441, %441 : vector<16x128xf32>
    %cst_376 = arith.constant dense<0.000000e+00> : vector<16xf32>
    %443 = vector.multi_reduction <add>, %442, %cst_376 [1] : vector<16x128xf32> to vector<16xf32>
    %444 = vector.shape_cast %443 : vector<16xf32> to vector<16x1xf32>
    %cst_377 = arith.constant 3.125000e-02 : f32
    %445 = vector.broadcast %cst_377 : f32 to vector<16x1xf32>
    %446 = arith.mulf %444, %445 : vector<16x1xf32>
    %c0_378 = arith.constant 0 : index
    %c0_379 = arith.constant 0 : index
    %447 = vector.load %arg22[%c0_378, %c0_379] : memref<16x1xf32, #tpu.memory_space<vmem>>, vector<16x1xf32>
    %cst_380 = arith.constant 9.99999974E-6 : f32
    %448 = vector.broadcast %cst_380 : f32 to vector<16x1xf32>
    %449 = arith.addf %446, %448 : vector<16x1xf32>
    %450 = math.rsqrt %449 : vector<16x1xf32>
    %451 = arith.mulf %447, %450 : vector<16x1xf32>
    %c0_381 = arith.constant 0 : index
    %c0_382 = arith.constant 0 : index
    %452 = vector.load %arg23[%c0_381, %c0_382] : memref<16x1xf32, #tpu.memory_space<vmem>>, vector<16x1xf32>
    %453 = arith.mulf %438, %451 : vector<16x1xf32>
    %454 = arith.subf %452, %453 : vector<16x1xf32>
    %455 = vector.broadcast %451 : vector<16x1xf32> to vector<16x128xf32>
    %456 = arith.mulf %433, %455 : vector<16x128xf32>
    %457 = vector.broadcast %454 : vector<16x1xf32> to vector<16x128xf32>
    %458 = arith.addf %456, %457 : vector<16x128xf32>
    %cst_383 = arith.constant 0.000000e+00 : f32
    %459 = vector.broadcast %cst_383 : f32 to vector<16x128xf32>
    %460 = arith.maximumf %458, %459 : vector<16x128xf32>
    %461 = arith.mulf %460, %2 : vector<16x128xf32>
    %462 = arith.truncf %461 : vector<16x128xf32> to vector<16x128xbf16>
    %c0_384 = arith.constant 0 : index
    %c8_385 = arith.constant 8 : index
    %463 = vector.load %arg42[%c0_384, %c8_385] : memref<16x144xbf16, #tpu.memory_space<vmem>>, vector<16x128xbf16>
    tpu.vector_store %arg42[%c0_384, %c8_385], %462 {strides = array<i32>} : memref<16x144xbf16, #tpu.memory_space<vmem>>, vector<16x128xbf16>,
    %c0_386 = arith.constant 0 : index
    %c7_387 = arith.constant 7 : index
    %464 = vector.load %arg42[%c0_386, %c7_387] : memref<16x144xbf16, #tpu.memory_space<vmem>>, vector<16x128xbf16>
    %c0_388 = arith.constant 0 : index
    %c0_389 = arith.constant 0 : index
    %c0_390 = arith.constant 0 : index
    %465 = vector.load %arg24[%c0_388, %c0_389, %c0_390] : memref<3x16x16xbf16, #tpu.memory_space<vmem>>, vector<1x16x16xbf16>
    %466 = vector.shape_cast %465 : vector<1x16x16xbf16> to vector<16x16xbf16>
    %cst_391 = arith.constant dense<0.000000e+00> : vector<16x128xf32>
    %467 = tpu.matmul %466, %464, %cst_391 {dimension_numbers = #tpu.dot_dimension_numbers<[1], [0], [0], [1], [0, 0, 1, 1], [], []>} : vector<16x16xbf16>, vector<16x128xbf16>, vector<16x128xf32> -> vector<16x128xf32>
    %c0_392 = arith.constant 0 : index
    %c8_393 = arith.constant 8 : index
    %468 = vector.load %arg42[%c0_392, %c8_393] : memref<16x144xbf16, #tpu.memory_space<vmem>>, vector<16x128xbf16>
    %c1_394 = arith.constant 1 : index
    %c0_395 = arith.constant 0 : index
    %c0_396 = arith.constant 0 : index
    %469 = vector.load %arg24[%c1_394, %c0_395, %c0_396] : memref<3x16x16xbf16, #tpu.memory_space<vmem>>, vector<1x16x16xbf16>
    %470 = vector.shape_cast %469 : vector<1x16x16xbf16> to vector<16x16xbf16>
    %cst_397 = arith.constant dense<0.000000e+00> : vector<16x128xf32>
    %471 = tpu.matmul %470, %468, %cst_397 {dimension_numbers = #tpu.dot_dimension_numbers<[1], [0], [0], [1], [0, 0, 1, 1], [], []>} : vector<16x16xbf16>, vector<16x128xbf16>, vector<16x128xf32> -> vector<16x128xf32>
    %472 = arith.addf %467, %471 : vector<16x128xf32>
    %c0_398 = arith.constant 0 : index
    %c9_399 = arith.constant 9 : index
    %473 = vector.load %arg42[%c0_398, %c9_399] : memref<16x144xbf16, #tpu.memory_space<vmem>>, vector<16x128xbf16>
    %c2_400 = arith.constant 2 : index
    %c0_401 = arith.constant 0 : index
    %c0_402 = arith.constant 0 : index
    %474 = vector.load %arg24[%c2_400, %c0_401, %c0_402] : memref<3x16x16xbf16, #tpu.memory_space<vmem>>, vector<1x16x16xbf16>
    %475 = vector.shape_cast %474 : vector<1x16x16xbf16> to vector<16x16xbf16>
    %cst_403 = arith.constant dense<0.000000e+00> : vector<16x128xf32>
    %476 = tpu.matmul %475, %473, %cst_403 {dimension_numbers = #tpu.dot_dimension_numbers<[1], [0], [0], [1], [0, 0, 1, 1], [], []>} : vector<16x16xbf16>, vector<16x128xbf16>, vector<16x128xf32> -> vector<16x128xf32>
    %477 = arith.addf %472, %476 : vector<16x128xf32>
    %478 = arith.mulf %477, %2 : vector<16x128xf32>
    %cst_404 = arith.constant dense<0.000000e+00> : vector<16xf32>
    %479 = vector.multi_reduction <add>, %478, %cst_404 [1] : vector<16x128xf32> to vector<16xf32>
    %480 = vector.shape_cast %479 : vector<16xf32> to vector<16x1xf32>
    %cst_405 = arith.constant 3.125000e-02 : f32
    %481 = vector.broadcast %cst_405 : f32 to vector<16x1xf32>
    %482 = arith.mulf %480, %481 : vector<16x1xf32>
    %483 = vector.broadcast %482 : vector<16x1xf32> to vector<16x128xf32>
    %484 = arith.subf %477, %483 : vector<16x128xf32>
    %485 = arith.mulf %484, %2 : vector<16x128xf32>
    %486 = arith.mulf %485, %485 : vector<16x128xf32>
    %cst_406 = arith.constant dense<0.000000e+00> : vector<16xf32>
    %487 = vector.multi_reduction <add>, %486, %cst_406 [1] : vector<16x128xf32> to vector<16xf32>
    %488 = vector.shape_cast %487 : vector<16xf32> to vector<16x1xf32>
    %cst_407 = arith.constant 3.125000e-02 : f32
    %489 = vector.broadcast %cst_407 : f32 to vector<16x1xf32>
    %490 = arith.mulf %488, %489 : vector<16x1xf32>
    %c0_408 = arith.constant 0 : index
    %c0_409 = arith.constant 0 : index
    %491 = vector.load %arg25[%c0_408, %c0_409] : memref<16x1xf32, #tpu.memory_space<vmem>>, vector<16x1xf32>
    %cst_410 = arith.constant 9.99999974E-6 : f32
    %492 = vector.broadcast %cst_410 : f32 to vector<16x1xf32>
    %493 = arith.addf %490, %492 : vector<16x1xf32>
    %494 = math.rsqrt %493 : vector<16x1xf32>
    %495 = arith.mulf %491, %494 : vector<16x1xf32>
    %c0_411 = arith.constant 0 : index
    %c0_412 = arith.constant 0 : index
    %496 = vector.load %arg26[%c0_411, %c0_412] : memref<16x1xf32, #tpu.memory_space<vmem>>, vector<16x1xf32>
    %497 = arith.mulf %482, %495 : vector<16x1xf32>
    %498 = arith.subf %496, %497 : vector<16x1xf32>
    %499 = vector.broadcast %495 : vector<16x1xf32> to vector<16x128xf32>
    %500 = arith.mulf %477, %499 : vector<16x128xf32>
    %501 = vector.broadcast %498 : vector<16x1xf32> to vector<16x128xf32>
    %502 = arith.addf %500, %501 : vector<16x128xf32>
    %503 = arith.addf %502, %285 : vector<16x128xf32>
    %cst_413 = arith.constant 0.000000e+00 : f32
    %504 = vector.broadcast %cst_413 : f32 to vector<16x128xf32>
    %505 = arith.maximumf %503, %504 : vector<16x128xf32>
    %506 = arith.mulf %505, %2 : vector<16x128xf32>
    %507 = arith.truncf %506 : vector<16x128xf32> to vector<16x128xbf16>
    %c0_414 = arith.constant 0 : index
    %c8_415 = arith.constant 8 : index
    %508 = vector.load %arg42[%c0_414, %c8_415] : memref<16x144xbf16, #tpu.memory_space<vmem>>, vector<16x128xbf16>
    tpu.vector_store %arg42[%c0_414, %c8_415], %507 {strides = array<i32>} : memref<16x144xbf16, #tpu.memory_space<vmem>>, vector<16x128xbf16>,
    %c0_416 = arith.constant 0 : index
    %c0_417 = arith.constant 0 : index
    %509 = vector.load %arg30[%c0_416, %c0_417] : memref<16x16xbf16, #tpu.memory_space<vmem>>, vector<16x16xbf16>
    %c0_418 = arith.constant 0 : index
    %c8_419 = arith.constant 8 : index
    %510 = vector.load %arg42[%c0_418, %c8_419] : memref<16x144xbf16, #tpu.memory_space<vmem>>, vector<16x128xbf16>
    %cst_420 = arith.constant dense<0.000000e+00> : vector<16x128xf32>
    %511 = tpu.matmul %509, %510, %cst_420 {dimension_numbers = #tpu.dot_dimension_numbers<[1], [0], [0], [1], [0, 0, 1, 1], [], []>} : vector<16x16xbf16>, vector<16x128xbf16>, vector<16x128xf32> -> vector<16x128xf32>
    %512 = arith.mulf %511, %2 : vector<16x128xf32>
    %cst_421 = arith.constant dense<0.000000e+00> : vector<16xf32>
    %513 = vector.multi_reduction <add>, %512, %cst_421 [1] : vector<16x128xf32> to vector<16xf32>
    %514 = vector.shape_cast %513 : vector<16xf32> to vector<16x1xf32>
    %cst_422 = arith.constant 3.125000e-02 : f32
    %515 = vector.broadcast %cst_422 : f32 to vector<16x1xf32>
    %516 = arith.mulf %514, %515 : vector<16x1xf32>
    %517 = vector.broadcast %516 : vector<16x1xf32> to vector<16x128xf32>
    %518 = arith.subf %511, %517 : vector<16x128xf32>
    %519 = arith.mulf %518, %2 : vector<16x128xf32>
    %520 = arith.mulf %519, %519 : vector<16x128xf32>
    %cst_423 = arith.constant dense<0.000000e+00> : vector<16xf32>
    %521 = vector.multi_reduction <add>, %520, %cst_423 [1] : vector<16x128xf32> to vector<16xf32>
    %522 = vector.shape_cast %521 : vector<16xf32> to vector<16x1xf32>
    %cst_424 = arith.constant 3.125000e-02 : f32
    %523 = vector.broadcast %cst_424 : f32 to vector<16x1xf32>
    %524 = arith.mulf %522, %523 : vector<16x1xf32>
    %c0_425 = arith.constant 0 : index
    %c0_426 = arith.constant 0 : index
    %525 = vector.load %arg31[%c0_425, %c0_426] : memref<16x1xf32, #tpu.memory_space<vmem>>, vector<16x1xf32>
    %cst_427 = arith.constant 9.99999974E-6 : f32
    %526 = vector.broadcast %cst_427 : f32 to vector<16x1xf32>
    %527 = arith.addf %524, %526 : vector<16x1xf32>
    %528 = math.rsqrt %527 : vector<16x1xf32>
    %529 = arith.mulf %525, %528 : vector<16x1xf32>
    %c0_428 = arith.constant 0 : index
    %c0_429 = arith.constant 0 : index
    %530 = vector.load %arg32[%c0_428, %c0_429] : memref<16x1xf32, #tpu.memory_space<vmem>>, vector<16x1xf32>
    %531 = arith.mulf %516, %529 : vector<16x1xf32>
    %532 = arith.subf %530, %531 : vector<16x1xf32>
    %533 = vector.broadcast %529 : vector<16x1xf32> to vector<16x128xf32>
    %534 = arith.mulf %511, %533 : vector<16x128xf32>
    %535 = vector.broadcast %532 : vector<16x1xf32> to vector<16x128xf32>
    %536 = arith.addf %534, %535 : vector<16x128xf32>
    %c0_430 = arith.constant 0 : index
    %c1_431 = arith.constant 1 : index
    %537 = vector.load %arg42[%c0_430, %c1_431] : memref<16x144xbf16, #tpu.memory_space<vmem>>, vector<16x128xbf16>
    %c0_432 = arith.constant 0 : index
    %c0_433 = arith.constant 0 : index
    %c0_434 = arith.constant 0 : index
    %538 = vector.load %arg27[%c0_432, %c0_433, %c0_434] : memref<15x16x16xbf16, #tpu.memory_space<vmem>>, vector<1x16x16xbf16>
    %539 = vector.shape_cast %538 : vector<1x16x16xbf16> to vector<16x16xbf16>
    %cst_435 = arith.constant dense<0.000000e+00> : vector<16x128xf32>
    %540 = tpu.matmul %539, %537, %cst_435 {dimension_numbers = #tpu.dot_dimension_numbers<[1], [0], [0], [1], [0, 0, 1, 1], [], []>} : vector<16x16xbf16>, vector<16x128xbf16>, vector<16x128xf32> -> vector<16x128xf32>
    %c0_436 = arith.constant 0 : index
    %c2_437 = arith.constant 2 : index
    %541 = vector.load %arg42[%c0_436, %c2_437] : memref<16x144xbf16, #tpu.memory_space<vmem>>, vector<16x128xbf16>
    %c1_438 = arith.constant 1 : index
    %c0_439 = arith.constant 0 : index
    %c0_440 = arith.constant 0 : index
    %542 = vector.load %arg27[%c1_438, %c0_439, %c0_440] : memref<15x16x16xbf16, #tpu.memory_space<vmem>>, vector<1x16x16xbf16>
    %543 = vector.shape_cast %542 : vector<1x16x16xbf16> to vector<16x16xbf16>
    %cst_441 = arith.constant dense<0.000000e+00> : vector<16x128xf32>
    %544 = tpu.matmul %543, %541, %cst_441 {dimension_numbers = #tpu.dot_dimension_numbers<[1], [0], [0], [1], [0, 0, 1, 1], [], []>} : vector<16x16xbf16>, vector<16x128xbf16>, vector<16x128xf32> -> vector<16x128xf32>
    %545 = arith.addf %540, %544 : vector<16x128xf32>
    %c0_442 = arith.constant 0 : index
    %c3_443 = arith.constant 3 : index
    %546 = vector.load %arg42[%c0_442, %c3_443] : memref<16x144xbf16, #tpu.memory_space<vmem>>, vector<16x128xbf16>
    %c2_444 = arith.constant 2 : index
    %c0_445 = arith.constant 0 : index
    %c0_446 = arith.constant 0 : index
    %547 = vector.load %arg27[%c2_444, %c0_445, %c0_446] : memref<15x16x16xbf16, #tpu.memory_space<vmem>>, vector<1x16x16xbf16>
    %548 = vector.shape_cast %547 : vector<1x16x16xbf16> to vector<16x16xbf16>
    %cst_447 = arith.constant dense<0.000000e+00> : vector<16x128xf32>
    %549 = tpu.matmul %548, %546, %cst_447 {dimension_numbers = #tpu.dot_dimension_numbers<[1], [0], [0], [1], [0, 0, 1, 1], [], []>} : vector<16x16xbf16>, vector<16x128xbf16>, vector<16x128xf32> -> vector<16x128xf32>
    %550 = arith.addf %545, %549 : vector<16x128xf32>
    %c0_448 = arith.constant 0 : index
    %c4_449 = arith.constant 4 : index
    %551 = vector.load %arg42[%c0_448, %c4_449] : memref<16x144xbf16, #tpu.memory_space<vmem>>, vector<16x128xbf16>
    %c3_450 = arith.constant 3 : index
    %c0_451 = arith.constant 0 : index
    %c0_452 = arith.constant 0 : index
    %552 = vector.load %arg27[%c3_450, %c0_451, %c0_452] : memref<15x16x16xbf16, #tpu.memory_space<vmem>>, vector<1x16x16xbf16>
    %553 = vector.shape_cast %552 : vector<1x16x16xbf16> to vector<16x16xbf16>
    %cst_453 = arith.constant dense<0.000000e+00> : vector<16x128xf32>
    %554 = tpu.matmul %553, %551, %cst_453 {dimension_numbers = #tpu.dot_dimension_numbers<[1], [0], [0], [1], [0, 0, 1, 1], [], []>} : vector<16x16xbf16>, vector<16x128xbf16>, vector<16x128xf32> -> vector<16x128xf32>
    %555 = arith.addf %550, %554 : vector<16x128xf32>
    %c0_454 = arith.constant 0 : index
    %c5_455 = arith.constant 5 : index
    %556 = vector.load %arg42[%c0_454, %c5_455] : memref<16x144xbf16, #tpu.memory_space<vmem>>, vector<16x128xbf16>
    %c4_456 = arith.constant 4 : index
    %c0_457 = arith.constant 0 : index
    %c0_458 = arith.constant 0 : index
    %557 = vector.load %arg27[%c4_456, %c0_457, %c0_458] : memref<15x16x16xbf16, #tpu.memory_space<vmem>>, vector<1x16x16xbf16>
    %558 = vector.shape_cast %557 : vector<1x16x16xbf16> to vector<16x16xbf16>
    %cst_459 = arith.constant dense<0.000000e+00> : vector<16x128xf32>
    %559 = tpu.matmul %558, %556, %cst_459 {dimension_numbers = #tpu.dot_dimension_numbers<[1], [0], [0], [1], [0, 0, 1, 1], [], []>} : vector<16x16xbf16>, vector<16x128xbf16>, vector<16x128xf32> -> vector<16x128xf32>
    %560 = arith.addf %555, %559 : vector<16x128xf32>
    %c0_460 = arith.constant 0 : index
    %c6_461 = arith.constant 6 : index
    %561 = vector.load %arg42[%c0_460, %c6_461] : memref<16x144xbf16, #tpu.memory_space<vmem>>, vector<16x128xbf16>
    %c5_462 = arith.constant 5 : index
    %c0_463 = arith.constant 0 : index
    %c0_464 = arith.constant 0 : index
    %562 = vector.load %arg27[%c5_462, %c0_463, %c0_464] : memref<15x16x16xbf16, #tpu.memory_space<vmem>>, vector<1x16x16xbf16>
    %563 = vector.shape_cast %562 : vector<1x16x16xbf16> to vector<16x16xbf16>
    %cst_465 = arith.constant dense<0.000000e+00> : vector<16x128xf32>
    %564 = tpu.matmul %563, %561, %cst_465 {dimension_numbers = #tpu.dot_dimension_numbers<[1], [0], [0], [1], [0, 0, 1, 1], [], []>} : vector<16x16xbf16>, vector<16x128xbf16>, vector<16x128xf32> -> vector<16x128xf32>
    %565 = arith.addf %560, %564 : vector<16x128xf32>
    %c0_466 = arith.constant 0 : index
    %c7_467 = arith.constant 7 : index
    %566 = vector.load %arg42[%c0_466, %c7_467] : memref<16x144xbf16, #tpu.memory_space<vmem>>, vector<16x128xbf16>
    %c6_468 = arith.constant 6 : index
    %c0_469 = arith.constant 0 : index
    %c0_470 = arith.constant 0 : index
    %567 = vector.load %arg27[%c6_468, %c0_469, %c0_470] : memref<15x16x16xbf16, #tpu.memory_space<vmem>>, vector<1x16x16xbf16>
    %568 = vector.shape_cast %567 : vector<1x16x16xbf16> to vector<16x16xbf16>
    %cst_471 = arith.constant dense<0.000000e+00> : vector<16x128xf32>
    %569 = tpu.matmul %568, %566, %cst_471 {dimension_numbers = #tpu.dot_dimension_numbers<[1], [0], [0], [1], [0, 0, 1, 1], [], []>} : vector<16x16xbf16>, vector<16x128xbf16>, vector<16x128xf32> -> vector<16x128xf32>
    %570 = arith.addf %565, %569 : vector<16x128xf32>
    %c0_472 = arith.constant 0 : index
    %c8_473 = arith.constant 8 : index
    %571 = vector.load %arg42[%c0_472, %c8_473] : memref<16x144xbf16, #tpu.memory_space<vmem>>, vector<16x128xbf16>
    %c7_474 = arith.constant 7 : index
    %c0_475 = arith.constant 0 : index
    %c0_476 = arith.constant 0 : index
    %572 = vector.load %arg27[%c7_474, %c0_475, %c0_476] : memref<15x16x16xbf16, #tpu.memory_space<vmem>>, vector<1x16x16xbf16>
    %573 = vector.shape_cast %572 : vector<1x16x16xbf16> to vector<16x16xbf16>
    %cst_477 = arith.constant dense<0.000000e+00> : vector<16x128xf32>
    %574 = tpu.matmul %573, %571, %cst_477 {dimension_numbers = #tpu.dot_dimension_numbers<[1], [0], [0], [1], [0, 0, 1, 1], [], []>} : vector<16x16xbf16>, vector<16x128xbf16>, vector<16x128xf32> -> vector<16x128xf32>
    %575 = arith.addf %570, %574 : vector<16x128xf32>
    %c0_478 = arith.constant 0 : index
    %c9_479 = arith.constant 9 : index
    %576 = vector.load %arg42[%c0_478, %c9_479] : memref<16x144xbf16, #tpu.memory_space<vmem>>, vector<16x128xbf16>
    %c8_480 = arith.constant 8 : index
    %c0_481 = arith.constant 0 : index
    %c0_482 = arith.constant 0 : index
    %577 = vector.load %arg27[%c8_480, %c0_481, %c0_482] : memref<15x16x16xbf16, #tpu.memory_space<vmem>>, vector<1x16x16xbf16>
    %578 = vector.shape_cast %577 : vector<1x16x16xbf16> to vector<16x16xbf16>
    %cst_483 = arith.constant dense<0.000000e+00> : vector<16x128xf32>
    %579 = tpu.matmul %578, %576, %cst_483 {dimension_numbers = #tpu.dot_dimension_numbers<[1], [0], [0], [1], [0, 0, 1, 1], [], []>} : vector<16x16xbf16>, vector<16x128xbf16>, vector<16x128xf32> -> vector<16x128xf32>
    %580 = arith.addf %575, %579 : vector<16x128xf32>
    %c0_484 = arith.constant 0 : index
    %c10_485 = arith.constant 10 : index
    %581 = vector.load %arg42[%c0_484, %c10_485] : memref<16x144xbf16, #tpu.memory_space<vmem>>, vector<16x128xbf16>
    %c9_486 = arith.constant 9 : index
    %c0_487 = arith.constant 0 : index
    %c0_488 = arith.constant 0 : index
    %582 = vector.load %arg27[%c9_486, %c0_487, %c0_488] : memref<15x16x16xbf16, #tpu.memory_space<vmem>>, vector<1x16x16xbf16>
    %583 = vector.shape_cast %582 : vector<1x16x16xbf16> to vector<16x16xbf16>
    %cst_489 = arith.constant dense<0.000000e+00> : vector<16x128xf32>
    %584 = tpu.matmul %583, %581, %cst_489 {dimension_numbers = #tpu.dot_dimension_numbers<[1], [0], [0], [1], [0, 0, 1, 1], [], []>} : vector<16x16xbf16>, vector<16x128xbf16>, vector<16x128xf32> -> vector<16x128xf32>
    %585 = arith.addf %580, %584 : vector<16x128xf32>
    %c0_490 = arith.constant 0 : index
    %c11_491 = arith.constant 11 : index
    %586 = vector.load %arg42[%c0_490, %c11_491] : memref<16x144xbf16, #tpu.memory_space<vmem>>, vector<16x128xbf16>
    %c10_492 = arith.constant 10 : index
    %c0_493 = arith.constant 0 : index
    %c0_494 = arith.constant 0 : index
    %587 = vector.load %arg27[%c10_492, %c0_493, %c0_494] : memref<15x16x16xbf16, #tpu.memory_space<vmem>>, vector<1x16x16xbf16>
    %588 = vector.shape_cast %587 : vector<1x16x16xbf16> to vector<16x16xbf16>
    %cst_495 = arith.constant dense<0.000000e+00> : vector<16x128xf32>
    %589 = tpu.matmul %588, %586, %cst_495 {dimension_numbers = #tpu.dot_dimension_numbers<[1], [0], [0], [1], [0, 0, 1, 1], [], []>} : vector<16x16xbf16>, vector<16x128xbf16>, vector<16x128xf32> -> vector<16x128xf32>
    %590 = arith.addf %585, %589 : vector<16x128xf32>
    %c0_496 = arith.constant 0 : index
    %c12_497 = arith.constant 12 : index
    %591 = vector.load %arg42[%c0_496, %c12_497] : memref<16x144xbf16, #tpu.memory_space<vmem>>, vector<16x128xbf16>
    %c11_498 = arith.constant 11 : index
    %c0_499 = arith.constant 0 : index
    %c0_500 = arith.constant 0 : index
    %592 = vector.load %arg27[%c11_498, %c0_499, %c0_500] : memref<15x16x16xbf16, #tpu.memory_space<vmem>>, vector<1x16x16xbf16>
    %593 = vector.shape_cast %592 : vector<1x16x16xbf16> to vector<16x16xbf16>
    %cst_501 = arith.constant dense<0.000000e+00> : vector<16x128xf32>
    %594 = tpu.matmul %593, %591, %cst_501 {dimension_numbers = #tpu.dot_dimension_numbers<[1], [0], [0], [1], [0, 0, 1, 1], [], []>} : vector<16x16xbf16>, vector<16x128xbf16>, vector<16x128xf32> -> vector<16x128xf32>
    %595 = arith.addf %590, %594 : vector<16x128xf32>
    %c0_502 = arith.constant 0 : index
    %c13_503 = arith.constant 13 : index
    %596 = vector.load %arg42[%c0_502, %c13_503] : memref<16x144xbf16, #tpu.memory_space<vmem>>, vector<16x128xbf16>
    %c12_504 = arith.constant 12 : index
    %c0_505 = arith.constant 0 : index
    %c0_506 = arith.constant 0 : index
    %597 = vector.load %arg27[%c12_504, %c0_505, %c0_506] : memref<15x16x16xbf16, #tpu.memory_space<vmem>>, vector<1x16x16xbf16>
    %598 = vector.shape_cast %597 : vector<1x16x16xbf16> to vector<16x16xbf16>
    %cst_507 = arith.constant dense<0.000000e+00> : vector<16x128xf32>
    %599 = tpu.matmul %598, %596, %cst_507 {dimension_numbers = #tpu.dot_dimension_numbers<[1], [0], [0], [1], [0, 0, 1, 1], [], []>} : vector<16x16xbf16>, vector<16x128xbf16>, vector<16x128xf32> -> vector<16x128xf32>
    %600 = arith.addf %595, %599 : vector<16x128xf32>
    %c0_508 = arith.constant 0 : index
    %c14_509 = arith.constant 14 : index
    %601 = vector.load %arg42[%c0_508, %c14_509] : memref<16x144xbf16, #tpu.memory_space<vmem>>, vector<16x128xbf16>
    %c13_510 = arith.constant 13 : index
    %c0_511 = arith.constant 0 : index
    %c0_512 = arith.constant 0 : index
    %602 = vector.load %arg27[%c13_510, %c0_511, %c0_512] : memref<15x16x16xbf16, #tpu.memory_space<vmem>>, vector<1x16x16xbf16>
    %603 = vector.shape_cast %602 : vector<1x16x16xbf16> to vector<16x16xbf16>
    %cst_513 = arith.constant dense<0.000000e+00> : vector<16x128xf32>
    %604 = tpu.matmul %603, %601, %cst_513 {dimension_numbers = #tpu.dot_dimension_numbers<[1], [0], [0], [1], [0, 0, 1, 1], [], []>} : vector<16x16xbf16>, vector<16x128xbf16>, vector<16x128xf32> -> vector<16x128xf32>
    %605 = arith.addf %600, %604 : vector<16x128xf32>
    %c0_514 = arith.constant 0 : index
    %c15_515 = arith.constant 15 : index
    %606 = vector.load %arg42[%c0_514, %c15_515] : memref<16x144xbf16, #tpu.memory_space<vmem>>, vector<16x128xbf16>
    %c14_516 = arith.constant 14 : index
    %c0_517 = arith.constant 0 : index
    %c0_518 = arith.constant 0 : index
    %607 = vector.load %arg27[%c14_516, %c0_517, %c0_518] : memref<15x16x16xbf16, #tpu.memory_space<vmem>>, vector<1x16x16xbf16>
    %608 = vector.shape_cast %607 : vector<1x16x16xbf16> to vector<16x16xbf16>
    %cst_519 = arith.constant dense<0.000000e+00> : vector<16x128xf32>
    %609 = tpu.matmul %608, %606, %cst_519 {dimension_numbers = #tpu.dot_dimension_numbers<[1], [0], [0], [1], [0, 0, 1, 1], [], []>} : vector<16x16xbf16>, vector<16x128xbf16>, vector<16x128xf32> -> vector<16x128xf32>
    %610 = arith.addf %605, %609 : vector<16x128xf32>
    %611 = arith.mulf %610, %2 : vector<16x128xf32>
    %cst_520 = arith.constant dense<0.000000e+00> : vector<16xf32>
    %612 = vector.multi_reduction <add>, %611, %cst_520 [1] : vector<16x128xf32> to vector<16xf32>
    %613 = vector.shape_cast %612 : vector<16xf32> to vector<16x1xf32>
    %cst_521 = arith.constant 3.125000e-02 : f32
    %614 = vector.broadcast %cst_521 : f32 to vector<16x1xf32>
    %615 = arith.mulf %613, %614 : vector<16x1xf32>
    %616 = vector.broadcast %615 : vector<16x1xf32> to vector<16x128xf32>
    %617 = arith.subf %610, %616 : vector<16x128xf32>
    %618 = arith.mulf %617, %2 : vector<16x128xf32>
    %619 = arith.mulf %618, %618 : vector<16x128xf32>
    %cst_522 = arith.constant dense<0.000000e+00> : vector<16xf32>
    %620 = vector.multi_reduction <add>, %619, %cst_522 [1] : vector<16x128xf32> to vector<16xf32>
    %621 = vector.shape_cast %620 : vector<16xf32> to vector<16x1xf32>
    %cst_523 = arith.constant 3.125000e-02 : f32
    %622 = vector.broadcast %cst_523 : f32 to vector<16x1xf32>
    %623 = arith.mulf %621, %622 : vector<16x1xf32>
    %c0_524 = arith.constant 0 : index
    %c0_525 = arith.constant 0 : index
    %624 = vector.load %arg28[%c0_524, %c0_525] : memref<16x1xf32, #tpu.memory_space<vmem>>, vector<16x1xf32>
    %cst_526 = arith.constant 9.99999974E-6 : f32
    %625 = vector.broadcast %cst_526 : f32 to vector<16x1xf32>
    %626 = arith.addf %623, %625 : vector<16x1xf32>
    %627 = math.rsqrt %626 : vector<16x1xf32>
    %628 = arith.mulf %624, %627 : vector<16x1xf32>
    %c0_527 = arith.constant 0 : index
    %c0_528 = arith.constant 0 : index
    %629 = vector.load %arg29[%c0_527, %c0_528] : memref<16x1xf32, #tpu.memory_space<vmem>>, vector<16x1xf32>
    %630 = arith.mulf %615, %628 : vector<16x1xf32>
    %631 = arith.subf %629, %630 : vector<16x1xf32>
    %632 = vector.broadcast %628 : vector<16x1xf32> to vector<16x128xf32>
    %633 = arith.mulf %610, %632 : vector<16x128xf32>
    %634 = vector.broadcast %631 : vector<16x1xf32> to vector<16x128xf32>
    %635 = arith.addf %633, %634 : vector<16x128xf32>
    %cst_529 = arith.constant 0.000000e+00 : f32
    %636 = vector.broadcast %cst_529 : f32 to vector<16x128xf32>
    %637 = arith.maximumf %635, %636 : vector<16x128xf32>
    %638 = arith.mulf %637, %2 : vector<16x128xf32>
    %639 = arith.truncf %638 : vector<16x128xf32> to vector<16x128xbf16>
    %c0_530 = arith.constant 0 : index
    %c8_531 = arith.constant 8 : index
    %640 = vector.load %arg42[%c0_530, %c8_531] : memref<16x144xbf16, #tpu.memory_space<vmem>>, vector<16x128xbf16>
    tpu.vector_store %arg42[%c0_530, %c8_531], %639 {strides = array<i32>} : memref<16x144xbf16, #tpu.memory_space<vmem>>, vector<16x128xbf16>,
    %c0_532 = arith.constant 0 : index
    %c4_533 = arith.constant 4 : index
    %641 = vector.load %arg42[%c0_532, %c4_533] : memref<16x144xbf16, #tpu.memory_space<vmem>>, vector<16x128xbf16>
    %c0_534 = arith.constant 0 : index
    %c0_535 = arith.constant 0 : index
    %c0_536 = arith.constant 0 : index
    %642 = vector.load %arg33[%c0_534, %c0_535, %c0_536] : memref<9x16x16xbf16, #tpu.memory_space<vmem>>, vector<1x16x16xbf16>
    %643 = vector.shape_cast %642 : vector<1x16x16xbf16> to vector<16x16xbf16>
    %cst_537 = arith.constant dense<0.000000e+00> : vector<16x128xf32>
    %644 = tpu.matmul %643, %641, %cst_537 {dimension_numbers = #tpu.dot_dimension_numbers<[1], [0], [0], [1], [0, 0, 1, 1], [], []>} : vector<16x16xbf16>, vector<16x128xbf16>, vector<16x128xf32> -> vector<16x128xf32>
    %c0_538 = arith.constant 0 : index
    %c5_539 = arith.constant 5 : index
    %645 = vector.load %arg42[%c0_538, %c5_539] : memref<16x144xbf16, #tpu.memory_space<vmem>>, vector<16x128xbf16>
    %c1_540 = arith.constant 1 : index
    %c0_541 = arith.constant 0 : index
    %c0_542 = arith.constant 0 : index
    %646 = vector.load %arg33[%c1_540, %c0_541, %c0_542] : memref<9x16x16xbf16, #tpu.memory_space<vmem>>, vector<1x16x16xbf16>
    %647 = vector.shape_cast %646 : vector<1x16x16xbf16> to vector<16x16xbf16>
    %cst_543 = arith.constant dense<0.000000e+00> : vector<16x128xf32>
    %648 = tpu.matmul %647, %645, %cst_543 {dimension_numbers = #tpu.dot_dimension_numbers<[1], [0], [0], [1], [0, 0, 1, 1], [], []>} : vector<16x16xbf16>, vector<16x128xbf16>, vector<16x128xf32> -> vector<16x128xf32>
    %649 = arith.addf %644, %648 : vector<16x128xf32>
    %c0_544 = arith.constant 0 : index
    %c6_545 = arith.constant 6 : index
    %650 = vector.load %arg42[%c0_544, %c6_545] : memref<16x144xbf16, #tpu.memory_space<vmem>>, vector<16x128xbf16>
    %c2_546 = arith.constant 2 : index
    %c0_547 = arith.constant 0 : index
    %c0_548 = arith.constant 0 : index
    %651 = vector.load %arg33[%c2_546, %c0_547, %c0_548] : memref<9x16x16xbf16, #tpu.memory_space<vmem>>, vector<1x16x16xbf16>
    %652 = vector.shape_cast %651 : vector<1x16x16xbf16> to vector<16x16xbf16>
    %cst_549 = arith.constant dense<0.000000e+00> : vector<16x128xf32>
    %653 = tpu.matmul %652, %650, %cst_549 {dimension_numbers = #tpu.dot_dimension_numbers<[1], [0], [0], [1], [0, 0, 1, 1], [], []>} : vector<16x16xbf16>, vector<16x128xbf16>, vector<16x128xf32> -> vector<16x128xf32>
    %654 = arith.addf %649, %653 : vector<16x128xf32>
    %c0_550 = arith.constant 0 : index
    %c7_551 = arith.constant 7 : index
    %655 = vector.load %arg42[%c0_550, %c7_551] : memref<16x144xbf16, #tpu.memory_space<vmem>>, vector<16x128xbf16>
    %c3_552 = arith.constant 3 : index
    %c0_553 = arith.constant 0 : index
    %c0_554 = arith.constant 0 : index
    %656 = vector.load %arg33[%c3_552, %c0_553, %c0_554] : memref<9x16x16xbf16, #tpu.memory_space<vmem>>, vector<1x16x16xbf16>
    %657 = vector.shape_cast %656 : vector<1x16x16xbf16> to vector<16x16xbf16>
    %cst_555 = arith.constant dense<0.000000e+00> : vector<16x128xf32>
    %658 = tpu.matmul %657, %655, %cst_555 {dimension_numbers = #tpu.dot_dimension_numbers<[1], [0], [0], [1], [0, 0, 1, 1], [], []>} : vector<16x16xbf16>, vector<16x128xbf16>, vector<16x128xf32> -> vector<16x128xf32>
    %659 = arith.addf %654, %658 : vector<16x128xf32>
    %c0_556 = arith.constant 0 : index
    %c8_557 = arith.constant 8 : index
    %660 = vector.load %arg42[%c0_556, %c8_557] : memref<16x144xbf16, #tpu.memory_space<vmem>>, vector<16x128xbf16>
    %c4_558 = arith.constant 4 : index
    %c0_559 = arith.constant 0 : index
    %c0_560 = arith.constant 0 : index
    %661 = vector.load %arg33[%c4_558, %c0_559, %c0_560] : memref<9x16x16xbf16, #tpu.memory_space<vmem>>, vector<1x16x16xbf16>
    %662 = vector.shape_cast %661 : vector<1x16x16xbf16> to vector<16x16xbf16>
    %cst_561 = arith.constant dense<0.000000e+00> : vector<16x128xf32>
    %663 = tpu.matmul %662, %660, %cst_561 {dimension_numbers = #tpu.dot_dimension_numbers<[1], [0], [0], [1], [0, 0, 1, 1], [], []>} : vector<16x16xbf16>, vector<16x128xbf16>, vector<16x128xf32> -> vector<16x128xf32>
    %664 = arith.addf %659, %663 : vector<16x128xf32>
    %c0_562 = arith.constant 0 : index
    %c9_563 = arith.constant 9 : index
    %665 = vector.load %arg42[%c0_562, %c9_563] : memref<16x144xbf16, #tpu.memory_space<vmem>>, vector<16x128xbf16>
    %c5_564 = arith.constant 5 : index
    %c0_565 = arith.constant 0 : index
    %c0_566 = arith.constant 0 : index
    %666 = vector.load %arg33[%c5_564, %c0_565, %c0_566] : memref<9x16x16xbf16, #tpu.memory_space<vmem>>, vector<1x16x16xbf16>
    %667 = vector.shape_cast %666 : vector<1x16x16xbf16> to vector<16x16xbf16>
    %cst_567 = arith.constant dense<0.000000e+00> : vector<16x128xf32>
    %668 = tpu.matmul %667, %665, %cst_567 {dimension_numbers = #tpu.dot_dimension_numbers<[1], [0], [0], [1], [0, 0, 1, 1], [], []>} : vector<16x16xbf16>, vector<16x128xbf16>, vector<16x128xf32> -> vector<16x128xf32>
    %669 = arith.addf %664, %668 : vector<16x128xf32>
    %c0_568 = arith.constant 0 : index
    %c10_569 = arith.constant 10 : index
    %670 = vector.load %arg42[%c0_568, %c10_569] : memref<16x144xbf16, #tpu.memory_space<vmem>>, vector<16x128xbf16>
    %c6_570 = arith.constant 6 : index
    %c0_571 = arith.constant 0 : index
    %c0_572 = arith.constant 0 : index
    %671 = vector.load %arg33[%c6_570, %c0_571, %c0_572] : memref<9x16x16xbf16, #tpu.memory_space<vmem>>, vector<1x16x16xbf16>
    %672 = vector.shape_cast %671 : vector<1x16x16xbf16> to vector<16x16xbf16>
    %cst_573 = arith.constant dense<0.000000e+00> : vector<16x128xf32>
    %673 = tpu.matmul %672, %670, %cst_573 {dimension_numbers = #tpu.dot_dimension_numbers<[1], [0], [0], [1], [0, 0, 1, 1], [], []>} : vector<16x16xbf16>, vector<16x128xbf16>, vector<16x128xf32> -> vector<16x128xf32>
    %674 = arith.addf %669, %673 : vector<16x128xf32>
    %c0_574 = arith.constant 0 : index
    %c11_575 = arith.constant 11 : index
    %675 = vector.load %arg42[%c0_574, %c11_575] : memref<16x144xbf16, #tpu.memory_space<vmem>>, vector<16x128xbf16>
    %c7_576 = arith.constant 7 : index
    %c0_577 = arith.constant 0 : index
    %c0_578 = arith.constant 0 : index
    %676 = vector.load %arg33[%c7_576, %c0_577, %c0_578] : memref<9x16x16xbf16, #tpu.memory_space<vmem>>, vector<1x16x16xbf16>
    %677 = vector.shape_cast %676 : vector<1x16x16xbf16> to vector<16x16xbf16>
    %cst_579 = arith.constant dense<0.000000e+00> : vector<16x128xf32>
    %678 = tpu.matmul %677, %675, %cst_579 {dimension_numbers = #tpu.dot_dimension_numbers<[1], [0], [0], [1], [0, 0, 1, 1], [], []>} : vector<16x16xbf16>, vector<16x128xbf16>, vector<16x128xf32> -> vector<16x128xf32>
    %679 = arith.addf %674, %678 : vector<16x128xf32>
    %c0_580 = arith.constant 0 : index
    %c12_581 = arith.constant 12 : index
    %680 = vector.load %arg42[%c0_580, %c12_581] : memref<16x144xbf16, #tpu.memory_space<vmem>>, vector<16x128xbf16>
    %c8_582 = arith.constant 8 : index
    %c0_583 = arith.constant 0 : index
    %c0_584 = arith.constant 0 : index
    %681 = vector.load %arg33[%c8_582, %c0_583, %c0_584] : memref<9x16x16xbf16, #tpu.memory_space<vmem>>, vector<1x16x16xbf16>
    %682 = vector.shape_cast %681 : vector<1x16x16xbf16> to vector<16x16xbf16>
    %cst_585 = arith.constant dense<0.000000e+00> : vector<16x128xf32>
    %683 = tpu.matmul %682, %680, %cst_585 {dimension_numbers = #tpu.dot_dimension_numbers<[1], [0], [0], [1], [0, 0, 1, 1], [], []>} : vector<16x16xbf16>, vector<16x128xbf16>, vector<16x128xf32> -> vector<16x128xf32>
    %684 = arith.addf %679, %683 : vector<16x128xf32>
    %685 = arith.mulf %684, %2 : vector<16x128xf32>
    %cst_586 = arith.constant dense<0.000000e+00> : vector<16xf32>
    %686 = vector.multi_reduction <add>, %685, %cst_586 [1] : vector<16x128xf32> to vector<16xf32>
    %687 = vector.shape_cast %686 : vector<16xf32> to vector<16x1xf32>
    %cst_587 = arith.constant 3.125000e-02 : f32
    %688 = vector.broadcast %cst_587 : f32 to vector<16x1xf32>
    %689 = arith.mulf %687, %688 : vector<16x1xf32>
    %690 = vector.broadcast %689 : vector<16x1xf32> to vector<16x128xf32>
    %691 = arith.subf %684, %690 : vector<16x128xf32>
    %692 = arith.mulf %691, %2 : vector<16x128xf32>
    %693 = arith.mulf %692, %692 : vector<16x128xf32>
    %cst_588 = arith.constant dense<0.000000e+00> : vector<16xf32>
    %694 = vector.multi_reduction <add>, %693, %cst_588 [1] : vector<16x128xf32> to vector<16xf32>
    %695 = vector.shape_cast %694 : vector<16xf32> to vector<16x1xf32>
    %cst_589 = arith.constant 3.125000e-02 : f32
    %696 = vector.broadcast %cst_589 : f32 to vector<16x1xf32>
    %697 = arith.mulf %695, %696 : vector<16x1xf32>
    %c0_590 = arith.constant 0 : index
    %c0_591 = arith.constant 0 : index
    %698 = vector.load %arg34[%c0_590, %c0_591] : memref<16x1xf32, #tpu.memory_space<vmem>>, vector<16x1xf32>
    %cst_592 = arith.constant 9.99999974E-6 : f32
    %699 = vector.broadcast %cst_592 : f32 to vector<16x1xf32>
    %700 = arith.addf %697, %699 : vector<16x1xf32>
    %701 = math.rsqrt %700 : vector<16x1xf32>
    %702 = arith.mulf %698, %701 : vector<16x1xf32>
    %c0_593 = arith.constant 0 : index
    %c0_594 = arith.constant 0 : index
    %703 = vector.load %arg35[%c0_593, %c0_594] : memref<16x1xf32, #tpu.memory_space<vmem>>, vector<16x1xf32>
    %704 = arith.mulf %689, %702 : vector<16x1xf32>
    %705 = arith.subf %703, %704 : vector<16x1xf32>
    %706 = vector.broadcast %702 : vector<16x1xf32> to vector<16x128xf32>
    %707 = arith.mulf %684, %706 : vector<16x128xf32>
    %708 = vector.broadcast %705 : vector<16x1xf32> to vector<16x128xf32>
    %709 = arith.addf %707, %708 : vector<16x128xf32>
    %cst_595 = arith.constant 0.000000e+00 : f32
    %710 = vector.broadcast %cst_595 : f32 to vector<16x128xf32>
    %711 = arith.maximumf %709, %710 : vector<16x128xf32>
    %712 = arith.mulf %711, %2 : vector<16x128xf32>
    %713 = arith.truncf %712 : vector<16x128xf32> to vector<16x128xbf16>
    %c0_596 = arith.constant 0 : index
    %c8_597 = arith.constant 8 : index
    %714 = vector.load %arg42[%c0_596, %c8_597] : memref<16x144xbf16, #tpu.memory_space<vmem>>, vector<16x128xbf16>
    tpu.vector_store %arg42[%c0_596, %c8_597], %713 {strides = array<i32>} : memref<16x144xbf16, #tpu.memory_space<vmem>>, vector<16x128xbf16>,
    %c0_598 = arith.constant 0 : index
    %c7_599 = arith.constant 7 : index
    %715 = vector.load %arg42[%c0_598, %c7_599] : memref<16x144xbf16, #tpu.memory_space<vmem>>, vector<16x128xbf16>
    %c0_600 = arith.constant 0 : index
    %c0_601 = arith.constant 0 : index
    %c0_602 = arith.constant 0 : index
    %716 = vector.load %arg36[%c0_600, %c0_601, %c0_602] : memref<3x16x16xbf16, #tpu.memory_space<vmem>>, vector<1x16x16xbf16>
    %717 = vector.shape_cast %716 : vector<1x16x16xbf16> to vector<16x16xbf16>
    %cst_603 = arith.constant dense<0.000000e+00> : vector<16x128xf32>
    %718 = tpu.matmul %717, %715, %cst_603 {dimension_numbers = #tpu.dot_dimension_numbers<[1], [0], [0], [1], [0, 0, 1, 1], [], []>} : vector<16x16xbf16>, vector<16x128xbf16>, vector<16x128xf32> -> vector<16x128xf32>
    %c0_604 = arith.constant 0 : index
    %c8_605 = arith.constant 8 : index
    %719 = vector.load %arg42[%c0_604, %c8_605] : memref<16x144xbf16, #tpu.memory_space<vmem>>, vector<16x128xbf16>
    %c1_606 = arith.constant 1 : index
    %c0_607 = arith.constant 0 : index
    %c0_608 = arith.constant 0 : index
    %720 = vector.load %arg36[%c1_606, %c0_607, %c0_608] : memref<3x16x16xbf16, #tpu.memory_space<vmem>>, vector<1x16x16xbf16>
    %721 = vector.shape_cast %720 : vector<1x16x16xbf16> to vector<16x16xbf16>
    %cst_609 = arith.constant dense<0.000000e+00> : vector<16x128xf32>
    %722 = tpu.matmul %721, %719, %cst_609 {dimension_numbers = #tpu.dot_dimension_numbers<[1], [0], [0], [1], [0, 0, 1, 1], [], []>} : vector<16x16xbf16>, vector<16x128xbf16>, vector<16x128xf32> -> vector<16x128xf32>
    %723 = arith.addf %718, %722 : vector<16x128xf32>
    %c0_610 = arith.constant 0 : index
    %c9_611 = arith.constant 9 : index
    %724 = vector.load %arg42[%c0_610, %c9_611] : memref<16x144xbf16, #tpu.memory_space<vmem>>, vector<16x128xbf16>
    %c2_612 = arith.constant 2 : index
    %c0_613 = arith.constant 0 : index
    %c0_614 = arith.constant 0 : index
    %725 = vector.load %arg36[%c2_612, %c0_613, %c0_614] : memref<3x16x16xbf16, #tpu.memory_space<vmem>>, vector<1x16x16xbf16>
    %726 = vector.shape_cast %725 : vector<1x16x16xbf16> to vector<16x16xbf16>
    %cst_615 = arith.constant dense<0.000000e+00> : vector<16x128xf32>
    %727 = tpu.matmul %726, %724, %cst_615 {dimension_numbers = #tpu.dot_dimension_numbers<[1], [0], [0], [1], [0, 0, 1, 1], [], []>} : vector<16x16xbf16>, vector<16x128xbf16>, vector<16x128xf32> -> vector<16x128xf32>
    %728 = arith.addf %723, %727 : vector<16x128xf32>
    %729 = arith.mulf %728, %2 : vector<16x128xf32>
    %cst_616 = arith.constant dense<0.000000e+00> : vector<16xf32>
    %730 = vector.multi_reduction <add>, %729, %cst_616 [1] : vector<16x128xf32> to vector<16xf32>
    %731 = vector.shape_cast %730 : vector<16xf32> to vector<16x1xf32>
    %cst_617 = arith.constant 3.125000e-02 : f32
    %732 = vector.broadcast %cst_617 : f32 to vector<16x1xf32>
    %733 = arith.mulf %731, %732 : vector<16x1xf32>
    %734 = vector.broadcast %733 : vector<16x1xf32> to vector<16x128xf32>
    %735 = arith.subf %728, %734 : vector<16x128xf32>
    %736 = arith.mulf %735, %2 : vector<16x128xf32>
    %737 = arith.mulf %736, %736 : vector<16x128xf32>
    %cst_618 = arith.constant dense<0.000000e+00> : vector<16xf32>
    %738 = vector.multi_reduction <add>, %737, %cst_618 [1] : vector<16x128xf32> to vector<16xf32>
    %739 = vector.shape_cast %738 : vector<16xf32> to vector<16x1xf32>
    %cst_619 = arith.constant 3.125000e-02 : f32
    %740 = vector.broadcast %cst_619 : f32 to vector<16x1xf32>
    %741 = arith.mulf %739, %740 : vector<16x1xf32>
    %c0_620 = arith.constant 0 : index
    %c0_621 = arith.constant 0 : index
    %742 = vector.load %arg37[%c0_620, %c0_621] : memref<16x1xf32, #tpu.memory_space<vmem>>, vector<16x1xf32>
    %cst_622 = arith.constant 9.99999974E-6 : f32
    %743 = vector.broadcast %cst_622 : f32 to vector<16x1xf32>
    %744 = arith.addf %741, %743 : vector<16x1xf32>
    %745 = math.rsqrt %744 : vector<16x1xf32>
    %746 = arith.mulf %742, %745 : vector<16x1xf32>
    %c0_623 = arith.constant 0 : index
    %c0_624 = arith.constant 0 : index
    %747 = vector.load %arg38[%c0_623, %c0_624] : memref<16x1xf32, #tpu.memory_space<vmem>>, vector<16x1xf32>
    %748 = arith.mulf %733, %746 : vector<16x1xf32>
    %749 = arith.subf %747, %748 : vector<16x1xf32>
    %750 = vector.broadcast %746 : vector<16x1xf32> to vector<16x128xf32>
    %751 = arith.mulf %728, %750 : vector<16x128xf32>
    %752 = vector.broadcast %749 : vector<16x1xf32> to vector<16x128xf32>
    %753 = arith.addf %751, %752 : vector<16x128xf32>
    %754 = arith.addf %753, %536 : vector<16x128xf32>
    %cst_625 = arith.constant 0.000000e+00 : f32
    %755 = vector.broadcast %cst_625 : f32 to vector<16x128xf32>
    %756 = arith.maximumf %754, %755 : vector<16x128xf32>
    %757 = arith.mulf %756, %2 : vector<16x128xf32>
    %758 = arith.truncf %757 : vector<16x128xf32> to vector<16x128xbf16>
    %c0_626 = arith.constant 0 : index
    %c8_627 = arith.constant 8 : index
    %759 = vector.load %arg42[%c0_626, %c8_627] : memref<16x144xbf16, #tpu.memory_space<vmem>>, vector<16x128xbf16>
    tpu.vector_store %arg42[%c0_626, %c8_627], %758 {strides = array<i32>} : memref<16x144xbf16, #tpu.memory_space<vmem>>, vector<16x128xbf16>,
    %c0_628 = arith.constant 0 : index
    %c0_629 = arith.constant 0 : index
    %760 = vector.load %arg2[%c0_628, %c0_629] : memref<128x2xf32, #tpu.memory_space<vmem>>, vector<128x2xf32>
    %cst_630 = arith.constant dense<0.000000e+00> : vector<16x2xf32>
    %761 = tpu.matmul %757, %760, %cst_630 {dimension_numbers = #tpu.dot_dimension_numbers<[1], [0], [0], [1], [0, 0, 1, 1], [], []>} : vector<16x128xf32>, vector<128x2xf32>, vector<16x2xf32> -> vector<16x2xf32>
    %c0_631 = arith.constant 0 : index
    %c0_632 = arith.constant 0 : index
    %762 = vector.load %arg39[%c0_631, %c0_632] : memref<2x16xf32, #tpu.memory_space<vmem>>, vector<2x16xf32>
    %cst_633 = arith.constant dense<0.000000e+00> : vector<2x2xf32>
    %763 = tpu.matmul %762, %761, %cst_633 {dimension_numbers = #tpu.dot_dimension_numbers<[1], [0], [0], [1], [0, 0, 1, 1], [], []>} : vector<2x16xf32>, vector<16x2xf32>, vector<2x2xf32> -> vector<2x2xf32>
    %c0_634 = arith.constant 0 : index
    %c0_635 = arith.constant 0 : index
    %764 = vector.load %arg40[%c0_634, %c0_635] : memref<2x1xf32, #tpu.memory_space<vmem>>, vector<2x1xf32>
    %765 = vector.broadcast %764 : vector<2x1xf32> to vector<2x2xf32>
    %766 = arith.addf %763, %765 : vector<2x2xf32>
    %c0_636 = arith.constant 0 : index
    %c0_637 = arith.constant 0 : index
    %767 = vector.load %arg41[%c0_636, %c0_637] : memref<2x2xf32, #tpu.memory_space<vmem>>, vector<2x2xf32>
    tpu.vector_store %arg41[%c0_636, %c0_637], %766 {strides = array<i32>} : memref<2x2xf32, #tpu.memory_space<vmem>>, vector<2x2xf32>,
    return
  }
}

</mosaic_0001>

<llo_original>
// kernel: mul.5
$region0: #{mul.5}
  %s0 = inlined_call_operand.vmem [shape: f32[2,30], index: 0, kind: input, shape index: {}]
  %s1 = inlined_call_operand.vmem [shape: f32[60], index: 1, kind: output, shape index: {}]
  $region1: #{mul.5} parent=0
    #allocation0 [shape = 'u8[4096]{0}', space=vmem, size = 0x1000, scoped, tag = 'scoped mem for output reshape']
    #allocation1 [shape = 'u8[4096]{0}', space=vmem, size = 0x1000, scoped, tag = 'scoped mem for input reshape']
    %s3 = sshllo.u32 0, 2
    %v4 = vld [vmem:[%s0] sm:%s3]
    %5 = vst [vmem:[#allocation1] sm:%s3] %v4
    %v6 = vld [vmem:[#allocation1] sm:$0x1]
    %vm7 = vcmask 244736
    %8 = vst.msk [vmem:[#allocation0] sm:$0x1] %vm7, %v6
    %s9 = scalar_lea.vmem [#allocation1], 1
    %v10 = vld [vmem:[%s9] sm:$0x1]
    %11 = vrot.lane.b32.xlu0 %v10, 30
    %v12 = vpop.permute.xlu0 %11
    %vm13 = vcmask 490736
    %14 = vst.msk [vmem:[#allocation0] sm:$0x1] %vm13, %v12
    %s16 = sshllo.u32 0, 1
    %v18 = vld [vmem:[#allocation0] sm:%s16]
    %s19 = sshllo.u32 0, 1
    %20 = vst [vmem:[%s1] sm:%s19] %v18

// kernel: tile.18
$region0: #{tile.18}
  #allocation0 [shape = 's32[1]{0}', space=sflag, size = 0x4, scoped, tag = 'scoped memory for tile.18']
  %s0 = inlined_call_operand.vmem [shape: f32[30], index: 0, kind: input, shape index: {}]
  %s1 = inlined_call_operand.vmem [shape: f32[2,30], index: 1, kind: output, shape index: {}]
  // Predicated region
  $region2: #{tile.18} parent=0 // pred_check
    _
  $region3: #{tile.18} parent=0 // pred_check_branch
    %3 = sbr.rel (0) target = $region5
  $region4: #{tile.18} parent=0 // pred_region
    _
  $region5: #{tile.18} parent=0 // pred_fallthru
    _
  %v4 = vld [vmem:[%s0] ss:$0 sm:$0xff]
  %5 = vst [vmem:[%s1] sm:$0x3] %v4

// kernel: _lambda_.1
$region0: #{_lambda_.1}
  #allocation0 [shape = 'u32[]', space=smem, size = 0x4, offset = 0x4, fixed_abs, tag = 'smem constant byte address 0x4 - core index']
  #allocation1 [shape = 'u32[144,128]{1,0:T(1,128)}', space=vmem, size = 0x12000, scoped, tag = 'internal scratch']
  #allocation2 [shape = 'bf16[16,144]{1,0:T(16,128)(2,1)}', space=vmem, size = 0x2000, scoped, tag = 'scratch operand']
  %s0 = inlined_call_operand.smem [shape: u32[42], index: -1, kind: input, shape index: {}]
  %s1 = sld [smem:[%s0]]
  %s2 = scalar_lea.smem %s0, 1
  %s3 = sld [smem:[%s2]]
  %s4 = scalar_lea.smem %s0, 2
  %s5 = sld [smem:[%s4]]
  %s6 = scalar_lea.smem %s0, 3
  %s7 = sld [smem:[%s6]]
  %s8 = scalar_lea.smem %s0, 4
  %s9 = sld [smem:[%s8]]
  %s10 = scalar_lea.smem %s0, 5
  %s11 = sld [smem:[%s10]]
  %s12 = scalar_lea.smem %s0, 6
  %s13 = sld [smem:[%s12]]
  %s14 = scalar_lea.smem %s0, 7
  %s15 = sld [smem:[%s14]]
  %s16 = scalar_lea.smem %s0, 8
  %s17 = sld [smem:[%s16]]
  %s18 = scalar_lea.smem %s0, 9
  %s19 = sld [smem:[%s18]]
  %s20 = scalar_lea.smem %s0, 10
  %s21 = sld [smem:[%s20]]
  %s22 = scalar_lea.smem %s0, 11
  %s23 = sld [smem:[%s22]]
  %s24 = scalar_lea.smem %s0, 12
  %s25 = sld [smem:[%s24]]
  %s26 = scalar_lea.smem %s0, 13
  %s27 = sld [smem:[%s26]]
  %s28 = scalar_lea.smem %s0, 14
  %s29 = sld [smem:[%s28]]
  %s30 = scalar_lea.smem %s0, 15
  %s31 = sld [smem:[%s30]]
  %s32 = scalar_lea.smem %s0, 16
  %s33 = sld [smem:[%s32]]
  %s34 = scalar_lea.smem %s0, 17
  %s35 = sld [smem:[%s34]]
  %s36 = scalar_lea.smem %s0, 18
  %s37 = sld [smem:[%s36]]
  %s38 = scalar_lea.smem %s0, 19
  %s39 = sld [smem:[%s38]]
  %s40 = scalar_lea.smem %s0, 20
  %s41 = sld [smem:[%s40]]
  %s42 = scalar_lea.smem %s0, 21
  %s43 = sld [smem:[%s42]]
  %s44 = scalar_lea.smem %s0, 22
  %s45 = sld [smem:[%s44]]
  %s46 = scalar_lea.smem %s0, 23
  %s47 = sld [smem:[%s46]]
  %s48 = scalar_lea.smem %s0, 24
  %s49 = sld [smem:[%s48]]
  %s50 = scalar_lea.smem %s0, 25
  %s51 = sld [smem:[%s50]]
  %s52 = scalar_lea.smem %s0, 26
  %s53 = sld [smem:[%s52]]
  %s54 = scalar_lea.smem %s0, 27
  %s55 = sld [smem:[%s54]]
  %s56 = scalar_lea.smem %s0, 28
  %s57 = sld [smem:[%s56]]
  %s58 = scalar_lea.smem %s0, 29
  %s59 = sld [smem:[%s58]]
  %s60 = scalar_lea.smem %s0, 30
  %s61 = sld [smem:[%s60]]
  %s62 = scalar_lea.smem %s0, 31
  %s63 = sld [smem:[%s62]]
  %s64 = scalar_lea.smem %s0, 32
  %s65 = sld [smem:[%s64]]
  %s66 = scalar_lea.smem %s0, 33
  %s67 = sld [smem:[%s66]]
  %s68 = scalar_lea.smem %s0, 34
  %s69 = sld [smem:[%s68]]
  %s70 = scalar_lea.smem %s0, 35
  %s71 = sld [smem:[%s70]]
  %s72 = scalar_lea.smem %s0, 36
  %s73 = sld [smem:[%s72]]
  %s74 = scalar_lea.smem %s0, 37
  %s75 = sld [smem:[%s74]]
  %s76 = scalar_lea.smem %s0, 38
  %s77 = sld [smem:[%s76]]
  %s78 = scalar_lea.smem %s0, 39
  %s79 = sld [smem:[%s78]]
  %s80 = scalar_lea.smem %s0, 40
  %s81 = sld [smem:[%s80]]
  %s82 = scalar_lea.smem %s0, 41
  %s83 = sld [smem:[%s82]]
  %s84 = sld [smem:[#allocation0]]
  $region194: #{_lambda_.1} parent=0
    _
  %s86 = ssub.s32 1, %s84
  %s87 = scalar_select 0, %s86, %s84
  $region1: #{_lambda_.1} parent=0
    #allocation3 [shape = 'u8[4096]{0}', space=vmem, size = 0x1000, scoped, tag = 'input window, operand 6, single buffered']
    #allocation4 [shape = 's32[1]{0}', space=sflag, size = 0x4, scoped, tag = 'scoped memory for _lambda_.1']
    #allocation5 [shape = 'u8[4096]{0}', space=vmem, size = 0x1000, scoped, tag = 'input window, operand 30, single buffered']
    #allocation6 [shape = 's32[1]{0}', space=sflag, size = 0x4, scoped, tag = 'scoped memory for _lambda_.1']
    #allocation7 [shape = 'u8[12288]{0}', space=vmem, size = 0x3000, scoped, tag = 'input window, operand 36, single buffered']
    #allocation8 [shape = 'u8[1024]{0}', space=vmem, size = 0x400, scoped, tag = 'input window, operand 39, single buffered']
    #allocation9 [shape = 's32[1]{0}', space=sflag, size = 0x4, scoped, tag = 'scoped memory for _lambda_.1']
    #allocation10 [shape = 'u8[1024]{0}', space=vmem, size = 0x400, scoped, tag = 'input window, operand 40, single buffered']
    %88 = vsyncpa [#allocation4], 0
    %89 = vsyncpa [#allocation6], 0
    %90 = vsyncpa [#allocation9], 0
    // Predicated region
    $region2: #{_lambda_.1} parent=1 // pred_check
      _
    $region3: #{_lambda_.1} parent=1 // pred_check_branch
      %92 = sbr.rel (0) target = $region5
    $region4: #{_lambda_.1} parent=1 // pred_region
      _
    $region5: #{_lambda_.1} parent=1 // pred_fallthru
      _
    // Predicated region
    $region6: #{_lambda_.1} parent=1 // pred_check
      _
    $region7: #{_lambda_.1} parent=1 // pred_check_branch
      %94 = sbr.rel (0) target = $region9
    $region8: #{_lambda_.1} parent=1 // pred_region
      _
    $region9: #{_lambda_.1} parent=1 // pred_fallthru
      _
    // Predicated region
    $region10: #{_lambda_.1} parent=1 // pred_check
      _
    $region11: #{_lambda_.1} parent=1 // pred_check_branch
      %96 = sbr.rel (0) target = $region13
    $region12: #{_lambda_.1} parent=1 // pred_region
      _
    $region13: #{_lambda_.1} parent=1 // pred_fallthru
      _
    // Predicated region
    $region14: #{_lambda_.1} parent=1 // pred_check
      _
    $region15: #{_lambda_.1} parent=1 // pred_check_branch
      %98 = sbr.rel (0) target = $region17
    $region16: #{_lambda_.1} parent=1 // pred_region
      _
    $region17: #{_lambda_.1} parent=1 // pred_fallthru
      _
    // Predicated region
    $region18: #{_lambda_.1} parent=1 // pred_check
      _
    $region19: #{_lambda_.1} parent=1 // pred_check_branch
      %100 = sbr.rel (0) target = $region21
    $region20: #{_lambda_.1} parent=1 // pred_region
      _
    $region21: #{_lambda_.1} parent=1 // pred_fallthru
      _
    // Predicated region
    $region22: #{_lambda_.1} parent=1 // pred_check
      _
    $region23: #{_lambda_.1} parent=1 // pred_check_branch
      %102 = sbr.rel (0) target = $region25
    $region24: #{_lambda_.1} parent=1 // pred_region
      _
    $region25: #{_lambda_.1} parent=1 // pred_fallthru
      _
    // Predicated region
    $region26: #{_lambda_.1} parent=1 // pred_check
      _
    $region27: #{_lambda_.1} parent=1 // pred_check_branch
      %104 = sbr.rel (0) target = $region29
    $region28: #{_lambda_.1} parent=1 // pred_region
      %s106 = ssub.s32 128, 128
      %107 = vsyncadd [#allocation4], %s106
      %s108 = sshll.u32 [#allocation3], 4
      %s109 = int_to_ptr.vmem [resolvable:$true] %s108
      %114 = dma.hbm_to_vmem [thread:$0]  %s13, 128, %s109, [#allocation4], 64, 64, 4
    $region29: #{_lambda_.1} parent=1 // pred_fallthru
      _
    // Predicated region
    $region30: #{_lambda_.1} parent=1 // pred_check
      _
    $region31: #{_lambda_.1} parent=1 // pred_check_branch
      %116 = sbr.rel (0) target = $region33
    $region32: #{_lambda_.1} parent=1 // pred_region
      _
    $region33: #{_lambda_.1} parent=1 // pred_fallthru
      _
    // Predicated region
    $region34: #{_lambda_.1} parent=1 // pred_check
      _
    $region35: #{_lambda_.1} parent=1 // pred_check_branch
      %118 = sbr.rel (0) target = $region37
    $region36: #{_lambda_.1} parent=1 // pred_region
      _
    $region37: #{_lambda_.1} parent=1 // pred_fallthru
      _
    // Predicated region
    $region38: #{_lambda_.1} parent=1 // pred_check
      _
    $region39: #{_lambda_.1} parent=1 // pred_check_branch
      %120 = sbr.rel (0) target = $region41
    $region40: #{_lambda_.1} parent=1 // pred_region
      _
    $region41: #{_lambda_.1} parent=1 // pred_fallthru
      _
    // Predicated region
    $region42: #{_lambda_.1} parent=1 // pred_check
      _
    $region43: #{_lambda_.1} parent=1 // pred_check_branch
      %122 = sbr.rel (0) target = $region45
    $region44: #{_lambda_.1} parent=1 // pred_region
      _
    $region45: #{_lambda_.1} parent=1 // pred_fallthru
      _
    // Predicated region
    $region46: #{_lambda_.1} parent=1 // pred_check
      _
    $region47: #{_lambda_.1} parent=1 // pred_check_branch
      %124 = sbr.rel (0) target = $region49
    $region48: #{_lambda_.1} parent=1 // pred_region
      _
    $region49: #{_lambda_.1} parent=1 // pred_fallthru
      _
    // Predicated region
    $region50: #{_lambda_.1} parent=1 // pred_check
      _
    $region51: #{_lambda_.1} parent=1 // pred_check_branch
      %126 = sbr.rel (0) target = $region53
    $region52: #{_lambda_.1} parent=1 // pred_region
      _
    $region53: #{_lambda_.1} parent=1 // pred_fallthru
      _
    // Predicated region
    $region54: #{_lambda_.1} parent=1 // pred_check
      _
    $region55: #{_lambda_.1} parent=1 // pred_check_branch
      %128 = sbr.rel (0) target = $region57
    $region56: #{_lambda_.1} parent=1 // pred_region
      _
    $region57: #{_lambda_.1} parent=1 // pred_fallthru
      _
    // Predicated region
    $region58: #{_lambda_.1} parent=1 // pred_check
      _
    $region59: #{_lambda_.1} parent=1 // pred_check_branch
      %130 = sbr.rel (0) target = $region61
    $region60: #{_lambda_.1} parent=1 // pred_region
      _
    $region61: #{_lambda_.1} parent=1 // pred_fallthru
      _
    // Predicated region
    $region62: #{_lambda_.1} parent=1 // pred_check
      _
    $region63: #{_lambda_.1} parent=1 // pred_check_branch
      %132 = sbr.rel (0) target = $region65
    $region64: #{_lambda_.1} parent=1 // pred_region
      _
    $region65: #{_lambda_.1} parent=1 // pred_fallthru
      _
    // Predicated region
    $region66: #{_lambda_.1} parent=1 // pred_check
      _
    $region67: #{_lambda_.1} parent=1 // pred_check_branch
      %134 = sbr.rel (0) target = $region69
    $region68: #{_lambda_.1} parent=1 // pred_region
      _
    $region69: #{_lambda_.1} parent=1 // pred_fallthru
      _
    // Predicated region
    $region70: #{_lambda_.1} parent=1 // pred_check
      _
    $region71: #{_lambda_.1} parent=1 // pred_check_branch
      %136 = sbr.rel (0) target = $region73
    $region72: #{_lambda_.1} parent=1 // pred_region
      _
    $region73: #{_lambda_.1} parent=1 // pred_fallthru
      _
    // Predicated region
    $region74: #{_lambda_.1} parent=1 // pred_check
      _
    $region75: #{_lambda_.1} parent=1 // pred_check_branch
      %138 = sbr.rel (0) target = $region77
    $region76: #{_lambda_.1} parent=1 // pred_region
      _
    $region77: #{_lambda_.1} parent=1 // pred_fallthru
      _
    // Predicated region
    $region78: #{_lambda_.1} parent=1 // pred_check
      _
    $region79: #{_lambda_.1} parent=1 // pred_check_branch
      %140 = sbr.rel (0) target = $region81
    $region80: #{_lambda_.1} parent=1 // pred_region
      _
    $region81: #{_lambda_.1} parent=1 // pred_fallthru
      _
    // Predicated region
    $region82: #{_lambda_.1} parent=1 // pred_check
      _
    $region83: #{_lambda_.1} parent=1 // pred_check_branch
      %142 = sbr.rel (0) target = $region85
    $region84: #{_lambda_.1} parent=1 // pred_region
      _
    $region85: #{_lambda_.1} parent=1 // pred_fallthru
      _
    // Predicated region
    $region86: #{_lambda_.1} parent=1 // pred_check
      _
    $region87: #{_lambda_.1} parent=1 // pred_check_branch
      %144 = sbr.rel (0) target = $region89
    $region88: #{_lambda_.1} parent=1 // pred_region
      _
    $region89: #{_lambda_.1} parent=1 // pred_fallthru
      _
    // Predicated region
    $region90: #{_lambda_.1} parent=1 // pred_check
      _
    $region91: #{_lambda_.1} parent=1 // pred_check_branch
      %146 = sbr.rel (0) target = $region93
    $region92: #{_lambda_.1} parent=1 // pred_region
      _
    $region93: #{_lambda_.1} parent=1 // pred_fallthru
      _
    // Predicated region
    $region94: #{_lambda_.1} parent=1 // pred_check
      _
    $region95: #{_lambda_.1} parent=1 // pred_check_branch
      %148 = sbr.rel (0) target = $region97
    $region96: #{_lambda_.1} parent=1 // pred_region
      _
    $region97: #{_lambda_.1} parent=1 // pred_fallthru
      _
    // Predicated region
    $region98: #{_lambda_.1} parent=1 // pred_check
      _
    $region99: #{_lambda_.1} parent=1 // pred_check_branch
      %150 = sbr.rel (0) target = $region101
    $region100: #{_lambda_.1} parent=1 // pred_region
      _
    $region101: #{_lambda_.1} parent=1 // pred_fallthru
      _
    // Predicated region
    $region102: #{_lambda_.1} parent=1 // pred_check
      _
    $region103: #{_lambda_.1} parent=1 // pred_check_branch
      %152 = sbr.rel (0) target = $region105
    $region104: #{_lambda_.1} parent=1 // pred_region
      _
    $region105: #{_lambda_.1} parent=1 // pred_fallthru
      _
    // Predicated region
    $region106: #{_lambda_.1} parent=1 // pred_check
      _
    $region107: #{_lambda_.1} parent=1 // pred_check_branch
      %154 = sbr.rel (0) target = $region109
    $region108: #{_lambda_.1} parent=1 // pred_region
      _
    $region109: #{_lambda_.1} parent=1 // pred_fallthru
      _
    // Predicated region
    $region110: #{_lambda_.1} parent=1 // pred_check
      _
    $region111: #{_lambda_.1} parent=1 // pred_check_branch
      %156 = sbr.rel (0) target = $region113
    $region112: #{_lambda_.1} parent=1 // pred_region
      _
    $region113: #{_lambda_.1} parent=1 // pred_fallthru
      _
    // Predicated region
    $region114: #{_lambda_.1} parent=1 // pred_check
      _
    $region115: #{_lambda_.1} parent=1 // pred_check_branch
      %158 = sbr.rel (0) target = $region117
    $region116: #{_lambda_.1} parent=1 // pred_region
      _
    $region117: #{_lambda_.1} parent=1 // pred_fallthru
      _
    // Predicated region
    $region118: #{_lambda_.1} parent=1 // pred_check
      _
    $region119: #{_lambda_.1} parent=1 // pred_check_branch
      %160 = sbr.rel (0) target = $region121
    $region120: #{_lambda_.1} parent=1 // pred_region
      _
    $region121: #{_lambda_.1} parent=1 // pred_fallthru
      _
    // Predicated region
    $region122: #{_lambda_.1} parent=1 // pred_check
      _
    $region123: #{_lambda_.1} parent=1 // pred_check_branch
      %162 = sbr.rel (0) target = $region125
    $region124: #{_lambda_.1} parent=1 // pred_region
      %s164 = ssub.s32 128, 128
      %165 = vsyncadd [#allocation6], %s164
      %s166 = sshll.u32 [#allocation5], 4
      %s167 = int_to_ptr.vmem [resolvable:$true] %s166
      %172 = dma.hbm_to_vmem [thread:$0]  %s61, 128, %s167, [#allocation6], 64, 64, 4
    $region125: #{_lambda_.1} parent=1 // pred_fallthru
      _
    // Predicated region
    $region126: #{_lambda_.1} parent=1 // pred_check
      _
    $region127: #{_lambda_.1} parent=1 // pred_check_branch
      %174 = sbr.rel (0) target = $region129
    $region128: #{_lambda_.1} parent=1 // pred_region
      _
    $region129: #{_lambda_.1} parent=1 // pred_fallthru
      _
    // Predicated region
    $region130: #{_lambda_.1} parent=1 // pred_check
      _
    $region131: #{_lambda_.1} parent=1 // pred_check_branch
      %176 = sbr.rel (0) target = $region133
    $region132: #{_lambda_.1} parent=1 // pred_region
      _
    $region133: #{_lambda_.1} parent=1 // pred_fallthru
      _
    // Predicated region
    $region134: #{_lambda_.1} parent=1 // pred_check
      _
    $region135: #{_lambda_.1} parent=1 // pred_check_branch
      %178 = sbr.rel (0) target = $region137
    $region136: #{_lambda_.1} parent=1 // pred_region
      _
    $region137: #{_lambda_.1} parent=1 // pred_fallthru
      _
    // Predicated region
    $region138: #{_lambda_.1} parent=1 // pred_check
      _
    $region139: #{_lambda_.1} parent=1 // pred_check_branch
      %180 = sbr.rel (0) target = $region141
    $region140: #{_lambda_.1} parent=1 // pred_region
      _
    $region141: #{_lambda_.1} parent=1 // pred_fallthru
      _
    // Predicated region
    $region142: #{_lambda_.1} parent=1 // pred_check
      _
    $region143: #{_lambda_.1} parent=1 // pred_check_branch
      %182 = sbr.rel (0) target = $region145
    $region144: #{_lambda_.1} parent=1 // pred_region
      _
    $region145: #{_lambda_.1} parent=1 // pred_fallthru
      _
    // Predicated region
    $region146: #{_lambda_.1} parent=1 // pred_check
      _
    $region147: #{_lambda_.1} parent=1 // pred_check_branch
      %184 = sbr.rel (0) target = $region149
    $region148: #{_lambda_.1} parent=1 // pred_region
      %s186 = ssub.s32 384, 384
      %187 = vsyncadd [#allocation6], %s186
      %s188 = sshll.u32 [#allocation7], 4
      %s189 = int_to_ptr.vmem [resolvable:$true] %s188
      %194 = dma.hbm_to_vmem [thread:$0]  %s73, 384, %s189, [#allocation6], 64, 64, 4
    $region149: #{_lambda_.1} parent=1 // pred_fallthru
      _
    // Predicated region
    $region150: #{_lambda_.1} parent=1 // pred_check
      _
    $region151: #{_lambda_.1} parent=1 // pred_check_branch
      %196 = sbr.rel (0) target = $region153
    $region152: #{_lambda_.1} parent=1 // pred_region
      _
    $region153: #{_lambda_.1} parent=1 // pred_fallthru
      _
    // Predicated region
    $region154: #{_lambda_.1} parent=1 // pred_check
      _
    $region155: #{_lambda_.1} parent=1 // pred_check_branch
      %198 = sbr.rel (0) target = $region157
    $region156: #{_lambda_.1} parent=1 // pred_region
      _
    $region157: #{_lambda_.1} parent=1 // pred_fallthru
      _
    // Predicated region
    $region158: #{_lambda_.1} parent=1 // pred_check
      _
    $region159: #{_lambda_.1} parent=1 // pred_check_branch
      %200 = sbr.rel (0) target = $region161
    $region160: #{_lambda_.1} parent=1 // pred_region
      %s202 = ssub.s32 32, 32
      %203 = vsyncadd [#allocation9], %s202
      %s205 = sshll.u32 [#allocation8], 4
      %s206 = int_to_ptr.vmem [resolvable:$true] %s205
      %208 = dma.hbm_to_vmem [thread:$0]  %s79, 32, %s206, [#allocation9]
    $region161: #{_lambda_.1} parent=1 // pred_fallthru
      _
    // Predicated region
    $region162: #{_lambda_.1} parent=1 // pred_check
      _
    $region163: #{_lambda_.1} parent=1 // pred_check_branch
      %210 = sbr.rel (0) target = $region165
    $region164: #{_lambda_.1} parent=1 // pred_region
      %s212 = ssub.s32 32, 32
      %213 = vsyncadd [#allocation9], %s212
      %s215 = sshll.u32 [#allocation10], 4
      %s216 = int_to_ptr.vmem [resolvable:$true] %s215
      %218 = dma.hbm_to_vmem [thread:$0]  %s81, 32, %s216, [#allocation9]
    $region165: #{_lambda_.1} parent=1 // pred_fallthru
      _
    // Predicated region
    $region166: #{_lambda_.1} parent=1 // pred_check
      _
    $region167: #{_lambda_.1} parent=1 // pred_check_branch
      %220 = sbr.rel (0) target = $region169
    $region168: #{_lambda_.1} parent=1 // pred_region
      %221 = dma.done [#allocation4], 128
    $region169: #{_lambda_.1} parent=1 // pred_fallthru
      _
    // Predicated region
    $region170: #{_lambda_.1} parent=1 // pred_check
      _
    $region171: #{_lambda_.1} parent=1 // pred_check_branch
      %223 = sbr.rel (0) target = $region173
    $region172: #{_lambda_.1} parent=1 // pred_region
      %224 = dma.done [#allocation6], 128
    $region173: #{_lambda_.1} parent=1 // pred_fallthru
      _
    // Predicated region
    $region174: #{_lambda_.1} parent=1 // pred_check
      _
    $region175: #{_lambda_.1} parent=1 // pred_check_branch
      %226 = sbr.rel (0) target = $region177
    $region176: #{_lambda_.1} parent=1 // pred_region
      %227 = dma.done [#allocation6], 384
    $region177: #{_lambda_.1} parent=1 // pred_fallthru
      _
    // Predicated region
    $region178: #{_lambda_.1} parent=1 // pred_check
      _
    $region179: #{_lambda_.1} parent=1 // pred_check_branch
      %229 = sbr.rel (0) target = $region181
    $region180: #{_lambda_.1} parent=1 // pred_region
      %230 = dma.done [#allocation9], 32
    $region181: #{_lambda_.1} parent=1 // pred_fallthru
      _
    // Predicated region
    $region182: #{_lambda_.1} parent=1 // pred_check
      _
    $region183: #{_lambda_.1} parent=1 // pred_check_branch
      %232 = sbr.rel (0) target = $region185
    $region184: #{_lambda_.1} parent=1 // pred_region
      %233 = dma.done [#allocation9], 32
    $region185: #{_lambda_.1} parent=1 // pred_fallthru
      _
    %v235 = vld [vmem:[%s3] sm:$0x1]
    %v237 = vlaneseq
    %v238 = vshrl.u32 %v237, 7
    %v239 = vsub.s32 0, %v238
    %v240 = vrot.slane %v235, %v239
    %242 = vst [vmem:[#allocation2] sm:$0xff] 0
    %vm243 = vcmask 130048
    %244 = vst.msk [vmem:[#allocation2 + $0x8] sm:$0xff] %vm243, 0
    %v245 = vld [vmem:[%s1] sm:$0xf]
    %v246 = vld [vmem:[%s1 + $0x4] sm:$0xf]
    %v249 = vunpack.c.l.b16 %v245
    %v250 = vunpack.c.l.b16 %v246
    %v251 = vpack.c.b16 %v250, %v249
    %252 = vrot.lane.b32.xlu0 %v251, 8
    %v253 = vpop.permute.xlu0 %252
    %vm255 = vcmask 1047616
    %256 = vst.msk [vmem:[#allocation2] sm:$0xff] %vm255, %v253
    %vm257 = vcmask 64512
    %258 = vst.msk [vmem:[#allocation2 + $0x8] sm:$0xff] %vm257, %v253
    %v259 = vld [vmem:[#allocation3] sm:$0xf]
    %v260 = vld [vmem:[#allocation3 + $0x4] sm:$0xf]
    %v261 = vld [vmem:[#allocation2] sm:$0xff]
    %v262 = vld [vmem:[#allocation2 + $0x8] sm:$0xff]
    %v265 = vunpack.c.l.b16 %v259
    %v266 = vunpack.c.l.b16 %v260
    %v267 = vpack.c.b16 %v266, %v265
    %270 = vrot.lane.b32.xlu0 %v261, 120
    %v271 = vpop.permute.xlu0 %270
    %272 = vrot.lane.b32.xlu0 %v262, 120
    %v273 = vpop.permute.xlu0 %272
    %vm274 = vcmask 982016
    %v275 = vsel %vm274, %v271, %v273
    %v278 = vsel %vm243, %v267, 0
    %280 = vmatprep.subr.bf16.mxu0 0
    %281 = vmatpush1.bf16.msra.mxu0 %v275
    %282 = vmatprep.subr.bf16.mxu0 0
    %283 = vmatpush1.bf16.msra.mxu0 0
    %284 = vmatprep.subr.bf16.mxu0 0
    %285 = vmatpush1.bf16.msra.mxu0 0
    %286 = vmatprep.subr.bf16.mxu0 0
    %287 = vmatpush1.bf16.msra.mxu0 0
    %288 = vmatprep.subr.bf16.mxu0 0
    %289 = vmatpush1.bf16.msra.mxu0 0
    %290 = vmatprep.subr.bf16.mxu0 0
    %291 = vmatpush1.bf16.msra.mxu0 0
    %292 = vmatprep.subr.bf16.mxu0 0
    %293 = vmatpush1.bf16.msra.mxu0 0
    %294 = vmatprep.subr.bf16.mxu0 0
    %295 = vmatpush1.bf16.msra.mxu0 0
    %296 = vmatprep.subr.bf16.mxu0 0
    %297 = vmatpush1.bf16.msra.mxu0 0
    %298 = vmatprep.subr.bf16.mxu0 0
    %299 = vmatpush1.bf16.msra.mxu0 0
    %300 = vmatprep.subr.bf16.mxu0 0
    %301 = vmatpush1.bf16.msra.mxu0 0
    %302 = vmatprep.subr.bf16.mxu0 0
    %303 = vmatpush1.bf16.msra.mxu0 0
    %304 = vmatprep.subr.bf16.mxu0 0
    %305 = vmatpush1.bf16.msra.mxu0 0
    %306 = vmatprep.subr.bf16.mxu0 0
    %307 = vmatpush1.bf16.msra.mxu0 0
    %308 = vmatprep.subr.bf16.mxu0 0
    %309 = vmatpush1.bf16.msra.mxu0 0
    %310 = vmatprep.subr.bf16.mxu0 0
    %311 = vmatpush1.bf16.msra.mxu0 0
    %312 = vmatprep.mubr.bf16.mxu0 0
    %313 = vmatmul.mubr.bf16.gmra.mrb[0].mxu0 %v278
    %v314 = vpop.f32.mrb[0].mxu0
    %v315 = vadd.f32 0.0, %v314
    %v316 = vpop.f32.mrb[0].mxu0
    %v317 = vpop.f32.mrb[0].mxu0
    %v318 = vadd.f32 0.0, %v317
    %v319 = vpop.f32.mrb[0].mxu0
    %320 = vdwg.mxu0
    %v321 = vmul.f32 %v315, %v240
    %v322 = vmul.f32 %v318, %v240
    %323 = vadd.xlane.f32.xlu0 %v321
    %v324 = vpop.xlane.xlu0 %323
    %325 = vadd.xlane.f32.xlu0 %v322
    %v326 = vpop.xlane.xlu0 %325
    %v327 = vmul.f32 %v324, 0.03125
    %v328 = vmul.f32 %v326, 0.03125
    %v329 = vsub.f32 %v315, %v327
    %v330 = vsub.f32 %v318, %v328
    %v331 = vmul.f32 %v329, %v240
    %v332 = vmul.f32 %v330, %v240
    %v333 = vmul.f32 %v331, %v331
    %v334 = vmul.f32 %v332, %v332
    %335 = vadd.xlane.f32.xlu0 %v333
    %v336 = vpop.xlane.xlu0 %335
    %337 = vadd.xlane.f32.xlu0 %v334
    %v338 = vpop.xlane.xlu0 %337
    %v339 = vmul.f32 %v336, 0.03125
    %v340 = vmul.f32 %v338, 0.03125
    %v341 = vld [vmem:[%s15] sm:$0xff]
    %v342 = vld [vmem:[%s15 + $0x8] sm:$0xff]
    %v343 = vadd.f32 %v339, 1e-05
    %v344 = vadd.f32 %v340, 1e-05
    %v345 = vrsqrt.pop %v343
    %v346 = vrsqrt.pop %v344
    %v347 = vmul.f32 %v341, %v345
    %v348 = vmul.f32 %v342, %v346
    %v349 = vld [vmem:[%s17] sm:$0xff]
    %v350 = vld [vmem:[%s17 + $0x8] sm:$0xff]
    %v351 = vmul.f32 %v327, %v347
    %v352 = vmul.f32 %v328, %v348
    %v353 = vsub.f32 %v349, %v351
    %v354 = vsub.f32 %v350, %v352
    %356 = vset.pattern.permute.xlu0 0
    %357 = vperm.xlu0 %356, %v347
    %v358 = vpop.permute.xlu0 %357
    %361 = vset.pattern.permute.xlu0 0
    %362 = vperm.xlu0 %361, %v348
    %v363 = vpop.permute.xlu0 %362
    %v365 = vmul.f32 %v315, %v358
    %v366 = vmul.f32 %v318, %v363
    %368 = vset.pattern.permute.xlu0 0
    %369 = vperm.xlu0 %368, %v353
    %v370 = vpop.permute.xlu0 %369
    %373 = vset.pattern.permute.xlu0 0
    %374 = vperm.xlu0 %373, %v354
    %v375 = vpop.permute.xlu0 %374
    %v377 = vadd.f32 %v365, %v370
    %v378 = vadd.f32 %v366, %v375
    %v379 = vld [vmem:[%s7] sm:$0xf]
    %v380 = vld [vmem:[%s7 + $0x4] sm:$0xf]
    %s381 = scalar_lea.vmem %s7, 8
    %v382 = vld [vmem:[%s381] sm:$0xf]
    %v383 = vld [vmem:[%s381 + $0x4] sm:$0xf]
    %v386 = vunpack.c.l.b16 %v382
    %v387 = vunpack.c.l.b16 %v383
    %v388 = vpack.c.b16 %v387, %v386
    %389 = vrot.lane.b32.xlu0 %v261, 126
    %v390 = vpop.permute.xlu0 %389
    %391 = vrot.lane.b32.xlu0 %v262, 126
    %v392 = vpop.permute.xlu0 %391
    %vm393 = vcmask 1031168
    %v394 = vsel %vm393, %v390, %v392
    %v397 = vsel %vm243, %v388, 0
    %399 = vmatprep.subr.bf16.mxu0 0
    %400 = vmatpush1.bf16.msra.mxu0 %v394
    %401 = vmatprep.subr.bf16.mxu0 0
    %402 = vmatpush1.bf16.msra.mxu0 0
    %403 = vmatprep.subr.bf16.mxu0 0
    %404 = vmatpush1.bf16.msra.mxu0 0
    %405 = vmatprep.subr.bf16.mxu0 0
    %406 = vmatpush1.bf16.msra.mxu0 0
    %407 = vmatprep.subr.bf16.mxu0 0
    %408 = vmatpush1.bf16.msra.mxu0 0
    %409 = vmatprep.subr.bf16.mxu0 0
    %410 = vmatpush1.bf16.msra.mxu0 0
    %411 = vmatprep.subr.bf16.mxu0 0
    %412 = vmatpush1.bf16.msra.mxu0 0
    %413 = vmatprep.subr.bf16.mxu0 0
    %414 = vmatpush1.bf16.msra.mxu0 0
    %415 = vmatprep.subr.bf16.mxu0 0
    %416 = vmatpush1.bf16.msra.mxu0 0
    %417 = vmatprep.subr.bf16.mxu0 0
    %418 = vmatpush1.bf16.msra.mxu0 0
    %419 = vmatprep.subr.bf16.mxu0 0
    %420 = vmatpush1.bf16.msra.mxu0 0
    %421 = vmatprep.subr.bf16.mxu0 0
    %422 = vmatpush1.bf16.msra.mxu0 0
    %423 = vmatprep.subr.bf16.mxu0 0
    %424 = vmatpush1.bf16.msra.mxu0 0
    %425 = vmatprep.subr.bf16.mxu0 0
    %426 = vmatpush1.bf16.msra.mxu0 0
    %427 = vmatprep.subr.bf16.mxu0 0
    %428 = vmatpush1.bf16.msra.mxu0 0
    %429 = vmatprep.subr.bf16.mxu0 0
    %430 = vmatpush1.bf16.msra.mxu0 0
    %431 = vmatprep.mubr.bf16.mxu0 0
    %432 = vmatmul.mubr.bf16.gmra.mrb[0].mxu0 %v397
    %v433 = vpop.f32.mrb[0].mxu0
    %v434 = vadd.f32 0.0, %v433
    %v435 = vpop.f32.mrb[0].mxu0
    %v436 = vpop.f32.mrb[0].mxu0
    %v437 = vadd.f32 0.0, %v436
    %v438 = vpop.f32.mrb[0].mxu0
    %439 = vdwg.mxu0
    %v442 = vunpack.c.l.b16 %v379
    %v443 = vunpack.c.l.b16 %v380
    %v444 = vpack.c.b16 %v443, %v442
    %445 = vrot.lane.b32.xlu0 %v261, 127
    %v446 = vpop.permute.xlu0 %445
    %447 = vrot.lane.b32.xlu0 %v262, 127
    %v448 = vpop.permute.xlu0 %447
    %vm449 = vcmask 1039360
    %v450 = vsel %vm449, %v446, %v448
    %v453 = vsel %vm243, %v444, 0
    %455 = vmatprep.subr.bf16.mxu0 0
    %456 = vmatpush1.bf16.msra.mxu0 %v450
    %457 = vmatprep.subr.bf16.mxu0 0
    %458 = vmatpush1.bf16.msra.mxu0 0
    %459 = vmatprep.subr.bf16.mxu0 0
    %460 = vmatpush1.bf16.msra.mxu0 0
    %461 = vmatprep.subr.bf16.mxu0 0
    %462 = vmatpush1.bf16.msra.mxu0 0
    %463 = vmatprep.subr.bf16.mxu0 0
    %464 = vmatpush1.bf16.msra.mxu0 0
    %465 = vmatprep.subr.bf16.mxu0 0
    %466 = vmatpush1.bf16.msra.mxu0 0
    %467 = vmatprep.subr.bf16.mxu0 0
    %468 = vmatpush1.bf16.msra.mxu0 0
    %469 = vmatprep.subr.bf16.mxu0 0
    %470 = vmatpush1.bf16.msra.mxu0 0
    %471 = vmatprep.subr.bf16.mxu0 0
    %472 = vmatpush1.bf16.msra.mxu0 0
    %473 = vmatprep.subr.bf16.mxu0 0
    %474 = vmatpush1.bf16.msra.mxu0 0
    %475 = vmatprep.subr.bf16.mxu0 0
    %476 = vmatpush1.bf16.msra.mxu0 0
    %477 = vmatprep.subr.bf16.mxu0 0
    %478 = vmatpush1.bf16.msra.mxu0 0
    %479 = vmatprep.subr.bf16.mxu0 0
    %480 = vmatpush1.bf16.msra.mxu0 0
    %481 = vmatprep.subr.bf16.mxu0 0
    %482 = vmatpush1.bf16.msra.mxu0 0
    %483 = vmatprep.subr.bf16.mxu0 0
    %484 = vmatpush1.bf16.msra.mxu0 0
    %485 = vmatprep.subr.bf16.mxu0 0
    %486 = vmatpush1.bf16.msra.mxu0 0
    %487 = vmatprep.mubr.bf16.mxu0 0
    %488 = vmatmul.mubr.bf16.gmra.mrb[0].mxu0 %v453
    %v489 = vpop.f32.mrb[0].mxu0
    %v490 = vadd.f32 %v434, %v489
    %v491 = vpop.f32.mrb[0].mxu0
    %v492 = vpop.f32.mrb[0].mxu0
    %v493 = vadd.f32 %v437, %v492
    %v494 = vpop.f32.mrb[0].mxu0
    %495 = vdwg.mxu0
    %s496 = scalar_lea.vmem %s7, 16
    %v497 = vld [vmem:[%s496] sm:$0xf]
    %v498 = vld [vmem:[%s496 + $0x4] sm:$0xf]
    %v501 = vunpack.c.l.b16 %v497
    %v502 = vunpack.c.l.b16 %v498
    %v503 = vpack.c.b16 %v502, %v501
    %504 = vrot.lane.b32.xlu0 %v261, 125
    %v505 = vpop.permute.xlu0 %504
    %506 = vrot.lane.b32.xlu0 %v262, 125
    %v507 = vpop.permute.xlu0 %506
    %vm508 = vcmask 1022976
    %v509 = vsel %vm508, %v505, %v507
    %v512 = vsel %vm243, %v503, 0
    %514 = vmatprep.subr.bf16.mxu0 0
    %515 = vmatpush1.bf16.msra.mxu0 %v509
    %516 = vmatprep.subr.bf16.mxu0 0
    %517 = vmatpush1.bf16.msra.mxu0 0
    %518 = vmatprep.subr.bf16.mxu0 0
    %519 = vmatpush1.bf16.msra.mxu0 0
    %520 = vmatprep.subr.bf16.mxu0 0
    %521 = vmatpush1.bf16.msra.mxu0 0
    %522 = vmatprep.subr.bf16.mxu0 0
    %523 = vmatpush1.bf16.msra.mxu0 0
    %524 = vmatprep.subr.bf16.mxu0 0
    %525 = vmatpush1.bf16.msra.mxu0 0
    %526 = vmatprep.subr.bf16.mxu0 0
    %527 = vmatpush1.bf16.msra.mxu0 0
    %528 = vmatprep.subr.bf16.mxu0 0
    %529 = vmatpush1.bf16.msra.mxu0 0
    %530 = vmatprep.subr.bf16.mxu0 0
    %531 = vmatpush1.bf16.msra.mxu0 0
    %532 = vmatprep.subr.bf16.mxu0 0
    %533 = vmatpush1.bf16.msra.mxu0 0
    %534 = vmatprep.subr.bf16.mxu0 0
    %535 = vmatpush1.bf16.msra.mxu0 0
    %536 = vmatprep.subr.bf16.mxu0 0
    %537 = vmatpush1.bf16.msra.mxu0 0
    %538 = vmatprep.subr.bf16.mxu0 0
    %539 = vmatpush1.bf16.msra.mxu0 0
    %540 = vmatprep.subr.bf16.mxu0 0
    %541 = vmatpush1.bf16.msra.mxu0 0
    %542 = vmatprep.subr.bf16.mxu0 0
    %543 = vmatpush1.bf16.msra.mxu0 0
    %544 = vmatprep.subr.bf16.mxu0 0
    %545 = vmatpush1.bf16.msra.mxu0 0
    %546 = vmatprep.mubr.bf16.mxu0 0
    %547 = vmatmul.mubr.bf16.gmra.mrb[0].mxu0 %v512
    %v548 = vpop.f32.mrb[0].mxu0
    %v549 = vadd.f32 0.0, %v548
    %v550 = vpop.f32.mrb[0].mxu0
    %v551 = vpop.f32.mrb[0].mxu0
    %v552 = vadd.f32 0.0, %v551
    %v553 = vpop.f32.mrb[0].mxu0
    %554 = vdwg.mxu0
    %v555 = vadd.f32 %v490, %v549
    %v556 = vadd.f32 %v493, %v552
    %s557 = scalar_lea.vmem %s7, 24
    %v558 = vld [vmem:[%s557] sm:$0xf]
    %v559 = vld [vmem:[%s557 + $0x4] sm:$0xf]
    %v562 = vunpack.c.l.b16 %v558
    %v563 = vunpack.c.l.b16 %v559
    %v564 = vpack.c.b16 %v563, %v562
    %565 = vrot.lane.b32.xlu0 %v261, 124
    %v566 = vpop.permute.xlu0 %565
    %567 = vrot.lane.b32.xlu0 %v262, 124
    %v568 = vpop.permute.xlu0 %567
    %vm569 = vcmask 1014784
    %v570 = vsel %vm569, %v566, %v568
    %v573 = vsel %vm243, %v564, 0
    %575 = vmatprep.subr.bf16.mxu0 0
    %576 = vmatpush1.bf16.msra.mxu0 %v570
    %577 = vmatprep.subr.bf16.mxu0 0
    %578 = vmatpush1.bf16.msra.mxu0 0
    %579 = vmatprep.subr.bf16.mxu0 0
    %580 = vmatpush1.bf16.msra.mxu0 0
    %581 = vmatprep.subr.bf16.mxu0 0
    %582 = vmatpush1.bf16.msra.mxu0 0
    %583 = vmatprep.subr.bf16.mxu0 0
    %584 = vmatpush1.bf16.msra.mxu0 0
    %585 = vmatprep.subr.bf16.mxu0 0
    %586 = vmatpush1.bf16.msra.mxu0 0
    %587 = vmatprep.subr.bf16.mxu0 0
    %588 = vmatpush1.bf16.msra.mxu0 0
    %589 = vmatprep.subr.bf16.mxu0 0
    %590 = vmatpush1.bf16.msra.mxu0 0
    %591 = vmatprep.subr.bf16.mxu0 0
    %592 = vmatpush1.bf16.msra.mxu0 0
    %593 = vmatprep.subr.bf16.mxu0 0
    %594 = vmatpush1.bf16.msra.mxu0 0
    %595 = vmatprep.subr.bf16.mxu0 0
    %596 = vmatpush1.bf16.msra.mxu0 0
    %597 = vmatprep.subr.bf16.mxu0 0
    %598 = vmatpush1.bf16.msra.mxu0 0
    %599 = vmatprep.subr.bf16.mxu0 0
    %600 = vmatpush1.bf16.msra.mxu0 0
    %601 = vmatprep.subr.bf16.mxu0 0
    %602 = vmatpush1.bf16.msra.mxu0 0
    %603 = vmatprep.subr.bf16.mxu0 0
    %604 = vmatpush1.bf16.msra.mxu0 0
    %605 = vmatprep.subr.bf16.mxu0 0
    %606 = vmatpush1.bf16.msra.mxu0 0
    %607 = vmatprep.mubr.bf16.mxu0 0
    %608 = vmatmul.mubr.bf16.gmra.mrb[0].mxu0 %v573
    %v609 = vpop.f32.mrb[0].mxu0
    %v610 = vadd.f32 0.0, %v609
    %v611 = vpop.f32.mrb[0].mxu0
    %v612 = vpop.f32.mrb[0].mxu0
    %v613 = vadd.f32 0.0, %v612
    %v614 = vpop.f32.mrb[0].mxu0
    %615 = vdwg.mxu0
    %v616 = vadd.f32 %v555, %v610
    %v617 = vadd.f32 %v556, %v613
    %s618 = scalar_lea.vmem %s7, 32
    %v619 = vld [vmem:[%s618] sm:$0xf]
    %v620 = vld [vmem:[%s618 + $0x4] sm:$0xf]
    %v623 = vunpack.c.l.b16 %v619
    %v624 = vunpack.c.l.b16 %v620
    %v625 = vpack.c.b16 %v624, %v623
    %626 = vrot.lane.b32.xlu0 %v261, 123
    %v627 = vpop.permute.xlu0 %626
    %628 = vrot.lane.b32.xlu0 %v262, 123
    %v629 = vpop.permute.xlu0 %628
    %vm630 = vcmask 1006592
    %v631 = vsel %vm630, %v627, %v629
    %v634 = vsel %vm243, %v625, 0
    %636 = vmatprep.subr.bf16.mxu0 0
    %637 = vmatpush1.bf16.msra.mxu0 %v631
    %638 = vmatprep.subr.bf16.mxu0 0
    %639 = vmatpush1.bf16.msra.mxu0 0
    %640 = vmatprep.subr.bf16.mxu0 0
    %641 = vmatpush1.bf16.msra.mxu0 0
    %642 = vmatprep.subr.bf16.mxu0 0
    %643 = vmatpush1.bf16.msra.mxu0 0
    %644 = vmatprep.subr.bf16.mxu0 0
    %645 = vmatpush1.bf16.msra.mxu0 0
    %646 = vmatprep.subr.bf16.mxu0 0
    %647 = vmatpush1.bf16.msra.mxu0 0
    %648 = vmatprep.subr.bf16.mxu0 0
    %649 = vmatpush1.bf16.msra.mxu0 0
    %650 = vmatprep.subr.bf16.mxu0 0
    %651 = vmatpush1.bf16.msra.mxu0 0
    %652 = vmatprep.subr.bf16.mxu0 0
    %653 = vmatpush1.bf16.msra.mxu0 0
    %654 = vmatprep.subr.bf16.mxu0 0
    %655 = vmatpush1.bf16.msra.mxu0 0
    %656 = vmatprep.subr.bf16.mxu0 0
    %657 = vmatpush1.bf16.msra.mxu0 0
    %658 = vmatprep.subr.bf16.mxu0 0
    %659 = vmatpush1.bf16.msra.mxu0 0
    %660 = vmatprep.subr.bf16.mxu0 0
    %661 = vmatpush1.bf16.msra.mxu0 0
    %662 = vmatprep.subr.bf16.mxu0 0
    %663 = vmatpush1.bf16.msra.mxu0 0
    %664 = vmatprep.subr.bf16.mxu0 0
    %665 = vmatpush1.bf16.msra.mxu0 0
    %666 = vmatprep.subr.bf16.mxu0 0
    %667 = vmatpush1.bf16.msra.mxu0 0
    %668 = vmatprep.mubr.bf16.mxu0 0
    %669 = vmatmul.mubr.bf16.gmra.mrb[0].mxu0 %v634
    %v670 = vpop.f32.mrb[0].mxu0
    %v671 = vadd.f32 0.0, %v670
    %v672 = vpop.f32.mrb[0].mxu0
    %v673 = vpop.f32.mrb[0].mxu0
    %v674 = vadd.f32 0.0, %v673
    %v675 = vpop.f32.mrb[0].mxu0
    %676 = vdwg.mxu0
    %v677 = vadd.f32 %v616, %v671
    %v678 = vadd.f32 %v617, %v674
    %s679 = scalar_lea.vmem %s7, 40
    %v680 = vld [vmem:[%s679] sm:$0xf]
    %v681 = vld [vmem:[%s679 + $0x4] sm:$0xf]
    %v684 = vunpack.c.l.b16 %v680
    %v685 = vunpack.c.l.b16 %v681
    %v686 = vpack.c.b16 %v685, %v684
    %687 = vrot.lane.b32.xlu0 %v261, 122
    %v688 = vpop.permute.xlu0 %687
    %689 = vrot.lane.b32.xlu0 %v262, 122
    %v690 = vpop.permute.xlu0 %689
    %vm691 = vcmask 998400
    %v692 = vsel %vm691, %v688, %v690
    %v695 = vsel %vm243, %v686, 0
    %697 = vmatprep.subr.bf16.mxu0 0
    %698 = vmatpush1.bf16.msra.mxu0 %v692
    %699 = vmatprep.subr.bf16.mxu0 0
    %700 = vmatpush1.bf16.msra.mxu0 0
    %701 = vmatprep.subr.bf16.mxu0 0
    %702 = vmatpush1.bf16.msra.mxu0 0
    %703 = vmatprep.subr.bf16.mxu0 0
    %704 = vmatpush1.bf16.msra.mxu0 0
    %705 = vmatprep.subr.bf16.mxu0 0
    %706 = vmatpush1.bf16.msra.mxu0 0
    %707 = vmatprep.subr.bf16.mxu0 0
    %708 = vmatpush1.bf16.msra.mxu0 0
    %709 = vmatprep.subr.bf16.mxu0 0
    %710 = vmatpush1.bf16.msra.mxu0 0
    %711 = vmatprep.subr.bf16.mxu0 0
    %712 = vmatpush1.bf16.msra.mxu0 0
    %713 = vmatprep.subr.bf16.mxu0 0
    %714 = vmatpush1.bf16.msra.mxu0 0
    %715 = vmatprep.subr.bf16.mxu0 0
    %716 = vmatpush1.bf16.msra.mxu0 0
    %717 = vmatprep.subr.bf16.mxu0 0
    %718 = vmatpush1.bf16.msra.mxu0 0
    %719 = vmatprep.subr.bf16.mxu0 0
    %720 = vmatpush1.bf16.msra.mxu0 0
    %721 = vmatprep.subr.bf16.mxu0 0
    %722 = vmatpush1.bf16.msra.mxu0 0
    %723 = vmatprep.subr.bf16.mxu0 0
    %724 = vmatpush1.bf16.msra.mxu0 0
    %725 = vmatprep.subr.bf16.mxu0 0
    %726 = vmatpush1.bf16.msra.mxu0 0
    %727 = vmatprep.subr.bf16.mxu0 0
    %728 = vmatpush1.bf16.msra.mxu0 0
    %729 = vmatprep.mubr.bf16.mxu0 0
    %730 = vmatmul.mubr.bf16.gmra.mrb[0].mxu0 %v695
    %v731 = vpop.f32.mrb[0].mxu0
    %v732 = vadd.f32 0.0, %v731
    %v733 = vpop.f32.mrb[0].mxu0
    %v734 = vpop.f32.mrb[0].mxu0
    %v735 = vadd.f32 0.0, %v734
    %v736 = vpop.f32.mrb[0].mxu0
    %737 = vdwg.mxu0
    %v738 = vadd.f32 %v677, %v732
    %v739 = vadd.f32 %v678, %v735
    %s740 = scalar_lea.vmem %s7, 48
    %v741 = vld [vmem:[%s740] sm:$0xf]
    %v742 = vld [vmem:[%s740 + $0x4] sm:$0xf]
    %v745 = vunpack.c.l.b16 %v741
    %v746 = vunpack.c.l.b16 %v742
    %v747 = vpack.c.b16 %v746, %v745
    %748 = vrot.lane.b32.xlu0 %v261, 121
    %v749 = vpop.permute.xlu0 %748
    %750 = vrot.lane.b32.xlu0 %v262, 121
    %v751 = vpop.permute.xlu0 %750
    %vm752 = vcmask 990208
    %v753 = vsel %vm752, %v749, %v751
    %v756 = vsel %vm243, %v747, 0
    %758 = vmatprep.subr.bf16.mxu0 0
    %759 = vmatpush1.bf16.msra.mxu0 %v753
    %760 = vmatprep.subr.bf16.mxu0 0
    %761 = vmatpush1.bf16.msra.mxu0 0
    %762 = vmatprep.subr.bf16.mxu0 0
    %763 = vmatpush1.bf16.msra.mxu0 0
    %764 = vmatprep.subr.bf16.mxu0 0
    %765 = vmatpush1.bf16.msra.mxu0 0
    %766 = vmatprep.subr.bf16.mxu0 0
    %767 = vmatpush1.bf16.msra.mxu0 0
    %768 = vmatprep.subr.bf16.mxu0 0
    %769 = vmatpush1.bf16.msra.mxu0 0
    %770 = vmatprep.subr.bf16.mxu0 0
    %771 = vmatpush1.bf16.msra.mxu0 0
    %772 = vmatprep.subr.bf16.mxu0 0
    %773 = vmatpush1.bf16.msra.mxu0 0
    %774 = vmatprep.subr.bf16.mxu0 0
    %775 = vmatpush1.bf16.msra.mxu0 0
    %776 = vmatprep.subr.bf16.mxu0 0
    %777 = vmatpush1.bf16.msra.mxu0 0
    %778 = vmatprep.subr.bf16.mxu0 0
    %779 = vmatpush1.bf16.msra.mxu0 0
    %780 = vmatprep.subr.bf16.mxu0 0
    %781 = vmatpush1.bf16.msra.mxu0 0
    %782 = vmatprep.subr.bf16.mxu0 0
    %783 = vmatpush1.bf16.msra.mxu0 0
    %784 = vmatprep.subr.bf16.mxu0 0
    %785 = vmatpush1.bf16.msra.mxu0 0
    %786 = vmatprep.subr.bf16.mxu0 0
    %787 = vmatpush1.bf16.msra.mxu0 0
    %788 = vmatprep.subr.bf16.mxu0 0
    %789 = vmatpush1.bf16.msra.mxu0 0
    %790 = vmatprep.mubr.bf16.mxu0 0
    %791 = vmatmul.mubr.bf16.gmra.mrb[0].mxu0 %v756
    %v792 = vpop.f32.mrb[0].mxu0
    %v793 = vadd.f32 0.0, %v792
    %v794 = vpop.f32.mrb[0].mxu0
    %v795 = vpop.f32.mrb[0].mxu0
    %v796 = vadd.f32 0.0, %v795
    %v797 = vpop.f32.mrb[0].mxu0
    %798 = vdwg.mxu0
    %v799 = vadd.f32 %v738, %v793
    %v800 = vadd.f32 %v739, %v796
    %s801 = scalar_lea.vmem %s7, 56
    %v802 = vld [vmem:[%s801] sm:$0xf]
    %v803 = vld [vmem:[%s801 + $0x4] sm:$0xf]
    %v806 = vunpack.c.l.b16 %v802
    %v807 = vunpack.c.l.b16 %v803
    %v808 = vpack.c.b16 %v807, %v806
    %v810 = vsel %vm243, %v808, 0
    %812 = vmatprep.subr.bf16.mxu0 0
    %813 = vmatpush1.bf16.msra.mxu0 %v275
    %814 = vmatprep.subr.bf16.mxu0 0
    %815 = vmatpush1.bf16.msra.mxu0 0
    %816 = vmatprep.subr.bf16.mxu0 0
    %817 = vmatpush1.bf16.msra.mxu0 0
    %818 = vmatprep.subr.bf16.mxu0 0
    %819 = vmatpush1.bf16.msra.mxu0 0
    %820 = vmatprep.subr.bf16.mxu0 0
    %821 = vmatpush1.bf16.msra.mxu0 0
    %822 = vmatprep.subr.bf16.mxu0 0
    %823 = vmatpush1.bf16.msra.mxu0 0
    %824 = vmatprep.subr.bf16.mxu0 0
    %825 = vmatpush1.bf16.msra.mxu0 0
    %826 = vmatprep.subr.bf16.mxu0 0
    %827 = vmatpush1.bf16.msra.mxu0 0
    %828 = vmatprep.subr.bf16.mxu0 0
    %829 = vmatpush1.bf16.msra.mxu0 0
    %830 = vmatprep.subr.bf16.mxu0 0
    %831 = vmatpush1.bf16.msra.mxu0 0
    %832 = vmatprep.subr.bf16.mxu0 0
    %833 = vmatpush1.bf16.msra.mxu0 0
    %834 = vmatprep.subr.bf16.mxu0 0
    %835 = vmatpush1.bf16.msra.mxu0 0
    %836 = vmatprep.subr.bf16.mxu0 0
    %837 = vmatpush1.bf16.msra.mxu0 0
    %838 = vmatprep.subr.bf16.mxu0 0
    %839 = vmatpush1.bf16.msra.mxu0 0
    %840 = vmatprep.subr.bf16.mxu0 0
    %841 = vmatpush1.bf16.msra.mxu0 0
    %842 = vmatprep.subr.bf16.mxu0 0
    %843 = vmatpush1.bf16.msra.mxu0 0
    %844 = vmatprep.mubr.bf16.mxu0 0
    %845 = vmatmul.mubr.bf16.gmra.mrb[0].mxu0 %v810
    %v846 = vpop.f32.mrb[0].mxu0
    %v847 = vadd.f32 0.0, %v846
    %v848 = vpop.f32.mrb[0].mxu0
    %v849 = vpop.f32.mrb[0].mxu0
    %v850 = vadd.f32 0.0, %v849
    %v851 = vpop.f32.mrb[0].mxu0
    %852 = vdwg.mxu0
    %v853 = vadd.f32 %v799, %v847
    %v854 = vadd.f32 %v800, %v850
    %s855 = scalar_lea.vmem %s7, 64
    %v856 = vld [vmem:[%s855] sm:$0xf]
    %v857 = vld [vmem:[%s855 + $0x4] sm:$0xf]
    %v860 = vunpack.c.l.b16 %v856
    %v861 = vunpack.c.l.b16 %v857
    %v862 = vpack.c.b16 %v861, %v860
    %863 = vrot.lane.b32.xlu0 %v261, 119
    %v864 = vpop.permute.xlu0 %863
    %865 = vrot.lane.b32.xlu0 %v262, 119
    %v866 = vpop.permute.xlu0 %865
    %vm867 = vcmask 973824
    %v868 = vsel %vm867, %v864, %v866
    %v871 = vsel %vm243, %v862, 0
    %873 = vmatprep.subr.bf16.mxu0 0
    %874 = vmatpush1.bf16.msra.mxu0 %v868
    %875 = vmatprep.subr.bf16.mxu0 0
    %876 = vmatpush1.bf16.msra.mxu0 0
    %877 = vmatprep.subr.bf16.mxu0 0
    %878 = vmatpush1.bf16.msra.mxu0 0
    %879 = vmatprep.subr.bf16.mxu0 0
    %880 = vmatpush1.bf16.msra.mxu0 0
    %881 = vmatprep.subr.bf16.mxu0 0
    %882 = vmatpush1.bf16.msra.mxu0 0
    %883 = vmatprep.subr.bf16.mxu0 0
    %884 = vmatpush1.bf16.msra.mxu0 0
    %885 = vmatprep.subr.bf16.mxu0 0
    %886 = vmatpush1.bf16.msra.mxu0 0
    %887 = vmatprep.subr.bf16.mxu0 0
    %888 = vmatpush1.bf16.msra.mxu0 0
    %889 = vmatprep.subr.bf16.mxu0 0
    %890 = vmatpush1.bf16.msra.mxu0 0
    %891 = vmatprep.subr.bf16.mxu0 0
    %892 = vmatpush1.bf16.msra.mxu0 0
    %893 = vmatprep.subr.bf16.mxu0 0
    %894 = vmatpush1.bf16.msra.mxu0 0
    %895 = vmatprep.subr.bf16.mxu0 0
    %896 = vmatpush1.bf16.msra.mxu0 0
    %897 = vmatprep.subr.bf16.mxu0 0
    %898 = vmatpush1.bf16.msra.mxu0 0
    %899 = vmatprep.subr.bf16.mxu0 0
    %900 = vmatpush1.bf16.msra.mxu0 0
    %901 = vmatprep.subr.bf16.mxu0 0
    %902 = vmatpush1.bf16.msra.mxu0 0
    %903 = vmatprep.subr.bf16.mxu0 0
    %904 = vmatpush1.bf16.msra.mxu0 0
    %905 = vmatprep.mubr.bf16.mxu0 0
    %906 = vmatmul.mubr.bf16.gmra.mrb[0].mxu0 %v871
    %v907 = vpop.f32.mrb[0].mxu0
    %v908 = vadd.f32 0.0, %v907
    %v909 = vpop.f32.mrb[0].mxu0
    %v910 = vpop.f32.mrb[0].mxu0
    %v911 = vadd.f32 0.0, %v910
    %v912 = vpop.f32.mrb[0].mxu0
    %913 = vdwg.mxu0
    %v914 = vadd.f32 %v853, %v908
    %v915 = vadd.f32 %v854, %v911
    %s916 = scalar_lea.vmem %s7, 72
    %v917 = vld [vmem:[%s916] sm:$0xf]
    %v918 = vld [vmem:[%s916 + $0x4] sm:$0xf]
    %v921 = vunpack.c.l.b16 %v917
    %v922 = vunpack.c.l.b16 %v918
    %v923 = vpack.c.b16 %v922, %v921
    %924 = vrot.lane.b32.xlu0 %v261, 118
    %v925 = vpop.permute.xlu0 %924
    %926 = vrot.lane.b32.xlu0 %v262, 118
    %v927 = vpop.permute.xlu0 %926
    %vm928 = vcmask 965632
    %v929 = vsel %vm928, %v925, %v927
    %v932 = vsel %vm243, %v923, 0
    %934 = vmatprep.subr.bf16.mxu0 0
    %935 = vmatpush1.bf16.msra.mxu0 %v929
    %936 = vmatprep.subr.bf16.mxu0 0
    %937 = vmatpush1.bf16.msra.mxu0 0
    %938 = vmatprep.subr.bf16.mxu0 0
    %939 = vmatpush1.bf16.msra.mxu0 0
    %940 = vmatprep.subr.bf16.mxu0 0
    %941 = vmatpush1.bf16.msra.mxu0 0
    %942 = vmatprep.subr.bf16.mxu0 0
    %943 = vmatpush1.bf16.msra.mxu0 0
    %944 = vmatprep.subr.bf16.mxu0 0
    %945 = vmatpush1.bf16.msra.mxu0 0
    %946 = vmatprep.subr.bf16.mxu0 0
    %947 = vmatpush1.bf16.msra.mxu0 0
    %948 = vmatprep.subr.bf16.mxu0 0
    %949 = vmatpush1.bf16.msra.mxu0 0
    %950 = vmatprep.subr.bf16.mxu0 0
    %951 = vmatpush1.bf16.msra.mxu0 0
    %952 = vmatprep.subr.bf16.mxu0 0
    %953 = vmatpush1.bf16.msra.mxu0 0
    %954 = vmatprep.subr.bf16.mxu0 0
    %955 = vmatpush1.bf16.msra.mxu0 0
    %956 = vmatprep.subr.bf16.mxu0 0
    %957 = vmatpush1.bf16.msra.mxu0 0
    %958 = vmatprep.subr.bf16.mxu0 0
    %959 = vmatpush1.bf16.msra.mxu0 0
    %960 = vmatprep.subr.bf16.mxu0 0
    %961 = vmatpush1.bf16.msra.mxu0 0
    %962 = vmatprep.subr.bf16.mxu0 0
    %963 = vmatpush1.bf16.msra.mxu0 0
    %964 = vmatprep.subr.bf16.mxu0 0
    %965 = vmatpush1.bf16.msra.mxu0 0
    %966 = vmatprep.mubr.bf16.mxu0 0
    %967 = vmatmul.mubr.bf16.gmra.mrb[0].mxu0 %v932
    %v968 = vpop.f32.mrb[0].mxu0
    %v969 = vadd.f32 0.0, %v968
    %v970 = vpop.f32.mrb[0].mxu0
    %v971 = vpop.f32.mrb[0].mxu0
    %v972 = vadd.f32 0.0, %v971
    %v973 = vpop.f32.mrb[0].mxu0
    %974 = vdwg.mxu0
    %v975 = vadd.f32 %v914, %v969
    %v976 = vadd.f32 %v915, %v972
    %s977 = scalar_lea.vmem %s7, 80
    %v978 = vld [vmem:[%s977] sm:$0xf]
    %v979 = vld [vmem:[%s977 + $0x4] sm:$0xf]
    %v982 = vunpack.c.l.b16 %v978
    %v983 = vunpack.c.l.b16 %v979
    %v984 = vpack.c.b16 %v983, %v982
    %985 = vrot.lane.b32.xlu0 %v261, 117
    %v986 = vpop.permute.xlu0 %985
    %987 = vrot.lane.b32.xlu0 %v262, 117
    %v988 = vpop.permute.xlu0 %987
    %vm989 = vcmask 957440
    %v990 = vsel %vm989, %v986, %v988
    %v993 = vsel %vm243, %v984, 0
    %995 = vmatprep.subr.bf16.mxu0 0
    %996 = vmatpush1.bf16.msra.mxu0 %v990
    %997 = vmatprep.subr.bf16.mxu0 0
    %998 = vmatpush1.bf16.msra.mxu0 0
    %999 = vmatprep.subr.bf16.mxu0 0
    %1000 = vmatpush1.bf16.msra.mxu0 0
    %1001 = vmatprep.subr.bf16.mxu0 0
    %1002 = vmatpush1.bf16.msra.mxu0 0
    %1003 = vmatprep.subr.bf16.mxu0 0
    %1004 = vmatpush1.bf16.msra.mxu0 0
    %1005 = vmatprep.subr.bf16.mxu0 0
    %1006 = vmatpush1.bf16.msra.mxu0 0
    %1007 = vmatprep.subr.bf16.mxu0 0
    %1008 = vmatpush1.bf16.msra.mxu0 0
    %1009 = vmatprep.subr.bf16.mxu0 0
    %1010 = vmatpush1.bf16.msra.mxu0 0
    %1011 = vmatprep.subr.bf16.mxu0 0
    %1012 = vmatpush1.bf16.msra.mxu0 0
    %1013 = vmatprep.subr.bf16.mxu0 0
    %1014 = vmatpush1.bf16.msra.mxu0 0
    %1015 = vmatprep.subr.bf16.mxu0 0
    %1016 = vmatpush1.bf16.msra.mxu0 0
    %1017 = vmatprep.subr.bf16.mxu0 0
    %1018 = vmatpush1.bf16.msra.mxu0 0
    %1019 = vmatprep.subr.bf16.mxu0 0
    %1020 = vmatpush1.bf16.msra.mxu0 0
    %1021 = vmatprep.subr.bf16.mxu0 0
    %1022 = vmatpush1.bf16.msra.mxu0 0
    %1023 = vmatprep.subr.bf16.mxu0 0
    %1024 = vmatpush1.bf16.msra.mxu0 0
    %1025 = vmatprep.subr.bf16.mxu0 0
    %1026 = vmatpush1.bf16.msra.mxu0 0
    %1027 = vmatprep.mubr.bf16.mxu0 0
    %1028 = vmatmul.mubr.bf16.gmra.mrb[0].mxu0 %v993
    %v1029 = vpop.f32.mrb[0].mxu0
    %v1030 = vadd.f32 0.0, %v1029
    %v1031 = vpop.f32.mrb[0].mxu0
    %v1032 = vpop.f32.mrb[0].mxu0
    %v1033 = vadd.f32 0.0, %v1032
    %v1034 = vpop.f32.mrb[0].mxu0
    %1035 = vdwg.mxu0
    %v1036 = vadd.f32 %v975, %v1030
    %v1037 = vadd.f32 %v976, %v1033
    %s1038 = scalar_lea.vmem %s7, 88
    %v1039 = vld [vmem:[%s1038] sm:$0xf]
    %v1040 = vld [vmem:[%s1038 + $0x4] sm:$0xf]
    %v1043 = vunpack.c.l.b16 %v1039
    %v1044 = vunpack.c.l.b16 %v1040
    %v1045 = vpack.c.b16 %v1044, %v1043
    %1046 = vrot.lane.b32.xlu0 %v261, 116
    %v1047 = vpop.permute.xlu0 %1046
    %1048 = vrot.lane.b32.xlu0 %v262, 116
    %v1049 = vpop.permute.xlu0 %1048
    %vm1050 = vcmask 949248
    %v1051 = vsel %vm1050, %v1047, %v1049
    %v1054 = vsel %vm243, %v1045, 0
    %1056 = vmatprep.subr.bf16.mxu0 0
    %1057 = vmatpush1.bf16.msra.mxu0 %v1051
    %1058 = vmatprep.subr.bf16.mxu0 0
    %1059 = vmatpush1.bf16.msra.mxu0 0
    %1060 = vmatprep.subr.bf16.mxu0 0
    %1061 = vmatpush1.bf16.msra.mxu0 0
    %1062 = vmatprep.subr.bf16.mxu0 0
    %1063 = vmatpush1.bf16.msra.mxu0 0
    %1064 = vmatprep.subr.bf16.mxu0 0
    %1065 = vmatpush1.bf16.msra.mxu0 0
    %1066 = vmatprep.subr.bf16.mxu0 0
    %1067 = vmatpush1.bf16.msra.mxu0 0
    %1068 = vmatprep.subr.bf16.mxu0 0
    %1069 = vmatpush1.bf16.msra.mxu0 0
    %1070 = vmatprep.subr.bf16.mxu0 0
    %1071 = vmatpush1.bf16.msra.mxu0 0
    %1072 = vmatprep.subr.bf16.mxu0 0
    %1073 = vmatpush1.bf16.msra.mxu0 0
    %1074 = vmatprep.subr.bf16.mxu0 0
    %1075 = vmatpush1.bf16.msra.mxu0 0
    %1076 = vmatprep.subr.bf16.mxu0 0
    %1077 = vmatpush1.bf16.msra.mxu0 0
    %1078 = vmatprep.subr.bf16.mxu0 0
    %1079 = vmatpush1.bf16.msra.mxu0 0
    %1080 = vmatprep.subr.bf16.mxu0 0
    %1081 = vmatpush1.bf16.msra.mxu0 0
    %1082 = vmatprep.subr.bf16.mxu0 0
    %1083 = vmatpush1.bf16.msra.mxu0 0
    %1084 = vmatprep.subr.bf16.mxu0 0
    %1085 = vmatpush1.bf16.msra.mxu0 0
    %1086 = vmatprep.subr.bf16.mxu0 0
    %1087 = vmatpush1.bf16.msra.mxu0 0
    %1088 = vmatprep.mubr.bf16.mxu0 0
    %1089 = vmatmul.mubr.bf16.gmra.mrb[0].mxu0 %v1054
    %v1090 = vpop.f32.mrb[0].mxu0
    %v1091 = vadd.f32 0.0, %v1090
    %v1092 = vpop.f32.mrb[0].mxu0
    %v1093 = vpop.f32.mrb[0].mxu0
    %v1094 = vadd.f32 0.0, %v1093
    %v1095 = vpop.f32.mrb[0].mxu0
    %1096 = vdwg.mxu0
    %v1097 = vadd.f32 %v1036, %v1091
    %v1098 = vadd.f32 %v1037, %v1094
    %s1099 = scalar_lea.vmem %s7, 96
    %v1100 = vld [vmem:[%s1099] sm:$0xf]
    %v1101 = vld [vmem:[%s1099 + $0x4] sm:$0xf]
    %v1104 = vunpack.c.l.b16 %v1100
    %v1105 = vunpack.c.l.b16 %v1101
    %v1106 = vpack.c.b16 %v1105, %v1104
    %1107 = vrot.lane.b32.xlu0 %v261, 115
    %v1108 = vpop.permute.xlu0 %1107
    %1109 = vrot.lane.b32.xlu0 %v262, 115
    %v1110 = vpop.permute.xlu0 %1109
    %vm1111 = vcmask 941056
    %v1112 = vsel %vm1111, %v1108, %v1110
    %v1115 = vsel %vm243, %v1106, 0
    %1117 = vmatprep.subr.bf16.mxu0 0
    %1118 = vmatpush1.bf16.msra.mxu0 %v1112
    %1119 = vmatprep.subr.bf16.mxu0 0
    %1120 = vmatpush1.bf16.msra.mxu0 0
    %1121 = vmatprep.subr.bf16.mxu0 0
    %1122 = vmatpush1.bf16.msra.mxu0 0
    %1123 = vmatprep.subr.bf16.mxu0 0
    %1124 = vmatpush1.bf16.msra.mxu0 0
    %1125 = vmatprep.subr.bf16.mxu0 0
    %1126 = vmatpush1.bf16.msra.mxu0 0
    %1127 = vmatprep.subr.bf16.mxu0 0
    %1128 = vmatpush1.bf16.msra.mxu0 0
    %1129 = vmatprep.subr.bf16.mxu0 0
    %1130 = vmatpush1.bf16.msra.mxu0 0
    %1131 = vmatprep.subr.bf16.mxu0 0
    %1132 = vmatpush1.bf16.msra.mxu0 0
    %1133 = vmatprep.subr.bf16.mxu0 0
    %1134 = vmatpush1.bf16.msra.mxu0 0
    %1135 = vmatprep.subr.bf16.mxu0 0
    %1136 = vmatpush1.bf16.msra.mxu0 0
    %1137 = vmatprep.subr.bf16.mxu0 0
    %1138 = vmatpush1.bf16.msra.mxu0 0
    %1139 = vmatprep.subr.bf16.mxu0 0
    %1140 = vmatpush1.bf16.msra.mxu0 0
    %1141 = vmatprep.subr.bf16.mxu0 0
    %1142 = vmatpush1.bf16.msra.mxu0 0
    %1143 = vmatprep.subr.bf16.mxu0 0
    %1144 = vmatpush1.bf16.msra.mxu0 0
    %1145 = vmatprep.subr.bf16.mxu0 0
    %1146 = vmatpush1.bf16.msra.mxu0 0
    %1147 = vmatprep.subr.bf16.mxu0 0
    %1148 = vmatpush1.bf16.msra.mxu0 0
    %1149 = vmatprep.mubr.bf16.mxu0 0
    %1150 = vmatmul.mubr.bf16.gmra.mrb[0].mxu0 %v1115
    %v1151 = vpop.f32.mrb[0].mxu0
    %v1152 = vadd.f32 0.0, %v1151
    %v1153 = vpop.f32.mrb[0].mxu0
    %v1154 = vpop.f32.mrb[0].mxu0
    %v1155 = vadd.f32 0.0, %v1154
    %v1156 = vpop.f32.mrb[0].mxu0
    %1157 = vdwg.mxu0
    %v1158 = vadd.f32 %v1097, %v1152
    %v1159 = vadd.f32 %v1098, %v1155
    %s1160 = scalar_lea.vmem %s7, 104
    %v1161 = vld [vmem:[%s1160] sm:$0xf]
    %v1162 = vld [vmem:[%s1160 + $0x4] sm:$0xf]
    %v1165 = vunpack.c.l.b16 %v1161
    %v1166 = vunpack.c.l.b16 %v1162
    %v1167 = vpack.c.b16 %v1166, %v1165
    %1168 = vrot.lane.b32.xlu0 %v261, 114
    %v1169 = vpop.permute.xlu0 %1168
    %1170 = vrot.lane.b32.xlu0 %v262, 114
    %v1171 = vpop.permute.xlu0 %1170
    %vm1172 = vcmask 932864
    %v1173 = vsel %vm1172, %v1169, %v1171
    %v1176 = vsel %vm243, %v1167, 0
    %1178 = vmatprep.subr.bf16.mxu0 0
    %1179 = vmatpush1.bf16.msra.mxu0 %v1173
    %1180 = vmatprep.subr.bf16.mxu0 0
    %1181 = vmatpush1.bf16.msra.mxu0 0
    %1182 = vmatprep.subr.bf16.mxu0 0
    %1183 = vmatpush1.bf16.msra.mxu0 0
    %1184 = vmatprep.subr.bf16.mxu0 0
    %1185 = vmatpush1.bf16.msra.mxu0 0
    %1186 = vmatprep.subr.bf16.mxu0 0
    %1187 = vmatpush1.bf16.msra.mxu0 0
    %1188 = vmatprep.subr.bf16.mxu0 0
    %1189 = vmatpush1.bf16.msra.mxu0 0
    %1190 = vmatprep.subr.bf16.mxu0 0
    %1191 = vmatpush1.bf16.msra.mxu0 0
    %1192 = vmatprep.subr.bf16.mxu0 0
    %1193 = vmatpush1.bf16.msra.mxu0 0
    %1194 = vmatprep.subr.bf16.mxu0 0
    %1195 = vmatpush1.bf16.msra.mxu0 0
    %1196 = vmatprep.subr.bf16.mxu0 0
    %1197 = vmatpush1.bf16.msra.mxu0 0
    %1198 = vmatprep.subr.bf16.mxu0 0
    %1199 = vmatpush1.bf16.msra.mxu0 0
    %1200 = vmatprep.subr.bf16.mxu0 0
    %1201 = vmatpush1.bf16.msra.mxu0 0
    %1202 = vmatprep.subr.bf16.mxu0 0
    %1203 = vmatpush1.bf16.msra.mxu0 0
    %1204 = vmatprep.subr.bf16.mxu0 0
    %1205 = vmatpush1.bf16.msra.mxu0 0
    %1206 = vmatprep.subr.bf16.mxu0 0
    %1207 = vmatpush1.bf16.msra.mxu0 0
    %1208 = vmatprep.subr.bf16.mxu0 0
    %1209 = vmatpush1.bf16.msra.mxu0 0
    %1210 = vmatprep.mubr.bf16.mxu0 0
    %1211 = vmatmul.mubr.bf16.gmra.mrb[0].mxu0 %v1176
    %v1212 = vpop.f32.mrb[0].mxu0
    %v1213 = vadd.f32 0.0, %v1212
    %v1214 = vpop.f32.mrb[0].mxu0
    %v1215 = vpop.f32.mrb[0].mxu0
    %v1216 = vadd.f32 0.0, %v1215
    %v1217 = vpop.f32.mrb[0].mxu0
    %1218 = vdwg.mxu0
    %v1219 = vadd.f32 %v1158, %v1213
    %v1220 = vadd.f32 %v1159, %v1216
    %s1221 = scalar_lea.vmem %s7, 112
    %v1222 = vld [vmem:[%s1221] sm:$0xf]
    %v1223 = vld [vmem:[%s1221 + $0x4] sm:$0xf]
    %v1226 = vunpack.c.l.b16 %v1222
    %v1227 = vunpack.c.l.b16 %v1223
    %v1228 = vpack.c.b16 %v1227, %v1226
    %1229 = vrot.lane.b32.xlu0 %v261, 113
    %v1230 = vpop.permute.xlu0 %1229
    %1231 = vrot.lane.b32.xlu0 %v262, 113
    %v1232 = vpop.permute.xlu0 %1231
    %vm1233 = vcmask 924672
    %v1234 = vsel %vm1233, %v1230, %v1232
    %v1237 = vsel %vm243, %v1228, 0
    %1239 = vmatprep.subr.bf16.mxu0 0
    %1240 = vmatpush1.bf16.msra.mxu0 %v1234
    %1241 = vmatprep.subr.bf16.mxu0 0
    %1242 = vmatpush1.bf16.msra.mxu0 0
    %1243 = vmatprep.subr.bf16.mxu0 0
    %1244 = vmatpush1.bf16.msra.mxu0 0
    %1245 = vmatprep.subr.bf16.mxu0 0
    %1246 = vmatpush1.bf16.msra.mxu0 0
    %1247 = vmatprep.subr.bf16.mxu0 0
    %1248 = vmatpush1.bf16.msra.mxu0 0
    %1249 = vmatprep.subr.bf16.mxu0 0
    %1250 = vmatpush1.bf16.msra.mxu0 0
    %1251 = vmatprep.subr.bf16.mxu0 0
    %1252 = vmatpush1.bf16.msra.mxu0 0
    %1253 = vmatprep.subr.bf16.mxu0 0
    %1254 = vmatpush1.bf16.msra.mxu0 0
    %1255 = vmatprep.subr.bf16.mxu0 0
    %1256 = vmatpush1.bf16.msra.mxu0 0
    %1257 = vmatprep.subr.bf16.mxu0 0
    %1258 = vmatpush1.bf16.msra.mxu0 0
    %1259 = vmatprep.subr.bf16.mxu0 0
    %1260 = vmatpush1.bf16.msra.mxu0 0
    %1261 = vmatprep.subr.bf16.mxu0 0
    %1262 = vmatpush1.bf16.msra.mxu0 0
    %1263 = vmatprep.subr.bf16.mxu0 0
    %1264 = vmatpush1.bf16.msra.mxu0 0
    %1265 = vmatprep.subr.bf16.mxu0 0
    %1266 = vmatpush1.bf16.msra.mxu0 0
    %1267 = vmatprep.subr.bf16.mxu0 0
    %1268 = vmatpush1.bf16.msra.mxu0 0
    %1269 = vmatprep.subr.bf16.mxu0 0
    %1270 = vmatpush1.bf16.msra.mxu0 0
    %1271 = vmatprep.mubr.bf16.mxu0 0
    %1272 = vmatmul.mubr.bf16.gmra.mrb[0].mxu0 %v1237
    %v1273 = vpop.f32.mrb[0].mxu0
    %v1274 = vadd.f32 0.0, %v1273
    %v1275 = vpop.f32.mrb[0].mxu0
    %v1276 = vpop.f32.mrb[0].mxu0
    %v1277 = vadd.f32 0.0, %v1276
    %v1278 = vpop.f32.mrb[0].mxu0
    %1279 = vdwg.mxu0
    %v1280 = vadd.f32 %v1219, %v1274
    %v1281 = vadd.f32 %v1220, %v1277
    %v1282 = vmul.f32 %v1280, %v240
    %v1283 = vmul.f32 %v1281, %v240
    %1284 = vadd.xlane.f32.xlu0 %v1282
    %v1285 = vpop.xlane.xlu0 %1284
    %1286 = vadd.xlane.f32.xlu0 %v1283
    %v1287 = vpop.xlane.xlu0 %1286
    %v1288 = vmul.f32 %v1285, 0.03125
    %v1289 = vmul.f32 %v1287, 0.03125
    %v1290 = vsub.f32 %v1280, %v1288
    %v1291 = vsub.f32 %v1281, %v1289
    %v1292 = vmul.f32 %v1290, %v240
    %v1293 = vmul.f32 %v1291, %v240
    %v1294 = vmul.f32 %v1292, %v1292
    %v1295 = vmul.f32 %v1293, %v1293
    %1296 = vadd.xlane.f32.xlu0 %v1294
    %v1297 = vpop.xlane.xlu0 %1296
    %1298 = vadd.xlane.f32.xlu0 %v1295
    %v1299 = vpop.xlane.xlu0 %1298
    %v1300 = vmul.f32 %v1297, 0.03125
    %v1301 = vmul.f32 %v1299, 0.03125
    %v1302 = vld [vmem:[%s9] sm:$0xff]
    %v1303 = vld [vmem:[%s9 + $0x8] sm:$0xff]
    %v1304 = vadd.f32 %v1300, 1e-05
    %v1305 = vadd.f32 %v1301, 1e-05
    %v1306 = vrsqrt.pop %v1304
    %v1307 = vrsqrt.pop %v1305
    %v1308 = vmul.f32 %v1302, %v1306
    %v1309 = vmul.f32 %v1303, %v1307
    %v1310 = vld [vmem:[%s11] sm:$0xff]
    %v1311 = vld [vmem:[%s11 + $0x8] sm:$0xff]
    %v1312 = vmul.f32 %v1288, %v1308
    %v1313 = vmul.f32 %v1289, %v1309
    %v1314 = vsub.f32 %v1310, %v1312
    %v1315 = vsub.f32 %v1311, %v1313
    %1317 = vset.pattern.permute.xlu0 0
    %1318 = vperm.xlu0 %1317, %v1308
    %v1319 = vpop.permute.xlu0 %1318
    %1322 = vset.pattern.permute.xlu0 0
    %1323 = vperm.xlu0 %1322, %v1309
    %v1324 = vpop.permute.xlu0 %1323
    %v1326 = vmul.f32 %v1280, %v1319
    %v1327 = vmul.f32 %v1281, %v1324
    %1329 = vset.pattern.permute.xlu0 0
    %1330 = vperm.xlu0 %1329, %v1314
    %v1331 = vpop.permute.xlu0 %1330
    %1334 = vset.pattern.permute.xlu0 0
    %1335 = vperm.xlu0 %1334, %v1315
    %v1336 = vpop.permute.xlu0 %1335
    %v1338 = vadd.f32 %v1326, %v1331
    %v1339 = vadd.f32 %v1327, %v1336
    %v1340 = vmax.f32 %v1338, 0.0
    %v1341 = vmax.f32 %v1339, 0.0
    %v1342 = vmul.f32 %v1340, %v240
    %v1343 = vmul.f32 %v1341, %v240
    %v1344 = vpack.c.bf16 %v1343, %v1342
    %1346 = vrot.lane.b32.xlu0 %v1344, 8
    %v1347 = vpop.permute.xlu0 %1346
    %1349 = vst.msk [vmem:[#allocation2] sm:$0xff] %vm255, %v1347
    %1350 = vst.msk [vmem:[#allocation2 + $0x8] sm:$0xff] %vm257, %v1347
    %v1351 = vld [vmem:[#allocation2] sm:$0xff]
    %v1352 = vld [vmem:[#allocation2 + $0x8] sm:$0xff]
    %v1353 = vld [vmem:[%s19] sm:$0xf]
    %v1354 = vld [vmem:[%s19 + $0x4] sm:$0xf]
    %s1355 = scalar_lea.vmem %s19, 8
    %v1356 = vld [vmem:[%s1355] sm:$0xf]
    %v1357 = vld [vmem:[%s1355 + $0x4] sm:$0xf]
    %v1360 = vunpack.c.l.b16 %v1356
    %v1361 = vunpack.c.l.b16 %v1357
    %v1362 = vpack.c.b16 %v1361, %v1360
    %1365 = vrot.lane.b32.xlu0 %v1351, 123
    %v1366 = vpop.permute.xlu0 %1365
    %1367 = vrot.lane.b32.xlu0 %v1352, 123
    %v1368 = vpop.permute.xlu0 %1367
    %v1369 = vsel %vm630, %v1366, %v1368
    %v1372 = vsel %vm243, %v1362, 0
    %1374 = vmatprep.subr.bf16.mxu0 0
    %1375 = vmatpush1.bf16.msra.mxu0 %v1369
    %1376 = vmatprep.subr.bf16.mxu0 0
    %1377 = vmatpush1.bf16.msra.mxu0 0
    %1378 = vmatprep.subr.bf16.mxu0 0
    %1379 = vmatpush1.bf16.msra.mxu0 0
    %1380 = vmatprep.subr.bf16.mxu0 0
    %1381 = vmatpush1.bf16.msra.mxu0 0
    %1382 = vmatprep.subr.bf16.mxu0 0
    %1383 = vmatpush1.bf16.msra.mxu0 0
    %1384 = vmatprep.subr.bf16.mxu0 0
    %1385 = vmatpush1.bf16.msra.mxu0 0
    %1386 = vmatprep.subr.bf16.mxu0 0
    %1387 = vmatpush1.bf16.msra.mxu0 0
    %1388 = vmatprep.subr.bf16.mxu0 0
    %1389 = vmatpush1.bf16.msra.mxu0 0
    %1390 = vmatprep.subr.bf16.mxu0 0
    %1391 = vmatpush1.bf16.msra.mxu0 0
    %1392 = vmatprep.subr.bf16.mxu0 0
    %1393 = vmatpush1.bf16.msra.mxu0 0
    %1394 = vmatprep.subr.bf16.mxu0 0
    %1395 = vmatpush1.bf16.msra.mxu0 0
    %1396 = vmatprep.subr.bf16.mxu0 0
    %1397 = vmatpush1.bf16.msra.mxu0 0
    %1398 = vmatprep.subr.bf16.mxu0 0
    %1399 = vmatpush1.bf16.msra.mxu0 0
    %1400 = vmatprep.subr.bf16.mxu0 0
    %1401 = vmatpush1.bf16.msra.mxu0 0
    %1402 = vmatprep.subr.bf16.mxu0 0
    %1403 = vmatpush1.bf16.msra.mxu0 0
    %1404 = vmatprep.subr.bf16.mxu0 0
    %1405 = vmatpush1.bf16.msra.mxu0 0
    %1406 = vmatprep.mubr.bf16.mxu0 0
    %1407 = vmatmul.mubr.bf16.gmra.mrb[0].mxu0 %v1372
    %v1408 = vpop.f32.mrb[0].mxu0
    %v1409 = vadd.f32 0.0, %v1408
    %v1410 = vpop.f32.mrb[0].mxu0
    %v1411 = vpop.f32.mrb[0].mxu0
    %v1412 = vadd.f32 0.0, %v1411
    %v1413 = vpop.f32.mrb[0].mxu0
    %1414 = vdwg.mxu0
    %v1417 = vunpack.c.l.b16 %v1353
    %v1418 = vunpack.c.l.b16 %v1354
    %v1419 = vpack.c.b16 %v1418, %v1417
    %1420 = vrot.lane.b32.xlu0 %v1351, 124
    %v1421 = vpop.permute.xlu0 %1420
    %1422 = vrot.lane.b32.xlu0 %v1352, 124
    %v1423 = vpop.permute.xlu0 %1422
    %v1424 = vsel %vm569, %v1421, %v1423
    %v1427 = vsel %vm243, %v1419, 0
    %1429 = vmatprep.subr.bf16.mxu0 0
    %1430 = vmatpush1.bf16.msra.mxu0 %v1424
    %1431 = vmatprep.subr.bf16.mxu0 0
    %1432 = vmatpush1.bf16.msra.mxu0 0
    %1433 = vmatprep.subr.bf16.mxu0 0
    %1434 = vmatpush1.bf16.msra.mxu0 0
    %1435 = vmatprep.subr.bf16.mxu0 0
    %1436 = vmatpush1.bf16.msra.mxu0 0
    %1437 = vmatprep.subr.bf16.mxu0 0
    %1438 = vmatpush1.bf16.msra.mxu0 0
    %1439 = vmatprep.subr.bf16.mxu0 0
    %1440 = vmatpush1.bf16.msra.mxu0 0
    %1441 = vmatprep.subr.bf16.mxu0 0
    %1442 = vmatpush1.bf16.msra.mxu0 0
    %1443 = vmatprep.subr.bf16.mxu0 0
    %1444 = vmatpush1.bf16.msra.mxu0 0
    %1445 = vmatprep.subr.bf16.mxu0 0
    %1446 = vmatpush1.bf16.msra.mxu0 0
    %1447 = vmatprep.subr.bf16.mxu0 0
    %1448 = vmatpush1.bf16.msra.mxu0 0
    %1449 = vmatprep.subr.bf16.mxu0 0
    %1450 = vmatpush1.bf16.msra.mxu0 0
    %1451 = vmatprep.subr.bf16.mxu0 0
    %1452 = vmatpush1.bf16.msra.mxu0 0
    %1453 = vmatprep.subr.bf16.mxu0 0
    %1454 = vmatpush1.bf16.msra.mxu0 0
    %1455 = vmatprep.subr.bf16.mxu0 0
    %1456 = vmatpush1.bf16.msra.mxu0 0
    %1457 = vmatprep.subr.bf16.mxu0 0
    %1458 = vmatpush1.bf16.msra.mxu0 0
    %1459 = vmatprep.subr.bf16.mxu0 0
    %1460 = vmatpush1.bf16.msra.mxu0 0
    %1461 = vmatprep.mubr.bf16.mxu0 0
    %1462 = vmatmul.mubr.bf16.gmra.mrb[0].mxu0 %v1427
    %v1463 = vpop.f32.mrb[0].mxu0
    %v1464 = vadd.f32 %v1409, %v1463
    %v1465 = vpop.f32.mrb[0].mxu0
    %v1466 = vpop.f32.mrb[0].mxu0
    %v1467 = vadd.f32 %v1412, %v1466
    %v1468 = vpop.f32.mrb[0].mxu0
    %1469 = vdwg.mxu0
    %s1470 = scalar_lea.vmem %s19, 16
    %v1471 = vld [vmem:[%s1470] sm:$0xf]
    %v1472 = vld [vmem:[%s1470 + $0x4] sm:$0xf]
    %v1475 = vunpack.c.l.b16 %v1471
    %v1476 = vunpack.c.l.b16 %v1472
    %v1477 = vpack.c.b16 %v1476, %v1475
    %1478 = vrot.lane.b32.xlu0 %v1351, 122
    %v1479 = vpop.permute.xlu0 %1478
    %1480 = vrot.lane.b32.xlu0 %v1352, 122
    %v1481 = vpop.permute.xlu0 %1480
    %v1482 = vsel %vm691, %v1479, %v1481
    %v1485 = vsel %vm243, %v1477, 0
    %1487 = vmatprep.subr.bf16.mxu0 0
    %1488 = vmatpush1.bf16.msra.mxu0 %v1482
    %1489 = vmatprep.subr.bf16.mxu0 0
    %1490 = vmatpush1.bf16.msra.mxu0 0
    %1491 = vmatprep.subr.bf16.mxu0 0
    %1492 = vmatpush1.bf16.msra.mxu0 0
    %1493 = vmatprep.subr.bf16.mxu0 0
    %1494 = vmatpush1.bf16.msra.mxu0 0
    %1495 = vmatprep.subr.bf16.mxu0 0
    %1496 = vmatpush1.bf16.msra.mxu0 0
    %1497 = vmatprep.subr.bf16.mxu0 0
    %1498 = vmatpush1.bf16.msra.mxu0 0
    %1499 = vmatprep.subr.bf16.mxu0 0
    %1500 = vmatpush1.bf16.msra.mxu0 0
    %1501 = vmatprep.subr.bf16.mxu0 0
    %1502 = vmatpush1.bf16.msra.mxu0 0
    %1503 = vmatprep.subr.bf16.mxu0 0
    %1504 = vmatpush1.bf16.msra.mxu0 0
    %1505 = vmatprep.subr.bf16.mxu0 0
    %1506 = vmatpush1.bf16.msra.mxu0 0
    %1507 = vmatprep.subr.bf16.mxu0 0
    %1508 = vmatpush1.bf16.msra.mxu0 0
    %1509 = vmatprep.subr.bf16.mxu0 0
    %1510 = vmatpush1.bf16.msra.mxu0 0
    %1511 = vmatprep.subr.bf16.mxu0 0
    %1512 = vmatpush1.bf16.msra.mxu0 0
    %1513 = vmatprep.subr.bf16.mxu0 0
    %1514 = vmatpush1.bf16.msra.mxu0 0
    %1515 = vmatprep.subr.bf16.mxu0 0
    %1516 = vmatpush1.bf16.msra.mxu0 0
    %1517 = vmatprep.subr.bf16.mxu0 0
    %1518 = vmatpush1.bf16.msra.mxu0 0
    %1519 = vmatprep.mubr.bf16.mxu0 0
    %1520 = vmatmul.mubr.bf16.gmra.mrb[0].mxu0 %v1485
    %v1521 = vpop.f32.mrb[0].mxu0
    %v1522 = vadd.f32 0.0, %v1521
    %v1523 = vpop.f32.mrb[0].mxu0
    %v1524 = vpop.f32.mrb[0].mxu0
    %v1525 = vadd.f32 0.0, %v1524
    %v1526 = vpop.f32.mrb[0].mxu0
    %1527 = vdwg.mxu0
    %v1528 = vadd.f32 %v1464, %v1522
    %v1529 = vadd.f32 %v1467, %v1525
    %s1530 = scalar_lea.vmem %s19, 24
    %v1531 = vld [vmem:[%s1530] sm:$0xf]
    %v1532 = vld [vmem:[%s1530 + $0x4] sm:$0xf]
    %v1535 = vunpack.c.l.b16 %v1531
    %v1536 = vunpack.c.l.b16 %v1532
    %v1537 = vpack.c.b16 %v1536, %v1535
    %1538 = vrot.lane.b32.xlu0 %v1351, 121
    %v1539 = vpop.permute.xlu0 %1538
    %1540 = vrot.lane.b32.xlu0 %v1352, 121
    %v1541 = vpop.permute.xlu0 %1540
    %v1542 = vsel %vm752, %v1539, %v1541
    %v1545 = vsel %vm243, %v1537, 0
    %1547 = vmatprep.subr.bf16.mxu0 0
    %1548 = vmatpush1.bf16.msra.mxu0 %v1542
    %1549 = vmatprep.subr.bf16.mxu0 0
    %1550 = vmatpush1.bf16.msra.mxu0 0
    %1551 = vmatprep.subr.bf16.mxu0 0
    %1552 = vmatpush1.bf16.msra.mxu0 0
    %1553 = vmatprep.subr.bf16.mxu0 0
    %1554 = vmatpush1.bf16.msra.mxu0 0
    %1555 = vmatprep.subr.bf16.mxu0 0
    %1556 = vmatpush1.bf16.msra.mxu0 0
    %1557 = vmatprep.subr.bf16.mxu0 0
    %1558 = vmatpush1.bf16.msra.mxu0 0
    %1559 = vmatprep.subr.bf16.mxu0 0
    %1560 = vmatpush1.bf16.msra.mxu0 0
    %1561 = vmatprep.subr.bf16.mxu0 0
    %1562 = vmatpush1.bf16.msra.mxu0 0
    %1563 = vmatprep.subr.bf16.mxu0 0
    %1564 = vmatpush1.bf16.msra.mxu0 0
    %1565 = vmatprep.subr.bf16.mxu0 0
    %1566 = vmatpush1.bf16.msra.mxu0 0
    %1567 = vmatprep.subr.bf16.mxu0 0
    %1568 = vmatpush1.bf16.msra.mxu0 0
    %1569 = vmatprep.subr.bf16.mxu0 0
    %1570 = vmatpush1.bf16.msra.mxu0 0
    %1571 = vmatprep.subr.bf16.mxu0 0
    %1572 = vmatpush1.bf16.msra.mxu0 0
    %1573 = vmatprep.subr.bf16.mxu0 0
    %1574 = vmatpush1.bf16.msra.mxu0 0
    %1575 = vmatprep.subr.bf16.mxu0 0
    %1576 = vmatpush1.bf16.msra.mxu0 0
    %1577 = vmatprep.subr.bf16.mxu0 0
    %1578 = vmatpush1.bf16.msra.mxu0 0
    %1579 = vmatprep.mubr.bf16.mxu0 0
    %1580 = vmatmul.mubr.bf16.gmra.mrb[0].mxu0 %v1545
    %v1581 = vpop.f32.mrb[0].mxu0
    %v1582 = vadd.f32 0.0, %v1581
    %v1583 = vpop.f32.mrb[0].mxu0
    %v1584 = vpop.f32.mrb[0].mxu0
    %v1585 = vadd.f32 0.0, %v1584
    %v1586 = vpop.f32.mrb[0].mxu0
    %1587 = vdwg.mxu0
    %v1588 = vadd.f32 %v1528, %v1582
    %v1589 = vadd.f32 %v1529, %v1585
    %s1590 = scalar_lea.vmem %s19, 32
    %v1591 = vld [vmem:[%s1590] sm:$0xf]
    %v1592 = vld [vmem:[%s1590 + $0x4] sm:$0xf]
    %v1595 = vunpack.c.l.b16 %v1591
    %v1596 = vunpack.c.l.b16 %v1592
    %v1597 = vpack.c.b16 %v1596, %v1595
    %1598 = vrot.lane.b32.xlu0 %v1351, 120
    %v1599 = vpop.permute.xlu0 %1598
    %1600 = vrot.lane.b32.xlu0 %v1352, 120
    %v1601 = vpop.permute.xlu0 %1600
    %v1602 = vsel %vm274, %v1599, %v1601
    %v1605 = vsel %vm243, %v1597, 0
    %1607 = vmatprep.subr.bf16.mxu0 0
    %1608 = vmatpush1.bf16.msra.mxu0 %v1602
    %1609 = vmatprep.subr.bf16.mxu0 0
    %1610 = vmatpush1.bf16.msra.mxu0 0
    %1611 = vmatprep.subr.bf16.mxu0 0
    %1612 = vmatpush1.bf16.msra.mxu0 0
    %1613 = vmatprep.subr.bf16.mxu0 0
    %1614 = vmatpush1.bf16.msra.mxu0 0
    %1615 = vmatprep.subr.bf16.mxu0 0
    %1616 = vmatpush1.bf16.msra.mxu0 0
    %1617 = vmatprep.subr.bf16.mxu0 0
    %1618 = vmatpush1.bf16.msra.mxu0 0
    %1619 = vmatprep.subr.bf16.mxu0 0
    %1620 = vmatpush1.bf16.msra.mxu0 0
    %1621 = vmatprep.subr.bf16.mxu0 0
    %1622 = vmatpush1.bf16.msra.mxu0 0
    %1623 = vmatprep.subr.bf16.mxu0 0
    %1624 = vmatpush1.bf16.msra.mxu0 0
    %1625 = vmatprep.subr.bf16.mxu0 0
    %1626 = vmatpush1.bf16.msra.mxu0 0
    %1627 = vmatprep.subr.bf16.mxu0 0
    %1628 = vmatpush1.bf16.msra.mxu0 0
    %1629 = vmatprep.subr.bf16.mxu0 0
    %1630 = vmatpush1.bf16.msra.mxu0 0
    %1631 = vmatprep.subr.bf16.mxu0 0
    %1632 = vmatpush1.bf16.msra.mxu0 0
    %1633 = vmatprep.subr.bf16.mxu0 0
    %1634 = vmatpush1.bf16.msra.mxu0 0
    %1635 = vmatprep.subr.bf16.mxu0 0
    %1636 = vmatpush1.bf16.msra.mxu0 0
    %1637 = vmatprep.subr.bf16.mxu0 0
    %1638 = vmatpush1.bf16.msra.mxu0 0
    %1639 = vmatprep.mubr.bf16.mxu0 0
    %1640 = vmatmul.mubr.bf16.gmra.mrb[0].mxu0 %v1605
    %v1641 = vpop.f32.mrb[0].mxu0
    %v1642 = vadd.f32 0.0, %v1641
    %v1643 = vpop.f32.mrb[0].mxu0
    %v1644 = vpop.f32.mrb[0].mxu0
    %v1645 = vadd.f32 0.0, %v1644
    %v1646 = vpop.f32.mrb[0].mxu0
    %1647 = vdwg.mxu0
    %v1648 = vadd.f32 %v1588, %v1642
    %v1649 = vadd.f32 %v1589, %v1645
    %s1650 = scalar_lea.vmem %s19, 40
    %v1651 = vld [vmem:[%s1650] sm:$0xf]
    %v1652 = vld [vmem:[%s1650 + $0x4] sm:$0xf]
    %v1655 = vunpack.c.l.b16 %v1651
    %v1656 = vunpack.c.l.b16 %v1652
    %v1657 = vpack.c.b16 %v1656, %v1655
    %1658 = vrot.lane.b32.xlu0 %v1351, 119
    %v1659 = vpop.permute.xlu0 %1658
    %1660 = vrot.lane.b32.xlu0 %v1352, 119
    %v1661 = vpop.permute.xlu0 %1660
    %v1662 = vsel %vm867, %v1659, %v1661
    %v1665 = vsel %vm243, %v1657, 0
    %1667 = vmatprep.subr.bf16.mxu0 0
    %1668 = vmatpush1.bf16.msra.mxu0 %v1662
    %1669 = vmatprep.subr.bf16.mxu0 0
    %1670 = vmatpush1.bf16.msra.mxu0 0
    %1671 = vmatprep.subr.bf16.mxu0 0
    %1672 = vmatpush1.bf16.msra.mxu0 0
    %1673 = vmatprep.subr.bf16.mxu0 0
    %1674 = vmatpush1.bf16.msra.mxu0 0
    %1675 = vmatprep.subr.bf16.mxu0 0
    %1676 = vmatpush1.bf16.msra.mxu0 0
    %1677 = vmatprep.subr.bf16.mxu0 0
    %1678 = vmatpush1.bf16.msra.mxu0 0
    %1679 = vmatprep.subr.bf16.mxu0 0
    %1680 = vmatpush1.bf16.msra.mxu0 0
    %1681 = vmatprep.subr.bf16.mxu0 0
    %1682 = vmatpush1.bf16.msra.mxu0 0
    %1683 = vmatprep.subr.bf16.mxu0 0
    %1684 = vmatpush1.bf16.msra.mxu0 0
    %1685 = vmatprep.subr.bf16.mxu0 0
    %1686 = vmatpush1.bf16.msra.mxu0 0
    %1687 = vmatprep.subr.bf16.mxu0 0
    %1688 = vmatpush1.bf16.msra.mxu0 0
    %1689 = vmatprep.subr.bf16.mxu0 0
    %1690 = vmatpush1.bf16.msra.mxu0 0
    %1691 = vmatprep.subr.bf16.mxu0 0
    %1692 = vmatpush1.bf16.msra.mxu0 0
    %1693 = vmatprep.subr.bf16.mxu0 0
    %1694 = vmatpush1.bf16.msra.mxu0 0
    %1695 = vmatprep.subr.bf16.mxu0 0
    %1696 = vmatpush1.bf16.msra.mxu0 0
    %1697 = vmatprep.subr.bf16.mxu0 0
    %1698 = vmatpush1.bf16.msra.mxu0 0
    %1699 = vmatprep.mubr.bf16.mxu0 0
    %1700 = vmatmul.mubr.bf16.gmra.mrb[0].mxu0 %v1665
    %v1701 = vpop.f32.mrb[0].mxu0
    %v1702 = vadd.f32 0.0, %v1701
    %v1703 = vpop.f32.mrb[0].mxu0
    %v1704 = vpop.f32.mrb[0].mxu0
    %v1705 = vadd.f32 0.0, %v1704
    %v1706 = vpop.f32.mrb[0].mxu0
    %1707 = vdwg.mxu0
    %v1708 = vadd.f32 %v1648, %v1702
    %v1709 = vadd.f32 %v1649, %v1705
    %s1710 = scalar_lea.vmem %s19, 48
    %v1711 = vld [vmem:[%s1710] sm:$0xf]
    %v1712 = vld [vmem:[%s1710 + $0x4] sm:$0xf]
    %v1715 = vunpack.c.l.b16 %v1711
    %v1716 = vunpack.c.l.b16 %v1712
    %v1717 = vpack.c.b16 %v1716, %v1715
    %1718 = vrot.lane.b32.xlu0 %v1351, 118
    %v1719 = vpop.permute.xlu0 %1718
    %1720 = vrot.lane.b32.xlu0 %v1352, 118
    %v1721 = vpop.permute.xlu0 %1720
    %v1722 = vsel %vm928, %v1719, %v1721
    %v1725 = vsel %vm243, %v1717, 0
    %1727 = vmatprep.subr.bf16.mxu0 0
    %1728 = vmatpush1.bf16.msra.mxu0 %v1722
    %1729 = vmatprep.subr.bf16.mxu0 0
    %1730 = vmatpush1.bf16.msra.mxu0 0
    %1731 = vmatprep.subr.bf16.mxu0 0
    %1732 = vmatpush1.bf16.msra.mxu0 0
    %1733 = vmatprep.subr.bf16.mxu0 0
    %1734 = vmatpush1.bf16.msra.mxu0 0
    %1735 = vmatprep.subr.bf16.mxu0 0
    %1736 = vmatpush1.bf16.msra.mxu0 0
    %1737 = vmatprep.subr.bf16.mxu0 0
    %1738 = vmatpush1.bf16.msra.mxu0 0
    %1739 = vmatprep.subr.bf16.mxu0 0
    %1740 = vmatpush1.bf16.msra.mxu0 0
    %1741 = vmatprep.subr.bf16.mxu0 0
    %1742 = vmatpush1.bf16.msra.mxu0 0
    %1743 = vmatprep.subr.bf16.mxu0 0
    %1744 = vmatpush1.bf16.msra.mxu0 0
    %1745 = vmatprep.subr.bf16.mxu0 0
    %1746 = vmatpush1.bf16.msra.mxu0 0
    %1747 = vmatprep.subr.bf16.mxu0 0
    %1748 = vmatpush1.bf16.msra.mxu0 0
    %1749 = vmatprep.subr.bf16.mxu0 0
    %1750 = vmatpush1.bf16.msra.mxu0 0
    %1751 = vmatprep.subr.bf16.mxu0 0
    %1752 = vmatpush1.bf16.msra.mxu0 0
    %1753 = vmatprep.subr.bf16.mxu0 0
    %1754 = vmatpush1.bf16.msra.mxu0 0
    %1755 = vmatprep.subr.bf16.mxu0 0
    %1756 = vmatpush1.bf16.msra.mxu0 0
    %1757 = vmatprep.subr.bf16.mxu0 0
    %1758 = vmatpush1.bf16.msra.mxu0 0
    %1759 = vmatprep.mubr.bf16.mxu0 0
    %1760 = vmatmul.mubr.bf16.gmra.mrb[0].mxu0 %v1725
    %v1761 = vpop.f32.mrb[0].mxu0
    %v1762 = vadd.f32 0.0, %v1761
    %v1763 = vpop.f32.mrb[0].mxu0
    %v1764 = vpop.f32.mrb[0].mxu0
    %v1765 = vadd.f32 0.0, %v1764
    %v1766 = vpop.f32.mrb[0].mxu0
    %1767 = vdwg.mxu0
    %v1768 = vadd.f32 %v1708, %v1762
    %v1769 = vadd.f32 %v1709, %v1765
    %s1770 = scalar_lea.vmem %s19, 56
    %v1771 = vld [vmem:[%s1770] sm:$0xf]
    %v1772 = vld [vmem:[%s1770 + $0x4] sm:$0xf]
    %v1775 = vunpack.c.l.b16 %v1771
    %v1776 = vunpack.c.l.b16 %v1772
    %v1777 = vpack.c.b16 %v1776, %v1775
    %1778 = vrot.lane.b32.xlu0 %v1351, 117
    %v1779 = vpop.permute.xlu0 %1778
    %1780 = vrot.lane.b32.xlu0 %v1352, 117
    %v1781 = vpop.permute.xlu0 %1780
    %v1782 = vsel %vm989, %v1779, %v1781
    %v1785 = vsel %vm243, %v1777, 0
    %1787 = vmatprep.subr.bf16.mxu0 0
    %1788 = vmatpush1.bf16.msra.mxu0 %v1782
    %1789 = vmatprep.subr.bf16.mxu0 0
    %1790 = vmatpush1.bf16.msra.mxu0 0
    %1791 = vmatprep.subr.bf16.mxu0 0
    %1792 = vmatpush1.bf16.msra.mxu0 0
    %1793 = vmatprep.subr.bf16.mxu0 0
    %1794 = vmatpush1.bf16.msra.mxu0 0
    %1795 = vmatprep.subr.bf16.mxu0 0
    %1796 = vmatpush1.bf16.msra.mxu0 0
    %1797 = vmatprep.subr.bf16.mxu0 0
    %1798 = vmatpush1.bf16.msra.mxu0 0
    %1799 = vmatprep.subr.bf16.mxu0 0
    %1800 = vmatpush1.bf16.msra.mxu0 0
    %1801 = vmatprep.subr.bf16.mxu0 0
    %1802 = vmatpush1.bf16.msra.mxu0 0
    %1803 = vmatprep.subr.bf16.mxu0 0
    %1804 = vmatpush1.bf16.msra.mxu0 0
    %1805 = vmatprep.subr.bf16.mxu0 0
    %1806 = vmatpush1.bf16.msra.mxu0 0
    %1807 = vmatprep.subr.bf16.mxu0 0
    %1808 = vmatpush1.bf16.msra.mxu0 0
    %1809 = vmatprep.subr.bf16.mxu0 0
    %1810 = vmatpush1.bf16.msra.mxu0 0
    %1811 = vmatprep.subr.bf16.mxu0 0
    %1812 = vmatpush1.bf16.msra.mxu0 0
    %1813 = vmatprep.subr.bf16.mxu0 0
    %1814 = vmatpush1.bf16.msra.mxu0 0
    %1815 = vmatprep.subr.bf16.mxu0 0
    %1816 = vmatpush1.bf16.msra.mxu0 0
    %1817 = vmatprep.subr.bf16.mxu0 0
    %1818 = vmatpush1.bf16.msra.mxu0 0
    %1819 = vmatprep.mubr.bf16.mxu0 0
    %1820 = vmatmul.mubr.bf16.gmra.mrb[0].mxu0 %v1785
    %v1821 = vpop.f32.mrb[0].mxu0
    %v1822 = vadd.f32 0.0, %v1821
    %v1823 = vpop.f32.mrb[0].mxu0
    %v1824 = vpop.f32.mrb[0].mxu0
    %v1825 = vadd.f32 0.0, %v1824
    %v1826 = vpop.f32.mrb[0].mxu0
    %1827 = vdwg.mxu0
    %v1828 = vadd.f32 %v1768, %v1822
    %v1829 = vadd.f32 %v1769, %v1825
    %s1830 = scalar_lea.vmem %s19, 64
    %v1831 = vld [vmem:[%s1830] sm:$0xf]
    %v1832 = vld [vmem:[%s1830 + $0x4] sm:$0xf]
    %v1835 = vunpack.c.l.b16 %v1831
    %v1836 = vunpack.c.l.b16 %v1832
    %v1837 = vpack.c.b16 %v1836, %v1835
    %1838 = vrot.lane.b32.xlu0 %v1351, 116
    %v1839 = vpop.permute.xlu0 %1838
    %1840 = vrot.lane.b32.xlu0 %v1352, 116
    %v1841 = vpop.permute.xlu0 %1840
    %v1842 = vsel %vm1050, %v1839, %v1841
    %v1845 = vsel %vm243, %v1837, 0
    %1847 = vmatprep.subr.bf16.mxu0 0
    %1848 = vmatpush1.bf16.msra.mxu0 %v1842
    %1849 = vmatprep.subr.bf16.mxu0 0
    %1850 = vmatpush1.bf16.msra.mxu0 0
    %1851 = vmatprep.subr.bf16.mxu0 0
    %1852 = vmatpush1.bf16.msra.mxu0 0
    %1853 = vmatprep.subr.bf16.mxu0 0
    %1854 = vmatpush1.bf16.msra.mxu0 0
    %1855 = vmatprep.subr.bf16.mxu0 0
    %1856 = vmatpush1.bf16.msra.mxu0 0
    %1857 = vmatprep.subr.bf16.mxu0 0
    %1858 = vmatpush1.bf16.msra.mxu0 0
    %1859 = vmatprep.subr.bf16.mxu0 0
    %1860 = vmatpush1.bf16.msra.mxu0 0
    %1861 = vmatprep.subr.bf16.mxu0 0
    %1862 = vmatpush1.bf16.msra.mxu0 0
    %1863 = vmatprep.subr.bf16.mxu0 0
    %1864 = vmatpush1.bf16.msra.mxu0 0
    %1865 = vmatprep.subr.bf16.mxu0 0
    %1866 = vmatpush1.bf16.msra.mxu0 0
    %1867 = vmatprep.subr.bf16.mxu0 0
    %1868 = vmatpush1.bf16.msra.mxu0 0
    %1869 = vmatprep.subr.bf16.mxu0 0
    %1870 = vmatpush1.bf16.msra.mxu0 0
    %1871 = vmatprep.subr.bf16.mxu0 0
    %1872 = vmatpush1.bf16.msra.mxu0 0
    %1873 = vmatprep.subr.bf16.mxu0 0
    %1874 = vmatpush1.bf16.msra.mxu0 0
    %1875 = vmatprep.subr.bf16.mxu0 0
    %1876 = vmatpush1.bf16.msra.mxu0 0
    %1877 = vmatprep.subr.bf16.mxu0 0
    %1878 = vmatpush1.bf16.msra.mxu0 0
    %1879 = vmatprep.mubr.bf16.mxu0 0
    %1880 = vmatmul.mubr.bf16.gmra.mrb[0].mxu0 %v1845
    %v1881 = vpop.f32.mrb[0].mxu0
    %v1882 = vadd.f32 0.0, %v1881
    %v1883 = vpop.f32.mrb[0].mxu0
    %v1884 = vpop.f32.mrb[0].mxu0
    %v1885 = vadd.f32 0.0, %v1884
    %v1886 = vpop.f32.mrb[0].mxu0
    %1887 = vdwg.mxu0
    %v1888 = vadd.f32 %v1828, %v1882
    %v1889 = vadd.f32 %v1829, %v1885
    %v1890 = vmul.f32 %v1888, %v240
    %v1891 = vmul.f32 %v1889, %v240
    %1892 = vadd.xlane.f32.xlu0 %v1890
    %v1893 = vpop.xlane.xlu0 %1892
    %1894 = vadd.xlane.f32.xlu0 %v1891
    %v1895 = vpop.xlane.xlu0 %1894
    %v1896 = vmul.f32 %v1893, 0.03125
    %v1897 = vmul.f32 %v1895, 0.03125
    %v1898 = vsub.f32 %v1888, %v1896
    %v1899 = vsub.f32 %v1889, %v1897
    %v1900 = vmul.f32 %v1898, %v240
    %v1901 = vmul.f32 %v1899, %v240
    %v1902 = vmul.f32 %v1900, %v1900
    %v1903 = vmul.f32 %v1901, %v1901
    %1904 = vadd.xlane.f32.xlu0 %v1902
    %v1905 = vpop.xlane.xlu0 %1904
    %1906 = vadd.xlane.f32.xlu0 %v1903
    %v1907 = vpop.xlane.xlu0 %1906
    %v1908 = vmul.f32 %v1905, 0.03125
    %v1909 = vmul.f32 %v1907, 0.03125
    %v1910 = vld [vmem:[%s21] sm:$0xff]
    %v1911 = vld [vmem:[%s21 + $0x8] sm:$0xff]
    %v1912 = vadd.f32 %v1908, 1e-05
    %v1913 = vadd.f32 %v1909, 1e-05
    %v1914 = vrsqrt.pop %v1912
    %v1915 = vrsqrt.pop %v1913
    %v1916 = vmul.f32 %v1910, %v1914
    %v1917 = vmul.f32 %v1911, %v1915
    %v1918 = vld [vmem:[%s23] sm:$0xff]
    %v1919 = vld [vmem:[%s23 + $0x8] sm:$0xff]
    %v1920 = vmul.f32 %v1896, %v1916
    %v1921 = vmul.f32 %v1897, %v1917
    %v1922 = vsub.f32 %v1918, %v1920
    %v1923 = vsub.f32 %v1919, %v1921
    %1925 = vset.pattern.permute.xlu0 0
    %1926 = vperm.xlu0 %1925, %v1916
    %v1927 = vpop.permute.xlu0 %1926
    %1930 = vset.pattern.permute.xlu0 0
    %1931 = vperm.xlu0 %1930, %v1917
    %v1932 = vpop.permute.xlu0 %1931
    %v1934 = vmul.f32 %v1888, %v1927
    %v1935 = vmul.f32 %v1889, %v1932
    %1937 = vset.pattern.permute.xlu0 0
    %1938 = vperm.xlu0 %1937, %v1922
    %v1939 = vpop.permute.xlu0 %1938
    %1942 = vset.pattern.permute.xlu0 0
    %1943 = vperm.xlu0 %1942, %v1923
    %v1944 = vpop.permute.xlu0 %1943
    %v1946 = vadd.f32 %v1934, %v1939
    %v1947 = vadd.f32 %v1935, %v1944
    %v1948 = vmax.f32 %v1946, 0.0
    %v1949 = vmax.f32 %v1947, 0.0
    %v1950 = vmul.f32 %v1948, %v240
    %v1951 = vmul.f32 %v1949, %v240
    %v1952 = vpack.c.bf16 %v1951, %v1950
    %1954 = vrot.lane.b32.xlu0 %v1952, 8
    %v1955 = vpop.permute.xlu0 %1954
    %1957 = vst.msk [vmem:[#allocation2] sm:$0xff] %vm255, %v1955
    %1958 = vst.msk [vmem:[#allocation2 + $0x8] sm:$0xff] %vm257, %v1955
    %v1959 = vld [vmem:[#allocation2] sm:$0xff]
    %v1960 = vld [vmem:[#allocation2 + $0x8] sm:$0xff]
    %v1961 = vld [vmem:[%s25] sm:$0xf]
    %v1962 = vld [vmem:[%s25 + $0x4] sm:$0xf]
    %s1963 = scalar_lea.vmem %s25, 8
    %v1964 = vld [vmem:[%s1963] sm:$0xf]
    %v1965 = vld [vmem:[%s1963 + $0x4] sm:$0xf]
    %v1968 = vunpack.c.l.b16 %v1964
    %v1969 = vunpack.c.l.b16 %v1965
    %v1970 = vpack.c.b16 %v1969, %v1968
    %1973 = vrot.lane.b32.xlu0 %v1959, 120
    %v1974 = vpop.permute.xlu0 %1973
    %1975 = vrot.lane.b32.xlu0 %v1960, 120
    %v1976 = vpop.permute.xlu0 %1975
    %v1977 = vsel %vm274, %v1974, %v1976
    %v1980 = vsel %vm243, %v1970, 0
    %1982 = vmatprep.subr.bf16.mxu0 0
    %1983 = vmatpush1.bf16.msra.mxu0 %v1977
    %1984 = vmatprep.subr.bf16.mxu0 0
    %1985 = vmatpush1.bf16.msra.mxu0 0
    %1986 = vmatprep.subr.bf16.mxu0 0
    %1987 = vmatpush1.bf16.msra.mxu0 0
    %1988 = vmatprep.subr.bf16.mxu0 0
    %1989 = vmatpush1.bf16.msra.mxu0 0
    %1990 = vmatprep.subr.bf16.mxu0 0
    %1991 = vmatpush1.bf16.msra.mxu0 0
    %1992 = vmatprep.subr.bf16.mxu0 0
    %1993 = vmatpush1.bf16.msra.mxu0 0
    %1994 = vmatprep.subr.bf16.mxu0 0
    %1995 = vmatpush1.bf16.msra.mxu0 0
    %1996 = vmatprep.subr.bf16.mxu0 0
    %1997 = vmatpush1.bf16.msra.mxu0 0
    %1998 = vmatprep.subr.bf16.mxu0 0
    %1999 = vmatpush1.bf16.msra.mxu0 0
    %2000 = vmatprep.subr.bf16.mxu0 0
    %2001 = vmatpush1.bf16.msra.mxu0 0
    %2002 = vmatprep.subr.bf16.mxu0 0
    %2003 = vmatpush1.bf16.msra.mxu0 0
    %2004 = vmatprep.subr.bf16.mxu0 0
    %2005 = vmatpush1.bf16.msra.mxu0 0
    %2006 = vmatprep.subr.bf16.mxu0 0
    %2007 = vmatpush1.bf16.msra.mxu0 0
    %2008 = vmatprep.subr.bf16.mxu0 0
    %2009 = vmatpush1.bf16.msra.mxu0 0
    %2010 = vmatprep.subr.bf16.mxu0 0
    %2011 = vmatpush1.bf16.msra.mxu0 0
    %2012 = vmatprep.subr.bf16.mxu0 0
    %2013 = vmatpush1.bf16.msra.mxu0 0
    %2014 = vmatprep.mubr.bf16.mxu0 0
    %2015 = vmatmul.mubr.bf16.gmra.mrb[0].mxu0 %v1980
    %v2016 = vpop.f32.mrb[0].mxu0
    %v2017 = vadd.f32 0.0, %v2016
    %v2018 = vpop.f32.mrb[0].mxu0
    %v2019 = vpop.f32.mrb[0].mxu0
    %v2020 = vadd.f32 0.0, %v2019
    %v2021 = vpop.f32.mrb[0].mxu0
    %2022 = vdwg.mxu0
    %v2025 = vunpack.c.l.b16 %v1961
    %v2026 = vunpack.c.l.b16 %v1962
    %v2027 = vpack.c.b16 %v2026, %v2025
    %2028 = vrot.lane.b32.xlu0 %v1959, 121
    %v2029 = vpop.permute.xlu0 %2028
    %2030 = vrot.lane.b32.xlu0 %v1960, 121
    %v2031 = vpop.permute.xlu0 %2030
    %v2032 = vsel %vm752, %v2029, %v2031
    %v2035 = vsel %vm243, %v2027, 0
    %2037 = vmatprep.subr.bf16.mxu0 0
    %2038 = vmatpush1.bf16.msra.mxu0 %v2032
    %2039 = vmatprep.subr.bf16.mxu0 0
    %2040 = vmatpush1.bf16.msra.mxu0 0
    %2041 = vmatprep.subr.bf16.mxu0 0
    %2042 = vmatpush1.bf16.msra.mxu0 0
    %2043 = vmatprep.subr.bf16.mxu0 0
    %2044 = vmatpush1.bf16.msra.mxu0 0
    %2045 = vmatprep.subr.bf16.mxu0 0
    %2046 = vmatpush1.bf16.msra.mxu0 0
    %2047 = vmatprep.subr.bf16.mxu0 0
    %2048 = vmatpush1.bf16.msra.mxu0 0
    %2049 = vmatprep.subr.bf16.mxu0 0
    %2050 = vmatpush1.bf16.msra.mxu0 0
    %2051 = vmatprep.subr.bf16.mxu0 0
    %2052 = vmatpush1.bf16.msra.mxu0 0
    %2053 = vmatprep.subr.bf16.mxu0 0
    %2054 = vmatpush1.bf16.msra.mxu0 0
    %2055 = vmatprep.subr.bf16.mxu0 0
    %2056 = vmatpush1.bf16.msra.mxu0 0
    %2057 = vmatprep.subr.bf16.mxu0 0
    %2058 = vmatpush1.bf16.msra.mxu0 0
    %2059 = vmatprep.subr.bf16.mxu0 0
    %2060 = vmatpush1.bf16.msra.mxu0 0
    %2061 = vmatprep.subr.bf16.mxu0 0
    %2062 = vmatpush1.bf16.msra.mxu0 0
    %2063 = vmatprep.subr.bf16.mxu0 0
    %2064 = vmatpush1.bf16.msra.mxu0 0
    %2065 = vmatprep.subr.bf16.mxu0 0
    %2066 = vmatpush1.bf16.msra.mxu0 0
    %2067 = vmatprep.subr.bf16.mxu0 0
    %2068 = vmatpush1.bf16.msra.mxu0 0
    %2069 = vmatprep.mubr.bf16.mxu0 0
    %2070 = vmatmul.mubr.bf16.gmra.mrb[0].mxu0 %v2035
    %v2071 = vpop.f32.mrb[0].mxu0
    %v2072 = vadd.f32 %v2017, %v2071
    %v2073 = vpop.f32.mrb[0].mxu0
    %v2074 = vpop.f32.mrb[0].mxu0
    %v2075 = vadd.f32 %v2020, %v2074
    %v2076 = vpop.f32.mrb[0].mxu0
    %2077 = vdwg.mxu0
    %s2078 = scalar_lea.vmem %s25, 16
    %v2079 = vld [vmem:[%s2078] sm:$0xf]
    %v2080 = vld [vmem:[%s2078 + $0x4] sm:$0xf]
    %v2083 = vunpack.c.l.b16 %v2079
    %v2084 = vunpack.c.l.b16 %v2080
    %v2085 = vpack.c.b16 %v2084, %v2083
    %2086 = vrot.lane.b32.xlu0 %v1959, 119
    %v2087 = vpop.permute.xlu0 %2086
    %2088 = vrot.lane.b32.xlu0 %v1960, 119
    %v2089 = vpop.permute.xlu0 %2088
    %v2090 = vsel %vm867, %v2087, %v2089
    %v2093 = vsel %vm243, %v2085, 0
    %2095 = vmatprep.subr.bf16.mxu0 0
    %2096 = vmatpush1.bf16.msra.mxu0 %v2090
    %2097 = vmatprep.subr.bf16.mxu0 0
    %2098 = vmatpush1.bf16.msra.mxu0 0
    %2099 = vmatprep.subr.bf16.mxu0 0
    %2100 = vmatpush1.bf16.msra.mxu0 0
    %2101 = vmatprep.subr.bf16.mxu0 0
    %2102 = vmatpush1.bf16.msra.mxu0 0
    %2103 = vmatprep.subr.bf16.mxu0 0
    %2104 = vmatpush1.bf16.msra.mxu0 0
    %2105 = vmatprep.subr.bf16.mxu0 0
    %2106 = vmatpush1.bf16.msra.mxu0 0
    %2107 = vmatprep.subr.bf16.mxu0 0
    %2108 = vmatpush1.bf16.msra.mxu0 0
    %2109 = vmatprep.subr.bf16.mxu0 0
    %2110 = vmatpush1.bf16.msra.mxu0 0
    %2111 = vmatprep.subr.bf16.mxu0 0
    %2112 = vmatpush1.bf16.msra.mxu0 0
    %2113 = vmatprep.subr.bf16.mxu0 0
    %2114 = vmatpush1.bf16.msra.mxu0 0
    %2115 = vmatprep.subr.bf16.mxu0 0
    %2116 = vmatpush1.bf16.msra.mxu0 0
    %2117 = vmatprep.subr.bf16.mxu0 0
    %2118 = vmatpush1.bf16.msra.mxu0 0
    %2119 = vmatprep.subr.bf16.mxu0 0
    %2120 = vmatpush1.bf16.msra.mxu0 0
    %2121 = vmatprep.subr.bf16.mxu0 0
    %2122 = vmatpush1.bf16.msra.mxu0 0
    %2123 = vmatprep.subr.bf16.mxu0 0
    %2124 = vmatpush1.bf16.msra.mxu0 0
    %2125 = vmatprep.subr.bf16.mxu0 0
    %2126 = vmatpush1.bf16.msra.mxu0 0
    %2127 = vmatprep.mubr.bf16.mxu0 0
    %2128 = vmatmul.mubr.bf16.gmra.mrb[0].mxu0 %v2093
    %v2129 = vpop.f32.mrb[0].mxu0
    %v2130 = vadd.f32 0.0, %v2129
    %v2131 = vpop.f32.mrb[0].mxu0
    %v2132 = vpop.f32.mrb[0].mxu0
    %v2133 = vadd.f32 0.0, %v2132
    %v2134 = vpop.f32.mrb[0].mxu0
    %2135 = vdwg.mxu0
    %v2136 = vadd.f32 %v2072, %v2130
    %v2137 = vadd.f32 %v2075, %v2133
    %v2138 = vmul.f32 %v2136, %v240
    %v2139 = vmul.f32 %v2137, %v240
    %2140 = vadd.xlane.f32.xlu0 %v2138
    %v2141 = vpop.xlane.xlu0 %2140
    %2142 = vadd.xlane.f32.xlu0 %v2139
    %v2143 = vpop.xlane.xlu0 %2142
    %v2144 = vmul.f32 %v2141, 0.03125
    %v2145 = vmul.f32 %v2143, 0.03125
    %v2146 = vsub.f32 %v2136, %v2144
    %v2147 = vsub.f32 %v2137, %v2145
    %v2148 = vmul.f32 %v2146, %v240
    %v2149 = vmul.f32 %v2147, %v240
    %v2150 = vmul.f32 %v2148, %v2148
    %v2151 = vmul.f32 %v2149, %v2149
    %2152 = vadd.xlane.f32.xlu0 %v2150
    %v2153 = vpop.xlane.xlu0 %2152
    %2154 = vadd.xlane.f32.xlu0 %v2151
    %v2155 = vpop.xlane.xlu0 %2154
    %v2156 = vmul.f32 %v2153, 0.03125
    %v2157 = vmul.f32 %v2155, 0.03125
    %v2158 = vld [vmem:[%s27] sm:$0xff]
    %v2159 = vld [vmem:[%s27 + $0x8] sm:$0xff]
    %v2160 = vadd.f32 %v2156, 1e-05
    %v2161 = vadd.f32 %v2157, 1e-05
    %v2162 = vrsqrt.pop %v2160
    %v2163 = vrsqrt.pop %v2161
    %v2164 = vmul.f32 %v2158, %v2162
    %v2165 = vmul.f32 %v2159, %v2163
    %v2166 = vld [vmem:[%s29] sm:$0xff]
    %v2167 = vld [vmem:[%s29 + $0x8] sm:$0xff]
    %v2168 = vmul.f32 %v2144, %v2164
    %v2169 = vmul.f32 %v2145, %v2165
    %v2170 = vsub.f32 %v2166, %v2168
    %v2171 = vsub.f32 %v2167, %v2169
    %2173 = vset.pattern.permute.xlu0 0
    %2174 = vperm.xlu0 %2173, %v2164
    %v2175 = vpop.permute.xlu0 %2174
    %2178 = vset.pattern.permute.xlu0 0
    %2179 = vperm.xlu0 %2178, %v2165
    %v2180 = vpop.permute.xlu0 %2179
    %v2182 = vmul.f32 %v2136, %v2175
    %v2183 = vmul.f32 %v2137, %v2180
    %2185 = vset.pattern.permute.xlu0 0
    %2186 = vperm.xlu0 %2185, %v2170
    %v2187 = vpop.permute.xlu0 %2186
    %2190 = vset.pattern.permute.xlu0 0
    %2191 = vperm.xlu0 %2190, %v2171
    %v2192 = vpop.permute.xlu0 %2191
    %v2194 = vadd.f32 %v2182, %v2187
    %v2195 = vadd.f32 %v2183, %v2192
    %v2196 = vadd.f32 %v2194, %v377
    %v2197 = vadd.f32 %v2195, %v378
    %v2198 = vmax.f32 %v2196, 0.0
    %v2199 = vmax.f32 %v2197, 0.0
    %v2200 = vmul.f32 %v2198, %v240
    %v2201 = vmul.f32 %v2199, %v240
    %v2202 = vpack.c.bf16 %v2201, %v2200
    %2204 = vrot.lane.b32.xlu0 %v2202, 8
    %v2205 = vpop.permute.xlu0 %2204
    %2207 = vst.msk [vmem:[#allocation2] sm:$0xff] %vm255, %v2205
    %2208 = vst.msk [vmem:[#allocation2 + $0x8] sm:$0xff] %vm257, %v2205
    %v2209 = vld [vmem:[%s37] sm:$0xf]
    %v2210 = vld [vmem:[%s37 + $0x4] sm:$0xf]
    %v2211 = vld [vmem:[#allocation2] sm:$0xff]
    %v2212 = vld [vmem:[#allocation2 + $0x8] sm:$0xff]
    %v2215 = vunpack.c.l.b16 %v2209
    %v2216 = vunpack.c.l.b16 %v2210
    %v2217 = vpack.c.b16 %v2216, %v2215
    %2220 = vrot.lane.b32.xlu0 %v2211, 120
    %v2221 = vpop.permute.xlu0 %2220
    %2222 = vrot.lane.b32.xlu0 %v2212, 120
    %v2223 = vpop.permute.xlu0 %2222
    %v2224 = vsel %vm274, %v2221, %v2223
    %v2227 = vsel %vm243, %v2217, 0
    %2229 = vmatprep.subr.bf16.mxu0 0
    %2230 = vmatpush1.bf16.msra.mxu0 %v2224
    %2231 = vmatprep.subr.bf16.mxu0 0
    %2232 = vmatpush1.bf16.msra.mxu0 0
    %2233 = vmatprep.subr.bf16.mxu0 0
    %2234 = vmatpush1.bf16.msra.mxu0 0
    %2235 = vmatprep.subr.bf16.mxu0 0
    %2236 = vmatpush1.bf16.msra.mxu0 0
    %2237 = vmatprep.subr.bf16.mxu0 0
    %2238 = vmatpush1.bf16.msra.mxu0 0
    %2239 = vmatprep.subr.bf16.mxu0 0
    %2240 = vmatpush1.bf16.msra.mxu0 0
    %2241 = vmatprep.subr.bf16.mxu0 0
    %2242 = vmatpush1.bf16.msra.mxu0 0
    %2243 = vmatprep.subr.bf16.mxu0 0
    %2244 = vmatpush1.bf16.msra.mxu0 0
    %2245 = vmatprep.subr.bf16.mxu0 0
    %2246 = vmatpush1.bf16.msra.mxu0 0
    %2247 = vmatprep.subr.bf16.mxu0 0
    %2248 = vmatpush1.bf16.msra.mxu0 0
    %2249 = vmatprep.subr.bf16.mxu0 0
    %2250 = vmatpush1.bf16.msra.mxu0 0
    %2251 = vmatprep.subr.bf16.mxu0 0
    %2252 = vmatpush1.bf16.msra.mxu0 0
    %2253 = vmatprep.subr.bf16.mxu0 0
    %2254 = vmatpush1.bf16.msra.mxu0 0
    %2255 = vmatprep.subr.bf16.mxu0 0
    %2256 = vmatpush1.bf16.msra.mxu0 0
    %2257 = vmatprep.subr.bf16.mxu0 0
    %2258 = vmatpush1.bf16.msra.mxu0 0
    %2259 = vmatprep.subr.bf16.mxu0 0
    %2260 = vmatpush1.bf16.msra.mxu0 0
    %2261 = vmatprep.mubr.bf16.mxu0 0
    %2262 = vmatmul.mubr.bf16.gmra.mrb[0].mxu0 %v2227
    %v2263 = vpop.f32.mrb[0].mxu0
    %v2264 = vadd.f32 0.0, %v2263
    %v2265 = vpop.f32.mrb[0].mxu0
    %v2266 = vpop.f32.mrb[0].mxu0
    %v2267 = vadd.f32 0.0, %v2266
    %v2268 = vpop.f32.mrb[0].mxu0
    %2269 = vdwg.mxu0
    %v2270 = vmul.f32 %v2264, %v240
    %v2271 = vmul.f32 %v2267, %v240
    %2272 = vadd.xlane.f32.xlu0 %v2270
    %v2273 = vpop.xlane.xlu0 %2272
    %2274 = vadd.xlane.f32.xlu0 %v2271
    %v2275 = vpop.xlane.xlu0 %2274
    %v2276 = vmul.f32 %v2273, 0.03125
    %v2277 = vmul.f32 %v2275, 0.03125
    %v2278 = vsub.f32 %v2264, %v2276
    %v2279 = vsub.f32 %v2267, %v2277
    %v2280 = vmul.f32 %v2278, %v240
    %v2281 = vmul.f32 %v2279, %v240
    %v2282 = vmul.f32 %v2280, %v2280
    %v2283 = vmul.f32 %v2281, %v2281
    %2284 = vadd.xlane.f32.xlu0 %v2282
    %v2285 = vpop.xlane.xlu0 %2284
    %2286 = vadd.xlane.f32.xlu0 %v2283
    %v2287 = vpop.xlane.xlu0 %2286
    %v2288 = vmul.f32 %v2285, 0.03125
    %v2289 = vmul.f32 %v2287, 0.03125
    %v2290 = vld [vmem:[%s39] sm:$0xff]
    %v2291 = vld [vmem:[%s39 + $0x8] sm:$0xff]
    %v2292 = vadd.f32 %v2288, 1e-05
    %v2293 = vadd.f32 %v2289, 1e-05
    %v2294 = vrsqrt.pop %v2292
    %v2295 = vrsqrt.pop %v2293
    %v2296 = vmul.f32 %v2290, %v2294
    %v2297 = vmul.f32 %v2291, %v2295
    %v2298 = vld [vmem:[%s41] sm:$0xff]
    %v2299 = vld [vmem:[%s41 + $0x8] sm:$0xff]
    %v2300 = vmul.f32 %v2276, %v2296
    %v2301 = vmul.f32 %v2277, %v2297
    %v2302 = vsub.f32 %v2298, %v2300
    %v2303 = vsub.f32 %v2299, %v2301
    %2305 = vset.pattern.permute.xlu0 0
    %2306 = vperm.xlu0 %2305, %v2296
    %v2307 = vpop.permute.xlu0 %2306
    %2310 = vset.pattern.permute.xlu0 0
    %2311 = vperm.xlu0 %2310, %v2297
    %v2312 = vpop.permute.xlu0 %2311
    %v2314 = vmul.f32 %v2264, %v2307
    %v2315 = vmul.f32 %v2267, %v2312
    %2317 = vset.pattern.permute.xlu0 0
    %2318 = vperm.xlu0 %2317, %v2302
    %v2319 = vpop.permute.xlu0 %2318
    %2322 = vset.pattern.permute.xlu0 0
    %2323 = vperm.xlu0 %2322, %v2303
    %v2324 = vpop.permute.xlu0 %2323
    %v2326 = vadd.f32 %v2314, %v2319
    %v2327 = vadd.f32 %v2315, %v2324
    %v2328 = vld [vmem:[%s31] sm:$0xf]
    %v2329 = vld [vmem:[%s31 + $0x4] sm:$0xf]
    %s2330 = scalar_lea.vmem %s31, 8
    %v2331 = vld [vmem:[%s2330] sm:$0xf]
    %v2332 = vld [vmem:[%s2330 + $0x4] sm:$0xf]
    %v2335 = vunpack.c.l.b16 %v2331
    %v2336 = vunpack.c.l.b16 %v2332
    %v2337 = vpack.c.b16 %v2336, %v2335
    %2338 = vrot.lane.b32.xlu0 %v2211, 126
    %v2339 = vpop.permute.xlu0 %2338
    %2340 = vrot.lane.b32.xlu0 %v2212, 126
    %v2341 = vpop.permute.xlu0 %2340
    %v2342 = vsel %vm393, %v2339, %v2341
    %v2345 = vsel %vm243, %v2337, 0
    %2347 = vmatprep.subr.bf16.mxu0 0
    %2348 = vmatpush1.bf16.msra.mxu0 %v2342
    %2349 = vmatprep.subr.bf16.mxu0 0
    %2350 = vmatpush1.bf16.msra.mxu0 0
    %2351 = vmatprep.subr.bf16.mxu0 0
    %2352 = vmatpush1.bf16.msra.mxu0 0
    %2353 = vmatprep.subr.bf16.mxu0 0
    %2354 = vmatpush1.bf16.msra.mxu0 0
    %2355 = vmatprep.subr.bf16.mxu0 0
    %2356 = vmatpush1.bf16.msra.mxu0 0
    %2357 = vmatprep.subr.bf16.mxu0 0
    %2358 = vmatpush1.bf16.msra.mxu0 0
    %2359 = vmatprep.subr.bf16.mxu0 0
    %2360 = vmatpush1.bf16.msra.mxu0 0
    %2361 = vmatprep.subr.bf16.mxu0 0
    %2362 = vmatpush1.bf16.msra.mxu0 0
    %2363 = vmatprep.subr.bf16.mxu0 0
    %2364 = vmatpush1.bf16.msra.mxu0 0
    %2365 = vmatprep.subr.bf16.mxu0 0
    %2366 = vmatpush1.bf16.msra.mxu0 0
    %2367 = vmatprep.subr.bf16.mxu0 0
    %2368 = vmatpush1.bf16.msra.mxu0 0
    %2369 = vmatprep.subr.bf16.mxu0 0
    %2370 = vmatpush1.bf16.msra.mxu0 0
    %2371 = vmatprep.subr.bf16.mxu0 0
    %2372 = vmatpush1.bf16.msra.mxu0 0
    %2373 = vmatprep.subr.bf16.mxu0 0
    %2374 = vmatpush1.bf16.msra.mxu0 0
    %2375 = vmatprep.subr.bf16.mxu0 0
    %2376 = vmatpush1.bf16.msra.mxu0 0
    %2377 = vmatprep.subr.bf16.mxu0 0
    %2378 = vmatpush1.bf16.msra.mxu0 0
    %2379 = vmatprep.mubr.bf16.mxu0 0
    %2380 = vmatmul.mubr.bf16.gmra.mrb[0].mxu0 %v2345
    %v2381 = vpop.f32.mrb[0].mxu0
    %v2382 = vadd.f32 0.0, %v2381
    %v2383 = vpop.f32.mrb[0].mxu0
    %v2384 = vpop.f32.mrb[0].mxu0
    %v2385 = vadd.f32 0.0, %v2384
    %v2386 = vpop.f32.mrb[0].mxu0
    %2387 = vdwg.mxu0
    %v2390 = vunpack.c.l.b16 %v2328
    %v2391 = vunpack.c.l.b16 %v2329
    %v2392 = vpack.c.b16 %v2391, %v2390
    %2393 = vrot.lane.b32.xlu0 %v2211, 127
    %v2394 = vpop.permute.xlu0 %2393
    %2395 = vrot.lane.b32.xlu0 %v2212, 127
    %v2396 = vpop.permute.xlu0 %2395
    %v2397 = vsel %vm449, %v2394, %v2396
    %v2400 = vsel %vm243, %v2392, 0
    %2402 = vmatprep.subr.bf16.mxu0 0
    %2403 = vmatpush1.bf16.msra.mxu0 %v2397
    %2404 = vmatprep.subr.bf16.mxu0 0
    %2405 = vmatpush1.bf16.msra.mxu0 0
    %2406 = vmatprep.subr.bf16.mxu0 0
    %2407 = vmatpush1.bf16.msra.mxu0 0
    %2408 = vmatprep.subr.bf16.mxu0 0
    %2409 = vmatpush1.bf16.msra.mxu0 0
    %2410 = vmatprep.subr.bf16.mxu0 0
    %2411 = vmatpush1.bf16.msra.mxu0 0
    %2412 = vmatprep.subr.bf16.mxu0 0
    %2413 = vmatpush1.bf16.msra.mxu0 0
    %2414 = vmatprep.subr.bf16.mxu0 0
    %2415 = vmatpush1.bf16.msra.mxu0 0
    %2416 = vmatprep.subr.bf16.mxu0 0
    %2417 = vmatpush1.bf16.msra.mxu0 0
    %2418 = vmatprep.subr.bf16.mxu0 0
    %2419 = vmatpush1.bf16.msra.mxu0 0
    %2420 = vmatprep.subr.bf16.mxu0 0
    %2421 = vmatpush1.bf16.msra.mxu0 0
    %2422 = vmatprep.subr.bf16.mxu0 0
    %2423 = vmatpush1.bf16.msra.mxu0 0
    %2424 = vmatprep.subr.bf16.mxu0 0
    %2425 = vmatpush1.bf16.msra.mxu0 0
    %2426 = vmatprep.subr.bf16.mxu0 0
    %2427 = vmatpush1.bf16.msra.mxu0 0
    %2428 = vmatprep.subr.bf16.mxu0 0
    %2429 = vmatpush1.bf16.msra.mxu0 0
    %2430 = vmatprep.subr.bf16.mxu0 0
    %2431 = vmatpush1.bf16.msra.mxu0 0
    %2432 = vmatprep.subr.bf16.mxu0 0
    %2433 = vmatpush1.bf16.msra.mxu0 0
    %2434 = vmatprep.mubr.bf16.mxu0 0
    %2435 = vmatmul.mubr.bf16.gmra.mrb[0].mxu0 %v2400
    %v2436 = vpop.f32.mrb[0].mxu0
    %v2437 = vadd.f32 %v2382, %v2436
    %v2438 = vpop.f32.mrb[0].mxu0
    %v2439 = vpop.f32.mrb[0].mxu0
    %v2440 = vadd.f32 %v2385, %v2439
    %v2441 = vpop.f32.mrb[0].mxu0
    %2442 = vdwg.mxu0
    %s2443 = scalar_lea.vmem %s31, 16
    %v2444 = vld [vmem:[%s2443] sm:$0xf]
    %v2445 = vld [vmem:[%s2443 + $0x4] sm:$0xf]
    %v2448 = vunpack.c.l.b16 %v2444
    %v2449 = vunpack.c.l.b16 %v2445
    %v2450 = vpack.c.b16 %v2449, %v2448
    %2451 = vrot.lane.b32.xlu0 %v2211, 125
    %v2452 = vpop.permute.xlu0 %2451
    %2453 = vrot.lane.b32.xlu0 %v2212, 125
    %v2454 = vpop.permute.xlu0 %2453
    %v2455 = vsel %vm508, %v2452, %v2454
    %v2458 = vsel %vm243, %v2450, 0
    %2460 = vmatprep.subr.bf16.mxu0 0
    %2461 = vmatpush1.bf16.msra.mxu0 %v2455
    %2462 = vmatprep.subr.bf16.mxu0 0
    %2463 = vmatpush1.bf16.msra.mxu0 0
    %2464 = vmatprep.subr.bf16.mxu0 0
    %2465 = vmatpush1.bf16.msra.mxu0 0
    %2466 = vmatprep.subr.bf16.mxu0 0
    %2467 = vmatpush1.bf16.msra.mxu0 0
    %2468 = vmatprep.subr.bf16.mxu0 0
    %2469 = vmatpush1.bf16.msra.mxu0 0
    %2470 = vmatprep.subr.bf16.mxu0 0
    %2471 = vmatpush1.bf16.msra.mxu0 0
    %2472 = vmatprep.subr.bf16.mxu0 0
    %2473 = vmatpush1.bf16.msra.mxu0 0
    %2474 = vmatprep.subr.bf16.mxu0 0
    %2475 = vmatpush1.bf16.msra.mxu0 0
    %2476 = vmatprep.subr.bf16.mxu0 0
    %2477 = vmatpush1.bf16.msra.mxu0 0
    %2478 = vmatprep.subr.bf16.mxu0 0
    %2479 = vmatpush1.bf16.msra.mxu0 0
    %2480 = vmatprep.subr.bf16.mxu0 0
    %2481 = vmatpush1.bf16.msra.mxu0 0
    %2482 = vmatprep.subr.bf16.mxu0 0
    %2483 = vmatpush1.bf16.msra.mxu0 0
    %2484 = vmatprep.subr.bf16.mxu0 0
    %2485 = vmatpush1.bf16.msra.mxu0 0
    %2486 = vmatprep.subr.bf16.mxu0 0
    %2487 = vmatpush1.bf16.msra.mxu0 0
    %2488 = vmatprep.subr.bf16.mxu0 0
    %2489 = vmatpush1.bf16.msra.mxu0 0
    %2490 = vmatprep.subr.bf16.mxu0 0
    %2491 = vmatpush1.bf16.msra.mxu0 0
    %2492 = vmatprep.mubr.bf16.mxu0 0
    %2493 = vmatmul.mubr.bf16.gmra.mrb[0].mxu0 %v2458
    %v2494 = vpop.f32.mrb[0].mxu0
    %v2495 = vadd.f32 0.0, %v2494
    %v2496 = vpop.f32.mrb[0].mxu0
    %v2497 = vpop.f32.mrb[0].mxu0
    %v2498 = vadd.f32 0.0, %v2497
    %v2499 = vpop.f32.mrb[0].mxu0
    %2500 = vdwg.mxu0
    %v2501 = vadd.f32 %v2437, %v2495
    %v2502 = vadd.f32 %v2440, %v2498
    %s2503 = scalar_lea.vmem %s31, 24
    %v2504 = vld [vmem:[%s2503] sm:$0xf]
    %v2505 = vld [vmem:[%s2503 + $0x4] sm:$0xf]
    %v2508 = vunpack.c.l.b16 %v2504
    %v2509 = vunpack.c.l.b16 %v2505
    %v2510 = vpack.c.b16 %v2509, %v2508
    %2511 = vrot.lane.b32.xlu0 %v2211, 124
    %v2512 = vpop.permute.xlu0 %2511
    %2513 = vrot.lane.b32.xlu0 %v2212, 124
    %v2514 = vpop.permute.xlu0 %2513
    %v2515 = vsel %vm569, %v2512, %v2514
    %v2518 = vsel %vm243, %v2510, 0
    %2520 = vmatprep.subr.bf16.mxu0 0
    %2521 = vmatpush1.bf16.msra.mxu0 %v2515
    %2522 = vmatprep.subr.bf16.mxu0 0
    %2523 = vmatpush1.bf16.msra.mxu0 0
    %2524 = vmatprep.subr.bf16.mxu0 0
    %2525 = vmatpush1.bf16.msra.mxu0 0
    %2526 = vmatprep.subr.bf16.mxu0 0
    %2527 = vmatpush1.bf16.msra.mxu0 0
    %2528 = vmatprep.subr.bf16.mxu0 0
    %2529 = vmatpush1.bf16.msra.mxu0 0
    %2530 = vmatprep.subr.bf16.mxu0 0
    %2531 = vmatpush1.bf16.msra.mxu0 0
    %2532 = vmatprep.subr.bf16.mxu0 0
    %2533 = vmatpush1.bf16.msra.mxu0 0
    %2534 = vmatprep.subr.bf16.mxu0 0
    %2535 = vmatpush1.bf16.msra.mxu0 0
    %2536 = vmatprep.subr.bf16.mxu0 0
    %2537 = vmatpush1.bf16.msra.mxu0 0
    %2538 = vmatprep.subr.bf16.mxu0 0
    %2539 = vmatpush1.bf16.msra.mxu0 0
    %2540 = vmatprep.subr.bf16.mxu0 0
    %2541 = vmatpush1.bf16.msra.mxu0 0
    %2542 = vmatprep.subr.bf16.mxu0 0
    %2543 = vmatpush1.bf16.msra.mxu0 0
    %2544 = vmatprep.subr.bf16.mxu0 0
    %2545 = vmatpush1.bf16.msra.mxu0 0
    %2546 = vmatprep.subr.bf16.mxu0 0
    %2547 = vmatpush1.bf16.msra.mxu0 0
    %2548 = vmatprep.subr.bf16.mxu0 0
    %2549 = vmatpush1.bf16.msra.mxu0 0
    %2550 = vmatprep.subr.bf16.mxu0 0
    %2551 = vmatpush1.bf16.msra.mxu0 0
    %2552 = vmatprep.mubr.bf16.mxu0 0
    %2553 = vmatmul.mubr.bf16.gmra.mrb[0].mxu0 %v2518
    %v2554 = vpop.f32.mrb[0].mxu0
    %v2555 = vadd.f32 0.0, %v2554
    %v2556 = vpop.f32.mrb[0].mxu0
    %v2557 = vpop.f32.mrb[0].mxu0
    %v2558 = vadd.f32 0.0, %v2557
    %v2559 = vpop.f32.mrb[0].mxu0
    %2560 = vdwg.mxu0
    %v2561 = vadd.f32 %v2501, %v2555
    %v2562 = vadd.f32 %v2502, %v2558
    %s2563 = scalar_lea.vmem %s31, 32
    %v2564 = vld [vmem:[%s2563] sm:$0xf]
    %v2565 = vld [vmem:[%s2563 + $0x4] sm:$0xf]
    %v2568 = vunpack.c.l.b16 %v2564
    %v2569 = vunpack.c.l.b16 %v2565
    %v2570 = vpack.c.b16 %v2569, %v2568
    %2571 = vrot.lane.b32.xlu0 %v2211, 123
    %v2572 = vpop.permute.xlu0 %2571
    %2573 = vrot.lane.b32.xlu0 %v2212, 123
    %v2574 = vpop.permute.xlu0 %2573
    %v2575 = vsel %vm630, %v2572, %v2574
    %v2578 = vsel %vm243, %v2570, 0
    %2580 = vmatprep.subr.bf16.mxu0 0
    %2581 = vmatpush1.bf16.msra.mxu0 %v2575
    %2582 = vmatprep.subr.bf16.mxu0 0
    %2583 = vmatpush1.bf16.msra.mxu0 0
    %2584 = vmatprep.subr.bf16.mxu0 0
    %2585 = vmatpush1.bf16.msra.mxu0 0
    %2586 = vmatprep.subr.bf16.mxu0 0
    %2587 = vmatpush1.bf16.msra.mxu0 0
    %2588 = vmatprep.subr.bf16.mxu0 0
    %2589 = vmatpush1.bf16.msra.mxu0 0
    %2590 = vmatprep.subr.bf16.mxu0 0
    %2591 = vmatpush1.bf16.msra.mxu0 0
    %2592 = vmatprep.subr.bf16.mxu0 0
    %2593 = vmatpush1.bf16.msra.mxu0 0
    %2594 = vmatprep.subr.bf16.mxu0 0
    %2595 = vmatpush1.bf16.msra.mxu0 0
    %2596 = vmatprep.subr.bf16.mxu0 0
    %2597 = vmatpush1.bf16.msra.mxu0 0
    %2598 = vmatprep.subr.bf16.mxu0 0
    %2599 = vmatpush1.bf16.msra.mxu0 0
    %2600 = vmatprep.subr.bf16.mxu0 0
    %2601 = vmatpush1.bf16.msra.mxu0 0
    %2602 = vmatprep.subr.bf16.mxu0 0
    %2603 = vmatpush1.bf16.msra.mxu0 0
    %2604 = vmatprep.subr.bf16.mxu0 0
    %2605 = vmatpush1.bf16.msra.mxu0 0
    %2606 = vmatprep.subr.bf16.mxu0 0
    %2607 = vmatpush1.bf16.msra.mxu0 0
    %2608 = vmatprep.subr.bf16.mxu0 0
    %2609 = vmatpush1.bf16.msra.mxu0 0
    %2610 = vmatprep.subr.bf16.mxu0 0
    %2611 = vmatpush1.bf16.msra.mxu0 0
    %2612 = vmatprep.mubr.bf16.mxu0 0
    %2613 = vmatmul.mubr.bf16.gmra.mrb[0].mxu0 %v2578
    %v2614 = vpop.f32.mrb[0].mxu0
    %v2615 = vadd.f32 0.0, %v2614
    %v2616 = vpop.f32.mrb[0].mxu0
    %v2617 = vpop.f32.mrb[0].mxu0
    %v2618 = vadd.f32 0.0, %v2617
    %v2619 = vpop.f32.mrb[0].mxu0
    %2620 = vdwg.mxu0
    %v2621 = vadd.f32 %v2561, %v2615
    %v2622 = vadd.f32 %v2562, %v2618
    %s2623 = scalar_lea.vmem %s31, 40
    %v2624 = vld [vmem:[%s2623] sm:$0xf]
    %v2625 = vld [vmem:[%s2623 + $0x4] sm:$0xf]
    %v2628 = vunpack.c.l.b16 %v2624
    %v2629 = vunpack.c.l.b16 %v2625
    %v2630 = vpack.c.b16 %v2629, %v2628
    %2631 = vrot.lane.b32.xlu0 %v2211, 122
    %v2632 = vpop.permute.xlu0 %2631
    %2633 = vrot.lane.b32.xlu0 %v2212, 122
    %v2634 = vpop.permute.xlu0 %2633
    %v2635 = vsel %vm691, %v2632, %v2634
    %v2638 = vsel %vm243, %v2630, 0
    %2640 = vmatprep.subr.bf16.mxu0 0
    %2641 = vmatpush1.bf16.msra.mxu0 %v2635
    %2642 = vmatprep.subr.bf16.mxu0 0
    %2643 = vmatpush1.bf16.msra.mxu0 0
    %2644 = vmatprep.subr.bf16.mxu0 0
    %2645 = vmatpush1.bf16.msra.mxu0 0
    %2646 = vmatprep.subr.bf16.mxu0 0
    %2647 = vmatpush1.bf16.msra.mxu0 0
    %2648 = vmatprep.subr.bf16.mxu0 0
    %2649 = vmatpush1.bf16.msra.mxu0 0
    %2650 = vmatprep.subr.bf16.mxu0 0
    %2651 = vmatpush1.bf16.msra.mxu0 0
    %2652 = vmatprep.subr.bf16.mxu0 0
    %2653 = vmatpush1.bf16.msra.mxu0 0
    %2654 = vmatprep.subr.bf16.mxu0 0
    %2655 = vmatpush1.bf16.msra.mxu0 0
    %2656 = vmatprep.subr.bf16.mxu0 0
    %2657 = vmatpush1.bf16.msra.mxu0 0
    %2658 = vmatprep.subr.bf16.mxu0 0
    %2659 = vmatpush1.bf16.msra.mxu0 0
    %2660 = vmatprep.subr.bf16.mxu0 0
    %2661 = vmatpush1.bf16.msra.mxu0 0
    %2662 = vmatprep.subr.bf16.mxu0 0
    %2663 = vmatpush1.bf16.msra.mxu0 0
    %2664 = vmatprep.subr.bf16.mxu0 0
    %2665 = vmatpush1.bf16.msra.mxu0 0
    %2666 = vmatprep.subr.bf16.mxu0 0
    %2667 = vmatpush1.bf16.msra.mxu0 0
    %2668 = vmatprep.subr.bf16.mxu0 0
    %2669 = vmatpush1.bf16.msra.mxu0 0
    %2670 = vmatprep.subr.bf16.mxu0 0
    %2671 = vmatpush1.bf16.msra.mxu0 0
    %2672 = vmatprep.mubr.bf16.mxu0 0
    %2673 = vmatmul.mubr.bf16.gmra.mrb[0].mxu0 %v2638
    %v2674 = vpop.f32.mrb[0].mxu0
    %v2675 = vadd.f32 0.0, %v2674
    %v2676 = vpop.f32.mrb[0].mxu0
    %v2677 = vpop.f32.mrb[0].mxu0
    %v2678 = vadd.f32 0.0, %v2677
    %v2679 = vpop.f32.mrb[0].mxu0
    %2680 = vdwg.mxu0
    %v2681 = vadd.f32 %v2621, %v2675
    %v2682 = vadd.f32 %v2622, %v2678
    %s2683 = scalar_lea.vmem %s31, 48
    %v2684 = vld [vmem:[%s2683] sm:$0xf]
    %v2685 = vld [vmem:[%s2683 + $0x4] sm:$0xf]
    %v2688 = vunpack.c.l.b16 %v2684
    %v2689 = vunpack.c.l.b16 %v2685
    %v2690 = vpack.c.b16 %v2689, %v2688
    %2691 = vrot.lane.b32.xlu0 %v2211, 121
    %v2692 = vpop.permute.xlu0 %2691
    %2693 = vrot.lane.b32.xlu0 %v2212, 121
    %v2694 = vpop.permute.xlu0 %2693
    %v2695 = vsel %vm752, %v2692, %v2694
    %v2698 = vsel %vm243, %v2690, 0
    %2700 = vmatprep.subr.bf16.mxu0 0
    %2701 = vmatpush1.bf16.msra.mxu0 %v2695
    %2702 = vmatprep.subr.bf16.mxu0 0
    %2703 = vmatpush1.bf16.msra.mxu0 0
    %2704 = vmatprep.subr.bf16.mxu0 0
    %2705 = vmatpush1.bf16.msra.mxu0 0
    %2706 = vmatprep.subr.bf16.mxu0 0
    %2707 = vmatpush1.bf16.msra.mxu0 0
    %2708 = vmatprep.subr.bf16.mxu0 0
    %2709 = vmatpush1.bf16.msra.mxu0 0
    %2710 = vmatprep.subr.bf16.mxu0 0
    %2711 = vmatpush1.bf16.msra.mxu0 0
    %2712 = vmatprep.subr.bf16.mxu0 0
    %2713 = vmatpush1.bf16.msra.mxu0 0
    %2714 = vmatprep.subr.bf16.mxu0 0
    %2715 = vmatpush1.bf16.msra.mxu0 0
    %2716 = vmatprep.subr.bf16.mxu0 0
    %2717 = vmatpush1.bf16.msra.mxu0 0
    %2718 = vmatprep.subr.bf16.mxu0 0
    %2719 = vmatpush1.bf16.msra.mxu0 0
    %2720 = vmatprep.subr.bf16.mxu0 0
    %2721 = vmatpush1.bf16.msra.mxu0 0
    %2722 = vmatprep.subr.bf16.mxu0 0
    %2723 = vmatpush1.bf16.msra.mxu0 0
    %2724 = vmatprep.subr.bf16.mxu0 0
    %2725 = vmatpush1.bf16.msra.mxu0 0
    %2726 = vmatprep.subr.bf16.mxu0 0
    %2727 = vmatpush1.bf16.msra.mxu0 0
    %2728 = vmatprep.subr.bf16.mxu0 0
    %2729 = vmatpush1.bf16.msra.mxu0 0
    %2730 = vmatprep.subr.bf16.mxu0 0
    %2731 = vmatpush1.bf16.msra.mxu0 0
    %2732 = vmatprep.mubr.bf16.mxu0 0
    %2733 = vmatmul.mubr.bf16.gmra.mrb[0].mxu0 %v2698
    %v2734 = vpop.f32.mrb[0].mxu0
    %v2735 = vadd.f32 0.0, %v2734
    %v2736 = vpop.f32.mrb[0].mxu0
    %v2737 = vpop.f32.mrb[0].mxu0
    %v2738 = vadd.f32 0.0, %v2737
    %v2739 = vpop.f32.mrb[0].mxu0
    %2740 = vdwg.mxu0
    %v2741 = vadd.f32 %v2681, %v2735
    %v2742 = vadd.f32 %v2682, %v2738
    %s2743 = scalar_lea.vmem %s31, 56
    %v2744 = vld [vmem:[%s2743] sm:$0xf]
    %v2745 = vld [vmem:[%s2743 + $0x4] sm:$0xf]
    %v2748 = vunpack.c.l.b16 %v2744
    %v2749 = vunpack.c.l.b16 %v2745
    %v2750 = vpack.c.b16 %v2749, %v2748
    %v2752 = vsel %vm243, %v2750, 0
    %2754 = vmatprep.subr.bf16.mxu0 0
    %2755 = vmatpush1.bf16.msra.mxu0 %v2224
    %2756 = vmatprep.subr.bf16.mxu0 0
    %2757 = vmatpush1.bf16.msra.mxu0 0
    %2758 = vmatprep.subr.bf16.mxu0 0
    %2759 = vmatpush1.bf16.msra.mxu0 0
    %2760 = vmatprep.subr.bf16.mxu0 0
    %2761 = vmatpush1.bf16.msra.mxu0 0
    %2762 = vmatprep.subr.bf16.mxu0 0
    %2763 = vmatpush1.bf16.msra.mxu0 0
    %2764 = vmatprep.subr.bf16.mxu0 0
    %2765 = vmatpush1.bf16.msra.mxu0 0
    %2766 = vmatprep.subr.bf16.mxu0 0
    %2767 = vmatpush1.bf16.msra.mxu0 0
    %2768 = vmatprep.subr.bf16.mxu0 0
    %2769 = vmatpush1.bf16.msra.mxu0 0
    %2770 = vmatprep.subr.bf16.mxu0 0
    %2771 = vmatpush1.bf16.msra.mxu0 0
    %2772 = vmatprep.subr.bf16.mxu0 0
    %2773 = vmatpush1.bf16.msra.mxu0 0
    %2774 = vmatprep.subr.bf16.mxu0 0
    %2775 = vmatpush1.bf16.msra.mxu0 0
    %2776 = vmatprep.subr.bf16.mxu0 0
    %2777 = vmatpush1.bf16.msra.mxu0 0
    %2778 = vmatprep.subr.bf16.mxu0 0
    %2779 = vmatpush1.bf16.msra.mxu0 0
    %2780 = vmatprep.subr.bf16.mxu0 0
    %2781 = vmatpush1.bf16.msra.mxu0 0
    %2782 = vmatprep.subr.bf16.mxu0 0
    %2783 = vmatpush1.bf16.msra.mxu0 0
    %2784 = vmatprep.subr.bf16.mxu0 0
    %2785 = vmatpush1.bf16.msra.mxu0 0
    %2786 = vmatprep.mubr.bf16.mxu0 0
    %2787 = vmatmul.mubr.bf16.gmra.mrb[0].mxu0 %v2752
    %v2788 = vpop.f32.mrb[0].mxu0
    %v2789 = vadd.f32 0.0, %v2788
    %v2790 = vpop.f32.mrb[0].mxu0
    %v2791 = vpop.f32.mrb[0].mxu0
    %v2792 = vadd.f32 0.0, %v2791
    %v2793 = vpop.f32.mrb[0].mxu0
    %2794 = vdwg.mxu0
    %v2795 = vadd.f32 %v2741, %v2789
    %v2796 = vadd.f32 %v2742, %v2792
    %s2797 = scalar_lea.vmem %s31, 64
    %v2798 = vld [vmem:[%s2797] sm:$0xf]
    %v2799 = vld [vmem:[%s2797 + $0x4] sm:$0xf]
    %v2802 = vunpack.c.l.b16 %v2798
    %v2803 = vunpack.c.l.b16 %v2799
    %v2804 = vpack.c.b16 %v2803, %v2802
    %2805 = vrot.lane.b32.xlu0 %v2211, 119
    %v2806 = vpop.permute.xlu0 %2805
    %2807 = vrot.lane.b32.xlu0 %v2212, 119
    %v2808 = vpop.permute.xlu0 %2807
    %v2809 = vsel %vm867, %v2806, %v2808
    %v2812 = vsel %vm243, %v2804, 0
    %2814 = vmatprep.subr.bf16.mxu0 0
    %2815 = vmatpush1.bf16.msra.mxu0 %v2809
    %2816 = vmatprep.subr.bf16.mxu0 0
    %2817 = vmatpush1.bf16.msra.mxu0 0
    %2818 = vmatprep.subr.bf16.mxu0 0
    %2819 = vmatpush1.bf16.msra.mxu0 0
    %2820 = vmatprep.subr.bf16.mxu0 0
    %2821 = vmatpush1.bf16.msra.mxu0 0
    %2822 = vmatprep.subr.bf16.mxu0 0
    %2823 = vmatpush1.bf16.msra.mxu0 0
    %2824 = vmatprep.subr.bf16.mxu0 0
    %2825 = vmatpush1.bf16.msra.mxu0 0
    %2826 = vmatprep.subr.bf16.mxu0 0
    %2827 = vmatpush1.bf16.msra.mxu0 0
    %2828 = vmatprep.subr.bf16.mxu0 0
    %2829 = vmatpush1.bf16.msra.mxu0 0
    %2830 = vmatprep.subr.bf16.mxu0 0
    %2831 = vmatpush1.bf16.msra.mxu0 0
    %2832 = vmatprep.subr.bf16.mxu0 0
    %2833 = vmatpush1.bf16.msra.mxu0 0
    %2834 = vmatprep.subr.bf16.mxu0 0
    %2835 = vmatpush1.bf16.msra.mxu0 0
    %2836 = vmatprep.subr.bf16.mxu0 0
    %2837 = vmatpush1.bf16.msra.mxu0 0
    %2838 = vmatprep.subr.bf16.mxu0 0
    %2839 = vmatpush1.bf16.msra.mxu0 0
    %2840 = vmatprep.subr.bf16.mxu0 0
    %2841 = vmatpush1.bf16.msra.mxu0 0
    %2842 = vmatprep.subr.bf16.mxu0 0
    %2843 = vmatpush1.bf16.msra.mxu0 0
    %2844 = vmatprep.subr.bf16.mxu0 0
    %2845 = vmatpush1.bf16.msra.mxu0 0
    %2846 = vmatprep.mubr.bf16.mxu0 0
    %2847 = vmatmul.mubr.bf16.gmra.mrb[0].mxu0 %v2812
    %v2848 = vpop.f32.mrb[0].mxu0
    %v2849 = vadd.f32 0.0, %v2848
    %v2850 = vpop.f32.mrb[0].mxu0
    %v2851 = vpop.f32.mrb[0].mxu0
    %v2852 = vadd.f32 0.0, %v2851
    %v2853 = vpop.f32.mrb[0].mxu0
    %2854 = vdwg.mxu0
    %v2855 = vadd.f32 %v2795, %v2849
    %v2856 = vadd.f32 %v2796, %v2852
    %s2857 = scalar_lea.vmem %s31, 72
    %v2858 = vld [vmem:[%s2857] sm:$0xf]
    %v2859 = vld [vmem:[%s2857 + $0x4] sm:$0xf]
    %v2862 = vunpack.c.l.b16 %v2858
    %v2863 = vunpack.c.l.b16 %v2859
    %v2864 = vpack.c.b16 %v2863, %v2862
    %2865 = vrot.lane.b32.xlu0 %v2211, 118
    %v2866 = vpop.permute.xlu0 %2865
    %2867 = vrot.lane.b32.xlu0 %v2212, 118
    %v2868 = vpop.permute.xlu0 %2867
    %v2869 = vsel %vm928, %v2866, %v2868
    %v2872 = vsel %vm243, %v2864, 0
    %2874 = vmatprep.subr.bf16.mxu0 0
    %2875 = vmatpush1.bf16.msra.mxu0 %v2869
    %2876 = vmatprep.subr.bf16.mxu0 0
    %2877 = vmatpush1.bf16.msra.mxu0 0
    %2878 = vmatprep.subr.bf16.mxu0 0
    %2879 = vmatpush1.bf16.msra.mxu0 0
    %2880 = vmatprep.subr.bf16.mxu0 0
    %2881 = vmatpush1.bf16.msra.mxu0 0
    %2882 = vmatprep.subr.bf16.mxu0 0
    %2883 = vmatpush1.bf16.msra.mxu0 0
    %2884 = vmatprep.subr.bf16.mxu0 0
    %2885 = vmatpush1.bf16.msra.mxu0 0
    %2886 = vmatprep.subr.bf16.mxu0 0
    %2887 = vmatpush1.bf16.msra.mxu0 0
    %2888 = vmatprep.subr.bf16.mxu0 0
    %2889 = vmatpush1.bf16.msra.mxu0 0
    %2890 = vmatprep.subr.bf16.mxu0 0
    %2891 = vmatpush1.bf16.msra.mxu0 0
    %2892 = vmatprep.subr.bf16.mxu0 0
    %2893 = vmatpush1.bf16.msra.mxu0 0
    %2894 = vmatprep.subr.bf16.mxu0 0
    %2895 = vmatpush1.bf16.msra.mxu0 0
    %2896 = vmatprep.subr.bf16.mxu0 0
    %2897 = vmatpush1.bf16.msra.mxu0 0
    %2898 = vmatprep.subr.bf16.mxu0 0
    %2899 = vmatpush1.bf16.msra.mxu0 0
    %2900 = vmatprep.subr.bf16.mxu0 0
    %2901 = vmatpush1.bf16.msra.mxu0 0
    %2902 = vmatprep.subr.bf16.mxu0 0
    %2903 = vmatpush1.bf16.msra.mxu0 0
    %2904 = vmatprep.subr.bf16.mxu0 0
    %2905 = vmatpush1.bf16.msra.mxu0 0
    %2906 = vmatprep.mubr.bf16.mxu0 0
    %2907 = vmatmul.mubr.bf16.gmra.mrb[0].mxu0 %v2872
    %v2908 = vpop.f32.mrb[0].mxu0
    %v2909 = vadd.f32 0.0, %v2908
    %v2910 = vpop.f32.mrb[0].mxu0
    %v2911 = vpop.f32.mrb[0].mxu0
    %v2912 = vadd.f32 0.0, %v2911
    %v2913 = vpop.f32.mrb[0].mxu0
    %2914 = vdwg.mxu0
    %v2915 = vadd.f32 %v2855, %v2909
    %v2916 = vadd.f32 %v2856, %v2912
    %s2917 = scalar_lea.vmem %s31, 80
    %v2918 = vld [vmem:[%s2917] sm:$0xf]
    %v2919 = vld [vmem:[%s2917 + $0x4] sm:$0xf]
    %v2922 = vunpack.c.l.b16 %v2918
    %v2923 = vunpack.c.l.b16 %v2919
    %v2924 = vpack.c.b16 %v2923, %v2922
    %2925 = vrot.lane.b32.xlu0 %v2211, 117
    %v2926 = vpop.permute.xlu0 %2925
    %2927 = vrot.lane.b32.xlu0 %v2212, 117
    %v2928 = vpop.permute.xlu0 %2927
    %v2929 = vsel %vm989, %v2926, %v2928
    %v2932 = vsel %vm243, %v2924, 0
    %2934 = vmatprep.subr.bf16.mxu0 0
    %2935 = vmatpush1.bf16.msra.mxu0 %v2929
    %2936 = vmatprep.subr.bf16.mxu0 0
    %2937 = vmatpush1.bf16.msra.mxu0 0
    %2938 = vmatprep.subr.bf16.mxu0 0
    %2939 = vmatpush1.bf16.msra.mxu0 0
    %2940 = vmatprep.subr.bf16.mxu0 0
    %2941 = vmatpush1.bf16.msra.mxu0 0
    %2942 = vmatprep.subr.bf16.mxu0 0
    %2943 = vmatpush1.bf16.msra.mxu0 0
    %2944 = vmatprep.subr.bf16.mxu0 0
    %2945 = vmatpush1.bf16.msra.mxu0 0
    %2946 = vmatprep.subr.bf16.mxu0 0
    %2947 = vmatpush1.bf16.msra.mxu0 0
    %2948 = vmatprep.subr.bf16.mxu0 0
    %2949 = vmatpush1.bf16.msra.mxu0 0
    %2950 = vmatprep.subr.bf16.mxu0 0
    %2951 = vmatpush1.bf16.msra.mxu0 0
    %2952 = vmatprep.subr.bf16.mxu0 0
    %2953 = vmatpush1.bf16.msra.mxu0 0
    %2954 = vmatprep.subr.bf16.mxu0 0
    %2955 = vmatpush1.bf16.msra.mxu0 0
    %2956 = vmatprep.subr.bf16.mxu0 0
    %2957 = vmatpush1.bf16.msra.mxu0 0
    %2958 = vmatprep.subr.bf16.mxu0 0
    %2959 = vmatpush1.bf16.msra.mxu0 0
    %2960 = vmatprep.subr.bf16.mxu0 0
    %2961 = vmatpush1.bf16.msra.mxu0 0
    %2962 = vmatprep.subr.bf16.mxu0 0
    %2963 = vmatpush1.bf16.msra.mxu0 0
    %2964 = vmatprep.subr.bf16.mxu0 0
    %2965 = vmatpush1.bf16.msra.mxu0 0
    %2966 = vmatprep.mubr.bf16.mxu0 0
    %2967 = vmatmul.mubr.bf16.gmra.mrb[0].mxu0 %v2932
    %v2968 = vpop.f32.mrb[0].mxu0
    %v2969 = vadd.f32 0.0, %v2968
    %v2970 = vpop.f32.mrb[0].mxu0
    %v2971 = vpop.f32.mrb[0].mxu0
    %v2972 = vadd.f32 0.0, %v2971
    %v2973 = vpop.f32.mrb[0].mxu0
    %2974 = vdwg.mxu0
    %v2975 = vadd.f32 %v2915, %v2969
    %v2976 = vadd.f32 %v2916, %v2972
    %s2977 = scalar_lea.vmem %s31, 88
    %v2978 = vld [vmem:[%s2977] sm:$0xf]
    %v2979 = vld [vmem:[%s2977 + $0x4] sm:$0xf]
    %v2982 = vunpack.c.l.b16 %v2978
    %v2983 = vunpack.c.l.b16 %v2979
    %v2984 = vpack.c.b16 %v2983, %v2982
    %2985 = vrot.lane.b32.xlu0 %v2211, 116
    %v2986 = vpop.permute.xlu0 %2985
    %2987 = vrot.lane.b32.xlu0 %v2212, 116
    %v2988 = vpop.permute.xlu0 %2987
    %v2989 = vsel %vm1050, %v2986, %v2988
    %v2992 = vsel %vm243, %v2984, 0
    %2994 = vmatprep.subr.bf16.mxu0 0
    %2995 = vmatpush1.bf16.msra.mxu0 %v2989
    %2996 = vmatprep.subr.bf16.mxu0 0
    %2997 = vmatpush1.bf16.msra.mxu0 0
    %2998 = vmatprep.subr.bf16.mxu0 0
    %2999 = vmatpush1.bf16.msra.mxu0 0
    %3000 = vmatprep.subr.bf16.mxu0 0
    %3001 = vmatpush1.bf16.msra.mxu0 0
    %3002 = vmatprep.subr.bf16.mxu0 0
    %3003 = vmatpush1.bf16.msra.mxu0 0
    %3004 = vmatprep.subr.bf16.mxu0 0
    %3005 = vmatpush1.bf16.msra.mxu0 0
    %3006 = vmatprep.subr.bf16.mxu0 0
    %3007 = vmatpush1.bf16.msra.mxu0 0
    %3008 = vmatprep.subr.bf16.mxu0 0
    %3009 = vmatpush1.bf16.msra.mxu0 0
    %3010 = vmatprep.subr.bf16.mxu0 0
    %3011 = vmatpush1.bf16.msra.mxu0 0
    %3012 = vmatprep.subr.bf16.mxu0 0
    %3013 = vmatpush1.bf16.msra.mxu0 0
    %3014 = vmatprep.subr.bf16.mxu0 0
    %3015 = vmatpush1.bf16.msra.mxu0 0
    %3016 = vmatprep.subr.bf16.mxu0 0
    %3017 = vmatpush1.bf16.msra.mxu0 0
    %3018 = vmatprep.subr.bf16.mxu0 0
    %3019 = vmatpush1.bf16.msra.mxu0 0
    %3020 = vmatprep.subr.bf16.mxu0 0
    %3021 = vmatpush1.bf16.msra.mxu0 0
    %3022 = vmatprep.subr.bf16.mxu0 0
    %3023 = vmatpush1.bf16.msra.mxu0 0
    %3024 = vmatprep.subr.bf16.mxu0 0
    %3025 = vmatpush1.bf16.msra.mxu0 0
    %3026 = vmatprep.mubr.bf16.mxu0 0
    %3027 = vmatmul.mubr.bf16.gmra.mrb[0].mxu0 %v2992
    %v3028 = vpop.f32.mrb[0].mxu0
    %v3029 = vadd.f32 0.0, %v3028
    %v3030 = vpop.f32.mrb[0].mxu0
    %v3031 = vpop.f32.mrb[0].mxu0
    %v3032 = vadd.f32 0.0, %v3031
    %v3033 = vpop.f32.mrb[0].mxu0
    %3034 = vdwg.mxu0
    %v3035 = vadd.f32 %v2975, %v3029
    %v3036 = vadd.f32 %v2976, %v3032
    %s3037 = scalar_lea.vmem %s31, 96
    %v3038 = vld [vmem:[%s3037] sm:$0xf]
    %v3039 = vld [vmem:[%s3037 + $0x4] sm:$0xf]
    %v3042 = vunpack.c.l.b16 %v3038
    %v3043 = vunpack.c.l.b16 %v3039
    %v3044 = vpack.c.b16 %v3043, %v3042
    %3045 = vrot.lane.b32.xlu0 %v2211, 115
    %v3046 = vpop.permute.xlu0 %3045
    %3047 = vrot.lane.b32.xlu0 %v2212, 115
    %v3048 = vpop.permute.xlu0 %3047
    %v3049 = vsel %vm1111, %v3046, %v3048
    %v3052 = vsel %vm243, %v3044, 0
    %3054 = vmatprep.subr.bf16.mxu0 0
    %3055 = vmatpush1.bf16.msra.mxu0 %v3049
    %3056 = vmatprep.subr.bf16.mxu0 0
    %3057 = vmatpush1.bf16.msra.mxu0 0
    %3058 = vmatprep.subr.bf16.mxu0 0
    %3059 = vmatpush1.bf16.msra.mxu0 0
    %3060 = vmatprep.subr.bf16.mxu0 0
    %3061 = vmatpush1.bf16.msra.mxu0 0
    %3062 = vmatprep.subr.bf16.mxu0 0
    %3063 = vmatpush1.bf16.msra.mxu0 0
    %3064 = vmatprep.subr.bf16.mxu0 0
    %3065 = vmatpush1.bf16.msra.mxu0 0
    %3066 = vmatprep.subr.bf16.mxu0 0
    %3067 = vmatpush1.bf16.msra.mxu0 0
    %3068 = vmatprep.subr.bf16.mxu0 0
    %3069 = vmatpush1.bf16.msra.mxu0 0
    %3070 = vmatprep.subr.bf16.mxu0 0
    %3071 = vmatpush1.bf16.msra.mxu0 0
    %3072 = vmatprep.subr.bf16.mxu0 0
    %3073 = vmatpush1.bf16.msra.mxu0 0
    %3074 = vmatprep.subr.bf16.mxu0 0
    %3075 = vmatpush1.bf16.msra.mxu0 0
    %3076 = vmatprep.subr.bf16.mxu0 0
    %3077 = vmatpush1.bf16.msra.mxu0 0
    %3078 = vmatprep.subr.bf16.mxu0 0
    %3079 = vmatpush1.bf16.msra.mxu0 0
    %3080 = vmatprep.subr.bf16.mxu0 0
    %3081 = vmatpush1.bf16.msra.mxu0 0
    %3082 = vmatprep.subr.bf16.mxu0 0
    %3083 = vmatpush1.bf16.msra.mxu0 0
    %3084 = vmatprep.subr.bf16.mxu0 0
    %3085 = vmatpush1.bf16.msra.mxu0 0
    %3086 = vmatprep.mubr.bf16.mxu0 0
    %3087 = vmatmul.mubr.bf16.gmra.mrb[0].mxu0 %v3052
    %v3088 = vpop.f32.mrb[0].mxu0
    %v3089 = vadd.f32 0.0, %v3088
    %v3090 = vpop.f32.mrb[0].mxu0
    %v3091 = vpop.f32.mrb[0].mxu0
    %v3092 = vadd.f32 0.0, %v3091
    %v3093 = vpop.f32.mrb[0].mxu0
    %3094 = vdwg.mxu0
    %v3095 = vadd.f32 %v3035, %v3089
    %v3096 = vadd.f32 %v3036, %v3092
    %s3097 = scalar_lea.vmem %s31, 104
    %v3098 = vld [vmem:[%s3097] sm:$0xf]
    %v3099 = vld [vmem:[%s3097 + $0x4] sm:$0xf]
    %v3102 = vunpack.c.l.b16 %v3098
    %v3103 = vunpack.c.l.b16 %v3099
    %v3104 = vpack.c.b16 %v3103, %v3102
    %3105 = vrot.lane.b32.xlu0 %v2211, 114
    %v3106 = vpop.permute.xlu0 %3105
    %3107 = vrot.lane.b32.xlu0 %v2212, 114
    %v3108 = vpop.permute.xlu0 %3107
    %v3109 = vsel %vm1172, %v3106, %v3108
    %v3112 = vsel %vm243, %v3104, 0
    %3114 = vmatprep.subr.bf16.mxu0 0
    %3115 = vmatpush1.bf16.msra.mxu0 %v3109
    %3116 = vmatprep.subr.bf16.mxu0 0
    %3117 = vmatpush1.bf16.msra.mxu0 0
    %3118 = vmatprep.subr.bf16.mxu0 0
    %3119 = vmatpush1.bf16.msra.mxu0 0
    %3120 = vmatprep.subr.bf16.mxu0 0
    %3121 = vmatpush1.bf16.msra.mxu0 0
    %3122 = vmatprep.subr.bf16.mxu0 0
    %3123 = vmatpush1.bf16.msra.mxu0 0
    %3124 = vmatprep.subr.bf16.mxu0 0
    %3125 = vmatpush1.bf16.msra.mxu0 0
    %3126 = vmatprep.subr.bf16.mxu0 0
    %3127 = vmatpush1.bf16.msra.mxu0 0
    %3128 = vmatprep.subr.bf16.mxu0 0
    %3129 = vmatpush1.bf16.msra.mxu0 0
    %3130 = vmatprep.subr.bf16.mxu0 0
    %3131 = vmatpush1.bf16.msra.mxu0 0
    %3132 = vmatprep.subr.bf16.mxu0 0
    %3133 = vmatpush1.bf16.msra.mxu0 0
    %3134 = vmatprep.subr.bf16.mxu0 0
    %3135 = vmatpush1.bf16.msra.mxu0 0
    %3136 = vmatprep.subr.bf16.mxu0 0
    %3137 = vmatpush1.bf16.msra.mxu0 0
    %3138 = vmatprep.subr.bf16.mxu0 0
    %3139 = vmatpush1.bf16.msra.mxu0 0
    %3140 = vmatprep.subr.bf16.mxu0 0
    %3141 = vmatpush1.bf16.msra.mxu0 0
    %3142 = vmatprep.subr.bf16.mxu0 0
    %3143 = vmatpush1.bf16.msra.mxu0 0
    %3144 = vmatprep.subr.bf16.mxu0 0
    %3145 = vmatpush1.bf16.msra.mxu0 0
    %3146 = vmatprep.mubr.bf16.mxu0 0
    %3147 = vmatmul.mubr.bf16.gmra.mrb[0].mxu0 %v3112
    %v3148 = vpop.f32.mrb[0].mxu0
    %v3149 = vadd.f32 0.0, %v3148
    %v3150 = vpop.f32.mrb[0].mxu0
    %v3151 = vpop.f32.mrb[0].mxu0
    %v3152 = vadd.f32 0.0, %v3151
    %v3153 = vpop.f32.mrb[0].mxu0
    %3154 = vdwg.mxu0
    %v3155 = vadd.f32 %v3095, %v3149
    %v3156 = vadd.f32 %v3096, %v3152
    %s3157 = scalar_lea.vmem %s31, 112
    %v3158 = vld [vmem:[%s3157] sm:$0xf]
    %v3159 = vld [vmem:[%s3157 + $0x4] sm:$0xf]
    %v3162 = vunpack.c.l.b16 %v3158
    %v3163 = vunpack.c.l.b16 %v3159
    %v3164 = vpack.c.b16 %v3163, %v3162
    %3165 = vrot.lane.b32.xlu0 %v2211, 113
    %v3166 = vpop.permute.xlu0 %3165
    %3167 = vrot.lane.b32.xlu0 %v2212, 113
    %v3168 = vpop.permute.xlu0 %3167
    %v3169 = vsel %vm1233, %v3166, %v3168
    %v3172 = vsel %vm243, %v3164, 0
    %3174 = vmatprep.subr.bf16.mxu0 0
    %3175 = vmatpush1.bf16.msra.mxu0 %v3169
    %3176 = vmatprep.subr.bf16.mxu0 0
    %3177 = vmatpush1.bf16.msra.mxu0 0
    %3178 = vmatprep.subr.bf16.mxu0 0
    %3179 = vmatpush1.bf16.msra.mxu0 0
    %3180 = vmatprep.subr.bf16.mxu0 0
    %3181 = vmatpush1.bf16.msra.mxu0 0
    %3182 = vmatprep.subr.bf16.mxu0 0
    %3183 = vmatpush1.bf16.msra.mxu0 0
    %3184 = vmatprep.subr.bf16.mxu0 0
    %3185 = vmatpush1.bf16.msra.mxu0 0
    %3186 = vmatprep.subr.bf16.mxu0 0
    %3187 = vmatpush1.bf16.msra.mxu0 0
    %3188 = vmatprep.subr.bf16.mxu0 0
    %3189 = vmatpush1.bf16.msra.mxu0 0
    %3190 = vmatprep.subr.bf16.mxu0 0
    %3191 = vmatpush1.bf16.msra.mxu0 0
    %3192 = vmatprep.subr.bf16.mxu0 0
    %3193 = vmatpush1.bf16.msra.mxu0 0
    %3194 = vmatprep.subr.bf16.mxu0 0
    %3195 = vmatpush1.bf16.msra.mxu0 0
    %3196 = vmatprep.subr.bf16.mxu0 0
    %3197 = vmatpush1.bf16.msra.mxu0 0
    %3198 = vmatprep.subr.bf16.mxu0 0
    %3199 = vmatpush1.bf16.msra.mxu0 0
    %3200 = vmatprep.subr.bf16.mxu0 0
    %3201 = vmatpush1.bf16.msra.mxu0 0
    %3202 = vmatprep.subr.bf16.mxu0 0
    %3203 = vmatpush1.bf16.msra.mxu0 0
    %3204 = vmatprep.subr.bf16.mxu0 0
    %3205 = vmatpush1.bf16.msra.mxu0 0
    %3206 = vmatprep.mubr.bf16.mxu0 0
    %3207 = vmatmul.mubr.bf16.gmra.mrb[0].mxu0 %v3172
    %v3208 = vpop.f32.mrb[0].mxu0
    %v3209 = vadd.f32 0.0, %v3208
    %v3210 = vpop.f32.mrb[0].mxu0
    %v3211 = vpop.f32.mrb[0].mxu0
    %v3212 = vadd.f32 0.0, %v3211
    %v3213 = vpop.f32.mrb[0].mxu0
    %3214 = vdwg.mxu0
    %v3215 = vadd.f32 %v3155, %v3209
    %v3216 = vadd.f32 %v3156, %v3212
    %v3217 = vmul.f32 %v3215, %v240
    %v3218 = vmul.f32 %v3216, %v240
    %3219 = vadd.xlane.f32.xlu0 %v3217
    %v3220 = vpop.xlane.xlu0 %3219
    %3221 = vadd.xlane.f32.xlu0 %v3218
    %v3222 = vpop.xlane.xlu0 %3221
    %v3223 = vmul.f32 %v3220, 0.03125
    %v3224 = vmul.f32 %v3222, 0.03125
    %v3225 = vsub.f32 %v3215, %v3223
    %v3226 = vsub.f32 %v3216, %v3224
    %v3227 = vmul.f32 %v3225, %v240
    %v3228 = vmul.f32 %v3226, %v240
    %v3229 = vmul.f32 %v3227, %v3227
    %v3230 = vmul.f32 %v3228, %v3228
    %3231 = vadd.xlane.f32.xlu0 %v3229
    %v3232 = vpop.xlane.xlu0 %3231
    %3233 = vadd.xlane.f32.xlu0 %v3230
    %v3234 = vpop.xlane.xlu0 %3233
    %v3235 = vmul.f32 %v3232, 0.03125
    %v3236 = vmul.f32 %v3234, 0.03125
    %v3237 = vld [vmem:[%s33] sm:$0xff]
    %v3238 = vld [vmem:[%s33 + $0x8] sm:$0xff]
    %v3239 = vadd.f32 %v3235, 1e-05
    %v3240 = vadd.f32 %v3236, 1e-05
    %v3241 = vrsqrt.pop %v3239
    %v3242 = vrsqrt.pop %v3240
    %v3243 = vmul.f32 %v3237, %v3241
    %v3244 = vmul.f32 %v3238, %v3242
    %v3245 = vld [vmem:[%s35] sm:$0xff]
    %v3246 = vld [vmem:[%s35 + $0x8] sm:$0xff]
    %v3247 = vmul.f32 %v3223, %v3243
    %v3248 = vmul.f32 %v3224, %v3244
    %v3249 = vsub.f32 %v3245, %v3247
    %v3250 = vsub.f32 %v3246, %v3248
    %3252 = vset.pattern.permute.xlu0 0
    %3253 = vperm.xlu0 %3252, %v3243
    %v3254 = vpop.permute.xlu0 %3253
    %3257 = vset.pattern.permute.xlu0 0
    %3258 = vperm.xlu0 %3257, %v3244
    %v3259 = vpop.permute.xlu0 %3258
    %v3261 = vmul.f32 %v3215, %v3254
    %v3262 = vmul.f32 %v3216, %v3259
    %3264 = vset.pattern.permute.xlu0 0
    %3265 = vperm.xlu0 %3264, %v3249
    %v3266 = vpop.permute.xlu0 %3265
    %3269 = vset.pattern.permute.xlu0 0
    %3270 = vperm.xlu0 %3269, %v3250
    %v3271 = vpop.permute.xlu0 %3270
    %v3273 = vadd.f32 %v3261, %v3266
    %v3274 = vadd.f32 %v3262, %v3271
    %v3275 = vmax.f32 %v3273, 0.0
    %v3276 = vmax.f32 %v3274, 0.0
    %v3277 = vmul.f32 %v3275, %v240
    %v3278 = vmul.f32 %v3276, %v240
    %v3279 = vpack.c.bf16 %v3278, %v3277
    %3281 = vrot.lane.b32.xlu0 %v3279, 8
    %v3282 = vpop.permute.xlu0 %3281
    %3284 = vst.msk [vmem:[#allocation2] sm:$0xff] %vm255, %v3282
    %3285 = vst.msk [vmem:[#allocation2 + $0x8] sm:$0xff] %vm257, %v3282
    %v3286 = vld [vmem:[#allocation2] sm:$0xff]
    %v3287 = vld [vmem:[#allocation2 + $0x8] sm:$0xff]
    %v3288 = vld [vmem:[%s43] sm:$0xf]
    %v3289 = vld [vmem:[%s43 + $0x4] sm:$0xf]
    %s3290 = scalar_lea.vmem %s43, 8
    %v3291 = vld [vmem:[%s3290] sm:$0xf]
    %v3292 = vld [vmem:[%s3290 + $0x4] sm:$0xf]
    %v3295 = vunpack.c.l.b16 %v3291
    %v3296 = vunpack.c.l.b16 %v3292
    %v3297 = vpack.c.b16 %v3296, %v3295
    %3300 = vrot.lane.b32.xlu0 %v3286, 123
    %v3301 = vpop.permute.xlu0 %3300
    %3302 = vrot.lane.b32.xlu0 %v3287, 123
    %v3303 = vpop.permute.xlu0 %3302
    %v3304 = vsel %vm630, %v3301, %v3303
    %v3307 = vsel %vm243, %v3297, 0
    %3309 = vmatprep.subr.bf16.mxu0 0
    %3310 = vmatpush1.bf16.msra.mxu0 %v3304
    %3311 = vmatprep.subr.bf16.mxu0 0
    %3312 = vmatpush1.bf16.msra.mxu0 0
    %3313 = vmatprep.subr.bf16.mxu0 0
    %3314 = vmatpush1.bf16.msra.mxu0 0
    %3315 = vmatprep.subr.bf16.mxu0 0
    %3316 = vmatpush1.bf16.msra.mxu0 0
    %3317 = vmatprep.subr.bf16.mxu0 0
    %3318 = vmatpush1.bf16.msra.mxu0 0
    %3319 = vmatprep.subr.bf16.mxu0 0
    %3320 = vmatpush1.bf16.msra.mxu0 0
    %3321 = vmatprep.subr.bf16.mxu0 0
    %3322 = vmatpush1.bf16.msra.mxu0 0
    %3323 = vmatprep.subr.bf16.mxu0 0
    %3324 = vmatpush1.bf16.msra.mxu0 0
    %3325 = vmatprep.subr.bf16.mxu0 0
    %3326 = vmatpush1.bf16.msra.mxu0 0
    %3327 = vmatprep.subr.bf16.mxu0 0
    %3328 = vmatpush1.bf16.msra.mxu0 0
    %3329 = vmatprep.subr.bf16.mxu0 0
    %3330 = vmatpush1.bf16.msra.mxu0 0
    %3331 = vmatprep.subr.bf16.mxu0 0
    %3332 = vmatpush1.bf16.msra.mxu0 0
    %3333 = vmatprep.subr.bf16.mxu0 0
    %3334 = vmatpush1.bf16.msra.mxu0 0
    %3335 = vmatprep.subr.bf16.mxu0 0
    %3336 = vmatpush1.bf16.msra.mxu0 0
    %3337 = vmatprep.subr.bf16.mxu0 0
    %3338 = vmatpush1.bf16.msra.mxu0 0
    %3339 = vmatprep.subr.bf16.mxu0 0
    %3340 = vmatpush1.bf16.msra.mxu0 0
    %3341 = vmatprep.mubr.bf16.mxu0 0
    %3342 = vmatmul.mubr.bf16.gmra.mrb[0].mxu0 %v3307
    %v3343 = vpop.f32.mrb[0].mxu0
    %v3344 = vadd.f32 0.0, %v3343
    %v3345 = vpop.f32.mrb[0].mxu0
    %v3346 = vpop.f32.mrb[0].mxu0
    %v3347 = vadd.f32 0.0, %v3346
    %v3348 = vpop.f32.mrb[0].mxu0
    %3349 = vdwg.mxu0
    %v3352 = vunpack.c.l.b16 %v3288
    %v3353 = vunpack.c.l.b16 %v3289
    %v3354 = vpack.c.b16 %v3353, %v3352
    %3355 = vrot.lane.b32.xlu0 %v3286, 124
    %v3356 = vpop.permute.xlu0 %3355
    %3357 = vrot.lane.b32.xlu0 %v3287, 124
    %v3358 = vpop.permute.xlu0 %3357
    %v3359 = vsel %vm569, %v3356, %v3358
    %v3362 = vsel %vm243, %v3354, 0
    %3364 = vmatprep.subr.bf16.mxu0 0
    %3365 = vmatpush1.bf16.msra.mxu0 %v3359
    %3366 = vmatprep.subr.bf16.mxu0 0
    %3367 = vmatpush1.bf16.msra.mxu0 0
    %3368 = vmatprep.subr.bf16.mxu0 0
    %3369 = vmatpush1.bf16.msra.mxu0 0
    %3370 = vmatprep.subr.bf16.mxu0 0
    %3371 = vmatpush1.bf16.msra.mxu0 0
    %3372 = vmatprep.subr.bf16.mxu0 0
    %3373 = vmatpush1.bf16.msra.mxu0 0
    %3374 = vmatprep.subr.bf16.mxu0 0
    %3375 = vmatpush1.bf16.msra.mxu0 0
    %3376 = vmatprep.subr.bf16.mxu0 0
    %3377 = vmatpush1.bf16.msra.mxu0 0
    %3378 = vmatprep.subr.bf16.mxu0 0
    %3379 = vmatpush1.bf16.msra.mxu0 0
    %3380 = vmatprep.subr.bf16.mxu0 0
    %3381 = vmatpush1.bf16.msra.mxu0 0
    %3382 = vmatprep.subr.bf16.mxu0 0
    %3383 = vmatpush1.bf16.msra.mxu0 0
    %3384 = vmatprep.subr.bf16.mxu0 0
    %3385 = vmatpush1.bf16.msra.mxu0 0
    %3386 = vmatprep.subr.bf16.mxu0 0
    %3387 = vmatpush1.bf16.msra.mxu0 0
    %3388 = vmatprep.subr.bf16.mxu0 0
    %3389 = vmatpush1.bf16.msra.mxu0 0
    %3390 = vmatprep.subr.bf16.mxu0 0
    %3391 = vmatpush1.bf16.msra.mxu0 0
    %3392 = vmatprep.subr.bf16.mxu0 0
    %3393 = vmatpush1.bf16.msra.mxu0 0
    %3394 = vmatprep.subr.bf16.mxu0 0
    %3395 = vmatpush1.bf16.msra.mxu0 0
    %3396 = vmatprep.mubr.bf16.mxu0 0
    %3397 = vmatmul.mubr.bf16.gmra.mrb[0].mxu0 %v3362
    %v3398 = vpop.f32.mrb[0].mxu0
    %v3399 = vadd.f32 %v3344, %v3398
    %v3400 = vpop.f32.mrb[0].mxu0
    %v3401 = vpop.f32.mrb[0].mxu0
    %v3402 = vadd.f32 %v3347, %v3401
    %v3403 = vpop.f32.mrb[0].mxu0
    %3404 = vdwg.mxu0
    %s3405 = scalar_lea.vmem %s43, 16
    %v3406 = vld [vmem:[%s3405] sm:$0xf]
    %v3407 = vld [vmem:[%s3405 + $0x4] sm:$0xf]
    %v3410 = vunpack.c.l.b16 %v3406
    %v3411 = vunpack.c.l.b16 %v3407
    %v3412 = vpack.c.b16 %v3411, %v3410
    %3413 = vrot.lane.b32.xlu0 %v3286, 122
    %v3414 = vpop.permute.xlu0 %3413
    %3415 = vrot.lane.b32.xlu0 %v3287, 122
    %v3416 = vpop.permute.xlu0 %3415
    %v3417 = vsel %vm691, %v3414, %v3416
    %v3420 = vsel %vm243, %v3412, 0
    %3422 = vmatprep.subr.bf16.mxu0 0
    %3423 = vmatpush1.bf16.msra.mxu0 %v3417
    %3424 = vmatprep.subr.bf16.mxu0 0
    %3425 = vmatpush1.bf16.msra.mxu0 0
    %3426 = vmatprep.subr.bf16.mxu0 0
    %3427 = vmatpush1.bf16.msra.mxu0 0
    %3428 = vmatprep.subr.bf16.mxu0 0
    %3429 = vmatpush1.bf16.msra.mxu0 0
    %3430 = vmatprep.subr.bf16.mxu0 0
    %3431 = vmatpush1.bf16.msra.mxu0 0
    %3432 = vmatprep.subr.bf16.mxu0 0
    %3433 = vmatpush1.bf16.msra.mxu0 0
    %3434 = vmatprep.subr.bf16.mxu0 0
    %3435 = vmatpush1.bf16.msra.mxu0 0
    %3436 = vmatprep.subr.bf16.mxu0 0
    %3437 = vmatpush1.bf16.msra.mxu0 0
    %3438 = vmatprep.subr.bf16.mxu0 0
    %3439 = vmatpush1.bf16.msra.mxu0 0
    %3440 = vmatprep.subr.bf16.mxu0 0
    %3441 = vmatpush1.bf16.msra.mxu0 0
    %3442 = vmatprep.subr.bf16.mxu0 0
    %3443 = vmatpush1.bf16.msra.mxu0 0
    %3444 = vmatprep.subr.bf16.mxu0 0
    %3445 = vmatpush1.bf16.msra.mxu0 0
    %3446 = vmatprep.subr.bf16.mxu0 0
    %3447 = vmatpush1.bf16.msra.mxu0 0
    %3448 = vmatprep.subr.bf16.mxu0 0
    %3449 = vmatpush1.bf16.msra.mxu0 0
    %3450 = vmatprep.subr.bf16.mxu0 0
    %3451 = vmatpush1.bf16.msra.mxu0 0
    %3452 = vmatprep.subr.bf16.mxu0 0
    %3453 = vmatpush1.bf16.msra.mxu0 0
    %3454 = vmatprep.mubr.bf16.mxu0 0
    %3455 = vmatmul.mubr.bf16.gmra.mrb[0].mxu0 %v3420
    %v3456 = vpop.f32.mrb[0].mxu0
    %v3457 = vadd.f32 0.0, %v3456
    %v3458 = vpop.f32.mrb[0].mxu0
    %v3459 = vpop.f32.mrb[0].mxu0
    %v3460 = vadd.f32 0.0, %v3459
    %v3461 = vpop.f32.mrb[0].mxu0
    %3462 = vdwg.mxu0
    %v3463 = vadd.f32 %v3399, %v3457
    %v3464 = vadd.f32 %v3402, %v3460
    %s3465 = scalar_lea.vmem %s43, 24
    %v3466 = vld [vmem:[%s3465] sm:$0xf]
    %v3467 = vld [vmem:[%s3465 + $0x4] sm:$0xf]
    %v3470 = vunpack.c.l.b16 %v3466
    %v3471 = vunpack.c.l.b16 %v3467
    %v3472 = vpack.c.b16 %v3471, %v3470
    %3473 = vrot.lane.b32.xlu0 %v3286, 121
    %v3474 = vpop.permute.xlu0 %3473
    %3475 = vrot.lane.b32.xlu0 %v3287, 121
    %v3476 = vpop.permute.xlu0 %3475
    %v3477 = vsel %vm752, %v3474, %v3476
    %v3480 = vsel %vm243, %v3472, 0
    %3482 = vmatprep.subr.bf16.mxu0 0
    %3483 = vmatpush1.bf16.msra.mxu0 %v3477
    %3484 = vmatprep.subr.bf16.mxu0 0
    %3485 = vmatpush1.bf16.msra.mxu0 0
    %3486 = vmatprep.subr.bf16.mxu0 0
    %3487 = vmatpush1.bf16.msra.mxu0 0
    %3488 = vmatprep.subr.bf16.mxu0 0
    %3489 = vmatpush1.bf16.msra.mxu0 0
    %3490 = vmatprep.subr.bf16.mxu0 0
    %3491 = vmatpush1.bf16.msra.mxu0 0
    %3492 = vmatprep.subr.bf16.mxu0 0
    %3493 = vmatpush1.bf16.msra.mxu0 0
    %3494 = vmatprep.subr.bf16.mxu0 0
    %3495 = vmatpush1.bf16.msra.mxu0 0
    %3496 = vmatprep.subr.bf16.mxu0 0
    %3497 = vmatpush1.bf16.msra.mxu0 0
    %3498 = vmatprep.subr.bf16.mxu0 0
    %3499 = vmatpush1.bf16.msra.mxu0 0
    %3500 = vmatprep.subr.bf16.mxu0 0
    %3501 = vmatpush1.bf16.msra.mxu0 0
    %3502 = vmatprep.subr.bf16.mxu0 0
    %3503 = vmatpush1.bf16.msra.mxu0 0
    %3504 = vmatprep.subr.bf16.mxu0 0
    %3505 = vmatpush1.bf16.msra.mxu0 0
    %3506 = vmatprep.subr.bf16.mxu0 0
    %3507 = vmatpush1.bf16.msra.mxu0 0
    %3508 = vmatprep.subr.bf16.mxu0 0
    %3509 = vmatpush1.bf16.msra.mxu0 0
    %3510 = vmatprep.subr.bf16.mxu0 0
    %3511 = vmatpush1.bf16.msra.mxu0 0
    %3512 = vmatprep.subr.bf16.mxu0 0
    %3513 = vmatpush1.bf16.msra.mxu0 0
    %3514 = vmatprep.mubr.bf16.mxu0 0
    %3515 = vmatmul.mubr.bf16.gmra.mrb[0].mxu0 %v3480
    %v3516 = vpop.f32.mrb[0].mxu0
    %v3517 = vadd.f32 0.0, %v3516
    %v3518 = vpop.f32.mrb[0].mxu0
    %v3519 = vpop.f32.mrb[0].mxu0
    %v3520 = vadd.f32 0.0, %v3519
    %v3521 = vpop.f32.mrb[0].mxu0
    %3522 = vdwg.mxu0
    %v3523 = vadd.f32 %v3463, %v3517
    %v3524 = vadd.f32 %v3464, %v3520
    %s3525 = scalar_lea.vmem %s43, 32
    %v3526 = vld [vmem:[%s3525] sm:$0xf]
    %v3527 = vld [vmem:[%s3525 + $0x4] sm:$0xf]
    %v3530 = vunpack.c.l.b16 %v3526
    %v3531 = vunpack.c.l.b16 %v3527
    %v3532 = vpack.c.b16 %v3531, %v3530
    %3533 = vrot.lane.b32.xlu0 %v3286, 120
    %v3534 = vpop.permute.xlu0 %3533
    %3535 = vrot.lane.b32.xlu0 %v3287, 120
    %v3536 = vpop.permute.xlu0 %3535
    %v3537 = vsel %vm274, %v3534, %v3536
    %v3540 = vsel %vm243, %v3532, 0
    %3542 = vmatprep.subr.bf16.mxu0 0
    %3543 = vmatpush1.bf16.msra.mxu0 %v3537
    %3544 = vmatprep.subr.bf16.mxu0 0
    %3545 = vmatpush1.bf16.msra.mxu0 0
    %3546 = vmatprep.subr.bf16.mxu0 0
    %3547 = vmatpush1.bf16.msra.mxu0 0
    %3548 = vmatprep.subr.bf16.mxu0 0
    %3549 = vmatpush1.bf16.msra.mxu0 0
    %3550 = vmatprep.subr.bf16.mxu0 0
    %3551 = vmatpush1.bf16.msra.mxu0 0
    %3552 = vmatprep.subr.bf16.mxu0 0
    %3553 = vmatpush1.bf16.msra.mxu0 0
    %3554 = vmatprep.subr.bf16.mxu0 0
    %3555 = vmatpush1.bf16.msra.mxu0 0
    %3556 = vmatprep.subr.bf16.mxu0 0
    %3557 = vmatpush1.bf16.msra.mxu0 0
    %3558 = vmatprep.subr.bf16.mxu0 0
    %3559 = vmatpush1.bf16.msra.mxu0 0
    %3560 = vmatprep.subr.bf16.mxu0 0
    %3561 = vmatpush1.bf16.msra.mxu0 0
    %3562 = vmatprep.subr.bf16.mxu0 0
    %3563 = vmatpush1.bf16.msra.mxu0 0
    %3564 = vmatprep.subr.bf16.mxu0 0
    %3565 = vmatpush1.bf16.msra.mxu0 0
    %3566 = vmatprep.subr.bf16.mxu0 0
    %3567 = vmatpush1.bf16.msra.mxu0 0
    %3568 = vmatprep.subr.bf16.mxu0 0
    %3569 = vmatpush1.bf16.msra.mxu0 0
    %3570 = vmatprep.subr.bf16.mxu0 0
    %3571 = vmatpush1.bf16.msra.mxu0 0
    %3572 = vmatprep.subr.bf16.mxu0 0
    %3573 = vmatpush1.bf16.msra.mxu0 0
    %3574 = vmatprep.mubr.bf16.mxu0 0
    %3575 = vmatmul.mubr.bf16.gmra.mrb[0].mxu0 %v3540
    %v3576 = vpop.f32.mrb[0].mxu0
    %v3577 = vadd.f32 0.0, %v3576
    %v3578 = vpop.f32.mrb[0].mxu0
    %v3579 = vpop.f32.mrb[0].mxu0
    %v3580 = vadd.f32 0.0, %v3579
    %v3581 = vpop.f32.mrb[0].mxu0
    %3582 = vdwg.mxu0
    %v3583 = vadd.f32 %v3523, %v3577
    %v3584 = vadd.f32 %v3524, %v3580
    %s3585 = scalar_lea.vmem %s43, 40
    %v3586 = vld [vmem:[%s3585] sm:$0xf]
    %v3587 = vld [vmem:[%s3585 + $0x4] sm:$0xf]
    %v3590 = vunpack.c.l.b16 %v3586
    %v3591 = vunpack.c.l.b16 %v3587
    %v3592 = vpack.c.b16 %v3591, %v3590
    %3593 = vrot.lane.b32.xlu0 %v3286, 119
    %v3594 = vpop.permute.xlu0 %3593
    %3595 = vrot.lane.b32.xlu0 %v3287, 119
    %v3596 = vpop.permute.xlu0 %3595
    %v3597 = vsel %vm867, %v3594, %v3596
    %v3600 = vsel %vm243, %v3592, 0
    %3602 = vmatprep.subr.bf16.mxu0 0
    %3603 = vmatpush1.bf16.msra.mxu0 %v3597
    %3604 = vmatprep.subr.bf16.mxu0 0
    %3605 = vmatpush1.bf16.msra.mxu0 0
    %3606 = vmatprep.subr.bf16.mxu0 0
    %3607 = vmatpush1.bf16.msra.mxu0 0
    %3608 = vmatprep.subr.bf16.mxu0 0
    %3609 = vmatpush1.bf16.msra.mxu0 0
    %3610 = vmatprep.subr.bf16.mxu0 0
    %3611 = vmatpush1.bf16.msra.mxu0 0
    %3612 = vmatprep.subr.bf16.mxu0 0
    %3613 = vmatpush1.bf16.msra.mxu0 0
    %3614 = vmatprep.subr.bf16.mxu0 0
    %3615 = vmatpush1.bf16.msra.mxu0 0
    %3616 = vmatprep.subr.bf16.mxu0 0
    %3617 = vmatpush1.bf16.msra.mxu0 0
    %3618 = vmatprep.subr.bf16.mxu0 0
    %3619 = vmatpush1.bf16.msra.mxu0 0
    %3620 = vmatprep.subr.bf16.mxu0 0
    %3621 = vmatpush1.bf16.msra.mxu0 0
    %3622 = vmatprep.subr.bf16.mxu0 0
    %3623 = vmatpush1.bf16.msra.mxu0 0
    %3624 = vmatprep.subr.bf16.mxu0 0
    %3625 = vmatpush1.bf16.msra.mxu0 0
    %3626 = vmatprep.subr.bf16.mxu0 0
    %3627 = vmatpush1.bf16.msra.mxu0 0
    %3628 = vmatprep.subr.bf16.mxu0 0
    %3629 = vmatpush1.bf16.msra.mxu0 0
    %3630 = vmatprep.subr.bf16.mxu0 0
    %3631 = vmatpush1.bf16.msra.mxu0 0
    %3632 = vmatprep.subr.bf16.mxu0 0
    %3633 = vmatpush1.bf16.msra.mxu0 0
    %3634 = vmatprep.mubr.bf16.mxu0 0
    %3635 = vmatmul.mubr.bf16.gmra.mrb[0].mxu0 %v3600
    %v3636 = vpop.f32.mrb[0].mxu0
    %v3637 = vadd.f32 0.0, %v3636
    %v3638 = vpop.f32.mrb[0].mxu0
    %v3639 = vpop.f32.mrb[0].mxu0
    %v3640 = vadd.f32 0.0, %v3639
    %v3641 = vpop.f32.mrb[0].mxu0
    %3642 = vdwg.mxu0
    %v3643 = vadd.f32 %v3583, %v3637
    %v3644 = vadd.f32 %v3584, %v3640
    %s3645 = scalar_lea.vmem %s43, 48
    %v3646 = vld [vmem:[%s3645] sm:$0xf]
    %v3647 = vld [vmem:[%s3645 + $0x4] sm:$0xf]
    %v3650 = vunpack.c.l.b16 %v3646
    %v3651 = vunpack.c.l.b16 %v3647
    %v3652 = vpack.c.b16 %v3651, %v3650
    %3653 = vrot.lane.b32.xlu0 %v3286, 118
    %v3654 = vpop.permute.xlu0 %3653
    %3655 = vrot.lane.b32.xlu0 %v3287, 118
    %v3656 = vpop.permute.xlu0 %3655
    %v3657 = vsel %vm928, %v3654, %v3656
    %v3660 = vsel %vm243, %v3652, 0
    %3662 = vmatprep.subr.bf16.mxu0 0
    %3663 = vmatpush1.bf16.msra.mxu0 %v3657
    %3664 = vmatprep.subr.bf16.mxu0 0
    %3665 = vmatpush1.bf16.msra.mxu0 0
    %3666 = vmatprep.subr.bf16.mxu0 0
    %3667 = vmatpush1.bf16.msra.mxu0 0
    %3668 = vmatprep.subr.bf16.mxu0 0
    %3669 = vmatpush1.bf16.msra.mxu0 0
    %3670 = vmatprep.subr.bf16.mxu0 0
    %3671 = vmatpush1.bf16.msra.mxu0 0
    %3672 = vmatprep.subr.bf16.mxu0 0
    %3673 = vmatpush1.bf16.msra.mxu0 0
    %3674 = vmatprep.subr.bf16.mxu0 0
    %3675 = vmatpush1.bf16.msra.mxu0 0
    %3676 = vmatprep.subr.bf16.mxu0 0
    %3677 = vmatpush1.bf16.msra.mxu0 0
    %3678 = vmatprep.subr.bf16.mxu0 0
    %3679 = vmatpush1.bf16.msra.mxu0 0
    %3680 = vmatprep.subr.bf16.mxu0 0
    %3681 = vmatpush1.bf16.msra.mxu0 0
    %3682 = vmatprep.subr.bf16.mxu0 0
    %3683 = vmatpush1.bf16.msra.mxu0 0
    %3684 = vmatprep.subr.bf16.mxu0 0
    %3685 = vmatpush1.bf16.msra.mxu0 0
    %3686 = vmatprep.subr.bf16.mxu0 0
    %3687 = vmatpush1.bf16.msra.mxu0 0
    %3688 = vmatprep.subr.bf16.mxu0 0
    %3689 = vmatpush1.bf16.msra.mxu0 0
    %3690 = vmatprep.subr.bf16.mxu0 0
    %3691 = vmatpush1.bf16.msra.mxu0 0
    %3692 = vmatprep.subr.bf16.mxu0 0
    %3693 = vmatpush1.bf16.msra.mxu0 0
    %3694 = vmatprep.mubr.bf16.mxu0 0
    %3695 = vmatmul.mubr.bf16.gmra.mrb[0].mxu0 %v3660
    %v3696 = vpop.f32.mrb[0].mxu0
    %v3697 = vadd.f32 0.0, %v3696
    %v3698 = vpop.f32.mrb[0].mxu0
    %v3699 = vpop.f32.mrb[0].mxu0
    %v3700 = vadd.f32 0.0, %v3699
    %v3701 = vpop.f32.mrb[0].mxu0
    %3702 = vdwg.mxu0
    %v3703 = vadd.f32 %v3643, %v3697
    %v3704 = vadd.f32 %v3644, %v3700
    %s3705 = scalar_lea.vmem %s43, 56
    %v3706 = vld [vmem:[%s3705] sm:$0xf]
    %v3707 = vld [vmem:[%s3705 + $0x4] sm:$0xf]
    %v3710 = vunpack.c.l.b16 %v3706
    %v3711 = vunpack.c.l.b16 %v3707
    %v3712 = vpack.c.b16 %v3711, %v3710
    %3713 = vrot.lane.b32.xlu0 %v3286, 117
    %v3714 = vpop.permute.xlu0 %3713
    %3715 = vrot.lane.b32.xlu0 %v3287, 117
    %v3716 = vpop.permute.xlu0 %3715
    %v3717 = vsel %vm989, %v3714, %v3716
    %v3720 = vsel %vm243, %v3712, 0
    %3722 = vmatprep.subr.bf16.mxu0 0
    %3723 = vmatpush1.bf16.msra.mxu0 %v3717
    %3724 = vmatprep.subr.bf16.mxu0 0
    %3725 = vmatpush1.bf16.msra.mxu0 0
    %3726 = vmatprep.subr.bf16.mxu0 0
    %3727 = vmatpush1.bf16.msra.mxu0 0
    %3728 = vmatprep.subr.bf16.mxu0 0
    %3729 = vmatpush1.bf16.msra.mxu0 0
    %3730 = vmatprep.subr.bf16.mxu0 0
    %3731 = vmatpush1.bf16.msra.mxu0 0
    %3732 = vmatprep.subr.bf16.mxu0 0
    %3733 = vmatpush1.bf16.msra.mxu0 0
    %3734 = vmatprep.subr.bf16.mxu0 0
    %3735 = vmatpush1.bf16.msra.mxu0 0
    %3736 = vmatprep.subr.bf16.mxu0 0
    %3737 = vmatpush1.bf16.msra.mxu0 0
    %3738 = vmatprep.subr.bf16.mxu0 0
    %3739 = vmatpush1.bf16.msra.mxu0 0
    %3740 = vmatprep.subr.bf16.mxu0 0
    %3741 = vmatpush1.bf16.msra.mxu0 0
    %3742 = vmatprep.subr.bf16.mxu0 0
    %3743 = vmatpush1.bf16.msra.mxu0 0
    %3744 = vmatprep.subr.bf16.mxu0 0
    %3745 = vmatpush1.bf16.msra.mxu0 0
    %3746 = vmatprep.subr.bf16.mxu0 0
    %3747 = vmatpush1.bf16.msra.mxu0 0
    %3748 = vmatprep.subr.bf16.mxu0 0
    %3749 = vmatpush1.bf16.msra.mxu0 0
    %3750 = vmatprep.subr.bf16.mxu0 0
    %3751 = vmatpush1.bf16.msra.mxu0 0
    %3752 = vmatprep.subr.bf16.mxu0 0
    %3753 = vmatpush1.bf16.msra.mxu0 0
    %3754 = vmatprep.mubr.bf16.mxu0 0
    %3755 = vmatmul.mubr.bf16.gmra.mrb[0].mxu0 %v3720
    %v3756 = vpop.f32.mrb[0].mxu0
    %v3757 = vadd.f32 0.0, %v3756
    %v3758 = vpop.f32.mrb[0].mxu0
    %v3759 = vpop.f32.mrb[0].mxu0
    %v3760 = vadd.f32 0.0, %v3759
    %v3761 = vpop.f32.mrb[0].mxu0
    %3762 = vdwg.mxu0
    %v3763 = vadd.f32 %v3703, %v3757
    %v3764 = vadd.f32 %v3704, %v3760
    %s3765 = scalar_lea.vmem %s43, 64
    %v3766 = vld [vmem:[%s3765] sm:$0xf]
    %v3767 = vld [vmem:[%s3765 + $0x4] sm:$0xf]
    %v3770 = vunpack.c.l.b16 %v3766
    %v3771 = vunpack.c.l.b16 %v3767
    %v3772 = vpack.c.b16 %v3771, %v3770
    %3773 = vrot.lane.b32.xlu0 %v3286, 116
    %v3774 = vpop.permute.xlu0 %3773
    %3775 = vrot.lane.b32.xlu0 %v3287, 116
    %v3776 = vpop.permute.xlu0 %3775
    %v3777 = vsel %vm1050, %v3774, %v3776
    %v3780 = vsel %vm243, %v3772, 0
    %3782 = vmatprep.subr.bf16.mxu0 0
    %3783 = vmatpush1.bf16.msra.mxu0 %v3777
    %3784 = vmatprep.subr.bf16.mxu0 0
    %3785 = vmatpush1.bf16.msra.mxu0 0
    %3786 = vmatprep.subr.bf16.mxu0 0
    %3787 = vmatpush1.bf16.msra.mxu0 0
    %3788 = vmatprep.subr.bf16.mxu0 0
    %3789 = vmatpush1.bf16.msra.mxu0 0
    %3790 = vmatprep.subr.bf16.mxu0 0
    %3791 = vmatpush1.bf16.msra.mxu0 0
    %3792 = vmatprep.subr.bf16.mxu0 0
    %3793 = vmatpush1.bf16.msra.mxu0 0
    %3794 = vmatprep.subr.bf16.mxu0 0
    %3795 = vmatpush1.bf16.msra.mxu0 0
    %3796 = vmatprep.subr.bf16.mxu0 0
    %3797 = vmatpush1.bf16.msra.mxu0 0
    %3798 = vmatprep.subr.bf16.mxu0 0
    %3799 = vmatpush1.bf16.msra.mxu0 0
    %3800 = vmatprep.subr.bf16.mxu0 0
    %3801 = vmatpush1.bf16.msra.mxu0 0
    %3802 = vmatprep.subr.bf16.mxu0 0
    %3803 = vmatpush1.bf16.msra.mxu0 0
    %3804 = vmatprep.subr.bf16.mxu0 0
    %3805 = vmatpush1.bf16.msra.mxu0 0
    %3806 = vmatprep.subr.bf16.mxu0 0
    %3807 = vmatpush1.bf16.msra.mxu0 0
    %3808 = vmatprep.subr.bf16.mxu0 0
    %3809 = vmatpush1.bf16.msra.mxu0 0
    %3810 = vmatprep.subr.bf16.mxu0 0
    %3811 = vmatpush1.bf16.msra.mxu0 0
    %3812 = vmatprep.subr.bf16.mxu0 0
    %3813 = vmatpush1.bf16.msra.mxu0 0
    %3814 = vmatprep.mubr.bf16.mxu0 0
    %3815 = vmatmul.mubr.bf16.gmra.mrb[0].mxu0 %v3780
    %v3816 = vpop.f32.mrb[0].mxu0
    %v3817 = vadd.f32 0.0, %v3816
    %v3818 = vpop.f32.mrb[0].mxu0
    %v3819 = vpop.f32.mrb[0].mxu0
    %v3820 = vadd.f32 0.0, %v3819
    %v3821 = vpop.f32.mrb[0].mxu0
    %3822 = vdwg.mxu0
    %v3823 = vadd.f32 %v3763, %v3817
    %v3824 = vadd.f32 %v3764, %v3820
    %v3825 = vmul.f32 %v3823, %v240
    %v3826 = vmul.f32 %v3824, %v240
    %3827 = vadd.xlane.f32.xlu0 %v3825
    %v3828 = vpop.xlane.xlu0 %3827
    %3829 = vadd.xlane.f32.xlu0 %v3826
    %v3830 = vpop.xlane.xlu0 %3829
    %v3831 = vmul.f32 %v3828, 0.03125
    %v3832 = vmul.f32 %v3830, 0.03125
    %v3833 = vsub.f32 %v3823, %v3831
    %v3834 = vsub.f32 %v3824, %v3832
    %v3835 = vmul.f32 %v3833, %v240
    %v3836 = vmul.f32 %v3834, %v240
    %v3837 = vmul.f32 %v3835, %v3835
    %v3838 = vmul.f32 %v3836, %v3836
    %3839 = vadd.xlane.f32.xlu0 %v3837
    %v3840 = vpop.xlane.xlu0 %3839
    %3841 = vadd.xlane.f32.xlu0 %v3838
    %v3842 = vpop.xlane.xlu0 %3841
    %v3843 = vmul.f32 %v3840, 0.03125
    %v3844 = vmul.f32 %v3842, 0.03125
    %v3845 = vld [vmem:[%s45] sm:$0xff]
    %v3846 = vld [vmem:[%s45 + $0x8] sm:$0xff]
    %v3847 = vadd.f32 %v3843, 1e-05
    %v3848 = vadd.f32 %v3844, 1e-05
    %v3849 = vrsqrt.pop %v3847
    %v3850 = vrsqrt.pop %v3848
    %v3851 = vmul.f32 %v3845, %v3849
    %v3852 = vmul.f32 %v3846, %v3850
    %v3853 = vld [vmem:[%s47] sm:$0xff]
    %v3854 = vld [vmem:[%s47 + $0x8] sm:$0xff]
    %v3855 = vmul.f32 %v3831, %v3851
    %v3856 = vmul.f32 %v3832, %v3852
    %v3857 = vsub.f32 %v3853, %v3855
    %v3858 = vsub.f32 %v3854, %v3856
    %3860 = vset.pattern.permute.xlu0 0
    %3861 = vperm.xlu0 %3860, %v3851
    %v3862 = vpop.permute.xlu0 %3861
    %3865 = vset.pattern.permute.xlu0 0
    %3866 = vperm.xlu0 %3865, %v3852
    %v3867 = vpop.permute.xlu0 %3866
    %v3869 = vmul.f32 %v3823, %v3862
    %v3870 = vmul.f32 %v3824, %v3867
    %3872 = vset.pattern.permute.xlu0 0
    %3873 = vperm.xlu0 %3872, %v3857
    %v3874 = vpop.permute.xlu0 %3873
    %3877 = vset.pattern.permute.xlu0 0
    %3878 = vperm.xlu0 %3877, %v3858
    %v3879 = vpop.permute.xlu0 %3878
    %v3881 = vadd.f32 %v3869, %v3874
    %v3882 = vadd.f32 %v3870, %v3879
    %v3883 = vmax.f32 %v3881, 0.0
    %v3884 = vmax.f32 %v3882, 0.0
    %v3885 = vmul.f32 %v3883, %v240
    %v3886 = vmul.f32 %v3884, %v240
    %v3887 = vpack.c.bf16 %v3886, %v3885
    %3889 = vrot.lane.b32.xlu0 %v3887, 8
    %v3890 = vpop.permute.xlu0 %3889
    %3892 = vst.msk [vmem:[#allocation2] sm:$0xff] %vm255, %v3890
    %3893 = vst.msk [vmem:[#allocation2 + $0x8] sm:$0xff] %vm257, %v3890
    %v3894 = vld [vmem:[#allocation2] sm:$0xff]
    %v3895 = vld [vmem:[#allocation2 + $0x8] sm:$0xff]
    %v3896 = vld [vmem:[%s49] sm:$0xf]
    %v3897 = vld [vmem:[%s49 + $0x4] sm:$0xf]
    %s3898 = scalar_lea.vmem %s49, 8
    %v3899 = vld [vmem:[%s3898] sm:$0xf]
    %v3900 = vld [vmem:[%s3898 + $0x4] sm:$0xf]
    %v3903 = vunpack.c.l.b16 %v3899
    %v3904 = vunpack.c.l.b16 %v3900
    %v3905 = vpack.c.b16 %v3904, %v3903
    %3908 = vrot.lane.b32.xlu0 %v3894, 120
    %v3909 = vpop.permute.xlu0 %3908
    %3910 = vrot.lane.b32.xlu0 %v3895, 120
    %v3911 = vpop.permute.xlu0 %3910
    %v3912 = vsel %vm274, %v3909, %v3911
    %v3915 = vsel %vm243, %v3905, 0
    %3917 = vmatprep.subr.bf16.mxu0 0
    %3918 = vmatpush1.bf16.msra.mxu0 %v3912
    %3919 = vmatprep.subr.bf16.mxu0 0
    %3920 = vmatpush1.bf16.msra.mxu0 0
    %3921 = vmatprep.subr.bf16.mxu0 0
    %3922 = vmatpush1.bf16.msra.mxu0 0
    %3923 = vmatprep.subr.bf16.mxu0 0
    %3924 = vmatpush1.bf16.msra.mxu0 0
    %3925 = vmatprep.subr.bf16.mxu0 0
    %3926 = vmatpush1.bf16.msra.mxu0 0
    %3927 = vmatprep.subr.bf16.mxu0 0
    %3928 = vmatpush1.bf16.msra.mxu0 0
    %3929 = vmatprep.subr.bf16.mxu0 0
    %3930 = vmatpush1.bf16.msra.mxu0 0
    %3931 = vmatprep.subr.bf16.mxu0 0
    %3932 = vmatpush1.bf16.msra.mxu0 0
    %3933 = vmatprep.subr.bf16.mxu0 0
    %3934 = vmatpush1.bf16.msra.mxu0 0
    %3935 = vmatprep.subr.bf16.mxu0 0
    %3936 = vmatpush1.bf16.msra.mxu0 0
    %3937 = vmatprep.subr.bf16.mxu0 0
    %3938 = vmatpush1.bf16.msra.mxu0 0
    %3939 = vmatprep.subr.bf16.mxu0 0
    %3940 = vmatpush1.bf16.msra.mxu0 0
    %3941 = vmatprep.subr.bf16.mxu0 0
    %3942 = vmatpush1.bf16.msra.mxu0 0
    %3943 = vmatprep.subr.bf16.mxu0 0
    %3944 = vmatpush1.bf16.msra.mxu0 0
    %3945 = vmatprep.subr.bf16.mxu0 0
    %3946 = vmatpush1.bf16.msra.mxu0 0
    %3947 = vmatprep.subr.bf16.mxu0 0
    %3948 = vmatpush1.bf16.msra.mxu0 0
    %3949 = vmatprep.mubr.bf16.mxu0 0
    %3950 = vmatmul.mubr.bf16.gmra.mrb[0].mxu0 %v3915
    %v3951 = vpop.f32.mrb[0].mxu0
    %v3952 = vadd.f32 0.0, %v3951
    %v3953 = vpop.f32.mrb[0].mxu0
    %v3954 = vpop.f32.mrb[0].mxu0
    %v3955 = vadd.f32 0.0, %v3954
    %v3956 = vpop.f32.mrb[0].mxu0
    %3957 = vdwg.mxu0
    %v3960 = vunpack.c.l.b16 %v3896
    %v3961 = vunpack.c.l.b16 %v3897
    %v3962 = vpack.c.b16 %v3961, %v3960
    %3963 = vrot.lane.b32.xlu0 %v3894, 121
    %v3964 = vpop.permute.xlu0 %3963
    %3965 = vrot.lane.b32.xlu0 %v3895, 121
    %v3966 = vpop.permute.xlu0 %3965
    %v3967 = vsel %vm752, %v3964, %v3966
    %v3970 = vsel %vm243, %v3962, 0
    %3972 = vmatprep.subr.bf16.mxu0 0
    %3973 = vmatpush1.bf16.msra.mxu0 %v3967
    %3974 = vmatprep.subr.bf16.mxu0 0
    %3975 = vmatpush1.bf16.msra.mxu0 0
    %3976 = vmatprep.subr.bf16.mxu0 0
    %3977 = vmatpush1.bf16.msra.mxu0 0
    %3978 = vmatprep.subr.bf16.mxu0 0
    %3979 = vmatpush1.bf16.msra.mxu0 0
    %3980 = vmatprep.subr.bf16.mxu0 0
    %3981 = vmatpush1.bf16.msra.mxu0 0
    %3982 = vmatprep.subr.bf16.mxu0 0
    %3983 = vmatpush1.bf16.msra.mxu0 0
    %3984 = vmatprep.subr.bf16.mxu0 0
    %3985 = vmatpush1.bf16.msra.mxu0 0
    %3986 = vmatprep.subr.bf16.mxu0 0
    %3987 = vmatpush1.bf16.msra.mxu0 0
    %3988 = vmatprep.subr.bf16.mxu0 0
    %3989 = vmatpush1.bf16.msra.mxu0 0
    %3990 = vmatprep.subr.bf16.mxu0 0
    %3991 = vmatpush1.bf16.msra.mxu0 0
    %3992 = vmatprep.subr.bf16.mxu0 0
    %3993 = vmatpush1.bf16.msra.mxu0 0
    %3994 = vmatprep.subr.bf16.mxu0 0
    %3995 = vmatpush1.bf16.msra.mxu0 0
    %3996 = vmatprep.subr.bf16.mxu0 0
    %3997 = vmatpush1.bf16.msra.mxu0 0
    %3998 = vmatprep.subr.bf16.mxu0 0
    %3999 = vmatpush1.bf16.msra.mxu0 0
    %4000 = vmatprep.subr.bf16.mxu0 0
    %4001 = vmatpush1.bf16.msra.mxu0 0
    %4002 = vmatprep.subr.bf16.mxu0 0
    %4003 = vmatpush1.bf16.msra.mxu0 0
    %4004 = vmatprep.mubr.bf16.mxu0 0
    %4005 = vmatmul.mubr.bf16.gmra.mrb[0].mxu0 %v3970
    %v4006 = vpop.f32.mrb[0].mxu0
    %v4007 = vadd.f32 %v3952, %v4006
    %v4008 = vpop.f32.mrb[0].mxu0
    %v4009 = vpop.f32.mrb[0].mxu0
    %v4010 = vadd.f32 %v3955, %v4009
    %v4011 = vpop.f32.mrb[0].mxu0
    %4012 = vdwg.mxu0
    %s4013 = scalar_lea.vmem %s49, 16
    %v4014 = vld [vmem:[%s4013] sm:$0xf]
    %v4015 = vld [vmem:[%s4013 + $0x4] sm:$0xf]
    %v4018 = vunpack.c.l.b16 %v4014
    %v4019 = vunpack.c.l.b16 %v4015
    %v4020 = vpack.c.b16 %v4019, %v4018
    %4021 = vrot.lane.b32.xlu0 %v3894, 119
    %v4022 = vpop.permute.xlu0 %4021
    %4023 = vrot.lane.b32.xlu0 %v3895, 119
    %v4024 = vpop.permute.xlu0 %4023
    %v4025 = vsel %vm867, %v4022, %v4024
    %v4028 = vsel %vm243, %v4020, 0
    %4030 = vmatprep.subr.bf16.mxu0 0
    %4031 = vmatpush1.bf16.msra.mxu0 %v4025
    %4032 = vmatprep.subr.bf16.mxu0 0
    %4033 = vmatpush1.bf16.msra.mxu0 0
    %4034 = vmatprep.subr.bf16.mxu0 0
    %4035 = vmatpush1.bf16.msra.mxu0 0
    %4036 = vmatprep.subr.bf16.mxu0 0
    %4037 = vmatpush1.bf16.msra.mxu0 0
    %4038 = vmatprep.subr.bf16.mxu0 0
    %4039 = vmatpush1.bf16.msra.mxu0 0
    %4040 = vmatprep.subr.bf16.mxu0 0
    %4041 = vmatpush1.bf16.msra.mxu0 0
    %4042 = vmatprep.subr.bf16.mxu0 0
    %4043 = vmatpush1.bf16.msra.mxu0 0
    %4044 = vmatprep.subr.bf16.mxu0 0
    %4045 = vmatpush1.bf16.msra.mxu0 0
    %4046 = vmatprep.subr.bf16.mxu0 0
    %4047 = vmatpush1.bf16.msra.mxu0 0
    %4048 = vmatprep.subr.bf16.mxu0 0
    %4049 = vmatpush1.bf16.msra.mxu0 0
    %4050 = vmatprep.subr.bf16.mxu0 0
    %4051 = vmatpush1.bf16.msra.mxu0 0
    %4052 = vmatprep.subr.bf16.mxu0 0
    %4053 = vmatpush1.bf16.msra.mxu0 0
    %4054 = vmatprep.subr.bf16.mxu0 0
    %4055 = vmatpush1.bf16.msra.mxu0 0
    %4056 = vmatprep.subr.bf16.mxu0 0
    %4057 = vmatpush1.bf16.msra.mxu0 0
    %4058 = vmatprep.subr.bf16.mxu0 0
    %4059 = vmatpush1.bf16.msra.mxu0 0
    %4060 = vmatprep.subr.bf16.mxu0 0
    %4061 = vmatpush1.bf16.msra.mxu0 0
    %4062 = vmatprep.mubr.bf16.mxu0 0
    %4063 = vmatmul.mubr.bf16.gmra.mrb[0].mxu0 %v4028
    %v4064 = vpop.f32.mrb[0].mxu0
    %v4065 = vadd.f32 0.0, %v4064
    %v4066 = vpop.f32.mrb[0].mxu0
    %v4067 = vpop.f32.mrb[0].mxu0
    %v4068 = vadd.f32 0.0, %v4067
    %v4069 = vpop.f32.mrb[0].mxu0
    %4070 = vdwg.mxu0
    %v4071 = vadd.f32 %v4007, %v4065
    %v4072 = vadd.f32 %v4010, %v4068
    %v4073 = vmul.f32 %v4071, %v240
    %v4074 = vmul.f32 %v4072, %v240
    %4075 = vadd.xlane.f32.xlu0 %v4073
    %v4076 = vpop.xlane.xlu0 %4075
    %4077 = vadd.xlane.f32.xlu0 %v4074
    %v4078 = vpop.xlane.xlu0 %4077
    %v4079 = vmul.f32 %v4076, 0.03125
    %v4080 = vmul.f32 %v4078, 0.03125
    %v4081 = vsub.f32 %v4071, %v4079
    %v4082 = vsub.f32 %v4072, %v4080
    %v4083 = vmul.f32 %v4081, %v240
    %v4084 = vmul.f32 %v4082, %v240
    %v4085 = vmul.f32 %v4083, %v4083
    %v4086 = vmul.f32 %v4084, %v4084
    %4087 = vadd.xlane.f32.xlu0 %v4085
    %v4088 = vpop.xlane.xlu0 %4087
    %4089 = vadd.xlane.f32.xlu0 %v4086
    %v4090 = vpop.xlane.xlu0 %4089
    %v4091 = vmul.f32 %v4088, 0.03125
    %v4092 = vmul.f32 %v4090, 0.03125
    %v4093 = vld [vmem:[%s51] sm:$0xff]
    %v4094 = vld [vmem:[%s51 + $0x8] sm:$0xff]
    %v4095 = vadd.f32 %v4091, 1e-05
    %v4096 = vadd.f32 %v4092, 1e-05
    %v4097 = vrsqrt.pop %v4095
    %v4098 = vrsqrt.pop %v4096
    %v4099 = vmul.f32 %v4093, %v4097
    %v4100 = vmul.f32 %v4094, %v4098
    %v4101 = vld [vmem:[%s53] sm:$0xff]
    %v4102 = vld [vmem:[%s53 + $0x8] sm:$0xff]
    %v4103 = vmul.f32 %v4079, %v4099
    %v4104 = vmul.f32 %v4080, %v4100
    %v4105 = vsub.f32 %v4101, %v4103
    %v4106 = vsub.f32 %v4102, %v4104
    %4108 = vset.pattern.permute.xlu0 0
    %4109 = vperm.xlu0 %4108, %v4099
    %v4110 = vpop.permute.xlu0 %4109
    %4113 = vset.pattern.permute.xlu0 0
    %4114 = vperm.xlu0 %4113, %v4100
    %v4115 = vpop.permute.xlu0 %4114
    %v4117 = vmul.f32 %v4071, %v4110
    %v4118 = vmul.f32 %v4072, %v4115
    %4120 = vset.pattern.permute.xlu0 0
    %4121 = vperm.xlu0 %4120, %v4105
    %v4122 = vpop.permute.xlu0 %4121
    %4125 = vset.pattern.permute.xlu0 0
    %4126 = vperm.xlu0 %4125, %v4106
    %v4127 = vpop.permute.xlu0 %4126
    %v4129 = vadd.f32 %v4117, %v4122
    %v4130 = vadd.f32 %v4118, %v4127
    %v4131 = vadd.f32 %v4129, %v2326
    %v4132 = vadd.f32 %v4130, %v2327
    %v4133 = vmax.f32 %v4131, 0.0
    %v4134 = vmax.f32 %v4132, 0.0
    %v4135 = vmul.f32 %v4133, %v240
    %v4136 = vmul.f32 %v4134, %v240
    %v4137 = vpack.c.bf16 %v4136, %v4135
    %4139 = vrot.lane.b32.xlu0 %v4137, 8
    %v4140 = vpop.permute.xlu0 %4139
    %4142 = vst.msk [vmem:[#allocation2] sm:$0xff] %vm255, %v4140
    %4143 = vst.msk [vmem:[#allocation2 + $0x8] sm:$0xff] %vm257, %v4140
    %v4144 = vld [vmem:[#allocation5] sm:$0xf]
    %v4145 = vld [vmem:[#allocation5 + $0x4] sm:$0xf]
    %v4146 = vld [vmem:[#allocation2] sm:$0xff]
    %v4147 = vld [vmem:[#allocation2 + $0x8] sm:$0xff]
    %v4150 = vunpack.c.l.b16 %v4144
    %v4151 = vunpack.c.l.b16 %v4145
    %v4152 = vpack.c.b16 %v4151, %v4150
    %4155 = vrot.lane.b32.xlu0 %v4146, 120
    %v4156 = vpop.permute.xlu0 %4155
    %4157 = vrot.lane.b32.xlu0 %v4147, 120
    %v4158 = vpop.permute.xlu0 %4157
    %v4159 = vsel %vm274, %v4156, %v4158
    %v4162 = vsel %vm243, %v4152, 0
    %4164 = vmatprep.subr.bf16.mxu0 0
    %4165 = vmatpush1.bf16.msra.mxu0 %v4159
    %4166 = vmatprep.subr.bf16.mxu0 0
    %4167 = vmatpush1.bf16.msra.mxu0 0
    %4168 = vmatprep.subr.bf16.mxu0 0
    %4169 = vmatpush1.bf16.msra.mxu0 0
    %4170 = vmatprep.subr.bf16.mxu0 0
    %4171 = vmatpush1.bf16.msra.mxu0 0
    %4172 = vmatprep.subr.bf16.mxu0 0
    %4173 = vmatpush1.bf16.msra.mxu0 0
    %4174 = vmatprep.subr.bf16.mxu0 0
    %4175 = vmatpush1.bf16.msra.mxu0 0
    %4176 = vmatprep.subr.bf16.mxu0 0
    %4177 = vmatpush1.bf16.msra.mxu0 0
    %4178 = vmatprep.subr.bf16.mxu0 0
    %4179 = vmatpush1.bf16.msra.mxu0 0
    %4180 = vmatprep.subr.bf16.mxu0 0
    %4181 = vmatpush1.bf16.msra.mxu0 0
    %4182 = vmatprep.subr.bf16.mxu0 0
    %4183 = vmatpush1.bf16.msra.mxu0 0
    %4184 = vmatprep.subr.bf16.mxu0 0
    %4185 = vmatpush1.bf16.msra.mxu0 0
    %4186 = vmatprep.subr.bf16.mxu0 0
    %4187 = vmatpush1.bf16.msra.mxu0 0
    %4188 = vmatprep.subr.bf16.mxu0 0
    %4189 = vmatpush1.bf16.msra.mxu0 0
    %4190 = vmatprep.subr.bf16.mxu0 0
    %4191 = vmatpush1.bf16.msra.mxu0 0
    %4192 = vmatprep.subr.bf16.mxu0 0
    %4193 = vmatpush1.bf16.msra.mxu0 0
    %4194 = vmatprep.subr.bf16.mxu0 0
    %4195 = vmatpush1.bf16.msra.mxu0 0
    %4196 = vmatprep.mubr.bf16.mxu0 0
    %4197 = vmatmul.mubr.bf16.gmra.mrb[0].mxu0 %v4162
    %v4198 = vpop.f32.mrb[0].mxu0
    %v4199 = vadd.f32 0.0, %v4198
    %v4200 = vpop.f32.mrb[0].mxu0
    %v4201 = vpop.f32.mrb[0].mxu0
    %v4202 = vadd.f32 0.0, %v4201
    %v4203 = vpop.f32.mrb[0].mxu0
    %4204 = vdwg.mxu0
    %v4205 = vmul.f32 %v4199, %v240
    %v4206 = vmul.f32 %v4202, %v240
    %4207 = vadd.xlane.f32.xlu0 %v4205
    %v4208 = vpop.xlane.xlu0 %4207
    %4209 = vadd.xlane.f32.xlu0 %v4206
    %v4210 = vpop.xlane.xlu0 %4209
    %v4211 = vmul.f32 %v4208, 0.03125
    %v4212 = vmul.f32 %v4210, 0.03125
    %v4213 = vsub.f32 %v4199, %v4211
    %v4214 = vsub.f32 %v4202, %v4212
    %v4215 = vmul.f32 %v4213, %v240
    %v4216 = vmul.f32 %v4214, %v240
    %v4217 = vmul.f32 %v4215, %v4215
    %v4218 = vmul.f32 %v4216, %v4216
    %4219 = vadd.xlane.f32.xlu0 %v4217
    %v4220 = vpop.xlane.xlu0 %4219
    %4221 = vadd.xlane.f32.xlu0 %v4218
    %v4222 = vpop.xlane.xlu0 %4221
    %v4223 = vmul.f32 %v4220, 0.03125
    %v4224 = vmul.f32 %v4222, 0.03125
    %v4225 = vld [vmem:[%s63] sm:$0xff]
    %v4226 = vld [vmem:[%s63 + $0x8] sm:$0xff]
    %v4227 = vadd.f32 %v4223, 1e-05
    %v4228 = vadd.f32 %v4224, 1e-05
    %v4229 = vrsqrt.pop %v4227
    %v4230 = vrsqrt.pop %v4228
    %v4231 = vmul.f32 %v4225, %v4229
    %v4232 = vmul.f32 %v4226, %v4230
    %v4233 = vld [vmem:[%s65] sm:$0xff]
    %v4234 = vld [vmem:[%s65 + $0x8] sm:$0xff]
    %v4235 = vmul.f32 %v4211, %v4231
    %v4236 = vmul.f32 %v4212, %v4232
    %v4237 = vsub.f32 %v4233, %v4235
    %v4238 = vsub.f32 %v4234, %v4236
    %4240 = vset.pattern.permute.xlu0 0
    %4241 = vperm.xlu0 %4240, %v4231
    %v4242 = vpop.permute.xlu0 %4241
    %4245 = vset.pattern.permute.xlu0 0
    %4246 = vperm.xlu0 %4245, %v4232
    %v4247 = vpop.permute.xlu0 %4246
    %v4249 = vmul.f32 %v4199, %v4242
    %v4250 = vmul.f32 %v4202, %v4247
    %4252 = vset.pattern.permute.xlu0 0
    %4253 = vperm.xlu0 %4252, %v4237
    %v4254 = vpop.permute.xlu0 %4253
    %4257 = vset.pattern.permute.xlu0 0
    %4258 = vperm.xlu0 %4257, %v4238
    %v4259 = vpop.permute.xlu0 %4258
    %v4261 = vadd.f32 %v4249, %v4254
    %v4262 = vadd.f32 %v4250, %v4259
    %v4263 = vld [vmem:[%s55] sm:$0xf]
    %v4264 = vld [vmem:[%s55 + $0x4] sm:$0xf]
    %s4265 = scalar_lea.vmem %s55, 8
    %v4266 = vld [vmem:[%s4265] sm:$0xf]
    %v4267 = vld [vmem:[%s4265 + $0x4] sm:$0xf]
    %v4270 = vunpack.c.l.b16 %v4266
    %v4271 = vunpack.c.l.b16 %v4267
    %v4272 = vpack.c.b16 %v4271, %v4270
    %4273 = vrot.lane.b32.xlu0 %v4146, 126
    %v4274 = vpop.permute.xlu0 %4273
    %4275 = vrot.lane.b32.xlu0 %v4147, 126
    %v4276 = vpop.permute.xlu0 %4275
    %v4277 = vsel %vm393, %v4274, %v4276
    %v4280 = vsel %vm243, %v4272, 0
    %4282 = vmatprep.subr.bf16.mxu0 0
    %4283 = vmatpush1.bf16.msra.mxu0 %v4277
    %4284 = vmatprep.subr.bf16.mxu0 0
    %4285 = vmatpush1.bf16.msra.mxu0 0
    %4286 = vmatprep.subr.bf16.mxu0 0
    %4287 = vmatpush1.bf16.msra.mxu0 0
    %4288 = vmatprep.subr.bf16.mxu0 0
    %4289 = vmatpush1.bf16.msra.mxu0 0
    %4290 = vmatprep.subr.bf16.mxu0 0
    %4291 = vmatpush1.bf16.msra.mxu0 0
    %4292 = vmatprep.subr.bf16.mxu0 0
    %4293 = vmatpush1.bf16.msra.mxu0 0
    %4294 = vmatprep.subr.bf16.mxu0 0
    %4295 = vmatpush1.bf16.msra.mxu0 0
    %4296 = vmatprep.subr.bf16.mxu0 0
    %4297 = vmatpush1.bf16.msra.mxu0 0
    %4298 = vmatprep.subr.bf16.mxu0 0
    %4299 = vmatpush1.bf16.msra.mxu0 0
    %4300 = vmatprep.subr.bf16.mxu0 0
    %4301 = vmatpush1.bf16.msra.mxu0 0
    %4302 = vmatprep.subr.bf16.mxu0 0
    %4303 = vmatpush1.bf16.msra.mxu0 0
    %4304 = vmatprep.subr.bf16.mxu0 0
    %4305 = vmatpush1.bf16.msra.mxu0 0
    %4306 = vmatprep.subr.bf16.mxu0 0
    %4307 = vmatpush1.bf16.msra.mxu0 0
    %4308 = vmatprep.subr.bf16.mxu0 0
    %4309 = vmatpush1.bf16.msra.mxu0 0
    %4310 = vmatprep.subr.bf16.mxu0 0
    %4311 = vmatpush1.bf16.msra.mxu0 0
    %4312 = vmatprep.subr.bf16.mxu0 0
    %4313 = vmatpush1.bf16.msra.mxu0 0
    %4314 = vmatprep.mubr.bf16.mxu0 0
    %4315 = vmatmul.mubr.bf16.gmra.mrb[0].mxu0 %v4280
    %v4316 = vpop.f32.mrb[0].mxu0
    %v4317 = vadd.f32 0.0, %v4316
    %v4318 = vpop.f32.mrb[0].mxu0
    %v4319 = vpop.f32.mrb[0].mxu0
    %v4320 = vadd.f32 0.0, %v4319
    %v4321 = vpop.f32.mrb[0].mxu0
    %4322 = vdwg.mxu0
    %v4325 = vunpack.c.l.b16 %v4263
    %v4326 = vunpack.c.l.b16 %v4264
    %v4327 = vpack.c.b16 %v4326, %v4325
    %4328 = vrot.lane.b32.xlu0 %v4146, 127
    %v4329 = vpop.permute.xlu0 %4328
    %4330 = vrot.lane.b32.xlu0 %v4147, 127
    %v4331 = vpop.permute.xlu0 %4330
    %v4332 = vsel %vm449, %v4329, %v4331
    %v4335 = vsel %vm243, %v4327, 0
    %4337 = vmatprep.subr.bf16.mxu0 0
    %4338 = vmatpush1.bf16.msra.mxu0 %v4332
    %4339 = vmatprep.subr.bf16.mxu0 0
    %4340 = vmatpush1.bf16.msra.mxu0 0
    %4341 = vmatprep.subr.bf16.mxu0 0
    %4342 = vmatpush1.bf16.msra.mxu0 0
    %4343 = vmatprep.subr.bf16.mxu0 0
    %4344 = vmatpush1.bf16.msra.mxu0 0
    %4345 = vmatprep.subr.bf16.mxu0 0
    %4346 = vmatpush1.bf16.msra.mxu0 0
    %4347 = vmatprep.subr.bf16.mxu0 0
    %4348 = vmatpush1.bf16.msra.mxu0 0
    %4349 = vmatprep.subr.bf16.mxu0 0
    %4350 = vmatpush1.bf16.msra.mxu0 0
    %4351 = vmatprep.subr.bf16.mxu0 0
    %4352 = vmatpush1.bf16.msra.mxu0 0
    %4353 = vmatprep.subr.bf16.mxu0 0
    %4354 = vmatpush1.bf16.msra.mxu0 0
    %4355 = vmatprep.subr.bf16.mxu0 0
    %4356 = vmatpush1.bf16.msra.mxu0 0
    %4357 = vmatprep.subr.bf16.mxu0 0
    %4358 = vmatpush1.bf16.msra.mxu0 0
    %4359 = vmatprep.subr.bf16.mxu0 0
    %4360 = vmatpush1.bf16.msra.mxu0 0
    %4361 = vmatprep.subr.bf16.mxu0 0
    %4362 = vmatpush1.bf16.msra.mxu0 0
    %4363 = vmatprep.subr.bf16.mxu0 0
    %4364 = vmatpush1.bf16.msra.mxu0 0
    %4365 = vmatprep.subr.bf16.mxu0 0
    %4366 = vmatpush1.bf16.msra.mxu0 0
    %4367 = vmatprep.subr.bf16.mxu0 0
    %4368 = vmatpush1.bf16.msra.mxu0 0
    %4369 = vmatprep.mubr.bf16.mxu0 0
    %4370 = vmatmul.mubr.bf16.gmra.mrb[0].mxu0 %v4335
    %v4371 = vpop.f32.mrb[0].mxu0
    %v4372 = vadd.f32 %v4317, %v4371
    %v4373 = vpop.f32.mrb[0].mxu0
    %v4374 = vpop.f32.mrb[0].mxu0
    %v4375 = vadd.f32 %v4320, %v4374
    %v4376 = vpop.f32.mrb[0].mxu0
    %4377 = vdwg.mxu0
    %s4378 = scalar_lea.vmem %s55, 16
    %v4379 = vld [vmem:[%s4378] sm:$0xf]
    %v4380 = vld [vmem:[%s4378 + $0x4] sm:$0xf]
    %v4383 = vunpack.c.l.b16 %v4379
    %v4384 = vunpack.c.l.b16 %v4380
    %v4385 = vpack.c.b16 %v4384, %v4383
    %4386 = vrot.lane.b32.xlu0 %v4146, 125
    %v4387 = vpop.permute.xlu0 %4386
    %4388 = vrot.lane.b32.xlu0 %v4147, 125
    %v4389 = vpop.permute.xlu0 %4388
    %v4390 = vsel %vm508, %v4387, %v4389
    %v4393 = vsel %vm243, %v4385, 0
    %4395 = vmatprep.subr.bf16.mxu0 0
    %4396 = vmatpush1.bf16.msra.mxu0 %v4390
    %4397 = vmatprep.subr.bf16.mxu0 0
    %4398 = vmatpush1.bf16.msra.mxu0 0
    %4399 = vmatprep.subr.bf16.mxu0 0
    %4400 = vmatpush1.bf16.msra.mxu0 0
    %4401 = vmatprep.subr.bf16.mxu0 0
    %4402 = vmatpush1.bf16.msra.mxu0 0
    %4403 = vmatprep.subr.bf16.mxu0 0
    %4404 = vmatpush1.bf16.msra.mxu0 0
    %4405 = vmatprep.subr.bf16.mxu0 0
    %4406 = vmatpush1.bf16.msra.mxu0 0
    %4407 = vmatprep.subr.bf16.mxu0 0
    %4408 = vmatpush1.bf16.msra.mxu0 0
    %4409 = vmatprep.subr.bf16.mxu0 0
    %4410 = vmatpush1.bf16.msra.mxu0 0
    %4411 = vmatprep.subr.bf16.mxu0 0
    %4412 = vmatpush1.bf16.msra.mxu0 0
    %4413 = vmatprep.subr.bf16.mxu0 0
    %4414 = vmatpush1.bf16.msra.mxu0 0
    %4415 = vmatprep.subr.bf16.mxu0 0
    %4416 = vmatpush1.bf16.msra.mxu0 0
    %4417 = vmatprep.subr.bf16.mxu0 0
    %4418 = vmatpush1.bf16.msra.mxu0 0
    %4419 = vmatprep.subr.bf16.mxu0 0
    %4420 = vmatpush1.bf16.msra.mxu0 0
    %4421 = vmatprep.subr.bf16.mxu0 0
    %4422 = vmatpush1.bf16.msra.mxu0 0
    %4423 = vmatprep.subr.bf16.mxu0 0
    %4424 = vmatpush1.bf16.msra.mxu0 0
    %4425 = vmatprep.subr.bf16.mxu0 0
    %4426 = vmatpush1.bf16.msra.mxu0 0
    %4427 = vmatprep.mubr.bf16.mxu0 0
    %4428 = vmatmul.mubr.bf16.gmra.mrb[0].mxu0 %v4393
    %v4429 = vpop.f32.mrb[0].mxu0
    %v4430 = vadd.f32 0.0, %v4429
    %v4431 = vpop.f32.mrb[0].mxu0
    %v4432 = vpop.f32.mrb[0].mxu0
    %v4433 = vadd.f32 0.0, %v4432
    %v4434 = vpop.f32.mrb[0].mxu0
    %4435 = vdwg.mxu0
    %v4436 = vadd.f32 %v4372, %v4430
    %v4437 = vadd.f32 %v4375, %v4433
    %s4438 = scalar_lea.vmem %s55, 24
    %v4439 = vld [vmem:[%s4438] sm:$0xf]
    %v4440 = vld [vmem:[%s4438 + $0x4] sm:$0xf]
    %v4443 = vunpack.c.l.b16 %v4439
    %v4444 = vunpack.c.l.b16 %v4440
    %v4445 = vpack.c.b16 %v4444, %v4443
    %4446 = vrot.lane.b32.xlu0 %v4146, 124
    %v4447 = vpop.permute.xlu0 %4446
    %4448 = vrot.lane.b32.xlu0 %v4147, 124
    %v4449 = vpop.permute.xlu0 %4448
    %v4450 = vsel %vm569, %v4447, %v4449
    %v4453 = vsel %vm243, %v4445, 0
    %4455 = vmatprep.subr.bf16.mxu0 0
    %4456 = vmatpush1.bf16.msra.mxu0 %v4450
    %4457 = vmatprep.subr.bf16.mxu0 0
    %4458 = vmatpush1.bf16.msra.mxu0 0
    %4459 = vmatprep.subr.bf16.mxu0 0
    %4460 = vmatpush1.bf16.msra.mxu0 0
    %4461 = vmatprep.subr.bf16.mxu0 0
    %4462 = vmatpush1.bf16.msra.mxu0 0
    %4463 = vmatprep.subr.bf16.mxu0 0
    %4464 = vmatpush1.bf16.msra.mxu0 0
    %4465 = vmatprep.subr.bf16.mxu0 0
    %4466 = vmatpush1.bf16.msra.mxu0 0
    %4467 = vmatprep.subr.bf16.mxu0 0
    %4468 = vmatpush1.bf16.msra.mxu0 0
    %4469 = vmatprep.subr.bf16.mxu0 0
    %4470 = vmatpush1.bf16.msra.mxu0 0
    %4471 = vmatprep.subr.bf16.mxu0 0
    %4472 = vmatpush1.bf16.msra.mxu0 0
    %4473 = vmatprep.subr.bf16.mxu0 0
    %4474 = vmatpush1.bf16.msra.mxu0 0
    %4475 = vmatprep.subr.bf16.mxu0 0
    %4476 = vmatpush1.bf16.msra.mxu0 0
    %4477 = vmatprep.subr.bf16.mxu0 0
    %4478 = vmatpush1.bf16.msra.mxu0 0
    %4479 = vmatprep.subr.bf16.mxu0 0
    %4480 = vmatpush1.bf16.msra.mxu0 0
    %4481 = vmatprep.subr.bf16.mxu0 0
    %4482 = vmatpush1.bf16.msra.mxu0 0
    %4483 = vmatprep.subr.bf16.mxu0 0
    %4484 = vmatpush1.bf16.msra.mxu0 0
    %4485 = vmatprep.subr.bf16.mxu0 0
    %4486 = vmatpush1.bf16.msra.mxu0 0
    %4487 = vmatprep.mubr.bf16.mxu0 0
    %4488 = vmatmul.mubr.bf16.gmra.mrb[0].mxu0 %v4453
    %v4489 = vpop.f32.mrb[0].mxu0
    %v4490 = vadd.f32 0.0, %v4489
    %v4491 = vpop.f32.mrb[0].mxu0
    %v4492 = vpop.f32.mrb[0].mxu0
    %v4493 = vadd.f32 0.0, %v4492
    %v4494 = vpop.f32.mrb[0].mxu0
    %4495 = vdwg.mxu0
    %v4496 = vadd.f32 %v4436, %v4490
    %v4497 = vadd.f32 %v4437, %v4493
    %s4498 = scalar_lea.vmem %s55, 32
    %v4499 = vld [vmem:[%s4498] sm:$0xf]
    %v4500 = vld [vmem:[%s4498 + $0x4] sm:$0xf]
    %v4503 = vunpack.c.l.b16 %v4499
    %v4504 = vunpack.c.l.b16 %v4500
    %v4505 = vpack.c.b16 %v4504, %v4503
    %4506 = vrot.lane.b32.xlu0 %v4146, 123
    %v4507 = vpop.permute.xlu0 %4506
    %4508 = vrot.lane.b32.xlu0 %v4147, 123
    %v4509 = vpop.permute.xlu0 %4508
    %v4510 = vsel %vm630, %v4507, %v4509
    %v4513 = vsel %vm243, %v4505, 0
    %4515 = vmatprep.subr.bf16.mxu0 0
    %4516 = vmatpush1.bf16.msra.mxu0 %v4510
    %4517 = vmatprep.subr.bf16.mxu0 0
    %4518 = vmatpush1.bf16.msra.mxu0 0
    %4519 = vmatprep.subr.bf16.mxu0 0
    %4520 = vmatpush1.bf16.msra.mxu0 0
    %4521 = vmatprep.subr.bf16.mxu0 0
    %4522 = vmatpush1.bf16.msra.mxu0 0
    %4523 = vmatprep.subr.bf16.mxu0 0
    %4524 = vmatpush1.bf16.msra.mxu0 0
    %4525 = vmatprep.subr.bf16.mxu0 0
    %4526 = vmatpush1.bf16.msra.mxu0 0
    %4527 = vmatprep.subr.bf16.mxu0 0
    %4528 = vmatpush1.bf16.msra.mxu0 0
    %4529 = vmatprep.subr.bf16.mxu0 0
    %4530 = vmatpush1.bf16.msra.mxu0 0
    %4531 = vmatprep.subr.bf16.mxu0 0
    %4532 = vmatpush1.bf16.msra.mxu0 0
    %4533 = vmatprep.subr.bf16.mxu0 0
    %4534 = vmatpush1.bf16.msra.mxu0 0
    %4535 = vmatprep.subr.bf16.mxu0 0
    %4536 = vmatpush1.bf16.msra.mxu0 0
    %4537 = vmatprep.subr.bf16.mxu0 0
    %4538 = vmatpush1.bf16.msra.mxu0 0
    %4539 = vmatprep.subr.bf16.mxu0 0
    %4540 = vmatpush1.bf16.msra.mxu0 0
    %4541 = vmatprep.subr.bf16.mxu0 0
    %4542 = vmatpush1.bf16.msra.mxu0 0
    %4543 = vmatprep.subr.bf16.mxu0 0
    %4544 = vmatpush1.bf16.msra.mxu0 0
    %4545 = vmatprep.subr.bf16.mxu0 0
    %4546 = vmatpush1.bf16.msra.mxu0 0
    %4547 = vmatprep.mubr.bf16.mxu0 0
    %4548 = vmatmul.mubr.bf16.gmra.mrb[0].mxu0 %v4513
    %v4549 = vpop.f32.mrb[0].mxu0
    %v4550 = vadd.f32 0.0, %v4549
    %v4551 = vpop.f32.mrb[0].mxu0
    %v4552 = vpop.f32.mrb[0].mxu0
    %v4553 = vadd.f32 0.0, %v4552
    %v4554 = vpop.f32.mrb[0].mxu0
    %4555 = vdwg.mxu0
    %v4556 = vadd.f32 %v4496, %v4550
    %v4557 = vadd.f32 %v4497, %v4553
    %s4558 = scalar_lea.vmem %s55, 40
    %v4559 = vld [vmem:[%s4558] sm:$0xf]
    %v4560 = vld [vmem:[%s4558 + $0x4] sm:$0xf]
    %v4563 = vunpack.c.l.b16 %v4559
    %v4564 = vunpack.c.l.b16 %v4560
    %v4565 = vpack.c.b16 %v4564, %v4563
    %4566 = vrot.lane.b32.xlu0 %v4146, 122
    %v4567 = vpop.permute.xlu0 %4566
    %4568 = vrot.lane.b32.xlu0 %v4147, 122
    %v4569 = vpop.permute.xlu0 %4568
    %v4570 = vsel %vm691, %v4567, %v4569
    %v4573 = vsel %vm243, %v4565, 0
    %4575 = vmatprep.subr.bf16.mxu0 0
    %4576 = vmatpush1.bf16.msra.mxu0 %v4570
    %4577 = vmatprep.subr.bf16.mxu0 0
    %4578 = vmatpush1.bf16.msra.mxu0 0
    %4579 = vmatprep.subr.bf16.mxu0 0
    %4580 = vmatpush1.bf16.msra.mxu0 0
    %4581 = vmatprep.subr.bf16.mxu0 0
    %4582 = vmatpush1.bf16.msra.mxu0 0
    %4583 = vmatprep.subr.bf16.mxu0 0
    %4584 = vmatpush1.bf16.msra.mxu0 0
    %4585 = vmatprep.subr.bf16.mxu0 0
    %4586 = vmatpush1.bf16.msra.mxu0 0
    %4587 = vmatprep.subr.bf16.mxu0 0
    %4588 = vmatpush1.bf16.msra.mxu0 0
    %4589 = vmatprep.subr.bf16.mxu0 0
    %4590 = vmatpush1.bf16.msra.mxu0 0
    %4591 = vmatprep.subr.bf16.mxu0 0
    %4592 = vmatpush1.bf16.msra.mxu0 0
    %4593 = vmatprep.subr.bf16.mxu0 0
    %4594 = vmatpush1.bf16.msra.mxu0 0
    %4595 = vmatprep.subr.bf16.mxu0 0
    %4596 = vmatpush1.bf16.msra.mxu0 0
    %4597 = vmatprep.subr.bf16.mxu0 0
    %4598 = vmatpush1.bf16.msra.mxu0 0
    %4599 = vmatprep.subr.bf16.mxu0 0
    %4600 = vmatpush1.bf16.msra.mxu0 0
    %4601 = vmatprep.subr.bf16.mxu0 0
    %4602 = vmatpush1.bf16.msra.mxu0 0
    %4603 = vmatprep.subr.bf16.mxu0 0
    %4604 = vmatpush1.bf16.msra.mxu0 0
    %4605 = vmatprep.subr.bf16.mxu0 0
    %4606 = vmatpush1.bf16.msra.mxu0 0
    %4607 = vmatprep.mubr.bf16.mxu0 0
    %4608 = vmatmul.mubr.bf16.gmra.mrb[0].mxu0 %v4573
    %v4609 = vpop.f32.mrb[0].mxu0
    %v4610 = vadd.f32 0.0, %v4609
    %v4611 = vpop.f32.mrb[0].mxu0
    %v4612 = vpop.f32.mrb[0].mxu0
    %v4613 = vadd.f32 0.0, %v4612
    %v4614 = vpop.f32.mrb[0].mxu0
    %4615 = vdwg.mxu0
    %v4616 = vadd.f32 %v4556, %v4610
    %v4617 = vadd.f32 %v4557, %v4613
    %s4618 = scalar_lea.vmem %s55, 48
    %v4619 = vld [vmem:[%s4618] sm:$0xf]
    %v4620 = vld [vmem:[%s4618 + $0x4] sm:$0xf]
    %v4623 = vunpack.c.l.b16 %v4619
    %v4624 = vunpack.c.l.b16 %v4620
    %v4625 = vpack.c.b16 %v4624, %v4623
    %4626 = vrot.lane.b32.xlu0 %v4146, 121
    %v4627 = vpop.permute.xlu0 %4626
    %4628 = vrot.lane.b32.xlu0 %v4147, 121
    %v4629 = vpop.permute.xlu0 %4628
    %v4630 = vsel %vm752, %v4627, %v4629
    %v4633 = vsel %vm243, %v4625, 0
    %4635 = vmatprep.subr.bf16.mxu0 0
    %4636 = vmatpush1.bf16.msra.mxu0 %v4630
    %4637 = vmatprep.subr.bf16.mxu0 0
    %4638 = vmatpush1.bf16.msra.mxu0 0
    %4639 = vmatprep.subr.bf16.mxu0 0
    %4640 = vmatpush1.bf16.msra.mxu0 0
    %4641 = vmatprep.subr.bf16.mxu0 0
    %4642 = vmatpush1.bf16.msra.mxu0 0
    %4643 = vmatprep.subr.bf16.mxu0 0
    %4644 = vmatpush1.bf16.msra.mxu0 0
    %4645 = vmatprep.subr.bf16.mxu0 0
    %4646 = vmatpush1.bf16.msra.mxu0 0
    %4647 = vmatprep.subr.bf16.mxu0 0
    %4648 = vmatpush1.bf16.msra.mxu0 0
    %4649 = vmatprep.subr.bf16.mxu0 0
    %4650 = vmatpush1.bf16.msra.mxu0 0
    %4651 = vmatprep.subr.bf16.mxu0 0
    %4652 = vmatpush1.bf16.msra.mxu0 0
    %4653 = vmatprep.subr.bf16.mxu0 0
    %4654 = vmatpush1.bf16.msra.mxu0 0
    %4655 = vmatprep.subr.bf16.mxu0 0
    %4656 = vmatpush1.bf16.msra.mxu0 0
    %4657 = vmatprep.subr.bf16.mxu0 0
    %4658 = vmatpush1.bf16.msra.mxu0 0
    %4659 = vmatprep.subr.bf16.mxu0 0
    %4660 = vmatpush1.bf16.msra.mxu0 0
    %4661 = vmatprep.subr.bf16.mxu0 0
    %4662 = vmatpush1.bf16.msra.mxu0 0
    %4663 = vmatprep.subr.bf16.mxu0 0
    %4664 = vmatpush1.bf16.msra.mxu0 0
    %4665 = vmatprep.subr.bf16.mxu0 0
    %4666 = vmatpush1.bf16.msra.mxu0 0
    %4667 = vmatprep.mubr.bf16.mxu0 0
    %4668 = vmatmul.mubr.bf16.gmra.mrb[0].mxu0 %v4633
    %v4669 = vpop.f32.mrb[0].mxu0
    %v4670 = vadd.f32 0.0, %v4669
    %v4671 = vpop.f32.mrb[0].mxu0
    %v4672 = vpop.f32.mrb[0].mxu0
    %v4673 = vadd.f32 0.0, %v4672
    %v4674 = vpop.f32.mrb[0].mxu0
    %4675 = vdwg.mxu0
    %v4676 = vadd.f32 %v4616, %v4670
    %v4677 = vadd.f32 %v4617, %v4673
    %s4678 = scalar_lea.vmem %s55, 56
    %v4679 = vld [vmem:[%s4678] sm:$0xf]
    %v4680 = vld [vmem:[%s4678 + $0x4] sm:$0xf]
    %v4683 = vunpack.c.l.b16 %v4679
    %v4684 = vunpack.c.l.b16 %v4680
    %v4685 = vpack.c.b16 %v4684, %v4683
    %v4687 = vsel %vm243, %v4685, 0
    %4689 = vmatprep.subr.bf16.mxu0 0
    %4690 = vmatpush1.bf16.msra.mxu0 %v4159
    %4691 = vmatprep.subr.bf16.mxu0 0
    %4692 = vmatpush1.bf16.msra.mxu0 0
    %4693 = vmatprep.subr.bf16.mxu0 0
    %4694 = vmatpush1.bf16.msra.mxu0 0
    %4695 = vmatprep.subr.bf16.mxu0 0
    %4696 = vmatpush1.bf16.msra.mxu0 0
    %4697 = vmatprep.subr.bf16.mxu0 0
    %4698 = vmatpush1.bf16.msra.mxu0 0
    %4699 = vmatprep.subr.bf16.mxu0 0
    %4700 = vmatpush1.bf16.msra.mxu0 0
    %4701 = vmatprep.subr.bf16.mxu0 0
    %4702 = vmatpush1.bf16.msra.mxu0 0
    %4703 = vmatprep.subr.bf16.mxu0 0
    %4704 = vmatpush1.bf16.msra.mxu0 0
    %4705 = vmatprep.subr.bf16.mxu0 0
    %4706 = vmatpush1.bf16.msra.mxu0 0
    %4707 = vmatprep.subr.bf16.mxu0 0
    %4708 = vmatpush1.bf16.msra.mxu0 0
    %4709 = vmatprep.subr.bf16.mxu0 0
    %4710 = vmatpush1.bf16.msra.mxu0 0
    %4711 = vmatprep.subr.bf16.mxu0 0
    %4712 = vmatpush1.bf16.msra.mxu0 0
    %4713 = vmatprep.subr.bf16.mxu0 0
    %4714 = vmatpush1.bf16.msra.mxu0 0
    %4715 = vmatprep.subr.bf16.mxu0 0
    %4716 = vmatpush1.bf16.msra.mxu0 0
    %4717 = vmatprep.subr.bf16.mxu0 0
    %4718 = vmatpush1.bf16.msra.mxu0 0
    %4719 = vmatprep.subr.bf16.mxu0 0
    %4720 = vmatpush1.bf16.msra.mxu0 0
    %4721 = vmatprep.mubr.bf16.mxu0 0
    %4722 = vmatmul.mubr.bf16.gmra.mrb[0].mxu0 %v4687
    %v4723 = vpop.f32.mrb[0].mxu0
    %v4724 = vadd.f32 0.0, %v4723
    %v4725 = vpop.f32.mrb[0].mxu0
    %v4726 = vpop.f32.mrb[0].mxu0
    %v4727 = vadd.f32 0.0, %v4726
    %v4728 = vpop.f32.mrb[0].mxu0
    %4729 = vdwg.mxu0
    %v4730 = vadd.f32 %v4676, %v4724
    %v4731 = vadd.f32 %v4677, %v4727
    %s4732 = scalar_lea.vmem %s55, 64
    %v4733 = vld [vmem:[%s4732] sm:$0xf]
    %v4734 = vld [vmem:[%s4732 + $0x4] sm:$0xf]
    %v4737 = vunpack.c.l.b16 %v4733
    %v4738 = vunpack.c.l.b16 %v4734
    %v4739 = vpack.c.b16 %v4738, %v4737
    %4740 = vrot.lane.b32.xlu0 %v4146, 119
    %v4741 = vpop.permute.xlu0 %4740
    %4742 = vrot.lane.b32.xlu0 %v4147, 119
    %v4743 = vpop.permute.xlu0 %4742
    %v4744 = vsel %vm867, %v4741, %v4743
    %v4747 = vsel %vm243, %v4739, 0
    %4749 = vmatprep.subr.bf16.mxu0 0
    %4750 = vmatpush1.bf16.msra.mxu0 %v4744
    %4751 = vmatprep.subr.bf16.mxu0 0
    %4752 = vmatpush1.bf16.msra.mxu0 0
    %4753 = vmatprep.subr.bf16.mxu0 0
    %4754 = vmatpush1.bf16.msra.mxu0 0
    %4755 = vmatprep.subr.bf16.mxu0 0
    %4756 = vmatpush1.bf16.msra.mxu0 0
    %4757 = vmatprep.subr.bf16.mxu0 0
    %4758 = vmatpush1.bf16.msra.mxu0 0
    %4759 = vmatprep.subr.bf16.mxu0 0
    %4760 = vmatpush1.bf16.msra.mxu0 0
    %4761 = vmatprep.subr.bf16.mxu0 0
    %4762 = vmatpush1.bf16.msra.mxu0 0
    %4763 = vmatprep.subr.bf16.mxu0 0
    %4764 = vmatpush1.bf16.msra.mxu0 0
    %4765 = vmatprep.subr.bf16.mxu0 0
    %4766 = vmatpush1.bf16.msra.mxu0 0
    %4767 = vmatprep.subr.bf16.mxu0 0
    %4768 = vmatpush1.bf16.msra.mxu0 0
    %4769 = vmatprep.subr.bf16.mxu0 0
    %4770 = vmatpush1.bf16.msra.mxu0 0
    %4771 = vmatprep.subr.bf16.mxu0 0
    %4772 = vmatpush1.bf16.msra.mxu0 0
    %4773 = vmatprep.subr.bf16.mxu0 0
    %4774 = vmatpush1.bf16.msra.mxu0 0
    %4775 = vmatprep.subr.bf16.mxu0 0
    %4776 = vmatpush1.bf16.msra.mxu0 0
    %4777 = vmatprep.subr.bf16.mxu0 0
    %4778 = vmatpush1.bf16.msra.mxu0 0
    %4779 = vmatprep.subr.bf16.mxu0 0
    %4780 = vmatpush1.bf16.msra.mxu0 0
    %4781 = vmatprep.mubr.bf16.mxu0 0
    %4782 = vmatmul.mubr.bf16.gmra.mrb[0].mxu0 %v4747
    %v4783 = vpop.f32.mrb[0].mxu0
    %v4784 = vadd.f32 0.0, %v4783
    %v4785 = vpop.f32.mrb[0].mxu0
    %v4786 = vpop.f32.mrb[0].mxu0
    %v4787 = vadd.f32 0.0, %v4786
    %v4788 = vpop.f32.mrb[0].mxu0
    %4789 = vdwg.mxu0
    %v4790 = vadd.f32 %v4730, %v4784
    %v4791 = vadd.f32 %v4731, %v4787
    %s4792 = scalar_lea.vmem %s55, 72
    %v4793 = vld [vmem:[%s4792] sm:$0xf]
    %v4794 = vld [vmem:[%s4792 + $0x4] sm:$0xf]
    %v4797 = vunpack.c.l.b16 %v4793
    %v4798 = vunpack.c.l.b16 %v4794
    %v4799 = vpack.c.b16 %v4798, %v4797
    %4800 = vrot.lane.b32.xlu0 %v4146, 118
    %v4801 = vpop.permute.xlu0 %4800
    %4802 = vrot.lane.b32.xlu0 %v4147, 118
    %v4803 = vpop.permute.xlu0 %4802
    %v4804 = vsel %vm928, %v4801, %v4803
    %v4807 = vsel %vm243, %v4799, 0
    %4809 = vmatprep.subr.bf16.mxu0 0
    %4810 = vmatpush1.bf16.msra.mxu0 %v4804
    %4811 = vmatprep.subr.bf16.mxu0 0
    %4812 = vmatpush1.bf16.msra.mxu0 0
    %4813 = vmatprep.subr.bf16.mxu0 0
    %4814 = vmatpush1.bf16.msra.mxu0 0
    %4815 = vmatprep.subr.bf16.mxu0 0
    %4816 = vmatpush1.bf16.msra.mxu0 0
    %4817 = vmatprep.subr.bf16.mxu0 0
    %4818 = vmatpush1.bf16.msra.mxu0 0
    %4819 = vmatprep.subr.bf16.mxu0 0
    %4820 = vmatpush1.bf16.msra.mxu0 0
    %4821 = vmatprep.subr.bf16.mxu0 0
    %4822 = vmatpush1.bf16.msra.mxu0 0
    %4823 = vmatprep.subr.bf16.mxu0 0
    %4824 = vmatpush1.bf16.msra.mxu0 0
    %4825 = vmatprep.subr.bf16.mxu0 0
    %4826 = vmatpush1.bf16.msra.mxu0 0
    %4827 = vmatprep.subr.bf16.mxu0 0
    %4828 = vmatpush1.bf16.msra.mxu0 0
    %4829 = vmatprep.subr.bf16.mxu0 0
    %4830 = vmatpush1.bf16.msra.mxu0 0
    %4831 = vmatprep.subr.bf16.mxu0 0
    %4832 = vmatpush1.bf16.msra.mxu0 0
    %4833 = vmatprep.subr.bf16.mxu0 0
    %4834 = vmatpush1.bf16.msra.mxu0 0
    %4835 = vmatprep.subr.bf16.mxu0 0
    %4836 = vmatpush1.bf16.msra.mxu0 0
    %4837 = vmatprep.subr.bf16.mxu0 0
    %4838 = vmatpush1.bf16.msra.mxu0 0
    %4839 = vmatprep.subr.bf16.mxu0 0
    %4840 = vmatpush1.bf16.msra.mxu0 0
    %4841 = vmatprep.mubr.bf16.mxu0 0
    %4842 = vmatmul.mubr.bf16.gmra.mrb[0].mxu0 %v4807
    %v4843 = vpop.f32.mrb[0].mxu0
    %v4844 = vadd.f32 0.0, %v4843
    %v4845 = vpop.f32.mrb[0].mxu0
    %v4846 = vpop.f32.mrb[0].mxu0
    %v4847 = vadd.f32 0.0, %v4846
    %v4848 = vpop.f32.mrb[0].mxu0
    %4849 = vdwg.mxu0
    %v4850 = vadd.f32 %v4790, %v4844
    %v4851 = vadd.f32 %v4791, %v4847
    %s4852 = scalar_lea.vmem %s55, 80
    %v4853 = vld [vmem:[%s4852] sm:$0xf]
    %v4854 = vld [vmem:[%s4852 + $0x4] sm:$0xf]
    %v4857 = vunpack.c.l.b16 %v4853
    %v4858 = vunpack.c.l.b16 %v4854
    %v4859 = vpack.c.b16 %v4858, %v4857
    %4860 = vrot.lane.b32.xlu0 %v4146, 117
    %v4861 = vpop.permute.xlu0 %4860
    %4862 = vrot.lane.b32.xlu0 %v4147, 117
    %v4863 = vpop.permute.xlu0 %4862
    %v4864 = vsel %vm989, %v4861, %v4863
    %v4867 = vsel %vm243, %v4859, 0
    %4869 = vmatprep.subr.bf16.mxu0 0
    %4870 = vmatpush1.bf16.msra.mxu0 %v4864
    %4871 = vmatprep.subr.bf16.mxu0 0
    %4872 = vmatpush1.bf16.msra.mxu0 0
    %4873 = vmatprep.subr.bf16.mxu0 0
    %4874 = vmatpush1.bf16.msra.mxu0 0
    %4875 = vmatprep.subr.bf16.mxu0 0
    %4876 = vmatpush1.bf16.msra.mxu0 0
    %4877 = vmatprep.subr.bf16.mxu0 0
    %4878 = vmatpush1.bf16.msra.mxu0 0
    %4879 = vmatprep.subr.bf16.mxu0 0
    %4880 = vmatpush1.bf16.msra.mxu0 0
    %4881 = vmatprep.subr.bf16.mxu0 0
    %4882 = vmatpush1.bf16.msra.mxu0 0
    %4883 = vmatprep.subr.bf16.mxu0 0
    %4884 = vmatpush1.bf16.msra.mxu0 0
    %4885 = vmatprep.subr.bf16.mxu0 0
    %4886 = vmatpush1.bf16.msra.mxu0 0
    %4887 = vmatprep.subr.bf16.mxu0 0
    %4888 = vmatpush1.bf16.msra.mxu0 0
    %4889 = vmatprep.subr.bf16.mxu0 0
    %4890 = vmatpush1.bf16.msra.mxu0 0
    %4891 = vmatprep.subr.bf16.mxu0 0
    %4892 = vmatpush1.bf16.msra.mxu0 0
    %4893 = vmatprep.subr.bf16.mxu0 0
    %4894 = vmatpush1.bf16.msra.mxu0 0
    %4895 = vmatprep.subr.bf16.mxu0 0
    %4896 = vmatpush1.bf16.msra.mxu0 0
    %4897 = vmatprep.subr.bf16.mxu0 0
    %4898 = vmatpush1.bf16.msra.mxu0 0
    %4899 = vmatprep.subr.bf16.mxu0 0
    %4900 = vmatpush1.bf16.msra.mxu0 0
    %4901 = vmatprep.mubr.bf16.mxu0 0
    %4902 = vmatmul.mubr.bf16.gmra.mrb[0].mxu0 %v4867
    %v4903 = vpop.f32.mrb[0].mxu0
    %v4904 = vadd.f32 0.0, %v4903
    %v4905 = vpop.f32.mrb[0].mxu0
    %v4906 = vpop.f32.mrb[0].mxu0
    %v4907 = vadd.f32 0.0, %v4906
    %v4908 = vpop.f32.mrb[0].mxu0
    %4909 = vdwg.mxu0
    %v4910 = vadd.f32 %v4850, %v4904
    %v4911 = vadd.f32 %v4851, %v4907
    %s4912 = scalar_lea.vmem %s55, 88
    %v4913 = vld [vmem:[%s4912] sm:$0xf]
    %v4914 = vld [vmem:[%s4912 + $0x4] sm:$0xf]
    %v4917 = vunpack.c.l.b16 %v4913
    %v4918 = vunpack.c.l.b16 %v4914
    %v4919 = vpack.c.b16 %v4918, %v4917
    %4920 = vrot.lane.b32.xlu0 %v4146, 116
    %v4921 = vpop.permute.xlu0 %4920
    %4922 = vrot.lane.b32.xlu0 %v4147, 116
    %v4923 = vpop.permute.xlu0 %4922
    %v4924 = vsel %vm1050, %v4921, %v4923
    %v4927 = vsel %vm243, %v4919, 0
    %4929 = vmatprep.subr.bf16.mxu0 0
    %4930 = vmatpush1.bf16.msra.mxu0 %v4924
    %4931 = vmatprep.subr.bf16.mxu0 0
    %4932 = vmatpush1.bf16.msra.mxu0 0
    %4933 = vmatprep.subr.bf16.mxu0 0
    %4934 = vmatpush1.bf16.msra.mxu0 0
    %4935 = vmatprep.subr.bf16.mxu0 0
    %4936 = vmatpush1.bf16.msra.mxu0 0
    %4937 = vmatprep.subr.bf16.mxu0 0
    %4938 = vmatpush1.bf16.msra.mxu0 0
    %4939 = vmatprep.subr.bf16.mxu0 0
    %4940 = vmatpush1.bf16.msra.mxu0 0
    %4941 = vmatprep.subr.bf16.mxu0 0
    %4942 = vmatpush1.bf16.msra.mxu0 0
    %4943 = vmatprep.subr.bf16.mxu0 0
    %4944 = vmatpush1.bf16.msra.mxu0 0
    %4945 = vmatprep.subr.bf16.mxu0 0
    %4946 = vmatpush1.bf16.msra.mxu0 0
    %4947 = vmatprep.subr.bf16.mxu0 0
    %4948 = vmatpush1.bf16.msra.mxu0 0
    %4949 = vmatprep.subr.bf16.mxu0 0
    %4950 = vmatpush1.bf16.msra.mxu0 0
    %4951 = vmatprep.subr.bf16.mxu0 0
    %4952 = vmatpush1.bf16.msra.mxu0 0
    %4953 = vmatprep.subr.bf16.mxu0 0
    %4954 = vmatpush1.bf16.msra.mxu0 0
    %4955 = vmatprep.subr.bf16.mxu0 0
    %4956 = vmatpush1.bf16.msra.mxu0 0
    %4957 = vmatprep.subr.bf16.mxu0 0
    %4958 = vmatpush1.bf16.msra.mxu0 0
    %4959 = vmatprep.subr.bf16.mxu0 0
    %4960 = vmatpush1.bf16.msra.mxu0 0
    %4961 = vmatprep.mubr.bf16.mxu0 0
    %4962 = vmatmul.mubr.bf16.gmra.mrb[0].mxu0 %v4927
    %v4963 = vpop.f32.mrb[0].mxu0
    %v4964 = vadd.f32 0.0, %v4963
    %v4965 = vpop.f32.mrb[0].mxu0
    %v4966 = vpop.f32.mrb[0].mxu0
    %v4967 = vadd.f32 0.0, %v4966
    %v4968 = vpop.f32.mrb[0].mxu0
    %4969 = vdwg.mxu0
    %v4970 = vadd.f32 %v4910, %v4964
    %v4971 = vadd.f32 %v4911, %v4967
    %s4972 = scalar_lea.vmem %s55, 96
    %v4973 = vld [vmem:[%s4972] sm:$0xf]
    %v4974 = vld [vmem:[%s4972 + $0x4] sm:$0xf]
    %v4977 = vunpack.c.l.b16 %v4973
    %v4978 = vunpack.c.l.b16 %v4974
    %v4979 = vpack.c.b16 %v4978, %v4977
    %4980 = vrot.lane.b32.xlu0 %v4146, 115
    %v4981 = vpop.permute.xlu0 %4980
    %4982 = vrot.lane.b32.xlu0 %v4147, 115
    %v4983 = vpop.permute.xlu0 %4982
    %v4984 = vsel %vm1111, %v4981, %v4983
    %v4987 = vsel %vm243, %v4979, 0
    %4989 = vmatprep.subr.bf16.mxu0 0
    %4990 = vmatpush1.bf16.msra.mxu0 %v4984
    %4991 = vmatprep.subr.bf16.mxu0 0
    %4992 = vmatpush1.bf16.msra.mxu0 0
    %4993 = vmatprep.subr.bf16.mxu0 0
    %4994 = vmatpush1.bf16.msra.mxu0 0
    %4995 = vmatprep.subr.bf16.mxu0 0
    %4996 = vmatpush1.bf16.msra.mxu0 0
    %4997 = vmatprep.subr.bf16.mxu0 0
    %4998 = vmatpush1.bf16.msra.mxu0 0
    %4999 = vmatprep.subr.bf16.mxu0 0
    %5000 = vmatpush1.bf16.msra.mxu0 0
    %5001 = vmatprep.subr.bf16.mxu0 0
    %5002 = vmatpush1.bf16.msra.mxu0 0
    %5003 = vmatprep.subr.bf16.mxu0 0
    %5004 = vmatpush1.bf16.msra.mxu0 0
    %5005 = vmatprep.subr.bf16.mxu0 0
    %5006 = vmatpush1.bf16.msra.mxu0 0
    %5007 = vmatprep.subr.bf16.mxu0 0
    %5008 = vmatpush1.bf16.msra.mxu0 0
    %5009 = vmatprep.subr.bf16.mxu0 0
    %5010 = vmatpush1.bf16.msra.mxu0 0
    %5011 = vmatprep.subr.bf16.mxu0 0
    %5012 = vmatpush1.bf16.msra.mxu0 0
    %5013 = vmatprep.subr.bf16.mxu0 0
    %5014 = vmatpush1.bf16.msra.mxu0 0
    %5015 = vmatprep.subr.bf16.mxu0 0
    %5016 = vmatpush1.bf16.msra.mxu0 0
    %5017 = vmatprep.subr.bf16.mxu0 0
    %5018 = vmatpush1.bf16.msra.mxu0 0
    %5019 = vmatprep.subr.bf16.mxu0 0
    %5020 = vmatpush1.bf16.msra.mxu0 0
    %5021 = vmatprep.mubr.bf16.mxu0 0
    %5022 = vmatmul.mubr.bf16.gmra.mrb[0].mxu0 %v4987
    %v5023 = vpop.f32.mrb[0].mxu0
    %v5024 = vadd.f32 0.0, %v5023
    %v5025 = vpop.f32.mrb[0].mxu0
    %v5026 = vpop.f32.mrb[0].mxu0
    %v5027 = vadd.f32 0.0, %v5026
    %v5028 = vpop.f32.mrb[0].mxu0
    %5029 = vdwg.mxu0
    %v5030 = vadd.f32 %v4970, %v5024
    %v5031 = vadd.f32 %v4971, %v5027
    %s5032 = scalar_lea.vmem %s55, 104
    %v5033 = vld [vmem:[%s5032] sm:$0xf]
    %v5034 = vld [vmem:[%s5032 + $0x4] sm:$0xf]
    %v5037 = vunpack.c.l.b16 %v5033
    %v5038 = vunpack.c.l.b16 %v5034
    %v5039 = vpack.c.b16 %v5038, %v5037
    %5040 = vrot.lane.b32.xlu0 %v4146, 114
    %v5041 = vpop.permute.xlu0 %5040
    %5042 = vrot.lane.b32.xlu0 %v4147, 114
    %v5043 = vpop.permute.xlu0 %5042
    %v5044 = vsel %vm1172, %v5041, %v5043
    %v5047 = vsel %vm243, %v5039, 0
    %5049 = vmatprep.subr.bf16.mxu0 0
    %5050 = vmatpush1.bf16.msra.mxu0 %v5044
    %5051 = vmatprep.subr.bf16.mxu0 0
    %5052 = vmatpush1.bf16.msra.mxu0 0
    %5053 = vmatprep.subr.bf16.mxu0 0
    %5054 = vmatpush1.bf16.msra.mxu0 0
    %5055 = vmatprep.subr.bf16.mxu0 0
    %5056 = vmatpush1.bf16.msra.mxu0 0
    %5057 = vmatprep.subr.bf16.mxu0 0
    %5058 = vmatpush1.bf16.msra.mxu0 0
    %5059 = vmatprep.subr.bf16.mxu0 0
    %5060 = vmatpush1.bf16.msra.mxu0 0
    %5061 = vmatprep.subr.bf16.mxu0 0
    %5062 = vmatpush1.bf16.msra.mxu0 0
    %5063 = vmatprep.subr.bf16.mxu0 0
    %5064 = vmatpush1.bf16.msra.mxu0 0
    %5065 = vmatprep.subr.bf16.mxu0 0
    %5066 = vmatpush1.bf16.msra.mxu0 0
    %5067 = vmatprep.subr.bf16.mxu0 0
    %5068 = vmatpush1.bf16.msra.mxu0 0
    %5069 = vmatprep.subr.bf16.mxu0 0
    %5070 = vmatpush1.bf16.msra.mxu0 0
    %5071 = vmatprep.subr.bf16.mxu0 0
    %5072 = vmatpush1.bf16.msra.mxu0 0
    %5073 = vmatprep.subr.bf16.mxu0 0
    %5074 = vmatpush1.bf16.msra.mxu0 0
    %5075 = vmatprep.subr.bf16.mxu0 0
    %5076 = vmatpush1.bf16.msra.mxu0 0
    %5077 = vmatprep.subr.bf16.mxu0 0
    %5078 = vmatpush1.bf16.msra.mxu0 0
    %5079 = vmatprep.subr.bf16.mxu0 0
    %5080 = vmatpush1.bf16.msra.mxu0 0
    %5081 = vmatprep.mubr.bf16.mxu0 0
    %5082 = vmatmul.mubr.bf16.gmra.mrb[0].mxu0 %v5047
    %v5083 = vpop.f32.mrb[0].mxu0
    %v5084 = vadd.f32 0.0, %v5083
    %v5085 = vpop.f32.mrb[0].mxu0
    %v5086 = vpop.f32.mrb[0].mxu0
    %v5087 = vadd.f32 0.0, %v5086
    %v5088 = vpop.f32.mrb[0].mxu0
    %5089 = vdwg.mxu0
    %v5090 = vadd.f32 %v5030, %v5084
    %v5091 = vadd.f32 %v5031, %v5087
    %s5092 = scalar_lea.vmem %s55, 112
    %v5093 = vld [vmem:[%s5092] sm:$0xf]
    %v5094 = vld [vmem:[%s5092 + $0x4] sm:$0xf]
    %v5097 = vunpack.c.l.b16 %v5093
    %v5098 = vunpack.c.l.b16 %v5094
    %v5099 = vpack.c.b16 %v5098, %v5097
    %5100 = vrot.lane.b32.xlu0 %v4146, 113
    %v5101 = vpop.permute.xlu0 %5100
    %5102 = vrot.lane.b32.xlu0 %v4147, 113
    %v5103 = vpop.permute.xlu0 %5102
    %v5104 = vsel %vm1233, %v5101, %v5103
    %v5107 = vsel %vm243, %v5099, 0
    %5109 = vmatprep.subr.bf16.mxu0 0
    %5110 = vmatpush1.bf16.msra.mxu0 %v5104
    %5111 = vmatprep.subr.bf16.mxu0 0
    %5112 = vmatpush1.bf16.msra.mxu0 0
    %5113 = vmatprep.subr.bf16.mxu0 0
    %5114 = vmatpush1.bf16.msra.mxu0 0
    %5115 = vmatprep.subr.bf16.mxu0 0
    %5116 = vmatpush1.bf16.msra.mxu0 0
    %5117 = vmatprep.subr.bf16.mxu0 0
    %5118 = vmatpush1.bf16.msra.mxu0 0
    %5119 = vmatprep.subr.bf16.mxu0 0
    %5120 = vmatpush1.bf16.msra.mxu0 0
    %5121 = vmatprep.subr.bf16.mxu0 0
    %5122 = vmatpush1.bf16.msra.mxu0 0
    %5123 = vmatprep.subr.bf16.mxu0 0
    %5124 = vmatpush1.bf16.msra.mxu0 0
    %5125 = vmatprep.subr.bf16.mxu0 0
    %5126 = vmatpush1.bf16.msra.mxu0 0
    %5127 = vmatprep.subr.bf16.mxu0 0
    %5128 = vmatpush1.bf16.msra.mxu0 0
    %5129 = vmatprep.subr.bf16.mxu0 0
    %5130 = vmatpush1.bf16.msra.mxu0 0
    %5131 = vmatprep.subr.bf16.mxu0 0
    %5132 = vmatpush1.bf16.msra.mxu0 0
    %5133 = vmatprep.subr.bf16.mxu0 0
    %5134 = vmatpush1.bf16.msra.mxu0 0
    %5135 = vmatprep.subr.bf16.mxu0 0
    %5136 = vmatpush1.bf16.msra.mxu0 0
    %5137 = vmatprep.subr.bf16.mxu0 0
    %5138 = vmatpush1.bf16.msra.mxu0 0
    %5139 = vmatprep.subr.bf16.mxu0 0
    %5140 = vmatpush1.bf16.msra.mxu0 0
    %5141 = vmatprep.mubr.bf16.mxu0 0
    %5142 = vmatmul.mubr.bf16.gmra.mrb[0].mxu0 %v5107
    %v5143 = vpop.f32.mrb[0].mxu0
    %v5144 = vadd.f32 0.0, %v5143
    %v5145 = vpop.f32.mrb[0].mxu0
    %v5146 = vpop.f32.mrb[0].mxu0
    %v5147 = vadd.f32 0.0, %v5146
    %v5148 = vpop.f32.mrb[0].mxu0
    %5149 = vdwg.mxu0
    %v5150 = vadd.f32 %v5090, %v5144
    %v5151 = vadd.f32 %v5091, %v5147
    %v5152 = vmul.f32 %v5150, %v240
    %v5153 = vmul.f32 %v5151, %v240
    %5154 = vadd.xlane.f32.xlu0 %v5152
    %v5155 = vpop.xlane.xlu0 %5154
    %5156 = vadd.xlane.f32.xlu0 %v5153
    %v5157 = vpop.xlane.xlu0 %5156
    %v5158 = vmul.f32 %v5155, 0.03125
    %v5159 = vmul.f32 %v5157, 0.03125
    %v5160 = vsub.f32 %v5150, %v5158
    %v5161 = vsub.f32 %v5151, %v5159
    %v5162 = vmul.f32 %v5160, %v240
    %v5163 = vmul.f32 %v5161, %v240
    %v5164 = vmul.f32 %v5162, %v5162
    %v5165 = vmul.f32 %v5163, %v5163
    %5166 = vadd.xlane.f32.xlu0 %v5164
    %v5167 = vpop.xlane.xlu0 %5166
    %5168 = vadd.xlane.f32.xlu0 %v5165
    %v5169 = vpop.xlane.xlu0 %5168
    %v5170 = vmul.f32 %v5167, 0.03125
    %v5171 = vmul.f32 %v5169, 0.03125
    %v5172 = vld [vmem:[%s57] sm:$0xff]
    %v5173 = vld [vmem:[%s57 + $0x8] sm:$0xff]
    %v5174 = vadd.f32 %v5170, 1e-05
    %v5175 = vadd.f32 %v5171, 1e-05
    %v5176 = vrsqrt.pop %v5174
    %v5177 = vrsqrt.pop %v5175
    %v5178 = vmul.f32 %v5172, %v5176
    %v5179 = vmul.f32 %v5173, %v5177
    %v5180 = vld [vmem:[%s59] sm:$0xff]
    %v5181 = vld [vmem:[%s59 + $0x8] sm:$0xff]
    %v5182 = vmul.f32 %v5158, %v5178
    %v5183 = vmul.f32 %v5159, %v5179
    %v5184 = vsub.f32 %v5180, %v5182
    %v5185 = vsub.f32 %v5181, %v5183
    %5187 = vset.pattern.permute.xlu0 0
    %5188 = vperm.xlu0 %5187, %v5178
    %v5189 = vpop.permute.xlu0 %5188
    %5192 = vset.pattern.permute.xlu0 0
    %5193 = vperm.xlu0 %5192, %v5179
    %v5194 = vpop.permute.xlu0 %5193
    %v5196 = vmul.f32 %v5150, %v5189
    %v5197 = vmul.f32 %v5151, %v5194
    %5199 = vset.pattern.permute.xlu0 0
    %5200 = vperm.xlu0 %5199, %v5184
    %v5201 = vpop.permute.xlu0 %5200
    %5204 = vset.pattern.permute.xlu0 0
    %5205 = vperm.xlu0 %5204, %v5185
    %v5206 = vpop.permute.xlu0 %5205
    %v5208 = vadd.f32 %v5196, %v5201
    %v5209 = vadd.f32 %v5197, %v5206
    %v5210 = vmax.f32 %v5208, 0.0
    %v5211 = vmax.f32 %v5209, 0.0
    %v5212 = vmul.f32 %v5210, %v240
    %v5213 = vmul.f32 %v5211, %v240
    %v5214 = vpack.c.bf16 %v5213, %v5212
    %5216 = vrot.lane.b32.xlu0 %v5214, 8
    %v5217 = vpop.permute.xlu0 %5216
    %5219 = vst.msk [vmem:[#allocation2] sm:$0xff] %vm255, %v5217
    %5220 = vst.msk [vmem:[#allocation2 + $0x8] sm:$0xff] %vm257, %v5217
    %v5221 = vld [vmem:[#allocation2] sm:$0xff]
    %v5222 = vld [vmem:[#allocation2 + $0x8] sm:$0xff]
    %v5223 = vld [vmem:[%s67] sm:$0xf]
    %v5224 = vld [vmem:[%s67 + $0x4] sm:$0xf]
    %s5225 = scalar_lea.vmem %s67, 8
    %v5226 = vld [vmem:[%s5225] sm:$0xf]
    %v5227 = vld [vmem:[%s5225 + $0x4] sm:$0xf]
    %v5230 = vunpack.c.l.b16 %v5226
    %v5231 = vunpack.c.l.b16 %v5227
    %v5232 = vpack.c.b16 %v5231, %v5230
    %5235 = vrot.lane.b32.xlu0 %v5221, 123
    %v5236 = vpop.permute.xlu0 %5235
    %5237 = vrot.lane.b32.xlu0 %v5222, 123
    %v5238 = vpop.permute.xlu0 %5237
    %v5239 = vsel %vm630, %v5236, %v5238
    %v5242 = vsel %vm243, %v5232, 0
    %5244 = vmatprep.subr.bf16.mxu0 0
    %5245 = vmatpush1.bf16.msra.mxu0 %v5239
    %5246 = vmatprep.subr.bf16.mxu0 0
    %5247 = vmatpush1.bf16.msra.mxu0 0
    %5248 = vmatprep.subr.bf16.mxu0 0
    %5249 = vmatpush1.bf16.msra.mxu0 0
    %5250 = vmatprep.subr.bf16.mxu0 0
    %5251 = vmatpush1.bf16.msra.mxu0 0
    %5252 = vmatprep.subr.bf16.mxu0 0
    %5253 = vmatpush1.bf16.msra.mxu0 0
    %5254 = vmatprep.subr.bf16.mxu0 0
    %5255 = vmatpush1.bf16.msra.mxu0 0
    %5256 = vmatprep.subr.bf16.mxu0 0
    %5257 = vmatpush1.bf16.msra.mxu0 0
    %5258 = vmatprep.subr.bf16.mxu0 0
    %5259 = vmatpush1.bf16.msra.mxu0 0
    %5260 = vmatprep.subr.bf16.mxu0 0
    %5261 = vmatpush1.bf16.msra.mxu0 0
    %5262 = vmatprep.subr.bf16.mxu0 0
    %5263 = vmatpush1.bf16.msra.mxu0 0
    %5264 = vmatprep.subr.bf16.mxu0 0
    %5265 = vmatpush1.bf16.msra.mxu0 0
    %5266 = vmatprep.subr.bf16.mxu0 0
    %5267 = vmatpush1.bf16.msra.mxu0 0
    %5268 = vmatprep.subr.bf16.mxu0 0
    %5269 = vmatpush1.bf16.msra.mxu0 0
    %5270 = vmatprep.subr.bf16.mxu0 0
    %5271 = vmatpush1.bf16.msra.mxu0 0
    %5272 = vmatprep.subr.bf16.mxu0 0
    %5273 = vmatpush1.bf16.msra.mxu0 0
    %5274 = vmatprep.subr.bf16.mxu0 0
    %5275 = vmatpush1.bf16.msra.mxu0 0
    %5276 = vmatprep.mubr.bf16.mxu0 0
    %5277 = vmatmul.mubr.bf16.gmra.mrb[0].mxu0 %v5242
    %v5278 = vpop.f32.mrb[0].mxu0
    %v5279 = vadd.f32 0.0, %v5278
    %v5280 = vpop.f32.mrb[0].mxu0
    %v5281 = vpop.f32.mrb[0].mxu0
    %v5282 = vadd.f32 0.0, %v5281
    %v5283 = vpop.f32.mrb[0].mxu0
    %5284 = vdwg.mxu0
    %v5287 = vunpack.c.l.b16 %v5223
    %v5288 = vunpack.c.l.b16 %v5224
    %v5289 = vpack.c.b16 %v5288, %v5287
    %5290 = vrot.lane.b32.xlu0 %v5221, 124
    %v5291 = vpop.permute.xlu0 %5290
    %5292 = vrot.lane.b32.xlu0 %v5222, 124
    %v5293 = vpop.permute.xlu0 %5292
    %v5294 = vsel %vm569, %v5291, %v5293
    %v5297 = vsel %vm243, %v5289, 0
    %5299 = vmatprep.subr.bf16.mxu0 0
    %5300 = vmatpush1.bf16.msra.mxu0 %v5294
    %5301 = vmatprep.subr.bf16.mxu0 0
    %5302 = vmatpush1.bf16.msra.mxu0 0
    %5303 = vmatprep.subr.bf16.mxu0 0
    %5304 = vmatpush1.bf16.msra.mxu0 0
    %5305 = vmatprep.subr.bf16.mxu0 0
    %5306 = vmatpush1.bf16.msra.mxu0 0
    %5307 = vmatprep.subr.bf16.mxu0 0
    %5308 = vmatpush1.bf16.msra.mxu0 0
    %5309 = vmatprep.subr.bf16.mxu0 0
    %5310 = vmatpush1.bf16.msra.mxu0 0
    %5311 = vmatprep.subr.bf16.mxu0 0
    %5312 = vmatpush1.bf16.msra.mxu0 0
    %5313 = vmatprep.subr.bf16.mxu0 0
    %5314 = vmatpush1.bf16.msra.mxu0 0
    %5315 = vmatprep.subr.bf16.mxu0 0
    %5316 = vmatpush1.bf16.msra.mxu0 0
    %5317 = vmatprep.subr.bf16.mxu0 0
    %5318 = vmatpush1.bf16.msra.mxu0 0
    %5319 = vmatprep.subr.bf16.mxu0 0
    %5320 = vmatpush1.bf16.msra.mxu0 0
    %5321 = vmatprep.subr.bf16.mxu0 0
    %5322 = vmatpush1.bf16.msra.mxu0 0
    %5323 = vmatprep.subr.bf16.mxu0 0
    %5324 = vmatpush1.bf16.msra.mxu0 0
    %5325 = vmatprep.subr.bf16.mxu0 0
    %5326 = vmatpush1.bf16.msra.mxu0 0
    %5327 = vmatprep.subr.bf16.mxu0 0
    %5328 = vmatpush1.bf16.msra.mxu0 0
    %5329 = vmatprep.subr.bf16.mxu0 0
    %5330 = vmatpush1.bf16.msra.mxu0 0
    %5331 = vmatprep.mubr.bf16.mxu0 0
    %5332 = vmatmul.mubr.bf16.gmra.mrb[0].mxu0 %v5297
    %v5333 = vpop.f32.mrb[0].mxu0
    %v5334 = vadd.f32 %v5279, %v5333
    %v5335 = vpop.f32.mrb[0].mxu0
    %v5336 = vpop.f32.mrb[0].mxu0
    %v5337 = vadd.f32 %v5282, %v5336
    %v5338 = vpop.f32.mrb[0].mxu0
    %5339 = vdwg.mxu0
    %s5340 = scalar_lea.vmem %s67, 16
    %v5341 = vld [vmem:[%s5340] sm:$0xf]
    %v5342 = vld [vmem:[%s5340 + $0x4] sm:$0xf]
    %v5345 = vunpack.c.l.b16 %v5341
    %v5346 = vunpack.c.l.b16 %v5342
    %v5347 = vpack.c.b16 %v5346, %v5345
    %5348 = vrot.lane.b32.xlu0 %v5221, 122
    %v5349 = vpop.permute.xlu0 %5348
    %5350 = vrot.lane.b32.xlu0 %v5222, 122
    %v5351 = vpop.permute.xlu0 %5350
    %v5352 = vsel %vm691, %v5349, %v5351
    %v5355 = vsel %vm243, %v5347, 0
    %5357 = vmatprep.subr.bf16.mxu0 0
    %5358 = vmatpush1.bf16.msra.mxu0 %v5352
    %5359 = vmatprep.subr.bf16.mxu0 0
    %5360 = vmatpush1.bf16.msra.mxu0 0
    %5361 = vmatprep.subr.bf16.mxu0 0
    %5362 = vmatpush1.bf16.msra.mxu0 0
    %5363 = vmatprep.subr.bf16.mxu0 0
    %5364 = vmatpush1.bf16.msra.mxu0 0
    %5365 = vmatprep.subr.bf16.mxu0 0
    %5366 = vmatpush1.bf16.msra.mxu0 0
    %5367 = vmatprep.subr.bf16.mxu0 0
    %5368 = vmatpush1.bf16.msra.mxu0 0
    %5369 = vmatprep.subr.bf16.mxu0 0
    %5370 = vmatpush1.bf16.msra.mxu0 0
    %5371 = vmatprep.subr.bf16.mxu0 0
    %5372 = vmatpush1.bf16.msra.mxu0 0
    %5373 = vmatprep.subr.bf16.mxu0 0
    %5374 = vmatpush1.bf16.msra.mxu0 0
    %5375 = vmatprep.subr.bf16.mxu0 0
    %5376 = vmatpush1.bf16.msra.mxu0 0
    %5377 = vmatprep.subr.bf16.mxu0 0
    %5378 = vmatpush1.bf16.msra.mxu0 0
    %5379 = vmatprep.subr.bf16.mxu0 0
    %5380 = vmatpush1.bf16.msra.mxu0 0
    %5381 = vmatprep.subr.bf16.mxu0 0
    %5382 = vmatpush1.bf16.msra.mxu0 0
    %5383 = vmatprep.subr.bf16.mxu0 0
    %5384 = vmatpush1.bf16.msra.mxu0 0
    %5385 = vmatprep.subr.bf16.mxu0 0
    %5386 = vmatpush1.bf16.msra.mxu0 0
    %5387 = vmatprep.subr.bf16.mxu0 0
    %5388 = vmatpush1.bf16.msra.mxu0 0
    %5389 = vmatprep.mubr.bf16.mxu0 0
    %5390 = vmatmul.mubr.bf16.gmra.mrb[0].mxu0 %v5355
    %v5391 = vpop.f32.mrb[0].mxu0
    %v5392 = vadd.f32 0.0, %v5391
    %v5393 = vpop.f32.mrb[0].mxu0
    %v5394 = vpop.f32.mrb[0].mxu0
    %v5395 = vadd.f32 0.0, %v5394
    %v5396 = vpop.f32.mrb[0].mxu0
    %5397 = vdwg.mxu0
    %v5398 = vadd.f32 %v5334, %v5392
    %v5399 = vadd.f32 %v5337, %v5395
    %s5400 = scalar_lea.vmem %s67, 24
    %v5401 = vld [vmem:[%s5400] sm:$0xf]
    %v5402 = vld [vmem:[%s5400 + $0x4] sm:$0xf]
    %v5405 = vunpack.c.l.b16 %v5401
    %v5406 = vunpack.c.l.b16 %v5402
    %v5407 = vpack.c.b16 %v5406, %v5405
    %5408 = vrot.lane.b32.xlu0 %v5221, 121
    %v5409 = vpop.permute.xlu0 %5408
    %5410 = vrot.lane.b32.xlu0 %v5222, 121
    %v5411 = vpop.permute.xlu0 %5410
    %v5412 = vsel %vm752, %v5409, %v5411
    %v5415 = vsel %vm243, %v5407, 0
    %5417 = vmatprep.subr.bf16.mxu0 0
    %5418 = vmatpush1.bf16.msra.mxu0 %v5412
    %5419 = vmatprep.subr.bf16.mxu0 0
    %5420 = vmatpush1.bf16.msra.mxu0 0
    %5421 = vmatprep.subr.bf16.mxu0 0
    %5422 = vmatpush1.bf16.msra.mxu0 0
    %5423 = vmatprep.subr.bf16.mxu0 0
    %5424 = vmatpush1.bf16.msra.mxu0 0
    %5425 = vmatprep.subr.bf16.mxu0 0
    %5426 = vmatpush1.bf16.msra.mxu0 0
    %5427 = vmatprep.subr.bf16.mxu0 0
    %5428 = vmatpush1.bf16.msra.mxu0 0
    %5429 = vmatprep.subr.bf16.mxu0 0
    %5430 = vmatpush1.bf16.msra.mxu0 0
    %5431 = vmatprep.subr.bf16.mxu0 0
    %5432 = vmatpush1.bf16.msra.mxu0 0
    %5433 = vmatprep.subr.bf16.mxu0 0
    %5434 = vmatpush1.bf16.msra.mxu0 0
    %5435 = vmatprep.subr.bf16.mxu0 0
    %5436 = vmatpush1.bf16.msra.mxu0 0
    %5437 = vmatprep.subr.bf16.mxu0 0
    %5438 = vmatpush1.bf16.msra.mxu0 0
    %5439 = vmatprep.subr.bf16.mxu0 0
    %5440 = vmatpush1.bf16.msra.mxu0 0
    %5441 = vmatprep.subr.bf16.mxu0 0
    %5442 = vmatpush1.bf16.msra.mxu0 0
    %5443 = vmatprep.subr.bf16.mxu0 0
    %5444 = vmatpush1.bf16.msra.mxu0 0
    %5445 = vmatprep.subr.bf16.mxu0 0
    %5446 = vmatpush1.bf16.msra.mxu0 0
    %5447 = vmatprep.subr.bf16.mxu0 0
    %5448 = vmatpush1.bf16.msra.mxu0 0
    %5449 = vmatprep.mubr.bf16.mxu0 0
    %5450 = vmatmul.mubr.bf16.gmra.mrb[0].mxu0 %v5415
    %v5451 = vpop.f32.mrb[0].mxu0
    %v5452 = vadd.f32 0.0, %v5451
    %v5453 = vpop.f32.mrb[0].mxu0
    %v5454 = vpop.f32.mrb[0].mxu0
    %v5455 = vadd.f32 0.0, %v5454
    %v5456 = vpop.f32.mrb[0].mxu0
    %5457 = vdwg.mxu0
    %v5458 = vadd.f32 %v5398, %v5452
    %v5459 = vadd.f32 %v5399, %v5455
    %s5460 = scalar_lea.vmem %s67, 32
    %v5461 = vld [vmem:[%s5460] sm:$0xf]
    %v5462 = vld [vmem:[%s5460 + $0x4] sm:$0xf]
    %v5465 = vunpack.c.l.b16 %v5461
    %v5466 = vunpack.c.l.b16 %v5462
    %v5467 = vpack.c.b16 %v5466, %v5465
    %5468 = vrot.lane.b32.xlu0 %v5221, 120
    %v5469 = vpop.permute.xlu0 %5468
    %5470 = vrot.lane.b32.xlu0 %v5222, 120
    %v5471 = vpop.permute.xlu0 %5470
    %v5472 = vsel %vm274, %v5469, %v5471
    %v5475 = vsel %vm243, %v5467, 0
    %5477 = vmatprep.subr.bf16.mxu0 0
    %5478 = vmatpush1.bf16.msra.mxu0 %v5472
    %5479 = vmatprep.subr.bf16.mxu0 0
    %5480 = vmatpush1.bf16.msra.mxu0 0
    %5481 = vmatprep.subr.bf16.mxu0 0
    %5482 = vmatpush1.bf16.msra.mxu0 0
    %5483 = vmatprep.subr.bf16.mxu0 0
    %5484 = vmatpush1.bf16.msra.mxu0 0
    %5485 = vmatprep.subr.bf16.mxu0 0
    %5486 = vmatpush1.bf16.msra.mxu0 0
    %5487 = vmatprep.subr.bf16.mxu0 0
    %5488 = vmatpush1.bf16.msra.mxu0 0
    %5489 = vmatprep.subr.bf16.mxu0 0
    %5490 = vmatpush1.bf16.msra.mxu0 0
    %5491 = vmatprep.subr.bf16.mxu0 0
    %5492 = vmatpush1.bf16.msra.mxu0 0
    %5493 = vmatprep.subr.bf16.mxu0 0
    %5494 = vmatpush1.bf16.msra.mxu0 0
    %5495 = vmatprep.subr.bf16.mxu0 0
    %5496 = vmatpush1.bf16.msra.mxu0 0
    %5497 = vmatprep.subr.bf16.mxu0 0
    %5498 = vmatpush1.bf16.msra.mxu0 0
    %5499 = vmatprep.subr.bf16.mxu0 0
    %5500 = vmatpush1.bf16.msra.mxu0 0
    %5501 = vmatprep.subr.bf16.mxu0 0
    %5502 = vmatpush1.bf16.msra.mxu0 0
    %5503 = vmatprep.subr.bf16.mxu0 0
    %5504 = vmatpush1.bf16.msra.mxu0 0
    %5505 = vmatprep.subr.bf16.mxu0 0
    %5506 = vmatpush1.bf16.msra.mxu0 0
    %5507 = vmatprep.subr.bf16.mxu0 0
    %5508 = vmatpush1.bf16.msra.mxu0 0
    %5509 = vmatprep.mubr.bf16.mxu0 0
    %5510 = vmatmul.mubr.bf16.gmra.mrb[0].mxu0 %v5475
    %v5511 = vpop.f32.mrb[0].mxu0
    %v5512 = vadd.f32 0.0, %v5511
    %v5513 = vpop.f32.mrb[0].mxu0
    %v5514 = vpop.f32.mrb[0].mxu0
    %v5515 = vadd.f32 0.0, %v5514
    %v5516 = vpop.f32.mrb[0].mxu0
    %5517 = vdwg.mxu0
    %v5518 = vadd.f32 %v5458, %v5512
    %v5519 = vadd.f32 %v5459, %v5515
    %s5520 = scalar_lea.vmem %s67, 40
    %v5521 = vld [vmem:[%s5520] sm:$0xf]
    %v5522 = vld [vmem:[%s5520 + $0x4] sm:$0xf]
    %v5525 = vunpack.c.l.b16 %v5521
    %v5526 = vunpack.c.l.b16 %v5522
    %v5527 = vpack.c.b16 %v5526, %v5525
    %5528 = vrot.lane.b32.xlu0 %v5221, 119
    %v5529 = vpop.permute.xlu0 %5528
    %5530 = vrot.lane.b32.xlu0 %v5222, 119
    %v5531 = vpop.permute.xlu0 %5530
    %v5532 = vsel %vm867, %v5529, %v5531
    %v5535 = vsel %vm243, %v5527, 0
    %5537 = vmatprep.subr.bf16.mxu0 0
    %5538 = vmatpush1.bf16.msra.mxu0 %v5532
    %5539 = vmatprep.subr.bf16.mxu0 0
    %5540 = vmatpush1.bf16.msra.mxu0 0
    %5541 = vmatprep.subr.bf16.mxu0 0
    %5542 = vmatpush1.bf16.msra.mxu0 0
    %5543 = vmatprep.subr.bf16.mxu0 0
    %5544 = vmatpush1.bf16.msra.mxu0 0
    %5545 = vmatprep.subr.bf16.mxu0 0
    %5546 = vmatpush1.bf16.msra.mxu0 0
    %5547 = vmatprep.subr.bf16.mxu0 0
    %5548 = vmatpush1.bf16.msra.mxu0 0
    %5549 = vmatprep.subr.bf16.mxu0 0
    %5550 = vmatpush1.bf16.msra.mxu0 0
    %5551 = vmatprep.subr.bf16.mxu0 0
    %5552 = vmatpush1.bf16.msra.mxu0 0
    %5553 = vmatprep.subr.bf16.mxu0 0
    %5554 = vmatpush1.bf16.msra.mxu0 0
    %5555 = vmatprep.subr.bf16.mxu0 0
    %5556 = vmatpush1.bf16.msra.mxu0 0
    %5557 = vmatprep.subr.bf16.mxu0 0
    %5558 = vmatpush1.bf16.msra.mxu0 0
    %5559 = vmatprep.subr.bf16.mxu0 0
    %5560 = vmatpush1.bf16.msra.mxu0 0
    %5561 = vmatprep.subr.bf16.mxu0 0
    %5562 = vmatpush1.bf16.msra.mxu0 0
    %5563 = vmatprep.subr.bf16.mxu0 0
    %5564 = vmatpush1.bf16.msra.mxu0 0
    %5565 = vmatprep.subr.bf16.mxu0 0
    %5566 = vmatpush1.bf16.msra.mxu0 0
    %5567 = vmatprep.subr.bf16.mxu0 0
    %5568 = vmatpush1.bf16.msra.mxu0 0
    %5569 = vmatprep.mubr.bf16.mxu0 0
    %5570 = vmatmul.mubr.bf16.gmra.mrb[0].mxu0 %v5535
    %v5571 = vpop.f32.mrb[0].mxu0
    %v5572 = vadd.f32 0.0, %v5571
    %v5573 = vpop.f32.mrb[0].mxu0
    %v5574 = vpop.f32.mrb[0].mxu0
    %v5575 = vadd.f32 0.0, %v5574
    %v5576 = vpop.f32.mrb[0].mxu0
    %5577 = vdwg.mxu0
    %v5578 = vadd.f32 %v5518, %v5572
    %v5579 = vadd.f32 %v5519, %v5575
    %s5580 = scalar_lea.vmem %s67, 48
    %v5581 = vld [vmem:[%s5580] sm:$0xf]
    %v5582 = vld [vmem:[%s5580 + $0x4] sm:$0xf]
    %v5585 = vunpack.c.l.b16 %v5581
    %v5586 = vunpack.c.l.b16 %v5582
    %v5587 = vpack.c.b16 %v5586, %v5585
    %5588 = vrot.lane.b32.xlu0 %v5221, 118
    %v5589 = vpop.permute.xlu0 %5588
    %5590 = vrot.lane.b32.xlu0 %v5222, 118
    %v5591 = vpop.permute.xlu0 %5590
    %v5592 = vsel %vm928, %v5589, %v5591
    %v5595 = vsel %vm243, %v5587, 0
    %5597 = vmatprep.subr.bf16.mxu0 0
    %5598 = vmatpush1.bf16.msra.mxu0 %v5592
    %5599 = vmatprep.subr.bf16.mxu0 0
    %5600 = vmatpush1.bf16.msra.mxu0 0
    %5601 = vmatprep.subr.bf16.mxu0 0
    %5602 = vmatpush1.bf16.msra.mxu0 0
    %5603 = vmatprep.subr.bf16.mxu0 0
    %5604 = vmatpush1.bf16.msra.mxu0 0
    %5605 = vmatprep.subr.bf16.mxu0 0
    %5606 = vmatpush1.bf16.msra.mxu0 0
    %5607 = vmatprep.subr.bf16.mxu0 0
    %5608 = vmatpush1.bf16.msra.mxu0 0
    %5609 = vmatprep.subr.bf16.mxu0 0
    %5610 = vmatpush1.bf16.msra.mxu0 0
    %5611 = vmatprep.subr.bf16.mxu0 0
    %5612 = vmatpush1.bf16.msra.mxu0 0
    %5613 = vmatprep.subr.bf16.mxu0 0
    %5614 = vmatpush1.bf16.msra.mxu0 0
    %5615 = vmatprep.subr.bf16.mxu0 0
    %5616 = vmatpush1.bf16.msra.mxu0 0
    %5617 = vmatprep.subr.bf16.mxu0 0
    %5618 = vmatpush1.bf16.msra.mxu0 0
    %5619 = vmatprep.subr.bf16.mxu0 0
    %5620 = vmatpush1.bf16.msra.mxu0 0
    %5621 = vmatprep.subr.bf16.mxu0 0
    %5622 = vmatpush1.bf16.msra.mxu0 0
    %5623 = vmatprep.subr.bf16.mxu0 0
    %5624 = vmatpush1.bf16.msra.mxu0 0
    %5625 = vmatprep.subr.bf16.mxu0 0
    %5626 = vmatpush1.bf16.msra.mxu0 0
    %5627 = vmatprep.subr.bf16.mxu0 0
    %5628 = vmatpush1.bf16.msra.mxu0 0
    %5629 = vmatprep.mubr.bf16.mxu0 0
    %5630 = vmatmul.mubr.bf16.gmra.mrb[0].mxu0 %v5595
    %v5631 = vpop.f32.mrb[0].mxu0
    %v5632 = vadd.f32 0.0, %v5631
    %v5633 = vpop.f32.mrb[0].mxu0
    %v5634 = vpop.f32.mrb[0].mxu0
    %v5635 = vadd.f32 0.0, %v5634
    %v5636 = vpop.f32.mrb[0].mxu0
    %5637 = vdwg.mxu0
    %v5638 = vadd.f32 %v5578, %v5632
    %v5639 = vadd.f32 %v5579, %v5635
    %s5640 = scalar_lea.vmem %s67, 56
    %v5641 = vld [vmem:[%s5640] sm:$0xf]
    %v5642 = vld [vmem:[%s5640 + $0x4] sm:$0xf]
    %v5645 = vunpack.c.l.b16 %v5641
    %v5646 = vunpack.c.l.b16 %v5642
    %v5647 = vpack.c.b16 %v5646, %v5645
    %5648 = vrot.lane.b32.xlu0 %v5221, 117
    %v5649 = vpop.permute.xlu0 %5648
    %5650 = vrot.lane.b32.xlu0 %v5222, 117
    %v5651 = vpop.permute.xlu0 %5650
    %v5652 = vsel %vm989, %v5649, %v5651
    %v5655 = vsel %vm243, %v5647, 0
    %5657 = vmatprep.subr.bf16.mxu0 0
    %5658 = vmatpush1.bf16.msra.mxu0 %v5652
    %5659 = vmatprep.subr.bf16.mxu0 0
    %5660 = vmatpush1.bf16.msra.mxu0 0
    %5661 = vmatprep.subr.bf16.mxu0 0
    %5662 = vmatpush1.bf16.msra.mxu0 0
    %5663 = vmatprep.subr.bf16.mxu0 0
    %5664 = vmatpush1.bf16.msra.mxu0 0
    %5665 = vmatprep.subr.bf16.mxu0 0
    %5666 = vmatpush1.bf16.msra.mxu0 0
    %5667 = vmatprep.subr.bf16.mxu0 0
    %5668 = vmatpush1.bf16.msra.mxu0 0
    %5669 = vmatprep.subr.bf16.mxu0 0
    %5670 = vmatpush1.bf16.msra.mxu0 0
    %5671 = vmatprep.subr.bf16.mxu0 0
    %5672 = vmatpush1.bf16.msra.mxu0 0
    %5673 = vmatprep.subr.bf16.mxu0 0
    %5674 = vmatpush1.bf16.msra.mxu0 0
    %5675 = vmatprep.subr.bf16.mxu0 0
    %5676 = vmatpush1.bf16.msra.mxu0 0
    %5677 = vmatprep.subr.bf16.mxu0 0
    %5678 = vmatpush1.bf16.msra.mxu0 0
    %5679 = vmatprep.subr.bf16.mxu0 0
    %5680 = vmatpush1.bf16.msra.mxu0 0
    %5681 = vmatprep.subr.bf16.mxu0 0
    %5682 = vmatpush1.bf16.msra.mxu0 0
    %5683 = vmatprep.subr.bf16.mxu0 0
    %5684 = vmatpush1.bf16.msra.mxu0 0
    %5685 = vmatprep.subr.bf16.mxu0 0
    %5686 = vmatpush1.bf16.msra.mxu0 0
    %5687 = vmatprep.subr.bf16.mxu0 0
    %5688 = vmatpush1.bf16.msra.mxu0 0
    %5689 = vmatprep.mubr.bf16.mxu0 0
    %5690 = vmatmul.mubr.bf16.gmra.mrb[0].mxu0 %v5655
    %v5691 = vpop.f32.mrb[0].mxu0
    %v5692 = vadd.f32 0.0, %v5691
    %v5693 = vpop.f32.mrb[0].mxu0
    %v5694 = vpop.f32.mrb[0].mxu0
    %v5695 = vadd.f32 0.0, %v5694
    %v5696 = vpop.f32.mrb[0].mxu0
    %5697 = vdwg.mxu0
    %v5698 = vadd.f32 %v5638, %v5692
    %v5699 = vadd.f32 %v5639, %v5695
    %s5700 = scalar_lea.vmem %s67, 64
    %v5701 = vld [vmem:[%s5700] sm:$0xf]
    %v5702 = vld [vmem:[%s5700 + $0x4] sm:$0xf]
    %v5705 = vunpack.c.l.b16 %v5701
    %v5706 = vunpack.c.l.b16 %v5702
    %v5707 = vpack.c.b16 %v5706, %v5705
    %5708 = vrot.lane.b32.xlu0 %v5221, 116
    %v5709 = vpop.permute.xlu0 %5708
    %5710 = vrot.lane.b32.xlu0 %v5222, 116
    %v5711 = vpop.permute.xlu0 %5710
    %v5712 = vsel %vm1050, %v5709, %v5711
    %v5715 = vsel %vm243, %v5707, 0
    %5717 = vmatprep.subr.bf16.mxu0 0
    %5718 = vmatpush1.bf16.msra.mxu0 %v5712
    %5719 = vmatprep.subr.bf16.mxu0 0
    %5720 = vmatpush1.bf16.msra.mxu0 0
    %5721 = vmatprep.subr.bf16.mxu0 0
    %5722 = vmatpush1.bf16.msra.mxu0 0
    %5723 = vmatprep.subr.bf16.mxu0 0
    %5724 = vmatpush1.bf16.msra.mxu0 0
    %5725 = vmatprep.subr.bf16.mxu0 0
    %5726 = vmatpush1.bf16.msra.mxu0 0
    %5727 = vmatprep.subr.bf16.mxu0 0
    %5728 = vmatpush1.bf16.msra.mxu0 0
    %5729 = vmatprep.subr.bf16.mxu0 0
    %5730 = vmatpush1.bf16.msra.mxu0 0
    %5731 = vmatprep.subr.bf16.mxu0 0
    %5732 = vmatpush1.bf16.msra.mxu0 0
    %5733 = vmatprep.subr.bf16.mxu0 0
    %5734 = vmatpush1.bf16.msra.mxu0 0
    %5735 = vmatprep.subr.bf16.mxu0 0
    %5736 = vmatpush1.bf16.msra.mxu0 0
    %5737 = vmatprep.subr.bf16.mxu0 0
    %5738 = vmatpush1.bf16.msra.mxu0 0
    %5739 = vmatprep.subr.bf16.mxu0 0
    %5740 = vmatpush1.bf16.msra.mxu0 0
    %5741 = vmatprep.subr.bf16.mxu0 0
    %5742 = vmatpush1.bf16.msra.mxu0 0
    %5743 = vmatprep.subr.bf16.mxu0 0
    %5744 = vmatpush1.bf16.msra.mxu0 0
    %5745 = vmatprep.subr.bf16.mxu0 0
    %5746 = vmatpush1.bf16.msra.mxu0 0
    %5747 = vmatprep.subr.bf16.mxu0 0
    %5748 = vmatpush1.bf16.msra.mxu0 0
    %5749 = vmatprep.mubr.bf16.mxu0 0
    %5750 = vmatmul.mubr.bf16.gmra.mrb[0].mxu0 %v5715
    %v5751 = vpop.f32.mrb[0].mxu0
    %v5752 = vadd.f32 0.0, %v5751
    %v5753 = vpop.f32.mrb[0].mxu0
    %v5754 = vpop.f32.mrb[0].mxu0
    %v5755 = vadd.f32 0.0, %v5754
    %v5756 = vpop.f32.mrb[0].mxu0
    %5757 = vdwg.mxu0
    %v5758 = vadd.f32 %v5698, %v5752
    %v5759 = vadd.f32 %v5699, %v5755
    %v5760 = vmul.f32 %v5758, %v240
    %v5761 = vmul.f32 %v5759, %v240
    %5762 = vadd.xlane.f32.xlu0 %v5760
    %v5763 = vpop.xlane.xlu0 %5762
    %5764 = vadd.xlane.f32.xlu0 %v5761
    %v5765 = vpop.xlane.xlu0 %5764
    %v5766 = vmul.f32 %v5763, 0.03125
    %v5767 = vmul.f32 %v5765, 0.03125
    %v5768 = vsub.f32 %v5758, %v5766
    %v5769 = vsub.f32 %v5759, %v5767
    %v5770 = vmul.f32 %v5768, %v240
    %v5771 = vmul.f32 %v5769, %v240
    %v5772 = vmul.f32 %v5770, %v5770
    %v5773 = vmul.f32 %v5771, %v5771
    %5774 = vadd.xlane.f32.xlu0 %v5772
    %v5775 = vpop.xlane.xlu0 %5774
    %5776 = vadd.xlane.f32.xlu0 %v5773
    %v5777 = vpop.xlane.xlu0 %5776
    %v5778 = vmul.f32 %v5775, 0.03125
    %v5779 = vmul.f32 %v5777, 0.03125
    %v5780 = vld [vmem:[%s69] sm:$0xff]
    %v5781 = vld [vmem:[%s69 + $0x8] sm:$0xff]
    %v5782 = vadd.f32 %v5778, 1e-05
    %v5783 = vadd.f32 %v5779, 1e-05
    %v5784 = vrsqrt.pop %v5782
    %v5785 = vrsqrt.pop %v5783
    %v5786 = vmul.f32 %v5780, %v5784
    %v5787 = vmul.f32 %v5781, %v5785
    %v5788 = vld [vmem:[%s71] sm:$0xff]
    %v5789 = vld [vmem:[%s71 + $0x8] sm:$0xff]
    %v5790 = vmul.f32 %v5766, %v5786
    %v5791 = vmul.f32 %v5767, %v5787
    %v5792 = vsub.f32 %v5788, %v5790
    %v5793 = vsub.f32 %v5789, %v5791
    %5795 = vset.pattern.permute.xlu0 0
    %5796 = vperm.xlu0 %5795, %v5786
    %v5797 = vpop.permute.xlu0 %5796
    %5800 = vset.pattern.permute.xlu0 0
    %5801 = vperm.xlu0 %5800, %v5787
    %v5802 = vpop.permute.xlu0 %5801
    %v5804 = vmul.f32 %v5758, %v5797
    %v5805 = vmul.f32 %v5759, %v5802
    %5807 = vset.pattern.permute.xlu0 0
    %5808 = vperm.xlu0 %5807, %v5792
    %v5809 = vpop.permute.xlu0 %5808
    %5812 = vset.pattern.permute.xlu0 0
    %5813 = vperm.xlu0 %5812, %v5793
    %v5814 = vpop.permute.xlu0 %5813
    %v5816 = vadd.f32 %v5804, %v5809
    %v5817 = vadd.f32 %v5805, %v5814
    %v5818 = vmax.f32 %v5816, 0.0
    %v5819 = vmax.f32 %v5817, 0.0
    %v5820 = vmul.f32 %v5818, %v240
    %v5821 = vmul.f32 %v5819, %v240
    %v5822 = vpack.c.bf16 %v5821, %v5820
    %5824 = vrot.lane.b32.xlu0 %v5822, 8
    %v5825 = vpop.permute.xlu0 %5824
    %5827 = vst.msk [vmem:[#allocation2] sm:$0xff] %vm255, %v5825
    %5828 = vst.msk [vmem:[#allocation2 + $0x8] sm:$0xff] %vm257, %v5825
    %v5829 = vld [vmem:[#allocation2] sm:$0xff]
    %v5830 = vld [vmem:[#allocation2 + $0x8] sm:$0xff]
    %v5831 = vld [vmem:[#allocation7] sm:$0xf]
    %v5832 = vld [vmem:[#allocation7 + $0x4] sm:$0xf]
    %s5833 = scalar_lea.vmem [#allocation7], 8
    %v5834 = vld [vmem:[%s5833] sm:$0xf]
    %v5835 = vld [vmem:[%s5833 + $0x4] sm:$0xf]
    %v5838 = vunpack.c.l.b16 %v5834
    %v5839 = vunpack.c.l.b16 %v5835
    %v5840 = vpack.c.b16 %v5839, %v5838
    %5843 = vrot.lane.b32.xlu0 %v5829, 120
    %v5844 = vpop.permute.xlu0 %5843
    %5845 = vrot.lane.b32.xlu0 %v5830, 120
    %v5846 = vpop.permute.xlu0 %5845
    %v5847 = vsel %vm274, %v5844, %v5846
    %v5850 = vsel %vm243, %v5840, 0
    %5852 = vmatprep.subr.bf16.mxu0 0
    %5853 = vmatpush1.bf16.msra.mxu0 %v5847
    %5854 = vmatprep.subr.bf16.mxu0 0
    %5855 = vmatpush1.bf16.msra.mxu0 0
    %5856 = vmatprep.subr.bf16.mxu0 0
    %5857 = vmatpush1.bf16.msra.mxu0 0
    %5858 = vmatprep.subr.bf16.mxu0 0
    %5859 = vmatpush1.bf16.msra.mxu0 0
    %5860 = vmatprep.subr.bf16.mxu0 0
    %5861 = vmatpush1.bf16.msra.mxu0 0
    %5862 = vmatprep.subr.bf16.mxu0 0
    %5863 = vmatpush1.bf16.msra.mxu0 0
    %5864 = vmatprep.subr.bf16.mxu0 0
    %5865 = vmatpush1.bf16.msra.mxu0 0
    %5866 = vmatprep.subr.bf16.mxu0 0
    %5867 = vmatpush1.bf16.msra.mxu0 0
    %5868 = vmatprep.subr.bf16.mxu0 0
    %5869 = vmatpush1.bf16.msra.mxu0 0
    %5870 = vmatprep.subr.bf16.mxu0 0
    %5871 = vmatpush1.bf16.msra.mxu0 0
    %5872 = vmatprep.subr.bf16.mxu0 0
    %5873 = vmatpush1.bf16.msra.mxu0 0
    %5874 = vmatprep.subr.bf16.mxu0 0
    %5875 = vmatpush1.bf16.msra.mxu0 0
    %5876 = vmatprep.subr.bf16.mxu0 0
    %5877 = vmatpush1.bf16.msra.mxu0 0
    %5878 = vmatprep.subr.bf16.mxu0 0
    %5879 = vmatpush1.bf16.msra.mxu0 0
    %5880 = vmatprep.subr.bf16.mxu0 0
    %5881 = vmatpush1.bf16.msra.mxu0 0
    %5882 = vmatprep.subr.bf16.mxu0 0
    %5883 = vmatpush1.bf16.msra.mxu0 0
    %5884 = vmatprep.mubr.bf16.mxu0 0
    %5885 = vmatmul.mubr.bf16.gmra.mrb[0].mxu0 %v5850
    %v5886 = vpop.f32.mrb[0].mxu0
    %v5887 = vadd.f32 0.0, %v5886
    %v5888 = vpop.f32.mrb[0].mxu0
    %v5889 = vpop.f32.mrb[0].mxu0
    %v5890 = vadd.f32 0.0, %v5889
    %v5891 = vpop.f32.mrb[0].mxu0
    %5892 = vdwg.mxu0
    %v5895 = vunpack.c.l.b16 %v5831
    %v5896 = vunpack.c.l.b16 %v5832
    %v5897 = vpack.c.b16 %v5896, %v5895
    %5898 = vrot.lane.b32.xlu0 %v5829, 121
    %v5899 = vpop.permute.xlu0 %5898
    %5900 = vrot.lane.b32.xlu0 %v5830, 121
    %v5901 = vpop.permute.xlu0 %5900
    %v5902 = vsel %vm752, %v5899, %v5901
    %v5905 = vsel %vm243, %v5897, 0
    %5907 = vmatprep.subr.bf16.mxu0 0
    %5908 = vmatpush1.bf16.msra.mxu0 %v5902
    %5909 = vmatprep.subr.bf16.mxu0 0
    %5910 = vmatpush1.bf16.msra.mxu0 0
    %5911 = vmatprep.subr.bf16.mxu0 0
    %5912 = vmatpush1.bf16.msra.mxu0 0
    %5913 = vmatprep.subr.bf16.mxu0 0
    %5914 = vmatpush1.bf16.msra.mxu0 0
    %5915 = vmatprep.subr.bf16.mxu0 0
    %5916 = vmatpush1.bf16.msra.mxu0 0
    %5917 = vmatprep.subr.bf16.mxu0 0
    %5918 = vmatpush1.bf16.msra.mxu0 0
    %5919 = vmatprep.subr.bf16.mxu0 0
    %5920 = vmatpush1.bf16.msra.mxu0 0
    %5921 = vmatprep.subr.bf16.mxu0 0
    %5922 = vmatpush1.bf16.msra.mxu0 0
    %5923 = vmatprep.subr.bf16.mxu0 0
    %5924 = vmatpush1.bf16.msra.mxu0 0
    %5925 = vmatprep.subr.bf16.mxu0 0
    %5926 = vmatpush1.bf16.msra.mxu0 0
    %5927 = vmatprep.subr.bf16.mxu0 0
    %5928 = vmatpush1.bf16.msra.mxu0 0
    %5929 = vmatprep.subr.bf16.mxu0 0
    %5930 = vmatpush1.bf16.msra.mxu0 0
    %5931 = vmatprep.subr.bf16.mxu0 0
    %5932 = vmatpush1.bf16.msra.mxu0 0
    %5933 = vmatprep.subr.bf16.mxu0 0
    %5934 = vmatpush1.bf16.msra.mxu0 0
    %5935 = vmatprep.subr.bf16.mxu0 0
    %5936 = vmatpush1.bf16.msra.mxu0 0
    %5937 = vmatprep.subr.bf16.mxu0 0
    %5938 = vmatpush1.bf16.msra.mxu0 0
    %5939 = vmatprep.mubr.bf16.mxu0 0
    %5940 = vmatmul.mubr.bf16.gmra.mrb[0].mxu0 %v5905
    %v5941 = vpop.f32.mrb[0].mxu0
    %v5942 = vadd.f32 %v5887, %v5941
    %v5943 = vpop.f32.mrb[0].mxu0
    %v5944 = vpop.f32.mrb[0].mxu0
    %v5945 = vadd.f32 %v5890, %v5944
    %v5946 = vpop.f32.mrb[0].mxu0
    %5947 = vdwg.mxu0
    %s5948 = scalar_lea.vmem [#allocation7], 16
    %v5949 = vld [vmem:[%s5948] sm:$0xf]
    %v5950 = vld [vmem:[%s5948 + $0x4] sm:$0xf]
    %v5953 = vunpack.c.l.b16 %v5949
    %v5954 = vunpack.c.l.b16 %v5950
    %v5955 = vpack.c.b16 %v5954, %v5953
    %5956 = vrot.lane.b32.xlu0 %v5829, 119
    %v5957 = vpop.permute.xlu0 %5956
    %5958 = vrot.lane.b32.xlu0 %v5830, 119
    %v5959 = vpop.permute.xlu0 %5958
    %v5960 = vsel %vm867, %v5957, %v5959
    %v5963 = vsel %vm243, %v5955, 0
    %5965 = vmatprep.subr.bf16.mxu0 0
    %5966 = vmatpush1.bf16.msra.mxu0 %v5960
    %5967 = vmatprep.subr.bf16.mxu0 0
    %5968 = vmatpush1.bf16.msra.mxu0 0
    %5969 = vmatprep.subr.bf16.mxu0 0
    %5970 = vmatpush1.bf16.msra.mxu0 0
    %5971 = vmatprep.subr.bf16.mxu0 0
    %5972 = vmatpush1.bf16.msra.mxu0 0
    %5973 = vmatprep.subr.bf16.mxu0 0
    %5974 = vmatpush1.bf16.msra.mxu0 0
    %5975 = vmatprep.subr.bf16.mxu0 0
    %5976 = vmatpush1.bf16.msra.mxu0 0
    %5977 = vmatprep.subr.bf16.mxu0 0
    %5978 = vmatpush1.bf16.msra.mxu0 0
    %5979 = vmatprep.subr.bf16.mxu0 0
    %5980 = vmatpush1.bf16.msra.mxu0 0
    %5981 = vmatprep.subr.bf16.mxu0 0
    %5982 = vmatpush1.bf16.msra.mxu0 0
    %5983 = vmatprep.subr.bf16.mxu0 0
    %5984 = vmatpush1.bf16.msra.mxu0 0
    %5985 = vmatprep.subr.bf16.mxu0 0
    %5986 = vmatpush1.bf16.msra.mxu0 0
    %5987 = vmatprep.subr.bf16.mxu0 0
    %5988 = vmatpush1.bf16.msra.mxu0 0
    %5989 = vmatprep.subr.bf16.mxu0 0
    %5990 = vmatpush1.bf16.msra.mxu0 0
    %5991 = vmatprep.subr.bf16.mxu0 0
    %5992 = vmatpush1.bf16.msra.mxu0 0
    %5993 = vmatprep.subr.bf16.mxu0 0
    %5994 = vmatpush1.bf16.msra.mxu0 0
    %5995 = vmatprep.subr.bf16.mxu0 0
    %5996 = vmatpush1.bf16.msra.mxu0 0
    %5997 = vmatprep.mubr.bf16.mxu0 0
    %5998 = vmatmul.mubr.bf16.gmra.mrb[0].mxu0 %v5963
    %v5999 = vpop.f32.mrb[0].mxu0
    %v6000 = vadd.f32 0.0, %v5999
    %v6001 = vpop.f32.mrb[0].mxu0
    %v6002 = vpop.f32.mrb[0].mxu0
    %v6003 = vadd.f32 0.0, %v6002
    %v6004 = vpop.f32.mrb[0].mxu0
    %6005 = vdwg.mxu0
    %v6006 = vadd.f32 %v5942, %v6000
    %v6007 = vadd.f32 %v5945, %v6003
    %v6008 = vmul.f32 %v6006, %v240
    %v6009 = vmul.f32 %v6007, %v240
    %6010 = vadd.xlane.f32.xlu0 %v6008
    %v6011 = vpop.xlane.xlu0 %6010
    %6012 = vadd.xlane.f32.xlu0 %v6009
    %v6013 = vpop.xlane.xlu0 %6012
    %v6014 = vmul.f32 %v6011, 0.03125
    %v6015 = vmul.f32 %v6013, 0.03125
    %v6016 = vsub.f32 %v6006, %v6014
    %v6017 = vsub.f32 %v6007, %v6015
    %v6018 = vmul.f32 %v6016, %v240
    %v6019 = vmul.f32 %v6017, %v240
    %v6020 = vmul.f32 %v6018, %v6018
    %v6021 = vmul.f32 %v6019, %v6019
    %6022 = vadd.xlane.f32.xlu0 %v6020
    %v6023 = vpop.xlane.xlu0 %6022
    %6024 = vadd.xlane.f32.xlu0 %v6021
    %v6025 = vpop.xlane.xlu0 %6024
    %v6026 = vmul.f32 %v6023, 0.03125
    %v6027 = vmul.f32 %v6025, 0.03125
    %v6028 = vld [vmem:[%s75] sm:$0xff]
    %v6029 = vld [vmem:[%s75 + $0x8] sm:$0xff]
    %v6030 = vadd.f32 %v6026, 1e-05
    %v6031 = vadd.f32 %v6027, 1e-05
    %v6032 = vrsqrt.pop %v6030
    %v6033 = vrsqrt.pop %v6031
    %v6034 = vmul.f32 %v6028, %v6032
    %v6035 = vmul.f32 %v6029, %v6033
    %v6036 = vld [vmem:[%s77] sm:$0xff]
    %v6037 = vld [vmem:[%s77 + $0x8] sm:$0xff]
    %v6038 = vmul.f32 %v6014, %v6034
    %v6039 = vmul.f32 %v6015, %v6035
    %v6040 = vsub.f32 %v6036, %v6038
    %v6041 = vsub.f32 %v6037, %v6039
    %6043 = vset.pattern.permute.xlu0 0
    %6044 = vperm.xlu0 %6043, %v6034
    %v6045 = vpop.permute.xlu0 %6044
    %6048 = vset.pattern.permute.xlu0 0
    %6049 = vperm.xlu0 %6048, %v6035
    %v6050 = vpop.permute.xlu0 %6049
    %v6052 = vmul.f32 %v6006, %v6045
    %v6053 = vmul.f32 %v6007, %v6050
    %6055 = vset.pattern.permute.xlu0 0
    %6056 = vperm.xlu0 %6055, %v6040
    %v6057 = vpop.permute.xlu0 %6056
    %6060 = vset.pattern.permute.xlu0 0
    %6061 = vperm.xlu0 %6060, %v6041
    %v6062 = vpop.permute.xlu0 %6061
    %v6064 = vadd.f32 %v6052, %v6057
    %v6065 = vadd.f32 %v6053, %v6062
    %v6066 = vadd.f32 %v6064, %v4261
    %v6067 = vadd.f32 %v6065, %v4262
    %v6068 = vmax.f32 %v6066, 0.0
    %v6069 = vmax.f32 %v6067, 0.0
    %v6070 = vmul.f32 %v6068, %v240
    %v6071 = vmul.f32 %v6069, %v240
    %v6072 = vpack.c.bf16 %v6071, %v6070
    %6074 = vrot.lane.b32.xlu0 %v6072, 8
    %v6075 = vpop.permute.xlu0 %6074
    %6077 = vst.msk [vmem:[#allocation2] sm:$0xff] %vm255, %v6075
    %6078 = vst.msk [vmem:[#allocation2 + $0x8] sm:$0xff] %vm257, %v6075
    %v6079 = vld [vmem:[%s5] sm:$0xff]
    %v6080 = vld [vmem:[%s5 + $0x8] sm:$0xff]
    %v6081 = vld [vmem:[%s5 + $0x10] sm:$0xff]
    %v6082 = vld [vmem:[%s5 + $0x18] sm:$0xff]
    %v6083 = vld [vmem:[%s5 + $0x20] sm:$0xff]
    %v6084 = vld [vmem:[%s5 + $0x28] sm:$0xff]
    %v6085 = vld [vmem:[%s5 + $0x30] sm:$0xff]
    %v6086 = vld [vmem:[%s5 + $0x38] sm:$0xff]
    %v6087 = vld [vmem:[%s5 + $0x40] sm:$0xff]
    %v6088 = vld [vmem:[%s5 + $0x48] sm:$0xff]
    %v6089 = vld [vmem:[%s5 + $0x50] sm:$0xff]
    %v6090 = vld [vmem:[%s5 + $0x58] sm:$0xff]
    %v6091 = vld [vmem:[%s5 + $0x60] sm:$0xff]
    %v6092 = vld [vmem:[%s5 + $0x68] sm:$0xff]
    %v6093 = vld [vmem:[%s5 + $0x70] sm:$0xff]
    %v6094 = vld [vmem:[%s5 + $0x78] sm:$0xff]
    %6095 = vmatprep.subr.mxu0 0.0
    %6096 = vmatpush1.msra.mxu0 %v6079
    %6097 = vmatprep.subr.mxu0 0.0
    %6098 = vmatpush1.msra.mxu0 %v6080
    %6099 = vmatprep.subr.mxu0 0.0
    %6100 = vmatpush1.msra.mxu0 %v6081
    %6101 = vmatprep.subr.mxu0 0.0
    %6102 = vmatpush1.msra.mxu0 %v6082
    %6103 = vmatprep.subr.mxu0 0.0
    %6104 = vmatpush1.msra.mxu0 %v6083
    %6105 = vmatprep.subr.mxu0 0.0
    %6106 = vmatpush1.msra.mxu0 %v6084
    %6107 = vmatprep.subr.mxu0 0.0
    %6108 = vmatpush1.msra.mxu0 %v6085
    %6109 = vmatprep.subr.mxu0 0.0
    %6110 = vmatpush1.msra.mxu0 %v6086
    %6111 = vmatprep.subr.mxu0 0.0
    %6112 = vmatpush1.msra.mxu0 %v6087
    %6113 = vmatprep.subr.mxu0 0.0
    %6114 = vmatpush1.msra.mxu0 %v6088
    %6115 = vmatprep.subr.mxu0 0.0
    %6116 = vmatpush1.msra.mxu0 %v6089
    %6117 = vmatprep.subr.mxu0 0.0
    %6118 = vmatpush1.msra.mxu0 %v6090
    %6119 = vmatprep.subr.mxu0 0.0
    %6120 = vmatpush1.msra.mxu0 %v6091
    %6121 = vmatprep.subr.mxu0 0.0
    %6122 = vmatpush1.msra.mxu0 %v6092
    %6123 = vmatprep.subr.mxu0 0.0
    %6124 = vmatpush1.msra.mxu0 %v6093
    %6125 = vmatprep.subr.mxu0 0.0
    %6126 = vmatpush1.msra.mxu0 %v6094
    %6127 = vmatprep.subr.mxu0 0.0
    %6128 = vmatpush1.msra.mxu0 0.0
    %6129 = vmatprep.subr.mxu0 0.0
    %6130 = vmatpush1.msra.mxu0 0.0
    %6131 = vmatprep.subr.mxu0 0.0
    %6132 = vmatpush1.msra.mxu0 0.0
    %6133 = vmatprep.subr.mxu0 0.0
    %6134 = vmatpush1.msra.mxu0 0.0
    %6135 = vmatprep.subr.mxu0 0.0
    %6136 = vmatpush1.msra.mxu0 0.0
    %6137 = vmatprep.subr.mxu0 0.0
    %6138 = vmatpush1.msra.mxu0 0.0
    %6139 = vmatprep.subr.mxu0 0.0
    %6140 = vmatpush1.msra.mxu0 0.0
    %6141 = vmatprep.subr.mxu0 0.0
    %6142 = vmatpush1.msra.mxu0 0.0
    %6143 = vmatprep.subr.mxu0 0.0
    %6144 = vmatpush1.msra.mxu0 0.0
    %6145 = vmatprep.subr.mxu0 0.0
    %6146 = vmatpush1.msra.mxu0 0.0
    %6147 = vmatprep.subr.mxu0 0.0
    %6148 = vmatpush1.msra.mxu0 0.0
    %6149 = vmatprep.subr.mxu0 0.0
    %6150 = vmatpush1.msra.mxu0 0.0
    %6151 = vmatprep.subr.mxu0 0.0
    %6152 = vmatpush1.msra.mxu0 0.0
    %6153 = vmatprep.subr.mxu0 0.0
    %6154 = vmatpush1.msra.mxu0 0.0
    %6155 = vmatprep.subr.mxu0 0.0
    %6156 = vmatpush1.msra.mxu0 0.0
    %6157 = vmatprep.subr.mxu0 0.0
    %6158 = vmatpush1.msra.mxu0 0.0
    %6159 = vmatprep.mubr.f32.mxu0 0.0
    %6160 = vmatmul.mubr.f32.gmra.mrb[0].mxu0 %v6070
    %v6161 = vpop.f32.mrb[0].mxu0
    %v6162 = vadd.f32 0.0, %v6161
    %v6163 = vpop.f32.mrb[0].mxu0
    %6164 = vmatprep.mubr.f32.mxu0 0.0
    %6165 = vmatmul.mubr.f32.gmra.mrb[0].mxu0 %v6071
    %v6166 = vpop.f32.mrb[0].mxu0
    %v6167 = vadd.f32 0.0, %v6166
    %v6168 = vpop.f32.mrb[0].mxu0
    %6169 = vdwg.mxu0
    %v6170 = vld [vmem:[#allocation8] sm:$0x3]
    %v6171 = vld [vmem:[#allocation10] sm:$0x3]
    %6173 = vset.pattern.permute.xlu0 0
    %6174 = vperm.xlu0 %6173, %v6171
    %v6175 = vpop.permute.xlu0 %6174
    %v6178 = vsel %vm243, %v6170, 0
    %6180 = vmatprep.subr.mxu0 0.0
    %6181 = vmatpush1.msra.mxu0 %v6162
    %6182 = vmatprep.subr.mxu0 0.0
    %6183 = vmatpush1.msra.mxu0 %v6167
    %6184 = vmatprep.subr.mxu0 0.0
    %6185 = vmatpush1.msra.mxu0 0.0
    %6186 = vmatprep.subr.mxu0 0.0
    %6187 = vmatpush1.msra.mxu0 0.0
    %6188 = vmatprep.subr.mxu0 0.0
    %6189 = vmatpush1.msra.mxu0 0.0
    %6190 = vmatprep.subr.mxu0 0.0
    %6191 = vmatpush1.msra.mxu0 0.0
    %6192 = vmatprep.subr.mxu0 0.0
    %6193 = vmatpush1.msra.mxu0 0.0
    %6194 = vmatprep.subr.mxu0 0.0
    %6195 = vmatpush1.msra.mxu0 0.0
    %6196 = vmatprep.subr.mxu0 0.0
    %6197 = vmatpush1.msra.mxu0 0.0
    %6198 = vmatprep.subr.mxu0 0.0
    %6199 = vmatpush1.msra.mxu0 0.0
    %6200 = vmatprep.subr.mxu0 0.0
    %6201 = vmatpush1.msra.mxu0 0.0
    %6202 = vmatprep.subr.mxu0 0.0
    %6203 = vmatpush1.msra.mxu0 0.0
    %6204 = vmatprep.subr.mxu0 0.0
    %6205 = vmatpush1.msra.mxu0 0.0
    %6206 = vmatprep.subr.mxu0 0.0
    %6207 = vmatpush1.msra.mxu0 0.0
    %6208 = vmatprep.subr.mxu0 0.0
    %6209 = vmatpush1.msra.mxu0 0.0
    %6210 = vmatprep.subr.mxu0 0.0
    %6211 = vmatpush1.msra.mxu0 0.0
    %6212 = vmatprep.subr.mxu0 0.0
    %6213 = vmatpush1.msra.mxu0 0.0
    %6214 = vmatprep.subr.mxu0 0.0
    %6215 = vmatpush1.msra.mxu0 0.0
    %6216 = vmatprep.subr.mxu0 0.0
    %6217 = vmatpush1.msra.mxu0 0.0
    %6218 = vmatprep.subr.mxu0 0.0
    %6219 = vmatpush1.msra.mxu0 0.0
    %6220 = vmatprep.subr.mxu0 0.0
    %6221 = vmatpush1.msra.mxu0 0.0
    %6222 = vmatprep.subr.mxu0 0.0
    %6223 = vmatpush1.msra.mxu0 0.0
    %6224 = vmatprep.subr.mxu0 0.0
    %6225 = vmatpush1.msra.mxu0 0.0
    %6226 = vmatprep.subr.mxu0 0.0
    %6227 = vmatpush1.msra.mxu0 0.0
    %6228 = vmatprep.subr.mxu0 0.0
    %6229 = vmatpush1.msra.mxu0 0.0
    %6230 = vmatprep.subr.mxu0 0.0
    %6231 = vmatpush1.msra.mxu0 0.0
    %6232 = vmatprep.subr.mxu0 0.0
    %6233 = vmatpush1.msra.mxu0 0.0
    %6234 = vmatprep.subr.mxu0 0.0
    %6235 = vmatpush1.msra.mxu0 0.0
    %6236 = vmatprep.subr.mxu0 0.0
    %6237 = vmatpush1.msra.mxu0 0.0
    %6238 = vmatprep.subr.mxu0 0.0
    %6239 = vmatpush1.msra.mxu0 0.0
    %6240 = vmatprep.subr.mxu0 0.0
    %6241 = vmatpush1.msra.mxu0 0.0
    %6242 = vmatprep.subr.mxu0 0.0
    %6243 = vmatpush1.msra.mxu0 0.0
    %6244 = vmatprep.mubr.f32.mxu0 0.0
    %6245 = vmatmul.mubr.f32.gmra.mrb[0].mxu0 %v6178
    %v6246 = vpop.f32.mrb[0].mxu0
    %v6247 = vadd.f32 %v6175, %v6246
    %v6248 = vpop.f32.mrb[0].mxu0
    %6249 = vdwg.mxu0
    %vm6250 = vcmask 9216
    %6251 = vst.msk [vmem:[%s83] sm:$0x3] %vm6250, %v6247
    // Predicated region
    $region186: #{_lambda_.1} parent=1 // pred_check
      _
    $region187: #{_lambda_.1} parent=1 // pred_check_branch
      %6253 = sbr.rel (0) target = $region189
    $region188: #{_lambda_.1} parent=1 // pred_region
      _
    $region189: #{_lambda_.1} parent=1 // pred_fallthru
      _
    // Predicated region
    $region190: #{_lambda_.1} parent=1 // pred_check
      _
    $region191: #{_lambda_.1} parent=1 // pred_check_branch
      %6255 = sbr.rel (0) target = $region193
    $region192: #{_lambda_.1} parent=1 // pred_region
      _
    $region193: #{_lambda_.1} parent=1 // pred_fallthru
      _
    %6256 = vsyncpa [#allocation4], 1
    %6257 = vsyncpa [#allocation6], 1
    %6258 = vsyncpa [#allocation9], 1

</llo_original>
